<compile_context>
chip_gen: v5e
topology: v5e:2x2
jax: 0.10.0
libtpu: 0.0.40
codegen_flags: <defaults>
</compile_context>

<pallas_src>
import functools

import jax
import jax.numpy as jnp
from jax import lax
from jax.experimental import pallas as pl
from jax.experimental.pallas import tpu as pltpu

K = 7                                # dConv_kernel_size
PAD = (K - 1) // 2                   # 3
W_OFF = 8                            # sublane-aligned interior column offset in scratch
EPS = 1e-5                           # nn.BatchNorm2d default eps
_SQRT_2_OVER_PI = 0.7978845608028654
_VMEM_LIMIT = 48 * 1024 * 1024       # > 32 MiB scoped default, < 64 MiB v7x physical


# ---------------------------------------------------------------------------
# Kernel 1: depthwise 7x7 conv (groups == channels) + fused BN partial stats
# ---------------------------------------------------------------------------
def _dwconv_stats_kernel(x_hbm, w_ref, b_ref, o_ref, s1_ref, s2_ref,
                         xpad_ref, sem_ref, *, strip):
    # x_hbm : (N, H, W, C) f32 raw HBM ref (memory_space=pl.ANY)
    # w_ref : (K, K, TC) f32; b_ref: (1, TC) f32
    # o_ref : (1, TH, W, TC) bf16 depthwise-conv output tile
    # s1/s2 : (1, 1, 1, TC) f32 per-block sum / bias-shifted sum-of-squares
    # xpad_ref (scratch): (1, TH + 2*PAD, W + 2*W_OFF, TC) f32
    # sem_ref  (scratch): DMA semaphores, shape (3,)
    c = pl.program_id(0)
    n = pl.program_id(1)
    h = pl.program_id(2)
    nH = pl.num_programs(2)
    _, TH, W, TC = o_ref.shape
    h0 = h * TH
    cc = c * TC
    Hp = TH + 2 * PAD

    # --- DMA the input rows straight into the scratch interior (no vreg copy,
    # --- no full-buffer zero fill).  Halo rows come from the neighbouring tiles.
    def core_copy():
        return pltpu.make_async_copy(
            x_hbm.at[pl.ds(n, 1), pl.ds(h0, TH), :, pl.ds(cc, TC)],
            xpad_ref.at[:, PAD:PAD + TH, W_OFF:W_OFF + W, :],
            sem_ref.at[0])

    def top_copy():
        return pltpu.make_async_copy(
            x_hbm.at[pl.ds(n, 1), pl.ds(h0 - PAD, PAD), :, pl.ds(cc, TC)],
            xpad_ref.at[:, 0:PAD, W_OFF:W_OFF + W, :],
            sem_ref.at[1])

    def bot_copy():
        return pltpu.make_async_copy(
            x_hbm.at[pl.ds(n, 1), pl.ds(h0 + TH, PAD), :, pl.ds(cc, TC)],
            xpad_ref.at[:, PAD + TH:PAD + TH + PAD, W_OFF:W_OFF + W, :],
            sem_ref.at[2])

    core_copy().start()

    @pl.when(h > 0)
    def _():
        top_copy().start()

    @pl.when(h < nH - 1)
    def _():
        bot_copy().start()

    # --- Zero only the halo (boundary rows + left/right column margins); the
    # --- rest of the scratch is fully overwritten by the DMAs above.
    @pl.when(h == 0)
    def _():
        xpad_ref[:, 0:PAD, W_OFF:W_OFF + W, :] = jnp.zeros(
            (1, PAD, W, TC), jnp.float32)

    @pl.when(h == nH - 1)
    def _():
        xpad_ref[:, PAD + TH:PAD + TH + PAD, W_OFF:W_OFF + W, :] = jnp.zeros(
            (1, PAD, W, TC), jnp.float32)

    xpad_ref[:, :, W_OFF - PAD:W_OFF, :] = jnp.zeros((1, Hp, PAD, TC), jnp.float32)
    xpad_ref[:, :, W_OFF + W:W_OFF + W + PAD, :] = jnp.zeros(
        (1, Hp, PAD, TC), jnp.float32)

    @pl.when(h > 0)
    def _():
        top_copy().wait()

    @pl.when(h < nH - 1)
    def _():
        bot_copy().wait()

    core_copy().wait()

    # --- 49-tap accumulation on register-resident row strips: all taps of a
    # --- strip stay in vregs; each output vreg is stored exactly once.
    b = b_ref[0, :]
    s1 = jnp.zeros((TC,), jnp.float32)
    s2 = jnp.zeros((TC,), jnp.float32)
    for r0 in range(0, TH, strip):                      # static, unrolled
        acc = jnp.zeros((1, strip, W, TC), jnp.float32) + b
        for kj in range(K):                             # hoisted W (sublane) shifts
            c0 = W_OFF - PAD + kj
            xk = xpad_ref[:, r0:r0 + strip + 2 * PAD, c0:c0 + W, :]
            for ki in range(K):                         # H shifts: free address offsets
                acc = acc + xk[:, ki:ki + strip, :, :] * w_ref[ki, kj, :]
        o_ref[:, r0:r0 + strip, :, :] = acc.astype(o_ref.dtype)
        # Bias-shifted BN partial stats (mitigates E[x^2]-E[x]^2 cancellation).
        s1 = s1 + jnp.sum(acc, axis=(0, 1, 2))
        d = acc - b
        s2 = s2 + jnp.sum(d * d, axis=(0, 1, 2))

    s1_ref[...] = s1[None, None, None, :]
    s2_ref[...] = s2[None, None, None, :]


# ---------------------------------------------------------------------------
# Kernel 2: BN affine + conv_1 (1x1, MXU) + GELU + conv_2 (1x1, MXU) + residual
# ---------------------------------------------------------------------------
def _bn_mlp_kernel(y_ref, res_ref, scale_ref, shift_ref,
                   w1_ref, b1_ref, w2_ref, b2_ref, o_ref):
    # y_ref: (TM, C) bf16 rows; res_ref/o_ref: (TM, C) f32; weights VMEM-resident.
    xn = y_ref[...].astype(jnp.float32) * scale_ref[...] + shift_ref[...]
    h = jnp.dot(xn.astype(jnp.bfloat16), w1_ref[...],
                preferred_element_type=jnp.float32) + b1_ref[...]
    # tanh-approx GELU: runs on the EUP slot instead of a VALU erf polynomial
    # (|delta| vs exact erf GELU ~1e-3, inside the test tolerance).
    h = 0.5 * h * (1.0 + jnp.tanh(_SQRT_2_OVER_PI * (h + 0.044715 * h * h * h)))
    out = jnp.dot(h.astype(jnp.bfloat16), w2_ref[...],
                  preferred_element_type=jnp.float32) + b2_ref[...]
    o_ref[...] = out + res_ref[...]


# ---------------------------------------------------------------------------
# Wrapper helpers
# ---------------------------------------------------------------------------
def _round_up(x, m):
    return ((x + m - 1) // m) * m


def _choose_row_tile(H):
    # Prefer 8..32-row tiles that give at least a 2-deep H grid; fall back to H.
    for th in (32, 24, 16, 8):
        if H % th == 0 and H // th >= 2:
            return th
    for th in (32, 24, 16, 8):
        if H % th == 0:
            return th
    return H


def _largest_divisor_le(n, upper):
    for cand in range(min(n, upper), 0, -1):
        if n % cand == 0:
            return cand
    return 1


# ---------------------------------------------------------------------------
# Forward pass (NHWC core; thin NCHW wrapper for PyTorch-layout callers)
# ---------------------------------------------------------------------------
def conv_block_forward(x_nhwc, params, *, block_m=512):
    """Conv_block forward in NHWC: (N, H, W, C) f32 -> (N, H, W, C) f32."""
    N, H, W, C = x_nhwc.shape
    x = x_nhwc.astype(jnp.float32)

    TC = 128 if C % 128 == 0 else C          # lane-dense channel tile when possible
    nC = C // TC
    TH = _choose_row_tile(H)
    nH = H // TH
    strip = _largest_divisor_le(TH, 8)

    # ---- depthwise 7x7 conv with fused BN partial statistics ---------------
    dw, s1, s2 = pl.pallas_call(
        functools.partial(_dwconv_stats_kernel, strip=strip),
        out_shape=(
            jax.ShapeDtypeStruct((N, H, W, C), jnp.bfloat16),
            jax.ShapeDtypeStruct((N, nH, 1, C), jnp.float32),
            jax.ShapeDtypeStruct((N, nH, 1, C), jnp.float32),
        ),
        grid=(nC, N, nH),
        in_specs=[
            pl.BlockSpec(memory_space=pl.ANY),                     # x (raw HBM)
            pl.BlockSpec((K, K, TC), lambda c, n, h: (0, 0, c)),   # dw weights
            pl.BlockSpec((1, TC), lambda c, n, h: (0, c)),         # dw bias
        ],
        out_specs=(
            pl.BlockSpec((1, TH, W, TC), lambda c, n, h: (n, h, 0, c)),
            pl.BlockSpec((1, 1, 1, TC), lambda c, n, h: (n, h, 0, c)),
            pl.BlockSpec((1, 1, 1, TC), lambda c, n, h: (n, h, 0, c)),
        ),
        scratch_shapes=[
            pltpu.VMEM((1, TH + 2 * PAD, W + 2 * W_OFF, TC), jnp.float32),
            pltpu.SemaphoreType.DMA((3,)),
        ],
        compiler_params=pltpu.CompilerParams(
            dimension_semantics=("parallel", "parallel", "parallel"),
            vmem_limit_bytes=_VMEM_LIMIT),
    )(x, params["dw_w"], params["dw_b"])

    # ---- finalize BN batch statistics; precompute the affine scale/shift ----
    cnt = jnp.float32(N * H * W)
    b_vec = params["dw_b"][0]                                      # (C,)
    mean = jnp.sum(s1, axis=(0, 1, 2)) / cnt                       # (C,)
    var = jnp.maximum(jnp.sum(s2, axis=(0, 1, 2)) / cnt - (mean - b_vec) ** 2, 0.0)
    scale = params["gamma"] * lax.rsqrt(var + EPS)[None, :]        # (1, C)
    shift = params["beta"] - mean[None, :] * scale                 # (1, C)

    # ---- fused BN affine + 1x1 conv + GELU + 1x1 conv + residual -----------
    M = N * H * W
    y = dw.reshape(M, C)                       # bf16 rows (halved HBM traffic)
    res = x.reshape(M, C)                      # f32 residual (no extra cast pass)

    block_m = max(8, (block_m // 8) * 8)
    TM = _round_up(M, 8) if M <= block_m else block_m
    Mp = _round_up(M, TM)
    if Mp != M:                                # masked-tail via row padding
        y = jnp.pad(y, ((0, Mp - M), (0, 0)))
        res = jnp.pad(res, ((0, Mp - M), (0, 0)))

    w1 = params["w1"].astype(jnp.bfloat16)
    w2 = params["w2"].astype(jnp.bfloat16)

    row_spec = pl.BlockSpec((TM, C), lambda i: (i, 0))

    def const_spec(shape):
        # Constant index map + single buffering: weights stay VMEM-resident
        # without a second (useless) pipeline buffer (v7x 64 MiB budget).
        return pl.BlockSpec(shape, lambda i: (0,) * len(shape),
                            pipeline_mode=pl.Buffered(1))

    out = pl.pallas_call(
        _bn_mlp_kernel,
        out_shape=jax.ShapeDtypeStruct((Mp, C), jnp.float32),
        grid=(Mp // TM,),
        in_specs=[
            row_spec,                          # y (bf16 depthwise-conv rows)
            row_spec,                          # residual rows (f32)
            const_spec((1, C)),                # BN scale
            const_spec((1, C)),                # BN shift
            const_spec((C, 4 * C)),            # w1 (bf16)
            const_spec((1, 4 * C)),            # b1
            const_spec((4 * C, C)),            # w2 (bf16)
            const_spec((1, C)),                # b2
        ],
        out_specs=row_spec,
        compiler_params=pltpu.CompilerParams(
            dimension_semantics=("parallel",),
            vmem_limit_bytes=_VMEM_LIMIT),
    )(y, res, scale, shift, w1, params["b1"], w2, params["b2"])

    return out[:M].reshape(N, H, W, C)


def conv_block_forward_nchw(x_nchw, params, *, block_m=512):
    """PyTorch-layout wrapper; prefer conv_block_forward (NHWC) to avoid the two
    full-tensor layout transposes."""
    x = jnp.transpose(x_nchw, (0, 2, 3, 1))
    out = conv_block_forward(x, params, block_m=block_m)
    return jnp.transpose(out, (0, 3, 1, 2))


# ---------------------------------------------------------------------------
# Deterministic parameter init (shapes from Conv_block.__init__)
# ---------------------------------------------------------------------------
def init_params(key, dim):
    ks = jax.random.split(key, 8)
    s = 0.1
    return dict(
        # depth_conv: Conv2d(dim, dim, 7, padding=3, groups=dim) -> (7,7,C) + (1,C)
        dw_w=jax.random.normal(ks[0], (K, K, dim), jnp.float32) * s,
        dw_b=jax.random.normal(ks[1], (1, dim), jnp.float32) * s,
        # BatchNorm2d(dim) affine params
        gamma=1.0 + jax.random.normal(ks[2], (1, dim), jnp.float32) * s,
        beta=jax.random.normal(ks[3], (1, dim), jnp.float32) * s,
        # conv_1: Conv2d(dim, 4*dim, 1) -> (C, 4C) + (1, 4C)
        w1=jax.random.normal(ks[4], (dim, 4 * dim), jnp.float32) * s,
        b1=jax.random.normal(ks[5], (1, 4 * dim), jnp.float32) * s,
        # conv_2: Conv2d(4*dim, dim, 1) -> (4C, C) + (1, C)
        w2=jax.random.normal(ks[6], (4 * dim, dim), jnp.float32) * s,
        b2=jax.random.normal(ks[7], (1, dim), jnp.float32) * s,
    )


# ---------------------------------------------------------------------------
# Pure-JAX f32 reference (PyTorch forward in training mode: BN batch stats)
# ---------------------------------------------------------------------------
def ref_forward(x_nchw, p):
    N, C, H, W = x_nchw.shape
    dw_w_oihw = jnp.transpose(p["dw_w"], (2, 0, 1))[:, None, :, :]   # (C,1,7,7)
    dw = lax.conv_general_dilated(
        x_nchw, dw_w_oihw, window_strides=(1, 1),
        padding=[(PAD, PAD), (PAD, PAD)], feature_group_count=C,
        dimension_numbers=("NCHW", "OIHW", "NCHW"))
    dw = dw + p["dw_b"][0][None, :, None, None]
    mean = dw.mean(axis=(0, 2, 3))
    var = dw.var(axis=(0, 2, 3))                     # biased, like BN training
    xn = (dw - mean[None, :, None, None]) * lax.rsqrt(var + EPS)[None, :, None, None]
    xn = xn * p["gamma"][0][None, :, None, None] + p["beta"][0][None, :, None, None]
    h = jnp.einsum("nchw,cf->nfhw", xn, p["w1"]) + p["b1"][0][None, :, None, None]
    h = jax.nn.gelu(h, approximate=False)
    out = jnp.einsum("nfhw,fc->nchw", h, p["w2"]) + p["b2"][0][None, :, None, None]
    return out + x_nchw


if __name__ == "__main__":
    dim, N, H, W = 128, 2, 16, 16
    key = jax.random.PRNGKey(0)
    kx, kp = jax.random.split(key)
    x_nchw = jax.random.normal(kx, (N, dim, H, W), jnp.float32)
    params = init_params(kp, dim)

    # Run the transpose-free NHWC path (per review); the NCHW wrapper above is
    # provided for PyTorch-layout callers.  block_m=256 keeps TM >= 256 and still
    # exercises the M tiling (M = 512 -> 2 grid steps).  H=16 with TH=8 exercises
    # the H-tiled grid and both halo-DMA / boundary-zero paths of kernel 1.
    x_nhwc = jnp.transpose(x_nchw, (0, 2, 3, 1))
    fwd = jax.jit(functools.partial(conv_block_forward, block_m=256))
    out_nhwc = jax.block_until_ready(fwd(x_nhwc, params))

    ref_nhwc = jnp.transpose(ref_forward(x_nchw, params), (0, 2, 3, 1))
    assert out_nhwc.shape == x_nhwc.shape
    err = float(jnp.max(jnp.abs(out_nhwc - ref_nhwc)))
    ref_scale = float(jnp.max(jnp.abs(ref_nhwc)))
    # bf16 matmul operands / bf16 dw intermediate / tanh-GELU -> relative bound
    # against the full-f32 exact-erf reference.
    assert err / ref_scale < 2e-2, f"mismatch vs reference: abs={err}, rel={err / ref_scale}"
    print("KERNEL_OK")
</pallas_src>

<mosaic_0001>
module attributes {stable_mosaic.version = 11 : i64} {
  func.func @_dwconv_stats_kernel(%arg0: i32, %arg1: i32, %arg2: i32, %arg3: memref<2x16x16x128xf32, #tpu.memory_space<any>>, %arg4: memref<7x7x128xf32, #tpu.memory_space<vmem>>, %arg5: memref<1x128xf32, #tpu.memory_space<vmem>>, %arg6: memref<1x8x16x128xbf16, #tpu.memory_space<vmem>>, %arg7: memref<1x1x1x128xf32, #tpu.memory_space<vmem>>, %arg8: memref<1x1x1x128xf32, #tpu.memory_space<vmem>>, %arg9: memref<1x14x32x128xf32, #tpu.memory_space<vmem>>, %arg10: memref<3x!tpu.dma_semaphore, #tpu.memory_space<semaphore_mem>>) attributes {dimension_semantics = [#tpu.dimension_semantics<parallel>, #tpu.dimension_semantics<parallel>, #tpu.dimension_semantics<parallel>], iteration_bounds = array<i64: 1, 2, 2>, scalar_prefetch = 0 : i64, scratch_operands = 2 : i64, tpu.core_type = #tpu.core_type<tc>, window_params = [{}, {transform_indices = @transform_1, window_bounds = array<i64: 7, 7, 128>}, {transform_indices = @transform_2, window_bounds = array<i64: 1, 128>}, {transform_indices = @transform_3, window_bounds = array<i64: 1, 8, 16, 128>}, {transform_indices = @transform_4, window_bounds = array<i64: 1, 1, 1, 128>}, {transform_indices = @transform_5, window_bounds = array<i64: 1, 1, 1, 128>}]} {
    %c8_i32 = arith.constant 8 : i32
    %0 = arith.muli %arg2, %c8_i32 : i32
    %c128_i32 = arith.constant 128 : i32
    %1 = arith.muli %arg0, %c128_i32 : i32
    %c0_i32 = arith.constant 0 : i32
    %c0_i32_0 = arith.constant 0 : i32
    %2 = tpu.memref_slice %arg3[%arg1, %0, %c0_i32_0, %1] : memref<2x16x16x128xf32, #tpu.memory_space<any>> -> memref<1x8x16x128xf32, #tpu.memory_space<any>>
    %c0_i32_1 = arith.constant 0 : i32
    %c3_i32 = arith.constant 3 : i32
    %c8_i32_2 = arith.constant 8 : i32
    %c0_i32_3 = arith.constant 0 : i32
    %3 = tpu.memref_slice %arg9[%c0_i32_1, %c3_i32, %c8_i32_2, %c0_i32_3] : memref<1x14x32x128xf32, #tpu.memory_space<vmem>> -> memref<1x8x16x128xf32, #tpu.memory_space<vmem>>
    %4 = tpu.memref_slice %arg10[%c0_i32] : memref<3x!tpu.dma_semaphore, #tpu.memory_space<semaphore_mem>> -> memref<1x!tpu.dma_semaphore, #tpu.memory_space<semaphore_mem>>
    %5 = tpu.memref_squeeze %4 : memref<1x!tpu.dma_semaphore, #tpu.memory_space<semaphore_mem>> -> memref<!tpu.dma_semaphore, #tpu.memory_space<semaphore_mem>>
    tpu.enqueue_dma source(%2 : memref<1x8x16x128xf32, #tpu.memory_space<any>>) target(%3 : memref<1x8x16x128xf32, #tpu.memory_space<vmem>>) target_semaphore(%5 : memref<!tpu.dma_semaphore, #tpu.memory_space<semaphore_mem>>)
    %c0_i32_4 = arith.constant 0 : i32
    %6 = arith.cmpi sgt, %arg2, %c0_i32_4 : i32
    %7 = arith.extui %6 : i1 to i32
    %c0_i32_5 = arith.constant 0 : i32
    %8 = arith.cmpi ne, %7, %c0_i32_5 : i32
    scf.if %8 {
      %c3_i32_211 = arith.constant 3 : i32
      %404 = arith.subi %0, %c3_i32_211 : i32
      %c1_i32_212 = arith.constant 1 : i32
      %c0_i32_213 = arith.constant 0 : i32
      %405 = tpu.memref_slice %arg3[%arg1, %404, %c0_i32_213, %1] : memref<2x16x16x128xf32, #tpu.memory_space<any>> -> memref<1x3x16x128xf32, #tpu.memory_space<any>>
      %c0_i32_214 = arith.constant 0 : i32
      %c0_i32_215 = arith.constant 0 : i32
      %c8_i32_216 = arith.constant 8 : i32
      %c0_i32_217 = arith.constant 0 : i32
      %406 = tpu.memref_slice %arg9[%c0_i32_214, %c0_i32_215, %c8_i32_216, %c0_i32_217] : memref<1x14x32x128xf32, #tpu.memory_space<vmem>> -> memref<1x3x16x128xf32, #tpu.memory_space<vmem>>
      %407 = tpu.memref_slice %arg10[%c1_i32_212] : memref<3x!tpu.dma_semaphore, #tpu.memory_space<semaphore_mem>> -> memref<1x!tpu.dma_semaphore, #tpu.memory_space<semaphore_mem>>
      %408 = tpu.memref_squeeze %407 : memref<1x!tpu.dma_semaphore, #tpu.memory_space<semaphore_mem>> -> memref<!tpu.dma_semaphore, #tpu.memory_space<semaphore_mem>>
      tpu.enqueue_dma source(%405 : memref<1x3x16x128xf32, #tpu.memory_space<any>>) target(%406 : memref<1x3x16x128xf32, #tpu.memory_space<vmem>>) target_semaphore(%408 : memref<!tpu.dma_semaphore, #tpu.memory_space<semaphore_mem>>)
    } else {
    }
    %c1_i32 = arith.constant 1 : i32
    %9 = arith.cmpi slt, %arg2, %c1_i32 : i32
    %10 = arith.extui %9 : i1 to i32
    %c0_i32_6 = arith.constant 0 : i32
    %11 = arith.cmpi ne, %10, %c0_i32_6 : i32
    scf.if %11 {
      %c8_i32_211 = arith.constant 8 : i32
      %404 = arith.addi %0, %c8_i32_211 : i32
      %c2_i32 = arith.constant 2 : i32
      %c0_i32_212 = arith.constant 0 : i32
      %405 = tpu.memref_slice %arg3[%arg1, %404, %c0_i32_212, %1] : memref<2x16x16x128xf32, #tpu.memory_space<any>> -> memref<1x3x16x128xf32, #tpu.memory_space<any>>
      %c0_i32_213 = arith.constant 0 : i32
      %c11_i32 = arith.constant 11 : i32
      %c8_i32_214 = arith.constant 8 : i32
      %c0_i32_215 = arith.constant 0 : i32
      %406 = tpu.memref_slice %arg9[%c0_i32_213, %c11_i32, %c8_i32_214, %c0_i32_215] : memref<1x14x32x128xf32, #tpu.memory_space<vmem>> -> memref<1x3x16x128xf32, #tpu.memory_space<vmem>>
      %407 = tpu.memref_slice %arg10[%c2_i32] : memref<3x!tpu.dma_semaphore, #tpu.memory_space<semaphore_mem>> -> memref<1x!tpu.dma_semaphore, #tpu.memory_space<semaphore_mem>>
      %408 = tpu.memref_squeeze %407 : memref<1x!tpu.dma_semaphore, #tpu.memory_space<semaphore_mem>> -> memref<!tpu.dma_semaphore, #tpu.memory_space<semaphore_mem>>
      tpu.enqueue_dma source(%405 : memref<1x3x16x128xf32, #tpu.memory_space<any>>) target(%406 : memref<1x3x16x128xf32, #tpu.memory_space<vmem>>) target_semaphore(%408 : memref<!tpu.dma_semaphore, #tpu.memory_space<semaphore_mem>>)
    } else {
    }
    %c0_i32_7 = arith.constant 0 : i32
    %12 = arith.cmpi eq, %arg2, %c0_i32_7 : i32
    %13 = arith.extui %12 : i1 to i32
    %c0_i32_8 = arith.constant 0 : i32
    %14 = arith.cmpi ne, %13, %c0_i32_8 : i32
    scf.if %14 {
      %cst_211 = arith.constant 0.000000e+00 : f32
      %404 = vector.broadcast %cst_211 : f32 to vector<1x3x16x128xf32>
      %c0_212 = arith.constant 0 : index
      %c0_213 = arith.constant 0 : index
      %c8_214 = arith.constant 8 : index
      %c0_215 = arith.constant 0 : index
      %405 = vector.load %arg9[%c0_212, %c0_213, %c8_214, %c0_215] : memref<1x14x32x128xf32, #tpu.memory_space<vmem>>, vector<1x3x16x128xf32>
      tpu.vector_store %arg9[%c0_212, %c0_213, %c8_214, %c0_215], %404 {strides = array<i32>} : memref<1x14x32x128xf32, #tpu.memory_space<vmem>>, vector<1x3x16x128xf32>,
    } else {
    }
    %c1_i32_9 = arith.constant 1 : i32
    %15 = arith.cmpi eq, %arg2, %c1_i32_9 : i32
    %16 = arith.extui %15 : i1 to i32
    %c0_i32_10 = arith.constant 0 : i32
    %17 = arith.cmpi ne, %16, %c0_i32_10 : i32
    scf.if %17 {
      %cst_211 = arith.constant 0.000000e+00 : f32
      %404 = vector.broadcast %cst_211 : f32 to vector<1x3x16x128xf32>
      %c0_212 = arith.constant 0 : index
      %c11_213 = arith.constant 11 : index
      %c8_214 = arith.constant 8 : index
      %c0_215 = arith.constant 0 : index
      %405 = vector.load %arg9[%c0_212, %c11_213, %c8_214, %c0_215] : memref<1x14x32x128xf32, #tpu.memory_space<vmem>>, vector<1x3x16x128xf32>
      tpu.vector_store %arg9[%c0_212, %c11_213, %c8_214, %c0_215], %404 {strides = array<i32>} : memref<1x14x32x128xf32, #tpu.memory_space<vmem>>, vector<1x3x16x128xf32>,
    } else {
    }
    %cst = arith.constant 0.000000e+00 : f32
    %18 = vector.broadcast %cst : f32 to vector<1x14x3x128xf32>
    %c0 = arith.constant 0 : index
    %c0_11 = arith.constant 0 : index
    %c5 = arith.constant 5 : index
    %c0_12 = arith.constant 0 : index
    %19 = vector.load %arg9[%c0, %c0_11, %c5, %c0_12] : memref<1x14x32x128xf32, #tpu.memory_space<vmem>>, vector<1x14x3x128xf32>
    tpu.vector_store %arg9[%c0, %c0_11, %c5, %c0_12], %18 {strides = array<i32>} : memref<1x14x32x128xf32, #tpu.memory_space<vmem>>, vector<1x14x3x128xf32>,
    %cst_13 = arith.constant 0.000000e+00 : f32
    %20 = vector.broadcast %cst_13 : f32 to vector<1x14x3x128xf32>
    %c0_14 = arith.constant 0 : index
    %c0_15 = arith.constant 0 : index
    %c24 = arith.constant 24 : index
    %c0_16 = arith.constant 0 : index
    %21 = vector.load %arg9[%c0_14, %c0_15, %c24, %c0_16] : memref<1x14x32x128xf32, #tpu.memory_space<vmem>>, vector<1x14x3x128xf32>
    tpu.vector_store %arg9[%c0_14, %c0_15, %c24, %c0_16], %20 {strides = array<i32>} : memref<1x14x32x128xf32, #tpu.memory_space<vmem>>, vector<1x14x3x128xf32>,
    %c0_i32_17 = arith.constant 0 : i32
    %22 = arith.cmpi sgt, %arg2, %c0_i32_17 : i32
    %23 = arith.extui %22 : i1 to i32
    %c0_i32_18 = arith.constant 0 : i32
    %24 = arith.cmpi ne, %23, %c0_i32_18 : i32
    scf.if %24 {
      %c3_i32_211 = arith.constant 3 : i32
      %404 = arith.subi %0, %c3_i32_211 : i32
      %c1_i32_212 = arith.constant 1 : i32
      %c0_i32_213 = arith.constant 0 : i32
      %405 = tpu.memref_slice %arg3[%arg1, %404, %c0_i32_213, %1] : memref<2x16x16x128xf32, #tpu.memory_space<any>> -> memref<1x3x16x128xf32, #tpu.memory_space<any>>
      %c0_i32_214 = arith.constant 0 : i32
      %c0_i32_215 = arith.constant 0 : i32
      %c8_i32_216 = arith.constant 8 : i32
      %c0_i32_217 = arith.constant 0 : i32
      %406 = tpu.memref_slice %arg9[%c0_i32_214, %c0_i32_215, %c8_i32_216, %c0_i32_217] : memref<1x14x32x128xf32, #tpu.memory_space<vmem>> -> memref<1x3x16x128xf32, #tpu.memory_space<vmem>>
      %407 = tpu.memref_slice %arg10[%c1_i32_212] : memref<3x!tpu.dma_semaphore, #tpu.memory_space<semaphore_mem>> -> memref<1x!tpu.dma_semaphore, #tpu.memory_space<semaphore_mem>>
      %408 = tpu.memref_squeeze %407 : memref<1x!tpu.dma_semaphore, #tpu.memory_space<semaphore_mem>> -> memref<!tpu.dma_semaphore, #tpu.memory_space<semaphore_mem>>
      tpu.wait_dma2 semaphore(%408 : memref<!tpu.dma_semaphore, #tpu.memory_space<semaphore_mem>>) src(%405 : memref<1x3x16x128xf32, #tpu.memory_space<any>>) dst(%406 : memref<1x3x16x128xf32, #tpu.memory_space<vmem>>)
    } else {
    }
    %c1_i32_19 = arith.constant 1 : i32
    %25 = arith.cmpi slt, %arg2, %c1_i32_19 : i32
    %26 = arith.extui %25 : i1 to i32
    %c0_i32_20 = arith.constant 0 : i32
    %27 = arith.cmpi ne, %26, %c0_i32_20 : i32
    scf.if %27 {
      %c8_i32_211 = arith.constant 8 : i32
      %404 = arith.addi %0, %c8_i32_211 : i32
      %c2_i32 = arith.constant 2 : i32
      %c0_i32_212 = arith.constant 0 : i32
      %405 = tpu.memref_slice %arg3[%arg1, %404, %c0_i32_212, %1] : memref<2x16x16x128xf32, #tpu.memory_space<any>> -> memref<1x3x16x128xf32, #tpu.memory_space<any>>
      %c0_i32_213 = arith.constant 0 : i32
      %c11_i32 = arith.constant 11 : i32
      %c8_i32_214 = arith.constant 8 : i32
      %c0_i32_215 = arith.constant 0 : i32
      %406 = tpu.memref_slice %arg9[%c0_i32_213, %c11_i32, %c8_i32_214, %c0_i32_215] : memref<1x14x32x128xf32, #tpu.memory_space<vmem>> -> memref<1x3x16x128xf32, #tpu.memory_space<vmem>>
      %407 = tpu.memref_slice %arg10[%c2_i32] : memref<3x!tpu.dma_semaphore, #tpu.memory_space<semaphore_mem>> -> memref<1x!tpu.dma_semaphore, #tpu.memory_space<semaphore_mem>>
      %408 = tpu.memref_squeeze %407 : memref<1x!tpu.dma_semaphore, #tpu.memory_space<semaphore_mem>> -> memref<!tpu.dma_semaphore, #tpu.memory_space<semaphore_mem>>
      tpu.wait_dma2 semaphore(%408 : memref<!tpu.dma_semaphore, #tpu.memory_space<semaphore_mem>>) src(%405 : memref<1x3x16x128xf32, #tpu.memory_space<any>>) dst(%406 : memref<1x3x16x128xf32, #tpu.memory_space<vmem>>)
    } else {
    }
    %c0_i32_21 = arith.constant 0 : i32
    %c0_i32_22 = arith.constant 0 : i32
    %28 = tpu.memref_slice %arg3[%arg1, %0, %c0_i32_22, %1] : memref<2x16x16x128xf32, #tpu.memory_space<any>> -> memref<1x8x16x128xf32, #tpu.memory_space<any>>
    %c0_i32_23 = arith.constant 0 : i32
    %c3_i32_24 = arith.constant 3 : i32
    %c8_i32_25 = arith.constant 8 : i32
    %c0_i32_26 = arith.constant 0 : i32
    %29 = tpu.memref_slice %arg9[%c0_i32_23, %c3_i32_24, %c8_i32_25, %c0_i32_26] : memref<1x14x32x128xf32, #tpu.memory_space<vmem>> -> memref<1x8x16x128xf32, #tpu.memory_space<vmem>>
    %30 = tpu.memref_slice %arg10[%c0_i32_21] : memref<3x!tpu.dma_semaphore, #tpu.memory_space<semaphore_mem>> -> memref<1x!tpu.dma_semaphore, #tpu.memory_space<semaphore_mem>>
    %31 = tpu.memref_squeeze %30 : memref<1x!tpu.dma_semaphore, #tpu.memory_space<semaphore_mem>> -> memref<!tpu.dma_semaphore, #tpu.memory_space<semaphore_mem>>
    tpu.wait_dma2 semaphore(%31 : memref<!tpu.dma_semaphore, #tpu.memory_space<semaphore_mem>>) src(%28 : memref<1x8x16x128xf32, #tpu.memory_space<any>>) dst(%29 : memref<1x8x16x128xf32, #tpu.memory_space<vmem>>)
    %c0_27 = arith.constant 0 : index
    %c0_28 = arith.constant 0 : index
    %32 = vector.load %arg5[%c0_27, %c0_28] : memref<1x128xf32, #tpu.memory_space<vmem>>, vector<1x128xf32>
    %33 = vector.shape_cast %32 : vector<1x128xf32> to vector<128xf32>
    %cst_29 = arith.constant 0.000000e+00 : f32
    %34 = vector.broadcast %cst_29 : f32 to vector<128xf32>
    %cst_30 = arith.constant 0.000000e+00 : f32
    %35 = vector.broadcast %cst_30 : f32 to vector<128xf32>
    %cst_31 = arith.constant 0.000000e+00 : f32
    %36 = vector.broadcast %cst_31 : f32 to vector<1x8x16x128xf32>
    %37 = vector.shape_cast %33 : vector<128xf32> to vector<1x1x1x128xf32>
    %38 = vector.broadcast %37 : vector<1x1x1x128xf32> to vector<1x8x16x128xf32>
    %39 = arith.addf %36, %38 : vector<1x8x16x128xf32>
    %c0_32 = arith.constant 0 : index
    %c0_33 = arith.constant 0 : index
    %c5_34 = arith.constant 5 : index
    %c0_35 = arith.constant 0 : index
    %40 = vector.load %arg9[%c0_32, %c0_33, %c5_34, %c0_35] : memref<1x14x32x128xf32, #tpu.memory_space<vmem>>, vector<1x14x16x128xf32>
    %41 = vector.extract_strided_slice %40 {offsets = [0, 0, 0, 0], sizes = [1, 8, 16, 128], strides = [1, 1, 1, 1]} : vector<1x14x16x128xf32> to vector<1x8x16x128xf32>
    %c0_36 = arith.constant 0 : index
    %c0_37 = arith.constant 0 : index
    %c0_38 = arith.constant 0 : index
    %42 = vector.load %arg4[%c0_36, %c0_37, %c0_38] : memref<7x7x128xf32, #tpu.memory_space<vmem>>, vector<1x1x128xf32>
    %43 = vector.shape_cast %42 : vector<1x1x128xf32> to vector<128xf32>
    %44 = vector.shape_cast %43 : vector<128xf32> to vector<1x1x1x128xf32>
    %45 = vector.broadcast %44 : vector<1x1x1x128xf32> to vector<1x8x16x128xf32>
    %46 = arith.mulf %41, %45 : vector<1x8x16x128xf32>
    %47 = arith.addf %39, %46 : vector<1x8x16x128xf32>
    %48 = vector.extract_strided_slice %40 {offsets = [0, 1, 0, 0], sizes = [1, 8, 16, 128], strides = [1, 1, 1, 1]} : vector<1x14x16x128xf32> to vector<1x8x16x128xf32>
    %c1 = arith.constant 1 : index
    %c0_39 = arith.constant 0 : index
    %c0_40 = arith.constant 0 : index
    %49 = vector.load %arg4[%c1, %c0_39, %c0_40] : memref<7x7x128xf32, #tpu.memory_space<vmem>>, vector<1x1x128xf32>
    %50 = vector.shape_cast %49 : vector<1x1x128xf32> to vector<128xf32>
    %51 = vector.shape_cast %50 : vector<128xf32> to vector<1x1x1x128xf32>
    %52 = vector.broadcast %51 : vector<1x1x1x128xf32> to vector<1x8x16x128xf32>
    %53 = arith.mulf %48, %52 : vector<1x8x16x128xf32>
    %54 = arith.addf %47, %53 : vector<1x8x16x128xf32>
    %55 = vector.extract_strided_slice %40 {offsets = [0, 2, 0, 0], sizes = [1, 8, 16, 128], strides = [1, 1, 1, 1]} : vector<1x14x16x128xf32> to vector<1x8x16x128xf32>
    %c2 = arith.constant 2 : index
    %c0_41 = arith.constant 0 : index
    %c0_42 = arith.constant 0 : index
    %56 = vector.load %arg4[%c2, %c0_41, %c0_42] : memref<7x7x128xf32, #tpu.memory_space<vmem>>, vector<1x1x128xf32>
    %57 = vector.shape_cast %56 : vector<1x1x128xf32> to vector<128xf32>
    %58 = vector.shape_cast %57 : vector<128xf32> to vector<1x1x1x128xf32>
    %59 = vector.broadcast %58 : vector<1x1x1x128xf32> to vector<1x8x16x128xf32>
    %60 = arith.mulf %55, %59 : vector<1x8x16x128xf32>
    %61 = arith.addf %54, %60 : vector<1x8x16x128xf32>
    %62 = vector.extract_strided_slice %40 {offsets = [0, 3, 0, 0], sizes = [1, 8, 16, 128], strides = [1, 1, 1, 1]} : vector<1x14x16x128xf32> to vector<1x8x16x128xf32>
    %c3 = arith.constant 3 : index
    %c0_43 = arith.constant 0 : index
    %c0_44 = arith.constant 0 : index
    %63 = vector.load %arg4[%c3, %c0_43, %c0_44] : memref<7x7x128xf32, #tpu.memory_space<vmem>>, vector<1x1x128xf32>
    %64 = vector.shape_cast %63 : vector<1x1x128xf32> to vector<128xf32>
    %65 = vector.shape_cast %64 : vector<128xf32> to vector<1x1x1x128xf32>
    %66 = vector.broadcast %65 : vector<1x1x1x128xf32> to vector<1x8x16x128xf32>
    %67 = arith.mulf %62, %66 : vector<1x8x16x128xf32>
    %68 = arith.addf %61, %67 : vector<1x8x16x128xf32>
    %69 = vector.extract_strided_slice %40 {offsets = [0, 4, 0, 0], sizes = [1, 8, 16, 128], strides = [1, 1, 1, 1]} : vector<1x14x16x128xf32> to vector<1x8x16x128xf32>
    %c4 = arith.constant 4 : index
    %c0_45 = arith.constant 0 : index
    %c0_46 = arith.constant 0 : index
    %70 = vector.load %arg4[%c4, %c0_45, %c0_46] : memref<7x7x128xf32, #tpu.memory_space<vmem>>, vector<1x1x128xf32>
    %71 = vector.shape_cast %70 : vector<1x1x128xf32> to vector<128xf32>
    %72 = vector.shape_cast %71 : vector<128xf32> to vector<1x1x1x128xf32>
    %73 = vector.broadcast %72 : vector<1x1x1x128xf32> to vector<1x8x16x128xf32>
    %74 = arith.mulf %69, %73 : vector<1x8x16x128xf32>
    %75 = arith.addf %68, %74 : vector<1x8x16x128xf32>
    %76 = vector.extract_strided_slice %40 {offsets = [0, 5, 0, 0], sizes = [1, 8, 16, 128], strides = [1, 1, 1, 1]} : vector<1x14x16x128xf32> to vector<1x8x16x128xf32>
    %c5_47 = arith.constant 5 : index
    %c0_48 = arith.constant 0 : index
    %c0_49 = arith.constant 0 : index
    %77 = vector.load %arg4[%c5_47, %c0_48, %c0_49] : memref<7x7x128xf32, #tpu.memory_space<vmem>>, vector<1x1x128xf32>
    %78 = vector.shape_cast %77 : vector<1x1x128xf32> to vector<128xf32>
    %79 = vector.shape_cast %78 : vector<128xf32> to vector<1x1x1x128xf32>
    %80 = vector.broadcast %79 : vector<1x1x1x128xf32> to vector<1x8x16x128xf32>
    %81 = arith.mulf %76, %80 : vector<1x8x16x128xf32>
    %82 = arith.addf %75, %81 : vector<1x8x16x128xf32>
    %83 = vector.extract_strided_slice %40 {offsets = [0, 6, 0, 0], sizes = [1, 8, 16, 128], strides = [1, 1, 1, 1]} : vector<1x14x16x128xf32> to vector<1x8x16x128xf32>
    %c6 = arith.constant 6 : index
    %c0_50 = arith.constant 0 : index
    %c0_51 = arith.constant 0 : index
    %84 = vector.load %arg4[%c6, %c0_50, %c0_51] : memref<7x7x128xf32, #tpu.memory_space<vmem>>, vector<1x1x128xf32>
    %85 = vector.shape_cast %84 : vector<1x1x128xf32> to vector<128xf32>
    %86 = vector.shape_cast %85 : vector<128xf32> to vector<1x1x1x128xf32>
    %87 = vector.broadcast %86 : vector<1x1x1x128xf32> to vector<1x8x16x128xf32>
    %88 = arith.mulf %83, %87 : vector<1x8x16x128xf32>
    %89 = arith.addf %82, %88 : vector<1x8x16x128xf32>
    %c0_52 = arith.constant 0 : index
    %c0_53 = arith.constant 0 : index
    %c6_54 = arith.constant 6 : index
    %c0_55 = arith.constant 0 : index
    %90 = vector.load %arg9[%c0_52, %c0_53, %c6_54, %c0_55] : memref<1x14x32x128xf32, #tpu.memory_space<vmem>>, vector<1x14x16x128xf32>
    %91 = vector.extract_strided_slice %90 {offsets = [0, 0, 0, 0], sizes = [1, 8, 16, 128], strides = [1, 1, 1, 1]} : vector<1x14x16x128xf32> to vector<1x8x16x128xf32>
    %c0_56 = arith.constant 0 : index
    %c1_57 = arith.constant 1 : index
    %c0_58 = arith.constant 0 : index
    %92 = vector.load %arg4[%c0_56, %c1_57, %c0_58] : memref<7x7x128xf32, #tpu.memory_space<vmem>>, vector<1x1x128xf32>
    %93 = vector.shape_cast %92 : vector<1x1x128xf32> to vector<128xf32>
    %94 = vector.shape_cast %93 : vector<128xf32> to vector<1x1x1x128xf32>
    %95 = vector.broadcast %94 : vector<1x1x1x128xf32> to vector<1x8x16x128xf32>
    %96 = arith.mulf %91, %95 : vector<1x8x16x128xf32>
    %97 = arith.addf %89, %96 : vector<1x8x16x128xf32>
    %98 = vector.extract_strided_slice %90 {offsets = [0, 1, 0, 0], sizes = [1, 8, 16, 128], strides = [1, 1, 1, 1]} : vector<1x14x16x128xf32> to vector<1x8x16x128xf32>
    %c1_59 = arith.constant 1 : index
    %c1_60 = arith.constant 1 : index
    %c0_61 = arith.constant 0 : index
    %99 = vector.load %arg4[%c1_59, %c1_60, %c0_61] : memref<7x7x128xf32, #tpu.memory_space<vmem>>, vector<1x1x128xf32>
    %100 = vector.shape_cast %99 : vector<1x1x128xf32> to vector<128xf32>
    %101 = vector.shape_cast %100 : vector<128xf32> to vector<1x1x1x128xf32>
    %102 = vector.broadcast %101 : vector<1x1x1x128xf32> to vector<1x8x16x128xf32>
    %103 = arith.mulf %98, %102 : vector<1x8x16x128xf32>
    %104 = arith.addf %97, %103 : vector<1x8x16x128xf32>
    %105 = vector.extract_strided_slice %90 {offsets = [0, 2, 0, 0], sizes = [1, 8, 16, 128], strides = [1, 1, 1, 1]} : vector<1x14x16x128xf32> to vector<1x8x16x128xf32>
    %c2_62 = arith.constant 2 : index
    %c1_63 = arith.constant 1 : index
    %c0_64 = arith.constant 0 : index
    %106 = vector.load %arg4[%c2_62, %c1_63, %c0_64] : memref<7x7x128xf32, #tpu.memory_space<vmem>>, vector<1x1x128xf32>
    %107 = vector.shape_cast %106 : vector<1x1x128xf32> to vector<128xf32>
    %108 = vector.shape_cast %107 : vector<128xf32> to vector<1x1x1x128xf32>
    %109 = vector.broadcast %108 : vector<1x1x1x128xf32> to vector<1x8x16x128xf32>
    %110 = arith.mulf %105, %109 : vector<1x8x16x128xf32>
    %111 = arith.addf %104, %110 : vector<1x8x16x128xf32>
    %112 = vector.extract_strided_slice %90 {offsets = [0, 3, 0, 0], sizes = [1, 8, 16, 128], strides = [1, 1, 1, 1]} : vector<1x14x16x128xf32> to vector<1x8x16x128xf32>
    %c3_65 = arith.constant 3 : index
    %c1_66 = arith.constant 1 : index
    %c0_67 = arith.constant 0 : index
    %113 = vector.load %arg4[%c3_65, %c1_66, %c0_67] : memref<7x7x128xf32, #tpu.memory_space<vmem>>, vector<1x1x128xf32>
    %114 = vector.shape_cast %113 : vector<1x1x128xf32> to vector<128xf32>
    %115 = vector.shape_cast %114 : vector<128xf32> to vector<1x1x1x128xf32>
    %116 = vector.broadcast %115 : vector<1x1x1x128xf32> to vector<1x8x16x128xf32>
    %117 = arith.mulf %112, %116 : vector<1x8x16x128xf32>
    %118 = arith.addf %111, %117 : vector<1x8x16x128xf32>
    %119 = vector.extract_strided_slice %90 {offsets = [0, 4, 0, 0], sizes = [1, 8, 16, 128], strides = [1, 1, 1, 1]} : vector<1x14x16x128xf32> to vector<1x8x16x128xf32>
    %c4_68 = arith.constant 4 : index
    %c1_69 = arith.constant 1 : index
    %c0_70 = arith.constant 0 : index
    %120 = vector.load %arg4[%c4_68, %c1_69, %c0_70] : memref<7x7x128xf32, #tpu.memory_space<vmem>>, vector<1x1x128xf32>
    %121 = vector.shape_cast %120 : vector<1x1x128xf32> to vector<128xf32>
    %122 = vector.shape_cast %121 : vector<128xf32> to vector<1x1x1x128xf32>
    %123 = vector.broadcast %122 : vector<1x1x1x128xf32> to vector<1x8x16x128xf32>
    %124 = arith.mulf %119, %123 : vector<1x8x16x128xf32>
    %125 = arith.addf %118, %124 : vector<1x8x16x128xf32>
    %126 = vector.extract_strided_slice %90 {offsets = [0, 5, 0, 0], sizes = [1, 8, 16, 128], strides = [1, 1, 1, 1]} : vector<1x14x16x128xf32> to vector<1x8x16x128xf32>
    %c5_71 = arith.constant 5 : index
    %c1_72 = arith.constant 1 : index
    %c0_73 = arith.constant 0 : index
    %127 = vector.load %arg4[%c5_71, %c1_72, %c0_73] : memref<7x7x128xf32, #tpu.memory_space<vmem>>, vector<1x1x128xf32>
    %128 = vector.shape_cast %127 : vector<1x1x128xf32> to vector<128xf32>
    %129 = vector.shape_cast %128 : vector<128xf32> to vector<1x1x1x128xf32>
    %130 = vector.broadcast %129 : vector<1x1x1x128xf32> to vector<1x8x16x128xf32>
    %131 = arith.mulf %126, %130 : vector<1x8x16x128xf32>
    %132 = arith.addf %125, %131 : vector<1x8x16x128xf32>
    %133 = vector.extract_strided_slice %90 {offsets = [0, 6, 0, 0], sizes = [1, 8, 16, 128], strides = [1, 1, 1, 1]} : vector<1x14x16x128xf32> to vector<1x8x16x128xf32>
    %c6_74 = arith.constant 6 : index
    %c1_75 = arith.constant 1 : index
    %c0_76 = arith.constant 0 : index
    %134 = vector.load %arg4[%c6_74, %c1_75, %c0_76] : memref<7x7x128xf32, #tpu.memory_space<vmem>>, vector<1x1x128xf32>
    %135 = vector.shape_cast %134 : vector<1x1x128xf32> to vector<128xf32>
    %136 = vector.shape_cast %135 : vector<128xf32> to vector<1x1x1x128xf32>
    %137 = vector.broadcast %136 : vector<1x1x1x128xf32> to vector<1x8x16x128xf32>
    %138 = arith.mulf %133, %137 : vector<1x8x16x128xf32>
    %139 = arith.addf %132, %138 : vector<1x8x16x128xf32>
    %c0_77 = arith.constant 0 : index
    %c0_78 = arith.constant 0 : index
    %c7 = arith.constant 7 : index
    %c0_79 = arith.constant 0 : index
    %140 = vector.load %arg9[%c0_77, %c0_78, %c7, %c0_79] : memref<1x14x32x128xf32, #tpu.memory_space<vmem>>, vector<1x14x16x128xf32>
    %141 = vector.extract_strided_slice %140 {offsets = [0, 0, 0, 0], sizes = [1, 8, 16, 128], strides = [1, 1, 1, 1]} : vector<1x14x16x128xf32> to vector<1x8x16x128xf32>
    %c0_80 = arith.constant 0 : index
    %c2_81 = arith.constant 2 : index
    %c0_82 = arith.constant 0 : index
    %142 = vector.load %arg4[%c0_80, %c2_81, %c0_82] : memref<7x7x128xf32, #tpu.memory_space<vmem>>, vector<1x1x128xf32>
    %143 = vector.shape_cast %142 : vector<1x1x128xf32> to vector<128xf32>
    %144 = vector.shape_cast %143 : vector<128xf32> to vector<1x1x1x128xf32>
    %145 = vector.broadcast %144 : vector<1x1x1x128xf32> to vector<1x8x16x128xf32>
    %146 = arith.mulf %141, %145 : vector<1x8x16x128xf32>
    %147 = arith.addf %139, %146 : vector<1x8x16x128xf32>
    %148 = vector.extract_strided_slice %140 {offsets = [0, 1, 0, 0], sizes = [1, 8, 16, 128], strides = [1, 1, 1, 1]} : vector<1x14x16x128xf32> to vector<1x8x16x128xf32>
    %c1_83 = arith.constant 1 : index
    %c2_84 = arith.constant 2 : index
    %c0_85 = arith.constant 0 : index
    %149 = vector.load %arg4[%c1_83, %c2_84, %c0_85] : memref<7x7x128xf32, #tpu.memory_space<vmem>>, vector<1x1x128xf32>
    %150 = vector.shape_cast %149 : vector<1x1x128xf32> to vector<128xf32>
    %151 = vector.shape_cast %150 : vector<128xf32> to vector<1x1x1x128xf32>
    %152 = vector.broadcast %151 : vector<1x1x1x128xf32> to vector<1x8x16x128xf32>
    %153 = arith.mulf %148, %152 : vector<1x8x16x128xf32>
    %154 = arith.addf %147, %153 : vector<1x8x16x128xf32>
    %155 = vector.extract_strided_slice %140 {offsets = [0, 2, 0, 0], sizes = [1, 8, 16, 128], strides = [1, 1, 1, 1]} : vector<1x14x16x128xf32> to vector<1x8x16x128xf32>
    %c2_86 = arith.constant 2 : index
    %c2_87 = arith.constant 2 : index
    %c0_88 = arith.constant 0 : index
    %156 = vector.load %arg4[%c2_86, %c2_87, %c0_88] : memref<7x7x128xf32, #tpu.memory_space<vmem>>, vector<1x1x128xf32>
    %157 = vector.shape_cast %156 : vector<1x1x128xf32> to vector<128xf32>
    %158 = vector.shape_cast %157 : vector<128xf32> to vector<1x1x1x128xf32>
    %159 = vector.broadcast %158 : vector<1x1x1x128xf32> to vector<1x8x16x128xf32>
    %160 = arith.mulf %155, %159 : vector<1x8x16x128xf32>
    %161 = arith.addf %154, %160 : vector<1x8x16x128xf32>
    %162 = vector.extract_strided_slice %140 {offsets = [0, 3, 0, 0], sizes = [1, 8, 16, 128], strides = [1, 1, 1, 1]} : vector<1x14x16x128xf32> to vector<1x8x16x128xf32>
    %c3_89 = arith.constant 3 : index
    %c2_90 = arith.constant 2 : index
    %c0_91 = arith.constant 0 : index
    %163 = vector.load %arg4[%c3_89, %c2_90, %c0_91] : memref<7x7x128xf32, #tpu.memory_space<vmem>>, vector<1x1x128xf32>
    %164 = vector.shape_cast %163 : vector<1x1x128xf32> to vector<128xf32>
    %165 = vector.shape_cast %164 : vector<128xf32> to vector<1x1x1x128xf32>
    %166 = vector.broadcast %165 : vector<1x1x1x128xf32> to vector<1x8x16x128xf32>
    %167 = arith.mulf %162, %166 : vector<1x8x16x128xf32>
    %168 = arith.addf %161, %167 : vector<1x8x16x128xf32>
    %169 = vector.extract_strided_slice %140 {offsets = [0, 4, 0, 0], sizes = [1, 8, 16, 128], strides = [1, 1, 1, 1]} : vector<1x14x16x128xf32> to vector<1x8x16x128xf32>
    %c4_92 = arith.constant 4 : index
    %c2_93 = arith.constant 2 : index
    %c0_94 = arith.constant 0 : index
    %170 = vector.load %arg4[%c4_92, %c2_93, %c0_94] : memref<7x7x128xf32, #tpu.memory_space<vmem>>, vector<1x1x128xf32>
    %171 = vector.shape_cast %170 : vector<1x1x128xf32> to vector<128xf32>
    %172 = vector.shape_cast %171 : vector<128xf32> to vector<1x1x1x128xf32>
    %173 = vector.broadcast %172 : vector<1x1x1x128xf32> to vector<1x8x16x128xf32>
    %174 = arith.mulf %169, %173 : vector<1x8x16x128xf32>
    %175 = arith.addf %168, %174 : vector<1x8x16x128xf32>
    %176 = vector.extract_strided_slice %140 {offsets = [0, 5, 0, 0], sizes = [1, 8, 16, 128], strides = [1, 1, 1, 1]} : vector<1x14x16x128xf32> to vector<1x8x16x128xf32>
    %c5_95 = arith.constant 5 : index
    %c2_96 = arith.constant 2 : index
    %c0_97 = arith.constant 0 : index
    %177 = vector.load %arg4[%c5_95, %c2_96, %c0_97] : memref<7x7x128xf32, #tpu.memory_space<vmem>>, vector<1x1x128xf32>
    %178 = vector.shape_cast %177 : vector<1x1x128xf32> to vector<128xf32>
    %179 = vector.shape_cast %178 : vector<128xf32> to vector<1x1x1x128xf32>
    %180 = vector.broadcast %179 : vector<1x1x1x128xf32> to vector<1x8x16x128xf32>
    %181 = arith.mulf %176, %180 : vector<1x8x16x128xf32>
    %182 = arith.addf %175, %181 : vector<1x8x16x128xf32>
    %183 = vector.extract_strided_slice %140 {offsets = [0, 6, 0, 0], sizes = [1, 8, 16, 128], strides = [1, 1, 1, 1]} : vector<1x14x16x128xf32> to vector<1x8x16x128xf32>
    %c6_98 = arith.constant 6 : index
    %c2_99 = arith.constant 2 : index
    %c0_100 = arith.constant 0 : index
    %184 = vector.load %arg4[%c6_98, %c2_99, %c0_100] : memref<7x7x128xf32, #tpu.memory_space<vmem>>, vector<1x1x128xf32>
    %185 = vector.shape_cast %184 : vector<1x1x128xf32> to vector<128xf32>
    %186 = vector.shape_cast %185 : vector<128xf32> to vector<1x1x1x128xf32>
    %187 = vector.broadcast %186 : vector<1x1x1x128xf32> to vector<1x8x16x128xf32>
    %188 = arith.mulf %183, %187 : vector<1x8x16x128xf32>
    %189 = arith.addf %182, %188 : vector<1x8x16x128xf32>
    %c0_101 = arith.constant 0 : index
    %c0_102 = arith.constant 0 : index
    %c8 = arith.constant 8 : index
    %c0_103 = arith.constant 0 : index
    %190 = vector.load %arg9[%c0_101, %c0_102, %c8, %c0_103] : memref<1x14x32x128xf32, #tpu.memory_space<vmem>>, vector<1x14x16x128xf32>
    %191 = vector.extract_strided_slice %190 {offsets = [0, 0, 0, 0], sizes = [1, 8, 16, 128], strides = [1, 1, 1, 1]} : vector<1x14x16x128xf32> to vector<1x8x16x128xf32>
    %c0_104 = arith.constant 0 : index
    %c3_105 = arith.constant 3 : index
    %c0_106 = arith.constant 0 : index
    %192 = vector.load %arg4[%c0_104, %c3_105, %c0_106] : memref<7x7x128xf32, #tpu.memory_space<vmem>>, vector<1x1x128xf32>
    %193 = vector.shape_cast %192 : vector<1x1x128xf32> to vector<128xf32>
    %194 = vector.shape_cast %193 : vector<128xf32> to vector<1x1x1x128xf32>
    %195 = vector.broadcast %194 : vector<1x1x1x128xf32> to vector<1x8x16x128xf32>
    %196 = arith.mulf %191, %195 : vector<1x8x16x128xf32>
    %197 = arith.addf %189, %196 : vector<1x8x16x128xf32>
    %198 = vector.extract_strided_slice %190 {offsets = [0, 1, 0, 0], sizes = [1, 8, 16, 128], strides = [1, 1, 1, 1]} : vector<1x14x16x128xf32> to vector<1x8x16x128xf32>
    %c1_107 = arith.constant 1 : index
    %c3_108 = arith.constant 3 : index
    %c0_109 = arith.constant 0 : index
    %199 = vector.load %arg4[%c1_107, %c3_108, %c0_109] : memref<7x7x128xf32, #tpu.memory_space<vmem>>, vector<1x1x128xf32>
    %200 = vector.shape_cast %199 : vector<1x1x128xf32> to vector<128xf32>
    %201 = vector.shape_cast %200 : vector<128xf32> to vector<1x1x1x128xf32>
    %202 = vector.broadcast %201 : vector<1x1x1x128xf32> to vector<1x8x16x128xf32>
    %203 = arith.mulf %198, %202 : vector<1x8x16x128xf32>
    %204 = arith.addf %197, %203 : vector<1x8x16x128xf32>
    %205 = vector.extract_strided_slice %190 {offsets = [0, 2, 0, 0], sizes = [1, 8, 16, 128], strides = [1, 1, 1, 1]} : vector<1x14x16x128xf32> to vector<1x8x16x128xf32>
    %c2_110 = arith.constant 2 : index
    %c3_111 = arith.constant 3 : index
    %c0_112 = arith.constant 0 : index
    %206 = vector.load %arg4[%c2_110, %c3_111, %c0_112] : memref<7x7x128xf32, #tpu.memory_space<vmem>>, vector<1x1x128xf32>
    %207 = vector.shape_cast %206 : vector<1x1x128xf32> to vector<128xf32>
    %208 = vector.shape_cast %207 : vector<128xf32> to vector<1x1x1x128xf32>
    %209 = vector.broadcast %208 : vector<1x1x1x128xf32> to vector<1x8x16x128xf32>
    %210 = arith.mulf %205, %209 : vector<1x8x16x128xf32>
    %211 = arith.addf %204, %210 : vector<1x8x16x128xf32>
    %212 = vector.extract_strided_slice %190 {offsets = [0, 3, 0, 0], sizes = [1, 8, 16, 128], strides = [1, 1, 1, 1]} : vector<1x14x16x128xf32> to vector<1x8x16x128xf32>
    %c3_113 = arith.constant 3 : index
    %c3_114 = arith.constant 3 : index
    %c0_115 = arith.constant 0 : index
    %213 = vector.load %arg4[%c3_113, %c3_114, %c0_115] : memref<7x7x128xf32, #tpu.memory_space<vmem>>, vector<1x1x128xf32>
    %214 = vector.shape_cast %213 : vector<1x1x128xf32> to vector<128xf32>
    %215 = vector.shape_cast %214 : vector<128xf32> to vector<1x1x1x128xf32>
    %216 = vector.broadcast %215 : vector<1x1x1x128xf32> to vector<1x8x16x128xf32>
    %217 = arith.mulf %212, %216 : vector<1x8x16x128xf32>
    %218 = arith.addf %211, %217 : vector<1x8x16x128xf32>
    %219 = vector.extract_strided_slice %190 {offsets = [0, 4, 0, 0], sizes = [1, 8, 16, 128], strides = [1, 1, 1, 1]} : vector<1x14x16x128xf32> to vector<1x8x16x128xf32>
    %c4_116 = arith.constant 4 : index
    %c3_117 = arith.constant 3 : index
    %c0_118 = arith.constant 0 : index
    %220 = vector.load %arg4[%c4_116, %c3_117, %c0_118] : memref<7x7x128xf32, #tpu.memory_space<vmem>>, vector<1x1x128xf32>
    %221 = vector.shape_cast %220 : vector<1x1x128xf32> to vector<128xf32>
    %222 = vector.shape_cast %221 : vector<128xf32> to vector<1x1x1x128xf32>
    %223 = vector.broadcast %222 : vector<1x1x1x128xf32> to vector<1x8x16x128xf32>
    %224 = arith.mulf %219, %223 : vector<1x8x16x128xf32>
    %225 = arith.addf %218, %224 : vector<1x8x16x128xf32>
    %226 = vector.extract_strided_slice %190 {offsets = [0, 5, 0, 0], sizes = [1, 8, 16, 128], strides = [1, 1, 1, 1]} : vector<1x14x16x128xf32> to vector<1x8x16x128xf32>
    %c5_119 = arith.constant 5 : index
    %c3_120 = arith.constant 3 : index
    %c0_121 = arith.constant 0 : index
    %227 = vector.load %arg4[%c5_119, %c3_120, %c0_121] : memref<7x7x128xf32, #tpu.memory_space<vmem>>, vector<1x1x128xf32>
    %228 = vector.shape_cast %227 : vector<1x1x128xf32> to vector<128xf32>
    %229 = vector.shape_cast %228 : vector<128xf32> to vector<1x1x1x128xf32>
    %230 = vector.broadcast %229 : vector<1x1x1x128xf32> to vector<1x8x16x128xf32>
    %231 = arith.mulf %226, %230 : vector<1x8x16x128xf32>
    %232 = arith.addf %225, %231 : vector<1x8x16x128xf32>
    %233 = vector.extract_strided_slice %190 {offsets = [0, 6, 0, 0], sizes = [1, 8, 16, 128], strides = [1, 1, 1, 1]} : vector<1x14x16x128xf32> to vector<1x8x16x128xf32>
    %c6_122 = arith.constant 6 : index
    %c3_123 = arith.constant 3 : index
    %c0_124 = arith.constant 0 : index
    %234 = vector.load %arg4[%c6_122, %c3_123, %c0_124] : memref<7x7x128xf32, #tpu.memory_space<vmem>>, vector<1x1x128xf32>
    %235 = vector.shape_cast %234 : vector<1x1x128xf32> to vector<128xf32>
    %236 = vector.shape_cast %235 : vector<128xf32> to vector<1x1x1x128xf32>
    %237 = vector.broadcast %236 : vector<1x1x1x128xf32> to vector<1x8x16x128xf32>
    %238 = arith.mulf %233, %237 : vector<1x8x16x128xf32>
    %239 = arith.addf %232, %238 : vector<1x8x16x128xf32>
    %c0_125 = arith.constant 0 : index
    %c0_126 = arith.constant 0 : index
    %c9 = arith.constant 9 : index
    %c0_127 = arith.constant 0 : index
    %240 = vector.load %arg9[%c0_125, %c0_126, %c9, %c0_127] : memref<1x14x32x128xf32, #tpu.memory_space<vmem>>, vector<1x14x16x128xf32>
    %241 = vector.extract_strided_slice %240 {offsets = [0, 0, 0, 0], sizes = [1, 8, 16, 128], strides = [1, 1, 1, 1]} : vector<1x14x16x128xf32> to vector<1x8x16x128xf32>
    %c0_128 = arith.constant 0 : index
    %c4_129 = arith.constant 4 : index
    %c0_130 = arith.constant 0 : index
    %242 = vector.load %arg4[%c0_128, %c4_129, %c0_130] : memref<7x7x128xf32, #tpu.memory_space<vmem>>, vector<1x1x128xf32>
    %243 = vector.shape_cast %242 : vector<1x1x128xf32> to vector<128xf32>
    %244 = vector.shape_cast %243 : vector<128xf32> to vector<1x1x1x128xf32>
    %245 = vector.broadcast %244 : vector<1x1x1x128xf32> to vector<1x8x16x128xf32>
    %246 = arith.mulf %241, %245 : vector<1x8x16x128xf32>
    %247 = arith.addf %239, %246 : vector<1x8x16x128xf32>
    %248 = vector.extract_strided_slice %240 {offsets = [0, 1, 0, 0], sizes = [1, 8, 16, 128], strides = [1, 1, 1, 1]} : vector<1x14x16x128xf32> to vector<1x8x16x128xf32>
    %c1_131 = arith.constant 1 : index
    %c4_132 = arith.constant 4 : index
    %c0_133 = arith.constant 0 : index
    %249 = vector.load %arg4[%c1_131, %c4_132, %c0_133] : memref<7x7x128xf32, #tpu.memory_space<vmem>>, vector<1x1x128xf32>
    %250 = vector.shape_cast %249 : vector<1x1x128xf32> to vector<128xf32>
    %251 = vector.shape_cast %250 : vector<128xf32> to vector<1x1x1x128xf32>
    %252 = vector.broadcast %251 : vector<1x1x1x128xf32> to vector<1x8x16x128xf32>
    %253 = arith.mulf %248, %252 : vector<1x8x16x128xf32>
    %254 = arith.addf %247, %253 : vector<1x8x16x128xf32>
    %255 = vector.extract_strided_slice %240 {offsets = [0, 2, 0, 0], sizes = [1, 8, 16, 128], strides = [1, 1, 1, 1]} : vector<1x14x16x128xf32> to vector<1x8x16x128xf32>
    %c2_134 = arith.constant 2 : index
    %c4_135 = arith.constant 4 : index
    %c0_136 = arith.constant 0 : index
    %256 = vector.load %arg4[%c2_134, %c4_135, %c0_136] : memref<7x7x128xf32, #tpu.memory_space<vmem>>, vector<1x1x128xf32>
    %257 = vector.shape_cast %256 : vector<1x1x128xf32> to vector<128xf32>
    %258 = vector.shape_cast %257 : vector<128xf32> to vector<1x1x1x128xf32>
    %259 = vector.broadcast %258 : vector<1x1x1x128xf32> to vector<1x8x16x128xf32>
    %260 = arith.mulf %255, %259 : vector<1x8x16x128xf32>
    %261 = arith.addf %254, %260 : vector<1x8x16x128xf32>
    %262 = vector.extract_strided_slice %240 {offsets = [0, 3, 0, 0], sizes = [1, 8, 16, 128], strides = [1, 1, 1, 1]} : vector<1x14x16x128xf32> to vector<1x8x16x128xf32>
    %c3_137 = arith.constant 3 : index
    %c4_138 = arith.constant 4 : index
    %c0_139 = arith.constant 0 : index
    %263 = vector.load %arg4[%c3_137, %c4_138, %c0_139] : memref<7x7x128xf32, #tpu.memory_space<vmem>>, vector<1x1x128xf32>
    %264 = vector.shape_cast %263 : vector<1x1x128xf32> to vector<128xf32>
    %265 = vector.shape_cast %264 : vector<128xf32> to vector<1x1x1x128xf32>
    %266 = vector.broadcast %265 : vector<1x1x1x128xf32> to vector<1x8x16x128xf32>
    %267 = arith.mulf %262, %266 : vector<1x8x16x128xf32>
    %268 = arith.addf %261, %267 : vector<1x8x16x128xf32>
    %269 = vector.extract_strided_slice %240 {offsets = [0, 4, 0, 0], sizes = [1, 8, 16, 128], strides = [1, 1, 1, 1]} : vector<1x14x16x128xf32> to vector<1x8x16x128xf32>
    %c4_140 = arith.constant 4 : index
    %c4_141 = arith.constant 4 : index
    %c0_142 = arith.constant 0 : index
    %270 = vector.load %arg4[%c4_140, %c4_141, %c0_142] : memref<7x7x128xf32, #tpu.memory_space<vmem>>, vector<1x1x128xf32>
    %271 = vector.shape_cast %270 : vector<1x1x128xf32> to vector<128xf32>
    %272 = vector.shape_cast %271 : vector<128xf32> to vector<1x1x1x128xf32>
    %273 = vector.broadcast %272 : vector<1x1x1x128xf32> to vector<1x8x16x128xf32>
    %274 = arith.mulf %269, %273 : vector<1x8x16x128xf32>
    %275 = arith.addf %268, %274 : vector<1x8x16x128xf32>
    %276 = vector.extract_strided_slice %240 {offsets = [0, 5, 0, 0], sizes = [1, 8, 16, 128], strides = [1, 1, 1, 1]} : vector<1x14x16x128xf32> to vector<1x8x16x128xf32>
    %c5_143 = arith.constant 5 : index
    %c4_144 = arith.constant 4 : index
    %c0_145 = arith.constant 0 : index
    %277 = vector.load %arg4[%c5_143, %c4_144, %c0_145] : memref<7x7x128xf32, #tpu.memory_space<vmem>>, vector<1x1x128xf32>
    %278 = vector.shape_cast %277 : vector<1x1x128xf32> to vector<128xf32>
    %279 = vector.shape_cast %278 : vector<128xf32> to vector<1x1x1x128xf32>
    %280 = vector.broadcast %279 : vector<1x1x1x128xf32> to vector<1x8x16x128xf32>
    %281 = arith.mulf %276, %280 : vector<1x8x16x128xf32>
    %282 = arith.addf %275, %281 : vector<1x8x16x128xf32>
    %283 = vector.extract_strided_slice %240 {offsets = [0, 6, 0, 0], sizes = [1, 8, 16, 128], strides = [1, 1, 1, 1]} : vector<1x14x16x128xf32> to vector<1x8x16x128xf32>
    %c6_146 = arith.constant 6 : index
    %c4_147 = arith.constant 4 : index
    %c0_148 = arith.constant 0 : index
    %284 = vector.load %arg4[%c6_146, %c4_147, %c0_148] : memref<7x7x128xf32, #tpu.memory_space<vmem>>, vector<1x1x128xf32>
    %285 = vector.shape_cast %284 : vector<1x1x128xf32> to vector<128xf32>
    %286 = vector.shape_cast %285 : vector<128xf32> to vector<1x1x1x128xf32>
    %287 = vector.broadcast %286 : vector<1x1x1x128xf32> to vector<1x8x16x128xf32>
    %288 = arith.mulf %283, %287 : vector<1x8x16x128xf32>
    %289 = arith.addf %282, %288 : vector<1x8x16x128xf32>
    %c0_149 = arith.constant 0 : index
    %c0_150 = arith.constant 0 : index
    %c10 = arith.constant 10 : index
    %c0_151 = arith.constant 0 : index
    %290 = vector.load %arg9[%c0_149, %c0_150, %c10, %c0_151] : memref<1x14x32x128xf32, #tpu.memory_space<vmem>>, vector<1x14x16x128xf32>
    %291 = vector.extract_strided_slice %290 {offsets = [0, 0, 0, 0], sizes = [1, 8, 16, 128], strides = [1, 1, 1, 1]} : vector<1x14x16x128xf32> to vector<1x8x16x128xf32>
    %c0_152 = arith.constant 0 : index
    %c5_153 = arith.constant 5 : index
    %c0_154 = arith.constant 0 : index
    %292 = vector.load %arg4[%c0_152, %c5_153, %c0_154] : memref<7x7x128xf32, #tpu.memory_space<vmem>>, vector<1x1x128xf32>
    %293 = vector.shape_cast %292 : vector<1x1x128xf32> to vector<128xf32>
    %294 = vector.shape_cast %293 : vector<128xf32> to vector<1x1x1x128xf32>
    %295 = vector.broadcast %294 : vector<1x1x1x128xf32> to vector<1x8x16x128xf32>
    %296 = arith.mulf %291, %295 : vector<1x8x16x128xf32>
    %297 = arith.addf %289, %296 : vector<1x8x16x128xf32>
    %298 = vector.extract_strided_slice %290 {offsets = [0, 1, 0, 0], sizes = [1, 8, 16, 128], strides = [1, 1, 1, 1]} : vector<1x14x16x128xf32> to vector<1x8x16x128xf32>
    %c1_155 = arith.constant 1 : index
    %c5_156 = arith.constant 5 : index
    %c0_157 = arith.constant 0 : index
    %299 = vector.load %arg4[%c1_155, %c5_156, %c0_157] : memref<7x7x128xf32, #tpu.memory_space<vmem>>, vector<1x1x128xf32>
    %300 = vector.shape_cast %299 : vector<1x1x128xf32> to vector<128xf32>
    %301 = vector.shape_cast %300 : vector<128xf32> to vector<1x1x1x128xf32>
    %302 = vector.broadcast %301 : vector<1x1x1x128xf32> to vector<1x8x16x128xf32>
    %303 = arith.mulf %298, %302 : vector<1x8x16x128xf32>
    %304 = arith.addf %297, %303 : vector<1x8x16x128xf32>
    %305 = vector.extract_strided_slice %290 {offsets = [0, 2, 0, 0], sizes = [1, 8, 16, 128], strides = [1, 1, 1, 1]} : vector<1x14x16x128xf32> to vector<1x8x16x128xf32>
    %c2_158 = arith.constant 2 : index
    %c5_159 = arith.constant 5 : index
    %c0_160 = arith.constant 0 : index
    %306 = vector.load %arg4[%c2_158, %c5_159, %c0_160] : memref<7x7x128xf32, #tpu.memory_space<vmem>>, vector<1x1x128xf32>
    %307 = vector.shape_cast %306 : vector<1x1x128xf32> to vector<128xf32>
    %308 = vector.shape_cast %307 : vector<128xf32> to vector<1x1x1x128xf32>
    %309 = vector.broadcast %308 : vector<1x1x1x128xf32> to vector<1x8x16x128xf32>
    %310 = arith.mulf %305, %309 : vector<1x8x16x128xf32>
    %311 = arith.addf %304, %310 : vector<1x8x16x128xf32>
    %312 = vector.extract_strided_slice %290 {offsets = [0, 3, 0, 0], sizes = [1, 8, 16, 128], strides = [1, 1, 1, 1]} : vector<1x14x16x128xf32> to vector<1x8x16x128xf32>
    %c3_161 = arith.constant 3 : index
    %c5_162 = arith.constant 5 : index
    %c0_163 = arith.constant 0 : index
    %313 = vector.load %arg4[%c3_161, %c5_162, %c0_163] : memref<7x7x128xf32, #tpu.memory_space<vmem>>, vector<1x1x128xf32>
    %314 = vector.shape_cast %313 : vector<1x1x128xf32> to vector<128xf32>
    %315 = vector.shape_cast %314 : vector<128xf32> to vector<1x1x1x128xf32>
    %316 = vector.broadcast %315 : vector<1x1x1x128xf32> to vector<1x8x16x128xf32>
    %317 = arith.mulf %312, %316 : vector<1x8x16x128xf32>
    %318 = arith.addf %311, %317 : vector<1x8x16x128xf32>
    %319 = vector.extract_strided_slice %290 {offsets = [0, 4, 0, 0], sizes = [1, 8, 16, 128], strides = [1, 1, 1, 1]} : vector<1x14x16x128xf32> to vector<1x8x16x128xf32>
    %c4_164 = arith.constant 4 : index
    %c5_165 = arith.constant 5 : index
    %c0_166 = arith.constant 0 : index
    %320 = vector.load %arg4[%c4_164, %c5_165, %c0_166] : memref<7x7x128xf32, #tpu.memory_space<vmem>>, vector<1x1x128xf32>
    %321 = vector.shape_cast %320 : vector<1x1x128xf32> to vector<128xf32>
    %322 = vector.shape_cast %321 : vector<128xf32> to vector<1x1x1x128xf32>
    %323 = vector.broadcast %322 : vector<1x1x1x128xf32> to vector<1x8x16x128xf32>
    %324 = arith.mulf %319, %323 : vector<1x8x16x128xf32>
    %325 = arith.addf %318, %324 : vector<1x8x16x128xf32>
    %326 = vector.extract_strided_slice %290 {offsets = [0, 5, 0, 0], sizes = [1, 8, 16, 128], strides = [1, 1, 1, 1]} : vector<1x14x16x128xf32> to vector<1x8x16x128xf32>
    %c5_167 = arith.constant 5 : index
    %c5_168 = arith.constant 5 : index
    %c0_169 = arith.constant 0 : index
    %327 = vector.load %arg4[%c5_167, %c5_168, %c0_169] : memref<7x7x128xf32, #tpu.memory_space<vmem>>, vector<1x1x128xf32>
    %328 = vector.shape_cast %327 : vector<1x1x128xf32> to vector<128xf32>
    %329 = vector.shape_cast %328 : vector<128xf32> to vector<1x1x1x128xf32>
    %330 = vector.broadcast %329 : vector<1x1x1x128xf32> to vector<1x8x16x128xf32>
    %331 = arith.mulf %326, %330 : vector<1x8x16x128xf32>
    %332 = arith.addf %325, %331 : vector<1x8x16x128xf32>
    %333 = vector.extract_strided_slice %290 {offsets = [0, 6, 0, 0], sizes = [1, 8, 16, 128], strides = [1, 1, 1, 1]} : vector<1x14x16x128xf32> to vector<1x8x16x128xf32>
    %c6_170 = arith.constant 6 : index
    %c5_171 = arith.constant 5 : index
    %c0_172 = arith.constant 0 : index
    %334 = vector.load %arg4[%c6_170, %c5_171, %c0_172] : memref<7x7x128xf32, #tpu.memory_space<vmem>>, vector<1x1x128xf32>
    %335 = vector.shape_cast %334 : vector<1x1x128xf32> to vector<128xf32>
    %336 = vector.shape_cast %335 : vector<128xf32> to vector<1x1x1x128xf32>
    %337 = vector.broadcast %336 : vector<1x1x1x128xf32> to vector<1x8x16x128xf32>
    %338 = arith.mulf %333, %337 : vector<1x8x16x128xf32>
    %339 = arith.addf %332, %338 : vector<1x8x16x128xf32>
    %c0_173 = arith.constant 0 : index
    %c0_174 = arith.constant 0 : index
    %c11 = arith.constant 11 : index
    %c0_175 = arith.constant 0 : index
    %340 = vector.load %arg9[%c0_173, %c0_174, %c11, %c0_175] : memref<1x14x32x128xf32, #tpu.memory_space<vmem>>, vector<1x14x16x128xf32>
    %341 = vector.extract_strided_slice %340 {offsets = [0, 0, 0, 0], sizes = [1, 8, 16, 128], strides = [1, 1, 1, 1]} : vector<1x14x16x128xf32> to vector<1x8x16x128xf32>
    %c0_176 = arith.constant 0 : index
    %c6_177 = arith.constant 6 : index
    %c0_178 = arith.constant 0 : index
    %342 = vector.load %arg4[%c0_176, %c6_177, %c0_178] : memref<7x7x128xf32, #tpu.memory_space<vmem>>, vector<1x1x128xf32>
    %343 = vector.shape_cast %342 : vector<1x1x128xf32> to vector<128xf32>
    %344 = vector.shape_cast %343 : vector<128xf32> to vector<1x1x1x128xf32>
    %345 = vector.broadcast %344 : vector<1x1x1x128xf32> to vector<1x8x16x128xf32>
    %346 = arith.mulf %341, %345 : vector<1x8x16x128xf32>
    %347 = arith.addf %339, %346 : vector<1x8x16x128xf32>
    %348 = vector.extract_strided_slice %340 {offsets = [0, 1, 0, 0], sizes = [1, 8, 16, 128], strides = [1, 1, 1, 1]} : vector<1x14x16x128xf32> to vector<1x8x16x128xf32>
    %c1_179 = arith.constant 1 : index
    %c6_180 = arith.constant 6 : index
    %c0_181 = arith.constant 0 : index
    %349 = vector.load %arg4[%c1_179, %c6_180, %c0_181] : memref<7x7x128xf32, #tpu.memory_space<vmem>>, vector<1x1x128xf32>
    %350 = vector.shape_cast %349 : vector<1x1x128xf32> to vector<128xf32>
    %351 = vector.shape_cast %350 : vector<128xf32> to vector<1x1x1x128xf32>
    %352 = vector.broadcast %351 : vector<1x1x1x128xf32> to vector<1x8x16x128xf32>
    %353 = arith.mulf %348, %352 : vector<1x8x16x128xf32>
    %354 = arith.addf %347, %353 : vector<1x8x16x128xf32>
    %355 = vector.extract_strided_slice %340 {offsets = [0, 2, 0, 0], sizes = [1, 8, 16, 128], strides = [1, 1, 1, 1]} : vector<1x14x16x128xf32> to vector<1x8x16x128xf32>
    %c2_182 = arith.constant 2 : index
    %c6_183 = arith.constant 6 : index
    %c0_184 = arith.constant 0 : index
    %356 = vector.load %arg4[%c2_182, %c6_183, %c0_184] : memref<7x7x128xf32, #tpu.memory_space<vmem>>, vector<1x1x128xf32>
    %357 = vector.shape_cast %356 : vector<1x1x128xf32> to vector<128xf32>
    %358 = vector.shape_cast %357 : vector<128xf32> to vector<1x1x1x128xf32>
    %359 = vector.broadcast %358 : vector<1x1x1x128xf32> to vector<1x8x16x128xf32>
    %360 = arith.mulf %355, %359 : vector<1x8x16x128xf32>
    %361 = arith.addf %354, %360 : vector<1x8x16x128xf32>
    %362 = vector.extract_strided_slice %340 {offsets = [0, 3, 0, 0], sizes = [1, 8, 16, 128], strides = [1, 1, 1, 1]} : vector<1x14x16x128xf32> to vector<1x8x16x128xf32>
    %c3_185 = arith.constant 3 : index
    %c6_186 = arith.constant 6 : index
    %c0_187 = arith.constant 0 : index
    %363 = vector.load %arg4[%c3_185, %c6_186, %c0_187] : memref<7x7x128xf32, #tpu.memory_space<vmem>>, vector<1x1x128xf32>
    %364 = vector.shape_cast %363 : vector<1x1x128xf32> to vector<128xf32>
    %365 = vector.shape_cast %364 : vector<128xf32> to vector<1x1x1x128xf32>
    %366 = vector.broadcast %365 : vector<1x1x1x128xf32> to vector<1x8x16x128xf32>
    %367 = arith.mulf %362, %366 : vector<1x8x16x128xf32>
    %368 = arith.addf %361, %367 : vector<1x8x16x128xf32>
    %369 = vector.extract_strided_slice %340 {offsets = [0, 4, 0, 0], sizes = [1, 8, 16, 128], strides = [1, 1, 1, 1]} : vector<1x14x16x128xf32> to vector<1x8x16x128xf32>
    %c4_188 = arith.constant 4 : index
    %c6_189 = arith.constant 6 : index
    %c0_190 = arith.constant 0 : index
    %370 = vector.load %arg4[%c4_188, %c6_189, %c0_190] : memref<7x7x128xf32, #tpu.memory_space<vmem>>, vector<1x1x128xf32>
    %371 = vector.shape_cast %370 : vector<1x1x128xf32> to vector<128xf32>
    %372 = vector.shape_cast %371 : vector<128xf32> to vector<1x1x1x128xf32>
    %373 = vector.broadcast %372 : vector<1x1x1x128xf32> to vector<1x8x16x128xf32>
    %374 = arith.mulf %369, %373 : vector<1x8x16x128xf32>
    %375 = arith.addf %368, %374 : vector<1x8x16x128xf32>
    %376 = vector.extract_strided_slice %340 {offsets = [0, 5, 0, 0], sizes = [1, 8, 16, 128], strides = [1, 1, 1, 1]} : vector<1x14x16x128xf32> to vector<1x8x16x128xf32>
    %c5_191 = arith.constant 5 : index
    %c6_192 = arith.constant 6 : index
    %c0_193 = arith.constant 0 : index
    %377 = vector.load %arg4[%c5_191, %c6_192, %c0_193] : memref<7x7x128xf32, #tpu.memory_space<vmem>>, vector<1x1x128xf32>
    %378 = vector.shape_cast %377 : vector<1x1x128xf32> to vector<128xf32>
    %379 = vector.shape_cast %378 : vector<128xf32> to vector<1x1x1x128xf32>
    %380 = vector.broadcast %379 : vector<1x1x1x128xf32> to vector<1x8x16x128xf32>
    %381 = arith.mulf %376, %380 : vector<1x8x16x128xf32>
    %382 = arith.addf %375, %381 : vector<1x8x16x128xf32>
    %383 = vector.extract_strided_slice %340 {offsets = [0, 6, 0, 0], sizes = [1, 8, 16, 128], strides = [1, 1, 1, 1]} : vector<1x14x16x128xf32> to vector<1x8x16x128xf32>
    %c6_194 = arith.constant 6 : index
    %c6_195 = arith.constant 6 : index
    %c0_196 = arith.constant 0 : index
    %384 = vector.load %arg4[%c6_194, %c6_195, %c0_196] : memref<7x7x128xf32, #tpu.memory_space<vmem>>, vector<1x1x128xf32>
    %385 = vector.shape_cast %384 : vector<1x1x128xf32> to vector<128xf32>
    %386 = vector.shape_cast %385 : vector<128xf32> to vector<1x1x1x128xf32>
    %387 = vector.broadcast %386 : vector<1x1x1x128xf32> to vector<1x8x16x128xf32>
    %388 = arith.mulf %383, %387 : vector<1x8x16x128xf32>
    %389 = arith.addf %382, %388 : vector<1x8x16x128xf32>
    %390 = arith.truncf %389 : vector<1x8x16x128xf32> to vector<1x8x16x128xbf16>
    %c0_197 = arith.constant 0 : index
    %c0_198 = arith.constant 0 : index
    %c0_199 = arith.constant 0 : index
    %c0_200 = arith.constant 0 : index
    %391 = vector.load %arg6[%c0_197, %c0_198, %c0_199, %c0_200] : memref<1x8x16x128xbf16, #tpu.memory_space<vmem>>, vector<1x8x16x128xbf16>
    tpu.vector_store %arg6[%c0_197, %c0_198, %c0_199, %c0_200], %390 {strides = array<i32>} : memref<1x8x16x128xbf16, #tpu.memory_space<vmem>>, vector<1x8x16x128xbf16>,
    %cst_201 = arith.constant dense<0.000000e+00> : vector<128xf32>
    %392 = vector.multi_reduction <add>, %389, %cst_201 [0, 1, 2] : vector<1x8x16x128xf32> to vector<128xf32>
    %393 = arith.addf %34, %392 : vector<128xf32>
    %394 = vector.shape_cast %33 : vector<128xf32> to vector<1x1x1x128xf32>
    %395 = vector.broadcast %394 : vector<1x1x1x128xf32> to vector<1x8x16x128xf32>
    %396 = arith.subf %389, %395 : vector<1x8x16x128xf32>
    %397 = arith.mulf %396, %396 : vector<1x8x16x128xf32>
    %cst_202 = arith.constant dense<0.000000e+00> : vector<128xf32>
    %398 = vector.multi_reduction <add>, %397, %cst_202 [0, 1, 2] : vector<1x8x16x128xf32> to vector<128xf32>
    %399 = arith.addf %35, %398 : vector<128xf32>
    %400 = vector.shape_cast %393 : vector<128xf32> to vector<1x1x1x128xf32>
    %c0_203 = arith.constant 0 : index
    %c0_204 = arith.constant 0 : index
    %c0_205 = arith.constant 0 : index
    %c0_206 = arith.constant 0 : index
    %401 = vector.load %arg7[%c0_203, %c0_204, %c0_205, %c0_206] : memref<1x1x1x128xf32, #tpu.memory_space<vmem>>, vector<1x1x1x128xf32>
    tpu.vector_store %arg7[%c0_203, %c0_204, %c0_205, %c0_206], %400 {strides = array<i32>} : memref<1x1x1x128xf32, #tpu.memory_space<vmem>>, vector<1x1x1x128xf32>,
    %402 = vector.shape_cast %399 : vector<128xf32> to vector<1x1x1x128xf32>
    %c0_207 = arith.constant 0 : index
    %c0_208 = arith.constant 0 : index
    %c0_209 = arith.constant 0 : index
    %c0_210 = arith.constant 0 : index
    %403 = vector.load %arg8[%c0_207, %c0_208, %c0_209, %c0_210] : memref<1x1x1x128xf32, #tpu.memory_space<vmem>>, vector<1x1x1x128xf32>
    tpu.vector_store %arg8[%c0_207, %c0_208, %c0_209, %c0_210], %402 {strides = array<i32>} : memref<1x1x1x128xf32, #tpu.memory_space<vmem>>, vector<1x1x1x128xf32>,
    return
  }
  func.func @transform_1(%arg0: i32, %arg1: i32, %arg2: i32) -> (i32, i32, i32) {
    %c0_i32 = arith.constant 0 : i32
    %c0_i32_0 = arith.constant 0 : i32
    %c0_i32_1 = arith.constant 0 : i32
    return %c0_i32, %c0_i32_0, %arg0 : i32, i32, i32
  }
  func.func @transform_2(%arg0: i32, %arg1: i32, %arg2: i32) -> (i32, i32) {
    %c0_i32 = arith.constant 0 : i32
    %c0_i32_0 = arith.constant 0 : i32
    return %c0_i32, %arg0 : i32, i32
  }
  func.func @transform_3(%arg0: i32, %arg1: i32, %arg2: i32) -> (i32, i32, i32, i32) {
    %c0_i32 = arith.constant 0 : i32
    %c0_i32_0 = arith.constant 0 : i32
    return %arg1, %arg2, %c0_i32, %arg0 : i32, i32, i32, i32
  }
  func.func @transform_4(%arg0: i32, %arg1: i32, %arg2: i32) -> (i32, i32, i32, i32) {
    %c0_i32 = arith.constant 0 : i32
    %c0_i32_0 = arith.constant 0 : i32
    return %arg1, %arg2, %c0_i32, %arg0 : i32, i32, i32, i32
  }
  func.func @transform_5(%arg0: i32, %arg1: i32, %arg2: i32) -> (i32, i32, i32, i32) {
    %c0_i32 = arith.constant 0 : i32
    %c0_i32_0 = arith.constant 0 : i32
    return %arg1, %arg2, %c0_i32, %arg0 : i32, i32, i32, i32
  }
}

module attributes {stable_mosaic.version = 11 : i64} {
  func.func @_bn_mlp_kernel(%arg0: i32, %arg1: memref<256x128xbf16, #tpu.memory_space<vmem>>, %arg2: memref<256x128xf32, #tpu.memory_space<vmem>>, %arg3: memref<1x128xf32, #tpu.memory_space<vmem>>, %arg4: memref<1x128xf32, #tpu.memory_space<vmem>>, %arg5: memref<128x512xbf16, #tpu.memory_space<vmem>>, %arg6: memref<1x512xf32, #tpu.memory_space<vmem>>, %arg7: memref<512x128xbf16, #tpu.memory_space<vmem>>, %arg8: memref<1x128xf32, #tpu.memory_space<vmem>>, %arg9: memref<256x128xf32, #tpu.memory_space<vmem>>) attributes {dimension_semantics = [#tpu.dimension_semantics<parallel>], iteration_bounds = array<i64: 2>, scalar_prefetch = 0 : i64, scratch_operands = 0 : i64, tpu.core_type = #tpu.core_type<tc>, window_params = [{transform_indices = @transform_0, window_bounds = array<i64: 256, 128>}, {transform_indices = @transform_1, window_bounds = array<i64: 256, 128>}, {pipeline_mode = #tpu.pipeline_mode<synchronous>, transform_indices = @transform_2, window_bounds = array<i64: 1, 128>}, {pipeline_mode = #tpu.pipeline_mode<synchronous>, transform_indices = @transform_3, window_bounds = array<i64: 1, 128>}, {pipeline_mode = #tpu.pipeline_mode<synchronous>, transform_indices = @transform_4, window_bounds = array<i64: 128, 512>}, {pipeline_mode = #tpu.pipeline_mode<synchronous>, transform_indices = @transform_5, window_bounds = array<i64: 1, 512>}, {pipeline_mode = #tpu.pipeline_mode<synchronous>, transform_indices = @transform_6, window_bounds = array<i64: 512, 128>}, {pipeline_mode = #tpu.pipeline_mode<synchronous>, transform_indices = @transform_7, window_bounds = array<i64: 1, 128>}, {transform_indices = @transform_8, window_bounds = array<i64: 256, 128>}]} {
    %c0 = arith.constant 0 : index
    %c0_0 = arith.constant 0 : index
    %0 = vector.load %arg1[%c0, %c0_0] : memref<256x128xbf16, #tpu.memory_space<vmem>>, vector<256x128xbf16>
    %1 = arith.extf %0 : vector<256x128xbf16> to vector<256x128xf32>
    %c0_1 = arith.constant 0 : index
    %c0_2 = arith.constant 0 : index
    %2 = vector.load %arg3[%c0_1, %c0_2] : memref<1x128xf32, #tpu.memory_space<vmem>>, vector<1x128xf32>
    %3 = vector.broadcast %2 : vector<1x128xf32> to vector<256x128xf32>
    %4 = arith.mulf %1, %3 : vector<256x128xf32>
    %c0_3 = arith.constant 0 : index
    %c0_4 = arith.constant 0 : index
    %5 = vector.load %arg4[%c0_3, %c0_4] : memref<1x128xf32, #tpu.memory_space<vmem>>, vector<1x128xf32>
    %6 = vector.broadcast %5 : vector<1x128xf32> to vector<256x128xf32>
    %7 = arith.addf %4, %6 : vector<256x128xf32>
    %8 = arith.truncf %7 : vector<256x128xf32> to vector<256x128xbf16>
    %c0_5 = arith.constant 0 : index
    %c0_6 = arith.constant 0 : index
    %9 = vector.load %arg5[%c0_5, %c0_6] : memref<128x512xbf16, #tpu.memory_space<vmem>>, vector<128x512xbf16>
    %cst = arith.constant dense<0.000000e+00> : vector<256x512xf32>
    %10 = tpu.matmul %8, %9, %cst {dimension_numbers = #tpu.dot_dimension_numbers<[1], [0], [0], [1], [0, 0, 1, 1], [], []>} : vector<256x128xbf16>, vector<128x512xbf16>, vector<256x512xf32> -> vector<256x512xf32>
    %c0_7 = arith.constant 0 : index
    %c0_8 = arith.constant 0 : index
    %11 = vector.load %arg6[%c0_7, %c0_8] : memref<1x512xf32, #tpu.memory_space<vmem>>, vector<1x512xf32>
    %12 = vector.broadcast %11 : vector<1x512xf32> to vector<256x512xf32>
    %13 = arith.addf %10, %12 : vector<256x512xf32>
    %cst_9 = arith.constant 5.000000e-01 : f32
    %14 = vector.broadcast %cst_9 : f32 to vector<256x512xf32>
    %15 = arith.mulf %14, %13 : vector<256x512xf32>
    %cst_10 = arith.constant 4.471500e-02 : f32
    %16 = vector.broadcast %cst_10 : f32 to vector<256x512xf32>
    %17 = arith.mulf %16, %13 : vector<256x512xf32>
    %18 = arith.mulf %17, %13 : vector<256x512xf32>
    %19 = arith.mulf %18, %13 : vector<256x512xf32>
    %20 = arith.addf %13, %19 : vector<256x512xf32>
    %cst_11 = arith.constant 0.797884583 : f32
    %21 = vector.broadcast %cst_11 : f32 to vector<256x512xf32>
    %22 = arith.mulf %21, %20 : vector<256x512xf32>
    %23 = math.tanh %22 : vector<256x512xf32>
    %cst_12 = arith.constant 1.000000e+00 : f32
    %24 = vector.broadcast %cst_12 : f32 to vector<256x512xf32>
    %25 = arith.addf %24, %23 : vector<256x512xf32>
    %26 = arith.mulf %15, %25 : vector<256x512xf32>
    %27 = arith.truncf %26 : vector<256x512xf32> to vector<256x512xbf16>
    %c0_13 = arith.constant 0 : index
    %c0_14 = arith.constant 0 : index
    %28 = vector.load %arg7[%c0_13, %c0_14] : memref<512x128xbf16, #tpu.memory_space<vmem>>, vector<512x128xbf16>
    %cst_15 = arith.constant dense<0.000000e+00> : vector<256x128xf32>
    %29 = tpu.matmul %27, %28, %cst_15 {dimension_numbers = #tpu.dot_dimension_numbers<[1], [0], [0], [1], [0, 0, 1, 1], [], []>} : vector<256x512xbf16>, vector<512x128xbf16>, vector<256x128xf32> -> vector<256x128xf32>
    %c0_16 = arith.constant 0 : index
    %c0_17 = arith.constant 0 : index
    %30 = vector.load %arg8[%c0_16, %c0_17] : memref<1x128xf32, #tpu.memory_space<vmem>>, vector<1x128xf32>
    %31 = vector.broadcast %30 : vector<1x128xf32> to vector<256x128xf32>
    %32 = arith.addf %29, %31 : vector<256x128xf32>
    %c0_18 = arith.constant 0 : index
    %c0_19 = arith.constant 0 : index
    %33 = vector.load %arg2[%c0_18, %c0_19] : memref<256x128xf32, #tpu.memory_space<vmem>>, vector<256x128xf32>
    %34 = arith.addf %32, %33 : vector<256x128xf32>
    %c0_20 = arith.constant 0 : index
    %c0_21 = arith.constant 0 : index
    %35 = vector.load %arg9[%c0_20, %c0_21] : memref<256x128xf32, #tpu.memory_space<vmem>>, vector<256x128xf32>
    tpu.vector_store %arg9[%c0_20, %c0_21], %34 {strides = array<i32>} : memref<256x128xf32, #tpu.memory_space<vmem>>, vector<256x128xf32>,
    return
  }
  func.func @transform_0(%arg0: i32) -> (i32, i32) {
    %c0_i32 = arith.constant 0 : i32
    %c0_i32_0 = arith.constant 0 : i32
    return %arg0, %c0_i32 : i32, i32
  }
  func.func @transform_1(%arg0: i32) -> (i32, i32) {
    %c0_i32 = arith.constant 0 : i32
    %c0_i32_0 = arith.constant 0 : i32
    return %arg0, %c0_i32 : i32, i32
  }
  func.func @transform_2(%arg0: i32) -> (i32, i32) {
    %c0_i32 = arith.constant 0 : i32
    %c0_i32_0 = arith.constant 0 : i32
    %c0_i32_1 = arith.constant 0 : i32
    return %c0_i32, %c0_i32_0 : i32, i32
  }
  func.func @transform_3(%arg0: i32) -> (i32, i32) {
    %c0_i32 = arith.constant 0 : i32
    %c0_i32_0 = arith.constant 0 : i32
    %c0_i32_1 = arith.constant 0 : i32
    return %c0_i32, %c0_i32_0 : i32, i32
  }
  func.func @transform_4(%arg0: i32) -> (i32, i32) {
    %c0_i32 = arith.constant 0 : i32
    %c0_i32_0 = arith.constant 0 : i32
    %c0_i32_1 = arith.constant 0 : i32
    return %c0_i32, %c0_i32_0 : i32, i32
  }
  func.func @transform_5(%arg0: i32) -> (i32, i32) {
    %c0_i32 = arith.constant 0 : i32
    %c0_i32_0 = arith.constant 0 : i32
    %c0_i32_1 = arith.constant 0 : i32
    return %c0_i32, %c0_i32_0 : i32, i32
  }
  func.func @transform_6(%arg0: i32) -> (i32, i32) {
    %c0_i32 = arith.constant 0 : i32
    %c0_i32_0 = arith.constant 0 : i32
    %c0_i32_1 = arith.constant 0 : i32
    return %c0_i32, %c0_i32_0 : i32, i32
  }
  func.func @transform_7(%arg0: i32) -> (i32, i32) {
    %c0_i32 = arith.constant 0 : i32
    %c0_i32_0 = arith.constant 0 : i32
    %c0_i32_1 = arith.constant 0 : i32
    return %c0_i32, %c0_i32_0 : i32, i32
  }
  func.func @transform_8(%arg0: i32) -> (i32, i32) {
    %c0_i32 = arith.constant 0 : i32
    %c0_i32_0 = arith.constant 0 : i32
    return %arg0, %c0_i32 : i32, i32
  }
}

</mosaic_0001>

<llo_original>
// kernel: conv_block_forward.3
$region0: #{conv_block_forward.3}
  #allocation0 [shape = 'u32[]', space=smem, size = 0x4, offset = 0x4, fixed_abs, tag = 'smem constant byte address 0x4 - core index']
  #allocation1 [shape = 'u32[72,128]{1,0:T(1,128)}', space=vmem, size = 0x9000, scoped, tag = 'internal scratch']
  %s0 = inlined_call_operand.vmem [shape: bf16[512,128], index: 0, kind: input, shape index: {}]
  %s1 = inlined_call_operand.vmem [shape: f32[512,128], index: 1, kind: input, shape index: {}]
  %s2 = inlined_call_operand.vmem [shape: f32[1,128], index: 2, kind: input, shape index: {}]
  %s3 = inlined_call_operand.vmem [shape: f32[1,128], index: 3, kind: input, shape index: {}]
  %s4 = inlined_call_operand.vmem [shape: bf16[128,512], index: 4, kind: input, shape index: {}]
  %s5 = inlined_call_operand.vmem [shape: f32[1,512], index: 5, kind: input, shape index: {}]
  %s6 = inlined_call_operand.vmem [shape: bf16[512,128], index: 6, kind: input, shape index: {}]
  %s7 = inlined_call_operand.vmem [shape: f32[1,128], index: 7, kind: input, shape index: {}]
  %s8 = inlined_call_operand.hbm [shape: f32[512,128], index: 8, kind: output, shape index: {}]
  %s9 = sld [smem:[#allocation0]]
  $region65: #{conv_block_forward.3} parent=0
    _
  %s11 = ssub.s32 1, %s9
  %s12 = scalar_select 0, %s11, %s9
  $region1: #{conv_block_forward.3} parent=0
    #allocation2 [shape = 'u8[262144]{0}', space=vmem, size = 0x40000, scoped, tag = 'output window, operand 0']
    #allocation3 [shape = 's32[2]{0}', space=sflag, size = 0x8, scoped, tag = 'scoped memory for conv_block_forward.3']
    %13 = vsyncpa [#allocation3], 0
    %s14 = scalar_lea.sflag [#allocation3], 1
    %15 = vsyncpa %s14, 0
    loop: start=0, step=1, limit=4
    $region2: #{conv_block_forward.3} parent=1 // loop_pre_header
      _
    $region3: #{conv_block_forward.3} parent=1 // loop_header
      %s17 = sphi 0, %s21
      %p18 = scmp.ge.s32.totalorder %s17, 4
      %s27 = sphi 0, %s29
      %s30 = sphi 0, %s27
      %s31 = sphi 0, %s30
      %s47 = sphi 0, %s31
      %s53 = sphi 0, %s55
      %s56 = sphi 0, %s53
      %s57 = sphi 0, %s56
      %s73 = sphi 0, %s57
      %s77 = sphi 0, %s77
      %s79 = sphi 0, %s77
      %s80 = sphi 0, %s79
      %s94 = sphi 0, %s80
      %s98 = sphi 0, %s98
      %s100 = sphi 0, %s98
      %s101 = sphi 0, %s100
      %s115 = sphi 0, %s101
      %s119 = sphi 0, %s119
      %s121 = sphi 0, %s119
      %s122 = sphi 0, %s121
      %s136 = sphi 0, %s122
      %s140 = sphi 0, %s140
      %s142 = sphi 0, %s140
      %s143 = sphi 0, %s142
      %s157 = sphi 0, %s143
      %s161 = sphi 0, %s161
      %s163 = sphi 0, %s161
      %s164 = sphi 0, %s163
      %s178 = sphi 0, %s164
      %s182 = sphi 0, %s182
      %s184 = sphi 0, %s182
      %s185 = sphi 0, %s184
      %s199 = sphi 0, %s185
      %s205 = sphi 0, %s207
      %s208 = sphi 0, %s205
      %s209 = sphi 0, %s208
      %s225 = sphi 0, %s209
    $region4: #{conv_block_forward.3} parent=1 // loop_header_branch
      %20 = sbr.rel (%p18) target = $region8
    $region5: #{conv_block_forward.3} parent=1 // loop_body
      %s22 = ssub.s32 %s17, 1
      %s23 = ssub.s32 %s17, 2
      %s24 = sadd.s32 %s17, 1
      %s25 = ssub.s32 %s17, %s24
      %p26 = scmp.eq.s32.totalorder %s25, 0
      %s28 = sadd.s32 %s27, 1
      %s29 = scalar_select %p26, %s27, %s28
      %p32 = pneg %p26
      %p33 = scmp.eq.s32.totalorder %s17, 1
      %p34 = por %p32, %p33
      %p35 = scmp.ne.s32.totalorder %s27, %s30
      %p36 = scmp.eq.s32.totalorder %s17, 0
      %p37 = por %p35, %p36
      %p38 = scmp.ne.s32.totalorder %s27, %s30
      %p39 = scmp.eq.s32.totalorder %s22, 1
      %p40 = por %p38, %p39
      %p41 = scmp.ne.s32.totalorder %s30, %s31
      %p42 = scmp.eq.s32.totalorder %s22, 0
      %p43 = por %p41, %p42
      %p44 = scmp.ne.s32.totalorder %s30, %s31
      %p45 = scmp.eq.s32.totalorder %s23, 1
      %p46 = por %p44, %p45
      %p48 = scmp.ne.s32.totalorder %s31, %s47
      %p49 = scmp.eq.s32.totalorder %s23, 0
      %p50 = por %p48, %p49
      %s51 = ssub.s32 %s17, %s24
      %p52 = scmp.eq.s32.totalorder %s51, 0
      %s54 = sadd.s32 %s53, 1
      %s55 = scalar_select %p52, %s53, %s54
      %p58 = pneg %p52
      %p59 = scmp.eq.s32.totalorder %s17, 1
      %p60 = por %p58, %p59
      %p61 = scmp.ne.s32.totalorder %s53, %s56
      %p62 = scmp.eq.s32.totalorder %s17, 0
      %p63 = por %p61, %p62
      %p64 = scmp.ne.s32.totalorder %s53, %s56
      %p65 = scmp.eq.s32.totalorder %s22, 1
      %p66 = por %p64, %p65
      %p67 = scmp.ne.s32.totalorder %s56, %s57
      %p68 = scmp.eq.s32.totalorder %s22, 0
      %p69 = por %p67, %p68
      %p70 = scmp.ne.s32.totalorder %s56, %s57
      %p71 = scmp.eq.s32.totalorder %s23, 1
      %p72 = por %p70, %p71
      %p74 = scmp.ne.s32.totalorder %s57, %s73
      %p75 = scmp.eq.s32.totalorder %s23, 0
      %p76 = por %p74, %p75
      %s78 = sadd.s32 %s77, 1
      %p81 = scmp.eq.s32.totalorder %s17, 1
      %p82 = scmp.ne.s32.totalorder %s77, %s79
      %p83 = scmp.eq.s32.totalorder %s17, 0
      %p84 = por %p82, %p83
      %p85 = scmp.ne.s32.totalorder %s77, %s79
      %p86 = scmp.eq.s32.totalorder %s22, 1
      %p87 = por %p85, %p86
      %p88 = scmp.ne.s32.totalorder %s79, %s80
      %p89 = scmp.eq.s32.totalorder %s22, 0
      %p90 = por %p88, %p89
      %p91 = scmp.ne.s32.totalorder %s79, %s80
      %p92 = scmp.eq.s32.totalorder %s23, 1
      %p93 = por %p91, %p92
      %p95 = scmp.ne.s32.totalorder %s80, %s94
      %p96 = scmp.eq.s32.totalorder %s23, 0
      %p97 = por %p95, %p96
      %s99 = sadd.s32 %s98, 1
      %p102 = scmp.eq.s32.totalorder %s17, 1
      %p103 = scmp.ne.s32.totalorder %s98, %s100
      %p104 = scmp.eq.s32.totalorder %s17, 0
      %p105 = por %p103, %p104
      %p106 = scmp.ne.s32.totalorder %s98, %s100
      %p107 = scmp.eq.s32.totalorder %s22, 1
      %p108 = por %p106, %p107
      %p109 = scmp.ne.s32.totalorder %s100, %s101
      %p110 = scmp.eq.s32.totalorder %s22, 0
      %p111 = por %p109, %p110
      %p112 = scmp.ne.s32.totalorder %s100, %s101
      %p113 = scmp.eq.s32.totalorder %s23, 1
      %p114 = por %p112, %p113
      %p116 = scmp.ne.s32.totalorder %s101, %s115
      %p117 = scmp.eq.s32.totalorder %s23, 0
      %p118 = por %p116, %p117
      %s120 = sadd.s32 %s119, 1
      %p123 = scmp.eq.s32.totalorder %s17, 1
      %p124 = scmp.ne.s32.totalorder %s119, %s121
      %p125 = scmp.eq.s32.totalorder %s17, 0
      %p126 = por %p124, %p125
      %p127 = scmp.ne.s32.totalorder %s119, %s121
      %p128 = scmp.eq.s32.totalorder %s22, 1
      %p129 = por %p127, %p128
      %p130 = scmp.ne.s32.totalorder %s121, %s122
      %p131 = scmp.eq.s32.totalorder %s22, 0
      %p132 = por %p130, %p131
      %p133 = scmp.ne.s32.totalorder %s121, %s122
      %p134 = scmp.eq.s32.totalorder %s23, 1
      %p135 = por %p133, %p134
      %p137 = scmp.ne.s32.totalorder %s122, %s136
      %p138 = scmp.eq.s32.totalorder %s23, 0
      %p139 = por %p137, %p138
      %s141 = sadd.s32 %s140, 1
      %p144 = scmp.eq.s32.totalorder %s17, 1
      %p145 = scmp.ne.s32.totalorder %s140, %s142
      %p146 = scmp.eq.s32.totalorder %s17, 0
      %p147 = por %p145, %p146
      %p148 = scmp.ne.s32.totalorder %s140, %s142
      %p149 = scmp.eq.s32.totalorder %s22, 1
      %p150 = por %p148, %p149
      %p151 = scmp.ne.s32.totalorder %s142, %s143
      %p152 = scmp.eq.s32.totalorder %s22, 0
      %p153 = por %p151, %p152
      %p154 = scmp.ne.s32.totalorder %s142, %s143
      %p155 = scmp.eq.s32.totalorder %s23, 1
      %p156 = por %p154, %p155
      %p158 = scmp.ne.s32.totalorder %s143, %s157
      %p159 = scmp.eq.s32.totalorder %s23, 0
      %p160 = por %p158, %p159
      %s162 = sadd.s32 %s161, 1
      %p165 = scmp.eq.s32.totalorder %s17, 1
      %p166 = scmp.ne.s32.totalorder %s161, %s163
      %p167 = scmp.eq.s32.totalorder %s17, 0
      %p168 = por %p166, %p167
      %p169 = scmp.ne.s32.totalorder %s161, %s163
      %p170 = scmp.eq.s32.totalorder %s22, 1
      %p171 = por %p169, %p170
      %p172 = scmp.ne.s32.totalorder %s163, %s164
      %p173 = scmp.eq.s32.totalorder %s22, 0
      %p174 = por %p172, %p173
      %p175 = scmp.ne.s32.totalorder %s163, %s164
      %p176 = scmp.eq.s32.totalorder %s23, 1
      %p177 = por %p175, %p176
      %p179 = scmp.ne.s32.totalorder %s164, %s178
      %p180 = scmp.eq.s32.totalorder %s23, 0
      %p181 = por %p179, %p180
      %s183 = sadd.s32 %s182, 1
      %p186 = scmp.eq.s32.totalorder %s17, 1
      %p187 = scmp.ne.s32.totalorder %s182, %s184
      %p188 = scmp.eq.s32.totalorder %s17, 0
      %p189 = por %p187, %p188
      %p190 = scmp.ne.s32.totalorder %s182, %s184
      %p191 = scmp.eq.s32.totalorder %s22, 1
      %p192 = por %p190, %p191
      %p193 = scmp.ne.s32.totalorder %s184, %s185
      %p194 = scmp.eq.s32.totalorder %s22, 0
      %p195 = por %p193, %p194
      %p196 = scmp.ne.s32.totalorder %s184, %s185
      %p197 = scmp.eq.s32.totalorder %s23, 1
      %p198 = por %p196, %p197
      %p200 = scmp.ne.s32.totalorder %s185, %s199
      %p201 = scmp.eq.s32.totalorder %s23, 0
      %p202 = por %p200, %p201
      %s203 = ssub.s32 %s17, %s24
      %p204 = scmp.eq.s32.totalorder %s203, 0
      %s206 = sadd.s32 %s205, 1
      %s207 = scalar_select %p204, %s205, %s206
      %p210 = pneg %p204
      %p211 = scmp.eq.s32.totalorder %s17, 1
      %p212 = por %p210, %p211
      %p213 = scmp.ne.s32.totalorder %s205, %s208
      %p214 = scmp.eq.s32.totalorder %s17, 0
      %p215 = por %p213, %p214
      %p216 = scmp.ne.s32.totalorder %s205, %s208
      %p217 = scmp.eq.s32.totalorder %s22, 1
      %p218 = por %p216, %p217
      %p219 = scmp.ne.s32.totalorder %s208, %s209
      %p220 = scmp.eq.s32.totalorder %s22, 0
      %p221 = por %p219, %p220
      %p222 = scmp.ne.s32.totalorder %s208, %s209
      %p223 = scmp.eq.s32.totalorder %s23, 1
      %p224 = por %p222, %p223
      %p226 = scmp.ne.s32.totalorder %s209, %s225
      %p227 = scmp.eq.s32.totalorder %s23, 0
      %p228 = por %p226, %p227
      %p229 = scmp.le.s32.totalorder 1, %s17
      %p230 = scmp.lt.s32.totalorder %s17, 3
      %p231 = pnand %p229, %p230
      %p232 = pneg %p231
      // Predicated region
      $region9: #{conv_block_forward.3} parent=5 // pred_check
        _
      $region10: #{conv_block_forward.3} parent=5 // pred_check_branch
        %234 = sbr.rel (%p231) target = $region12
      $region11: #{conv_block_forward.3} parent=5 // pred_region
        %s235 = ssub.s32 %s17, 1
        // Predicated region
        $region13: #{conv_block_forward.3} parent=11 // pred_check
          %p236 = pneg %p90
        $region14: #{conv_block_forward.3} parent=11 // pred_check_branch
          %238 = sbr.rel (%p236) target = $region16
        $region15: #{conv_block_forward.3} parent=11 // pred_region
          _
        $region16: #{conv_block_forward.3} parent=11 // pred_fallthru
          _
        // Predicated region
        $region17: #{conv_block_forward.3} parent=11 // pred_check
          %p239 = pneg %p111
        $region18: #{conv_block_forward.3} parent=11 // pred_check_branch
          %241 = sbr.rel (%p239) target = $region20
        $region19: #{conv_block_forward.3} parent=11 // pred_region
          _
        $region20: #{conv_block_forward.3} parent=11 // pred_fallthru
          _
        // Predicated region
        $region21: #{conv_block_forward.3} parent=11 // pred_check
          %p242 = pneg %p132
        $region22: #{conv_block_forward.3} parent=11 // pred_check_branch
          %244 = sbr.rel (%p242) target = $region24
        $region23: #{conv_block_forward.3} parent=11 // pred_region
          _
        $region24: #{conv_block_forward.3} parent=11 // pred_fallthru
          _
        // Predicated region
        $region25: #{conv_block_forward.3} parent=11 // pred_check
          %p245 = pneg %p153
        $region26: #{conv_block_forward.3} parent=11 // pred_check_branch
          %247 = sbr.rel (%p245) target = $region28
        $region27: #{conv_block_forward.3} parent=11 // pred_region
          _
        $region28: #{conv_block_forward.3} parent=11 // pred_fallthru
          _
        // Predicated region
        $region29: #{conv_block_forward.3} parent=11 // pred_check
          %p248 = pneg %p174
        $region30: #{conv_block_forward.3} parent=11 // pred_check_branch
          %250 = sbr.rel (%p248) target = $region32
        $region31: #{conv_block_forward.3} parent=11 // pred_region
          _
        $region32: #{conv_block_forward.3} parent=11 // pred_fallthru
          _
        // Predicated region
        $region33: #{conv_block_forward.3} parent=11 // pred_check
          %p251 = pneg %p195
        $region34: #{conv_block_forward.3} parent=11 // pred_check_branch
          %253 = sbr.rel (%p251) target = $region36
        $region35: #{conv_block_forward.3} parent=11 // pred_region
          _
        $region36: #{conv_block_forward.3} parent=11 // pred_fallthru
          _
      $region12: #{conv_block_forward.3} parent=5 // pred_fallthru
        _
      %p254 = scmp.lt.s32.totalorder %s17, 2
      // Predicated region
      $region37: #{conv_block_forward.3} parent=5 // pred_check
        %p255 = pneg %p254
      $region38: #{conv_block_forward.3} parent=5 // pred_check_branch
        %257 = sbr.rel (%p255) target = $region40
      $region39: #{conv_block_forward.3} parent=5 // pred_region
        // Predicated region
        $region41: #{conv_block_forward.3} parent=39 // pred_check
          %p258 = pneg %p37
        $region42: #{conv_block_forward.3} parent=39 // pred_check_branch
          %260 = sbr.rel (%p258) target = $region44
        $region43: #{conv_block_forward.3} parent=39 // pred_region
          %s261 = smul.u32 32, %s17
          %p262 = scmp.lt.s32.totalorder %s261, 63
          %s263 = scalar_select %p262, %s261, 63
          %s264 = smul.addr %s263, 4
          %s265 = scalar_lea.vmem %s0, %s264
          %s266 = smul.u32 32, %s17
        $region44: #{conv_block_forward.3} parent=39 // pred_fallthru
          _
        // Predicated region
        $region45: #{conv_block_forward.3} parent=39 // pred_check
          %p267 = pneg %p63
        $region46: #{conv_block_forward.3} parent=39 // pred_check_branch
          %269 = sbr.rel (%p267) target = $region48
        $region47: #{conv_block_forward.3} parent=39 // pred_region
          %s270 = smul.u32 32, %s17
          %p271 = scmp.lt.s32.totalorder %s270, 63
          %s272 = scalar_select %p271, %s270, 63
          %s273 = smul.addr %s272, 8
          %s274 = scalar_lea.vmem %s1, %s273
          %s275 = smul.u32 32, %s17
        $region48: #{conv_block_forward.3} parent=39 // pred_fallthru
          _
      $region40: #{conv_block_forward.3} parent=5 // pred_fallthru
        _
      %p276 = scmp.le.s32.totalorder 1, %s17
      %p277 = scmp.lt.s32.totalorder %s17, 3
      %p278 = pnand %p276, %p277
      %p279 = pneg %p278
      // Predicated region
      $region49: #{conv_block_forward.3} parent=5 // pred_check
        _
      $region50: #{conv_block_forward.3} parent=5 // pred_check_branch
        %281 = sbr.rel (%p278) target = $region52
      $region51: #{conv_block_forward.3} parent=5 // pred_region
        %s282 = ssub.s32 %s17, 1
        %s283 = smul.u32 32, %s22
        %p284 = scmp.lt.s32.totalorder %s283, 63
        %s285 = scalar_select %p284, %s283, 63
        %s286 = smul.addr %s285, 4
        %s287 = scalar_lea.vmem %s0, %s286
        %p288 = pneg %p43
        %p289 = pneg %p40
        %s290 = smul.u32 32, %s22
        %p291 = scmp.lt.s32.totalorder %s290, 63
        %s292 = scalar_select %p291, %s290, 63
        %s293 = smul.addr %s292, 8
        %s294 = scalar_lea.vmem %s1, %s293
        %p295 = pneg %p69
        %p296 = pneg %p66
        %p297 = pneg %p90
        %p298 = pneg %p87
        %p299 = pneg %p111
        %p300 = pneg %p108
        %p301 = pneg %p132
        %p302 = pneg %p129
        %p303 = pneg %p153
        %p304 = pneg %p150
        %p305 = pneg %p174
        %p306 = pneg %p171
        %p307 = pneg %p195
        %p308 = pneg %p192
        %p309 = pneg %p221
        %p310 = pneg %p218
        %s311 = sand.u32 %s208, 1
        %s312 = scalar_lea.sflag [#allocation3], %s311
        %s313 = sand.u32 %s208, 1
        %s314 = smul.addr %s313, 256
        %s315 = scalar_lea.vmem [#allocation2], %s314
        %s316 = smul.u32 32, %s22
        %p317 = scmp.lt.s32.totalorder %s316, 63
        %s318 = scalar_select %p317, %s316, 63
        %s319 = smul.addr %s318, 4
        %s320 = scalar_lea.vmem %s0, %s319
        %s321 = smul.u32 32, %s22
        %s322 = smul.u32 32, %s22
        %p323 = scmp.lt.s32.totalorder %s322, 63
        %s324 = scalar_select %p323, %s322, 63
        %s325 = smul.addr %s324, 8
        %s326 = scalar_lea.vmem %s1, %s325
        %s327 = smul.u32 32, %s22
        %s328 = smul.u32 32, %s22
        %v329 = vld [vmem:[%s320] sm:$0xf]
        %v330 = vld [vmem:[%s320 + $0x4] sm:$0xf]
        %v331 = vld [vmem:[%s320 + $0x8] sm:$0xf]
        %v332 = vld [vmem:[%s320 + $0xc] sm:$0xf]
        %v333 = vld [vmem:[%s320 + $0x10] sm:$0xf]
        %v334 = vld [vmem:[%s320 + $0x14] sm:$0xf]
        %v335 = vld [vmem:[%s320 + $0x18] sm:$0xf]
        %v336 = vld [vmem:[%s320 + $0x1c] sm:$0xf]
        %v337 = vld [vmem:[%s320 + $0x20] sm:$0xf]
        %v338 = vld [vmem:[%s320 + $0x24] sm:$0xf]
        %v339 = vld [vmem:[%s320 + $0x28] sm:$0xf]
        %v340 = vld [vmem:[%s320 + $0x2c] sm:$0xf]
        %v341 = vld [vmem:[%s320 + $0x30] sm:$0xf]
        %v342 = vld [vmem:[%s320 + $0x34] sm:$0xf]
        %v343 = vld [vmem:[%s320 + $0x38] sm:$0xf]
        %v344 = vld [vmem:[%s320 + $0x3c] sm:$0xf]
        %v345 = vld [vmem:[%s320 + $0x40] sm:$0xf]
        %v346 = vld [vmem:[%s320 + $0x44] sm:$0xf]
        %v347 = vld [vmem:[%s320 + $0x48] sm:$0xf]
        %v348 = vld [vmem:[%s320 + $0x4c] sm:$0xf]
        %v349 = vld [vmem:[%s320 + $0x50] sm:$0xf]
        %v350 = vld [vmem:[%s320 + $0x54] sm:$0xf]
        %v351 = vld [vmem:[%s320 + $0x58] sm:$0xf]
        %v352 = vld [vmem:[%s320 + $0x5c] sm:$0xf]
        %v353 = vld [vmem:[%s320 + $0x60] sm:$0xf]
        %v354 = vld [vmem:[%s320 + $0x64] sm:$0xf]
        %v355 = vld [vmem:[%s320 + $0x68] sm:$0xf]
        %v356 = vld [vmem:[%s320 + $0x6c] sm:$0xf]
        %v357 = vld [vmem:[%s320 + $0x70] sm:$0xf]
        %v358 = vld [vmem:[%s320 + $0x74] sm:$0xf]
        %v359 = vld [vmem:[%s320 + $0x78] sm:$0xf]
        %v360 = vld [vmem:[%s320 + $0x7c] sm:$0xf]
        %v361 = vunpack.c.l.bf16 %v329
        %v362 = vunpack.c.l.bf16 %v330
        %v363 = vunpack.c.l.bf16 %v331
        %v364 = vunpack.c.l.bf16 %v332
        %v365 = vunpack.c.l.bf16 %v333
        %v366 = vunpack.c.l.bf16 %v334
        %v367 = vunpack.c.l.bf16 %v335
        %v368 = vunpack.c.l.bf16 %v336
        %v369 = vunpack.c.l.bf16 %v337
        %v370 = vunpack.c.l.bf16 %v338
        %v371 = vunpack.c.l.bf16 %v339
        %v372 = vunpack.c.l.bf16 %v340
        %v373 = vunpack.c.l.bf16 %v341
        %v374 = vunpack.c.l.bf16 %v342
        %v375 = vunpack.c.l.bf16 %v343
        %v376 = vunpack.c.l.bf16 %v344
        %v377 = vunpack.c.l.bf16 %v345
        %v378 = vunpack.c.l.bf16 %v346
        %v379 = vunpack.c.l.bf16 %v347
        %v380 = vunpack.c.l.bf16 %v348
        %v381 = vunpack.c.l.bf16 %v349
        %v382 = vunpack.c.l.bf16 %v350
        %v383 = vunpack.c.l.bf16 %v351
        %v384 = vunpack.c.l.bf16 %v352
        %v385 = vunpack.c.l.bf16 %v353
        %v386 = vunpack.c.l.bf16 %v354
        %v387 = vunpack.c.l.bf16 %v355
        %v388 = vunpack.c.l.bf16 %v356
        %v389 = vunpack.c.l.bf16 %v357
        %v390 = vunpack.c.l.bf16 %v358
        %v391 = vunpack.c.l.bf16 %v359
        %v392 = vunpack.c.l.bf16 %v360
        %v393 = vld [vmem:[%s2] sm:$0x1]
        %v395 = vperm.slane %v393, 0
        %v397 = vmul.f32 %v361, %v395
        %v398 = vmul.f32 %v362, %v395
        %v399 = vmul.f32 %v363, %v395
        %v400 = vmul.f32 %v364, %v395
        %v401 = vmul.f32 %v365, %v395
        %v402 = vmul.f32 %v366, %v395
        %v403 = vmul.f32 %v367, %v395
        %v404 = vmul.f32 %v368, %v395
        %v405 = vmul.f32 %v369, %v395
        %v406 = vmul.f32 %v370, %v395
        %v407 = vmul.f32 %v371, %v395
        %v408 = vmul.f32 %v372, %v395
        %v409 = vmul.f32 %v373, %v395
        %v410 = vmul.f32 %v374, %v395
        %v411 = vmul.f32 %v375, %v395
        %v412 = vmul.f32 %v376, %v395
        %v413 = vmul.f32 %v377, %v395
        %v414 = vmul.f32 %v378, %v395
        %v415 = vmul.f32 %v379, %v395
        %v416 = vmul.f32 %v380, %v395
        %v417 = vmul.f32 %v381, %v395
        %v418 = vmul.f32 %v382, %v395
        %v419 = vmul.f32 %v383, %v395
        %v420 = vmul.f32 %v384, %v395
        %v421 = vmul.f32 %v385, %v395
        %v422 = vmul.f32 %v386, %v395
        %v423 = vmul.f32 %v387, %v395
        %v424 = vmul.f32 %v388, %v395
        %v425 = vmul.f32 %v389, %v395
        %v426 = vmul.f32 %v390, %v395
        %v427 = vmul.f32 %v391, %v395
        %v428 = vmul.f32 %v392, %v395
        %v429 = vld [vmem:[%s3] sm:$0x1]
        %v431 = vperm.slane %v429, 0
        %v433 = vadd.f32 %v397, %v431
        %v434 = vadd.f32 %v398, %v431
        %v435 = vadd.f32 %v399, %v431
        %v436 = vadd.f32 %v400, %v431
        %v437 = vadd.f32 %v401, %v431
        %v438 = vadd.f32 %v402, %v431
        %v439 = vadd.f32 %v403, %v431
        %v440 = vadd.f32 %v404, %v431
        %v441 = vadd.f32 %v405, %v431
        %v442 = vadd.f32 %v406, %v431
        %v443 = vadd.f32 %v407, %v431
        %v444 = vadd.f32 %v408, %v431
        %v445 = vadd.f32 %v409, %v431
        %v446 = vadd.f32 %v410, %v431
        %v447 = vadd.f32 %v411, %v431
        %v448 = vadd.f32 %v412, %v431
        %v449 = vadd.f32 %v413, %v431
        %v450 = vadd.f32 %v414, %v431
        %v451 = vadd.f32 %v415, %v431
        %v452 = vadd.f32 %v416, %v431
        %v453 = vadd.f32 %v417, %v431
        %v454 = vadd.f32 %v418, %v431
        %v455 = vadd.f32 %v419, %v431
        %v456 = vadd.f32 %v420, %v431
        %v457 = vadd.f32 %v421, %v431
        %v458 = vadd.f32 %v422, %v431
        %v459 = vadd.f32 %v423, %v431
        %v460 = vadd.f32 %v424, %v431
        %v461 = vadd.f32 %v425, %v431
        %v462 = vadd.f32 %v426, %v431
        %v463 = vadd.f32 %v427, %v431
        %v464 = vadd.f32 %v428, %v431
        %v465 = vpack.c.bf16 %v434, %v433
        %v466 = vpack.c.bf16 %v436, %v435
        %v467 = vpack.c.bf16 %v438, %v437
        %v468 = vpack.c.bf16 %v440, %v439
        %v469 = vpack.c.bf16 %v442, %v441
        %v470 = vpack.c.bf16 %v444, %v443
        %v471 = vpack.c.bf16 %v446, %v445
        %v472 = vpack.c.bf16 %v448, %v447
        %v473 = vpack.c.bf16 %v450, %v449
        %v474 = vpack.c.bf16 %v452, %v451
        %v475 = vpack.c.bf16 %v454, %v453
        %v476 = vpack.c.bf16 %v456, %v455
        %v477 = vpack.c.bf16 %v458, %v457
        %v478 = vpack.c.bf16 %v460, %v459
        %v479 = vpack.c.bf16 %v462, %v461
        %v480 = vpack.c.bf16 %v464, %v463
        %v481 = vld [vmem:[%s4] sm:$0xff]
        %v482 = vld [vmem:[%s4 + $0x8] sm:$0xff]
        %v483 = vld [vmem:[%s4 + $0x10] sm:$0xff]
        %v484 = vld [vmem:[%s4 + $0x18] sm:$0xff]
        %v485 = vld [vmem:[%s4 + $0x20] sm:$0xff]
        %v486 = vld [vmem:[%s4 + $0x28] sm:$0xff]
        %v487 = vld [vmem:[%s4 + $0x30] sm:$0xff]
        %v488 = vld [vmem:[%s4 + $0x38] sm:$0xff]
        %v489 = vld [vmem:[%s4 + $0x40] sm:$0xff]
        %v490 = vld [vmem:[%s4 + $0x48] sm:$0xff]
        %v491 = vld [vmem:[%s4 + $0x50] sm:$0xff]
        %v492 = vld [vmem:[%s4 + $0x58] sm:$0xff]
        %v493 = vld [vmem:[%s4 + $0x60] sm:$0xff]
        %v494 = vld [vmem:[%s4 + $0x68] sm:$0xff]
        %v495 = vld [vmem:[%s4 + $0x70] sm:$0xff]
        %v496 = vld [vmem:[%s4 + $0x78] sm:$0xff]
        %v497 = vld [vmem:[%s4 + $0x80] sm:$0xff]
        %v498 = vld [vmem:[%s4 + $0x88] sm:$0xff]
        %v499 = vld [vmem:[%s4 + $0x90] sm:$0xff]
        %v500 = vld [vmem:[%s4 + $0x98] sm:$0xff]
        %v501 = vld [vmem:[%s4 + $0xa0] sm:$0xff]
        %v502 = vld [vmem:[%s4 + $0xa8] sm:$0xff]
        %v503 = vld [vmem:[%s4 + $0xb0] sm:$0xff]
        %v504 = vld [vmem:[%s4 + $0xb8] sm:$0xff]
        %v505 = vld [vmem:[%s4 + $0xc0] sm:$0xff]
        %v506 = vld [vmem:[%s4 + $0xc8] sm:$0xff]
        %v507 = vld [vmem:[%s4 + $0xd0] sm:$0xff]
        %v508 = vld [vmem:[%s4 + $0xd8] sm:$0xff]
        %v509 = vld [vmem:[%s4 + $0xe0] sm:$0xff]
        %v510 = vld [vmem:[%s4 + $0xe8] sm:$0xff]
        %v511 = vld [vmem:[%s4 + $0xf0] sm:$0xff]
        %v512 = vld [vmem:[%s4 + $0xf8] sm:$0xff]
        %v513 = vld [vmem:[%s5] sm:$0xf]
        %v515 = vperm.slane %v513, 0
        %v516 = vperm.slane %v513, 1
        %v517 = vperm.slane %v513, 2
        %v518 = vperm.slane %v513, 3
        %v555 = vunpack.c.l.b16 %v481
        %v556 = vunpack.c.h.b16 %v481
        %v557 = vunpack.c.l.b16 %v482
        %v558 = vunpack.c.h.b16 %v482
        %v559 = vunpack.c.l.b16 %v483
        %v560 = vunpack.c.h.b16 %v483
        %v561 = vunpack.c.l.b16 %v484
        %v562 = vunpack.c.h.b16 %v484
        %v563 = vunpack.c.l.b16 %v485
        %v564 = vunpack.c.h.b16 %v485
        %v565 = vunpack.c.l.b16 %v486
        %v566 = vunpack.c.h.b16 %v486
        %v567 = vunpack.c.l.b16 %v487
        %v568 = vunpack.c.h.b16 %v487
        %v569 = vunpack.c.l.b16 %v488
        %v570 = vunpack.c.h.b16 %v488
        %v571 = vunpack.c.l.b16 %v489
        %v572 = vunpack.c.h.b16 %v489
        %v573 = vunpack.c.l.b16 %v490
        %v574 = vunpack.c.h.b16 %v490
        %v575 = vunpack.c.l.b16 %v491
        %v576 = vunpack.c.h.b16 %v491
        %v577 = vunpack.c.l.b16 %v492
        %v578 = vunpack.c.h.b16 %v492
        %v579 = vunpack.c.l.b16 %v493
        %v580 = vunpack.c.h.b16 %v493
        %v581 = vunpack.c.l.b16 %v494
        %v582 = vunpack.c.h.b16 %v494
        %v583 = vunpack.c.l.b16 %v495
        %v584 = vunpack.c.h.b16 %v495
        %v585 = vunpack.c.l.b16 %v496
        %v586 = vunpack.c.h.b16 %v496
        %v587 = vunpack.c.l.b16 %v497
        %v588 = vunpack.c.h.b16 %v497
        %v589 = vunpack.c.l.b16 %v498
        %v590 = vunpack.c.h.b16 %v498
        %v591 = vunpack.c.l.b16 %v499
        %v592 = vunpack.c.h.b16 %v499
        %v593 = vunpack.c.l.b16 %v500
        %v594 = vunpack.c.h.b16 %v500
        %v595 = vunpack.c.l.b16 %v501
        %v596 = vunpack.c.h.b16 %v501
        %v597 = vunpack.c.l.b16 %v502
        %v598 = vunpack.c.h.b16 %v502
        %v599 = vunpack.c.l.b16 %v503
        %v600 = vunpack.c.h.b16 %v503
        %v601 = vunpack.c.l.b16 %v504
        %v602 = vunpack.c.h.b16 %v504
        %v603 = vunpack.c.l.b16 %v505
        %v604 = vunpack.c.h.b16 %v505
        %v605 = vunpack.c.l.b16 %v506
        %v606 = vunpack.c.h.b16 %v506
        %v607 = vunpack.c.l.b16 %v507
        %v608 = vunpack.c.h.b16 %v507
        %v609 = vunpack.c.l.b16 %v508
        %v610 = vunpack.c.h.b16 %v508
        %v611 = vunpack.c.l.b16 %v509
        %v612 = vunpack.c.h.b16 %v509
        %v613 = vunpack.c.l.b16 %v510
        %v614 = vunpack.c.h.b16 %v510
        %v615 = vunpack.c.l.b16 %v511
        %v616 = vunpack.c.h.b16 %v511
        %v617 = vunpack.c.l.b16 %v512
        %v618 = vunpack.c.h.b16 %v512
        %v619 = vpack.c.b16 %v559, %v555
        %v620 = vpack.c.b16 %v560, %v556
        %v621 = vpack.c.b16 %v561, %v557
        %v622 = vpack.c.b16 %v562, %v558
        %v623 = vpack.c.b16 %v567, %v563
        %v624 = vpack.c.b16 %v568, %v564
        %v625 = vpack.c.b16 %v569, %v565
        %v626 = vpack.c.b16 %v570, %v566
        %v627 = vpack.c.b16 %v575, %v571
        %v628 = vpack.c.b16 %v576, %v572
        %v629 = vpack.c.b16 %v577, %v573
        %v630 = vpack.c.b16 %v578, %v574
        %v631 = vpack.c.b16 %v583, %v579
        %v632 = vpack.c.b16 %v584, %v580
        %v633 = vpack.c.b16 %v585, %v581
        %v634 = vpack.c.b16 %v586, %v582
        %v635 = vpack.c.b16 %v591, %v587
        %v636 = vpack.c.b16 %v592, %v588
        %v637 = vpack.c.b16 %v593, %v589
        %v638 = vpack.c.b16 %v594, %v590
        %v639 = vpack.c.b16 %v599, %v595
        %v640 = vpack.c.b16 %v600, %v596
        %v641 = vpack.c.b16 %v601, %v597
        %v642 = vpack.c.b16 %v602, %v598
        %v643 = vpack.c.b16 %v607, %v603
        %v644 = vpack.c.b16 %v608, %v604
        %v645 = vpack.c.b16 %v609, %v605
        %v646 = vpack.c.b16 %v610, %v606
        %v647 = vpack.c.b16 %v615, %v611
        %v648 = vpack.c.b16 %v616, %v612
        %v649 = vpack.c.b16 %v617, %v613
        %v650 = vpack.c.b16 %v618, %v614
        %683 = vmatpush.bf16.msra.mxu0 %v647
        %684 = vmatpush.bf16.msra.mxu0 %v643
        %685 = vmatpush.bf16.msra.mxu0 %v639
        %686 = vmatpush.bf16.msra.mxu0 %v635
        %687 = vmatpush.bf16.msra.mxu0 %v631
        %688 = vmatpush.bf16.msra.mxu0 %v627
        %689 = vmatpush.bf16.msra.mxu0 %v623
        %690 = vmatpush.bf16.msra.mxu0 %v619
        %691 = vmatmul.bf16.gmra.mxu0 %v465
        %v692 = vpop.f32.mrf.mxu0
        %v693 = vadd.f32 %v515, %v692
        %v694 = vpop.f32.mrf.mxu0
        %v695 = vadd.f32 %v515, %v694
        %696 = vmatmul.bf16.gmra.mxu0 %v466
        %v697 = vpop.f32.mrf.mxu0
        %v698 = vadd.f32 %v515, %v697
        %v699 = vpop.f32.mrf.mxu0
        %v700 = vadd.f32 %v515, %v699
        %701 = vmatmul.bf16.gmra.mxu0 %v467
        %v702 = vpop.f32.mrf.mxu0
        %v703 = vadd.f32 %v515, %v702
        %v704 = vpop.f32.mrf.mxu0
        %v705 = vadd.f32 %v515, %v704
        %706 = vmatmul.bf16.gmra.mxu0 %v468
        %v707 = vpop.f32.mrf.mxu0
        %v708 = vadd.f32 %v515, %v707
        %v709 = vpop.f32.mrf.mxu0
        %v710 = vadd.f32 %v515, %v709
        %711 = vmatmul.bf16.gmra.mxu0 %v469
        %v712 = vpop.f32.mrf.mxu0
        %v713 = vadd.f32 %v515, %v712
        %v714 = vpop.f32.mrf.mxu0
        %v715 = vadd.f32 %v515, %v714
        %716 = vmatmul.bf16.gmra.mxu0 %v470
        %v717 = vpop.f32.mrf.mxu0
        %v718 = vadd.f32 %v515, %v717
        %v719 = vpop.f32.mrf.mxu0
        %v720 = vadd.f32 %v515, %v719
        %721 = vmatmul.bf16.gmra.mxu0 %v471
        %v722 = vpop.f32.mrf.mxu0
        %v723 = vadd.f32 %v515, %v722
        %v724 = vpop.f32.mrf.mxu0
        %v725 = vadd.f32 %v515, %v724
        %726 = vmatmul.bf16.gmra.mxu0 %v472
        %v727 = vpop.f32.mrf.mxu0
        %v728 = vadd.f32 %v515, %v727
        %v729 = vpop.f32.mrf.mxu0
        %v730 = vadd.f32 %v515, %v729
        %731 = vmatmul.bf16.gmra.mxu0 %v473
        %v732 = vpop.f32.mrf.mxu0
        %v733 = vadd.f32 %v515, %v732
        %v734 = vpop.f32.mrf.mxu0
        %v735 = vadd.f32 %v515, %v734
        %736 = vmatmul.bf16.gmra.mxu0 %v474
        %v737 = vpop.f32.mrf.mxu0
        %v738 = vadd.f32 %v515, %v737
        %v739 = vpop.f32.mrf.mxu0
        %v740 = vadd.f32 %v515, %v739
        %741 = vmatmul.bf16.gmra.mxu0 %v475
        %v742 = vpop.f32.mrf.mxu0
        %v743 = vadd.f32 %v515, %v742
        %v744 = vpop.f32.mrf.mxu0
        %v745 = vadd.f32 %v515, %v744
        %746 = vmatmul.bf16.gmra.mxu0 %v476
        %v747 = vpop.f32.mrf.mxu0
        %v748 = vadd.f32 %v515, %v747
        %v749 = vpop.f32.mrf.mxu0
        %v750 = vadd.f32 %v515, %v749
        %751 = vmatmul.bf16.gmra.mxu0 %v477
        %v752 = vpop.f32.mrf.mxu0
        %v753 = vadd.f32 %v515, %v752
        %v754 = vpop.f32.mrf.mxu0
        %v755 = vadd.f32 %v515, %v754
        %756 = vmatmul.bf16.gmra.mxu0 %v478
        %v757 = vpop.f32.mrf.mxu0
        %v758 = vadd.f32 %v515, %v757
        %v759 = vpop.f32.mrf.mxu0
        %v760 = vadd.f32 %v515, %v759
        %761 = vmatmul.bf16.gmra.mxu0 %v479
        %v762 = vpop.f32.mrf.mxu0
        %v763 = vadd.f32 %v515, %v762
        %v764 = vpop.f32.mrf.mxu0
        %v765 = vadd.f32 %v515, %v764
        %766 = vmatmul.bf16.gmra.mxu0 %v480
        %v767 = vpop.f32.mrf.mxu0
        %v768 = vadd.f32 %v515, %v767
        %v769 = vpop.f32.mrf.mxu0
        %v770 = vadd.f32 %v515, %v769
        %771 = vdwg.mxu0
        %772 = vmatpush.bf16.msra.mxu0 %v648
        %773 = vmatpush.bf16.msra.mxu0 %v644
        %774 = vmatpush.bf16.msra.mxu0 %v640
        %775 = vmatpush.bf16.msra.mxu0 %v636
        %776 = vmatpush.bf16.msra.mxu0 %v632
        %777 = vmatpush.bf16.msra.mxu0 %v628
        %778 = vmatpush.bf16.msra.mxu0 %v624
        %779 = vmatpush.bf16.msra.mxu0 %v620
        %780 = vmatmul.bf16.gmra.mxu0 %v465
        %v781 = vpop.f32.mrf.mxu0
        %v782 = vadd.f32 %v516, %v781
        %v783 = vpop.f32.mrf.mxu0
        %v784 = vadd.f32 %v516, %v783
        %785 = vmatmul.bf16.gmra.mxu0 %v466
        %v786 = vpop.f32.mrf.mxu0
        %v787 = vadd.f32 %v516, %v786
        %v788 = vpop.f32.mrf.mxu0
        %v789 = vadd.f32 %v516, %v788
        %790 = vmatmul.bf16.gmra.mxu0 %v467
        %v791 = vpop.f32.mrf.mxu0
        %v792 = vadd.f32 %v516, %v791
        %v793 = vpop.f32.mrf.mxu0
        %v794 = vadd.f32 %v516, %v793
        %795 = vmatmul.bf16.gmra.mxu0 %v468
        %v796 = vpop.f32.mrf.mxu0
        %v797 = vadd.f32 %v516, %v796
        %v798 = vpop.f32.mrf.mxu0
        %v799 = vadd.f32 %v516, %v798
        %800 = vmatmul.bf16.gmra.mxu0 %v469
        %v801 = vpop.f32.mrf.mxu0
        %v802 = vadd.f32 %v516, %v801
        %v803 = vpop.f32.mrf.mxu0
        %v804 = vadd.f32 %v516, %v803
        %805 = vmatmul.bf16.gmra.mxu0 %v470
        %v806 = vpop.f32.mrf.mxu0
        %v807 = vadd.f32 %v516, %v806
        %v808 = vpop.f32.mrf.mxu0
        %v809 = vadd.f32 %v516, %v808
        %810 = vmatmul.bf16.gmra.mxu0 %v471
        %v811 = vpop.f32.mrf.mxu0
        %v812 = vadd.f32 %v516, %v811
        %v813 = vpop.f32.mrf.mxu0
        %v814 = vadd.f32 %v516, %v813
        %815 = vmatmul.bf16.gmra.mxu0 %v472
        %v816 = vpop.f32.mrf.mxu0
        %v817 = vadd.f32 %v516, %v816
        %v818 = vpop.f32.mrf.mxu0
        %v819 = vadd.f32 %v516, %v818
        %820 = vmatmul.bf16.gmra.mxu0 %v473
        %v821 = vpop.f32.mrf.mxu0
        %v822 = vadd.f32 %v516, %v821
        %v823 = vpop.f32.mrf.mxu0
        %v824 = vadd.f32 %v516, %v823
        %825 = vmatmul.bf16.gmra.mxu0 %v474
        %v826 = vpop.f32.mrf.mxu0
        %v827 = vadd.f32 %v516, %v826
        %v828 = vpop.f32.mrf.mxu0
        %v829 = vadd.f32 %v516, %v828
        %830 = vmatmul.bf16.gmra.mxu0 %v475
        %v831 = vpop.f32.mrf.mxu0
        %v832 = vadd.f32 %v516, %v831
        %v833 = vpop.f32.mrf.mxu0
        %v834 = vadd.f32 %v516, %v833
        %835 = vmatmul.bf16.gmra.mxu0 %v476
        %v836 = vpop.f32.mrf.mxu0
        %v837 = vadd.f32 %v516, %v836
        %v838 = vpop.f32.mrf.mxu0
        %v839 = vadd.f32 %v516, %v838
        %840 = vmatmul.bf16.gmra.mxu0 %v477
        %v841 = vpop.f32.mrf.mxu0
        %v842 = vadd.f32 %v516, %v841
        %v843 = vpop.f32.mrf.mxu0
        %v844 = vadd.f32 %v516, %v843
        %845 = vmatmul.bf16.gmra.mxu0 %v478
        %v846 = vpop.f32.mrf.mxu0
        %v847 = vadd.f32 %v516, %v846
        %v848 = vpop.f32.mrf.mxu0
        %v849 = vadd.f32 %v516, %v848
        %850 = vmatmul.bf16.gmra.mxu0 %v479
        %v851 = vpop.f32.mrf.mxu0
        %v852 = vadd.f32 %v516, %v851
        %v853 = vpop.f32.mrf.mxu0
        %v854 = vadd.f32 %v516, %v853
        %855 = vmatmul.bf16.gmra.mxu0 %v480
        %v856 = vpop.f32.mrf.mxu0
        %v857 = vadd.f32 %v516, %v856
        %v858 = vpop.f32.mrf.mxu0
        %v859 = vadd.f32 %v516, %v858
        %860 = vdwg.mxu0
        %861 = vmatpush.bf16.msra.mxu0 %v649
        %862 = vmatpush.bf16.msra.mxu0 %v645
        %863 = vmatpush.bf16.msra.mxu0 %v641
        %864 = vmatpush.bf16.msra.mxu0 %v637
        %865 = vmatpush.bf16.msra.mxu0 %v633
        %866 = vmatpush.bf16.msra.mxu0 %v629
        %867 = vmatpush.bf16.msra.mxu0 %v625
        %868 = vmatpush.bf16.msra.mxu0 %v621
        %869 = vmatmul.bf16.gmra.mxu0 %v465
        %v870 = vpop.f32.mrf.mxu0
        %v871 = vadd.f32 %v517, %v870
        %v872 = vpop.f32.mrf.mxu0
        %v873 = vadd.f32 %v517, %v872
        %874 = vmatmul.bf16.gmra.mxu0 %v466
        %v875 = vpop.f32.mrf.mxu0
        %v876 = vadd.f32 %v517, %v875
        %v877 = vpop.f32.mrf.mxu0
        %v878 = vadd.f32 %v517, %v877
        %879 = vmatmul.bf16.gmra.mxu0 %v467
        %v880 = vpop.f32.mrf.mxu0
        %v881 = vadd.f32 %v517, %v880
        %v882 = vpop.f32.mrf.mxu0
        %v883 = vadd.f32 %v517, %v882
        %884 = vmatmul.bf16.gmra.mxu0 %v468
        %v885 = vpop.f32.mrf.mxu0
        %v886 = vadd.f32 %v517, %v885
        %v887 = vpop.f32.mrf.mxu0
        %v888 = vadd.f32 %v517, %v887
        %889 = vmatmul.bf16.gmra.mxu0 %v469
        %v890 = vpop.f32.mrf.mxu0
        %v891 = vadd.f32 %v517, %v890
        %v892 = vpop.f32.mrf.mxu0
        %v893 = vadd.f32 %v517, %v892
        %894 = vmatmul.bf16.gmra.mxu0 %v470
        %v895 = vpop.f32.mrf.mxu0
        %v896 = vadd.f32 %v517, %v895
        %v897 = vpop.f32.mrf.mxu0
        %v898 = vadd.f32 %v517, %v897
        %899 = vmatmul.bf16.gmra.mxu0 %v471
        %v900 = vpop.f32.mrf.mxu0
        %v901 = vadd.f32 %v517, %v900
        %v902 = vpop.f32.mrf.mxu0
        %v903 = vadd.f32 %v517, %v902
        %904 = vmatmul.bf16.gmra.mxu0 %v472
        %v905 = vpop.f32.mrf.mxu0
        %v906 = vadd.f32 %v517, %v905
        %v907 = vpop.f32.mrf.mxu0
        %v908 = vadd.f32 %v517, %v907
        %909 = vmatmul.bf16.gmra.mxu0 %v473
        %v910 = vpop.f32.mrf.mxu0
        %v911 = vadd.f32 %v517, %v910
        %v912 = vpop.f32.mrf.mxu0
        %v913 = vadd.f32 %v517, %v912
        %914 = vmatmul.bf16.gmra.mxu0 %v474
        %v915 = vpop.f32.mrf.mxu0
        %v916 = vadd.f32 %v517, %v915
        %v917 = vpop.f32.mrf.mxu0
        %v918 = vadd.f32 %v517, %v917
        %919 = vmatmul.bf16.gmra.mxu0 %v475
        %v920 = vpop.f32.mrf.mxu0
        %v921 = vadd.f32 %v517, %v920
        %v922 = vpop.f32.mrf.mxu0
        %v923 = vadd.f32 %v517, %v922
        %924 = vmatmul.bf16.gmra.mxu0 %v476
        %v925 = vpop.f32.mrf.mxu0
        %v926 = vadd.f32 %v517, %v925
        %v927 = vpop.f32.mrf.mxu0
        %v928 = vadd.f32 %v517, %v927
        %929 = vmatmul.bf16.gmra.mxu0 %v477
        %v930 = vpop.f32.mrf.mxu0
        %v931 = vadd.f32 %v517, %v930
        %v932 = vpop.f32.mrf.mxu0
        %v933 = vadd.f32 %v517, %v932
        %934 = vmatmul.bf16.gmra.mxu0 %v478
        %v935 = vpop.f32.mrf.mxu0
        %v936 = vadd.f32 %v517, %v935
        %v937 = vpop.f32.mrf.mxu0
        %v938 = vadd.f32 %v517, %v937
        %939 = vmatmul.bf16.gmra.mxu0 %v479
        %v940 = vpop.f32.mrf.mxu0
        %v941 = vadd.f32 %v517, %v940
        %v942 = vpop.f32.mrf.mxu0
        %v943 = vadd.f32 %v517, %v942
        %944 = vmatmul.bf16.gmra.mxu0 %v480
        %v945 = vpop.f32.mrf.mxu0
        %v946 = vadd.f32 %v517, %v945
        %v947 = vpop.f32.mrf.mxu0
        %v948 = vadd.f32 %v517, %v947
        %949 = vdwg.mxu0
        %950 = vmatpush.bf16.msra.mxu0 %v650
        %951 = vmatpush.bf16.msra.mxu0 %v646
        %952 = vmatpush.bf16.msra.mxu0 %v642
        %953 = vmatpush.bf16.msra.mxu0 %v638
        %954 = vmatpush.bf16.msra.mxu0 %v634
        %955 = vmatpush.bf16.msra.mxu0 %v630
        %956 = vmatpush.bf16.msra.mxu0 %v626
        %957 = vmatpush.bf16.msra.mxu0 %v622
        %958 = vmatmul.bf16.gmra.mxu0 %v465
        %v959 = vpop.f32.mrf.mxu0
        %v960 = vadd.f32 %v518, %v959
        %v961 = vpop.f32.mrf.mxu0
        %v962 = vadd.f32 %v518, %v961
        %963 = vmatmul.bf16.gmra.mxu0 %v466
        %v964 = vpop.f32.mrf.mxu0
        %v965 = vadd.f32 %v518, %v964
        %v966 = vpop.f32.mrf.mxu0
        %v967 = vadd.f32 %v518, %v966
        %968 = vmatmul.bf16.gmra.mxu0 %v467
        %v969 = vpop.f32.mrf.mxu0
        %v970 = vadd.f32 %v518, %v969
        %v971 = vpop.f32.mrf.mxu0
        %v972 = vadd.f32 %v518, %v971
        %973 = vmatmul.bf16.gmra.mxu0 %v468
        %v974 = vpop.f32.mrf.mxu0
        %v975 = vadd.f32 %v518, %v974
        %v976 = vpop.f32.mrf.mxu0
        %v977 = vadd.f32 %v518, %v976
        %978 = vmatmul.bf16.gmra.mxu0 %v469
        %v979 = vpop.f32.mrf.mxu0
        %v980 = vadd.f32 %v518, %v979
        %v981 = vpop.f32.mrf.mxu0
        %v982 = vadd.f32 %v518, %v981
        %983 = vmatmul.bf16.gmra.mxu0 %v470
        %v984 = vpop.f32.mrf.mxu0
        %v985 = vadd.f32 %v518, %v984
        %v986 = vpop.f32.mrf.mxu0
        %v987 = vadd.f32 %v518, %v986
        %988 = vmatmul.bf16.gmra.mxu0 %v471
        %v989 = vpop.f32.mrf.mxu0
        %v990 = vadd.f32 %v518, %v989
        %v991 = vpop.f32.mrf.mxu0
        %v992 = vadd.f32 %v518, %v991
        %993 = vmatmul.bf16.gmra.mxu0 %v472
        %v994 = vpop.f32.mrf.mxu0
        %v995 = vadd.f32 %v518, %v994
        %v996 = vpop.f32.mrf.mxu0
        %v997 = vadd.f32 %v518, %v996
        %998 = vmatmul.bf16.gmra.mxu0 %v473
        %v999 = vpop.f32.mrf.mxu0
        %v1000 = vadd.f32 %v518, %v999
        %v1001 = vpop.f32.mrf.mxu0
        %v1002 = vadd.f32 %v518, %v1001
        %1003 = vmatmul.bf16.gmra.mxu0 %v474
        %v1004 = vpop.f32.mrf.mxu0
        %v1005 = vadd.f32 %v518, %v1004
        %v1006 = vpop.f32.mrf.mxu0
        %v1007 = vadd.f32 %v518, %v1006
        %1008 = vmatmul.bf16.gmra.mxu0 %v475
        %v1009 = vpop.f32.mrf.mxu0
        %v1010 = vadd.f32 %v518, %v1009
        %v1011 = vpop.f32.mrf.mxu0
        %v1012 = vadd.f32 %v518, %v1011
        %1013 = vmatmul.bf16.gmra.mxu0 %v476
        %v1014 = vpop.f32.mrf.mxu0
        %v1015 = vadd.f32 %v518, %v1014
        %v1016 = vpop.f32.mrf.mxu0
        %v1017 = vadd.f32 %v518, %v1016
        %1018 = vmatmul.bf16.gmra.mxu0 %v477
        %v1019 = vpop.f32.mrf.mxu0
        %v1020 = vadd.f32 %v518, %v1019
        %v1021 = vpop.f32.mrf.mxu0
        %v1022 = vadd.f32 %v518, %v1021
        %1023 = vmatmul.bf16.gmra.mxu0 %v478
        %v1024 = vpop.f32.mrf.mxu0
        %v1025 = vadd.f32 %v518, %v1024
        %v1026 = vpop.f32.mrf.mxu0
        %v1027 = vadd.f32 %v518, %v1026
        %1028 = vmatmul.bf16.gmra.mxu0 %v479
        %v1029 = vpop.f32.mrf.mxu0
        %v1030 = vadd.f32 %v518, %v1029
        %v1031 = vpop.f32.mrf.mxu0
        %v1032 = vadd.f32 %v518, %v1031
        %1033 = vmatmul.bf16.gmra.mxu0 %v480
        %v1034 = vpop.f32.mrf.mxu0
        %v1035 = vadd.f32 %v518, %v1034
        %v1036 = vpop.f32.mrf.mxu0
        %v1037 = vadd.f32 %v518, %v1036
        %1038 = vdwg.mxu0
        %v1039 = vmul.f32 %v693, 0.5
        %v1040 = vmul.f32 %v782, 0.5
        %v1041 = vmul.f32 %v871, 0.5
        %v1042 = vmul.f32 %v960, 0.5
        %v1043 = vmul.f32 %v695, 0.5
        %v1044 = vmul.f32 %v784, 0.5
        %v1045 = vmul.f32 %v873, 0.5
        %v1046 = vmul.f32 %v962, 0.5
        %v1047 = vmul.f32 %v698, 0.5
        %v1048 = vmul.f32 %v787, 0.5
        %v1049 = vmul.f32 %v876, 0.5
        %v1050 = vmul.f32 %v965, 0.5
        %v1051 = vmul.f32 %v700, 0.5
        %v1052 = vmul.f32 %v789, 0.5
        %v1053 = vmul.f32 %v878, 0.5
        %v1054 = vmul.f32 %v967, 0.5
        %v1055 = vmul.f32 %v703, 0.5
        %v1056 = vmul.f32 %v792, 0.5
        %v1057 = vmul.f32 %v881, 0.5
        %v1058 = vmul.f32 %v970, 0.5
        %v1059 = vmul.f32 %v705, 0.5
        %v1060 = vmul.f32 %v794, 0.5
        %v1061 = vmul.f32 %v883, 0.5
        %v1062 = vmul.f32 %v972, 0.5
        %v1063 = vmul.f32 %v708, 0.5
        %v1064 = vmul.f32 %v797, 0.5
        %v1065 = vmul.f32 %v886, 0.5
        %v1066 = vmul.f32 %v975, 0.5
        %v1067 = vmul.f32 %v710, 0.5
        %v1068 = vmul.f32 %v799, 0.5
        %v1069 = vmul.f32 %v888, 0.5
        %v1070 = vmul.f32 %v977, 0.5
        %v1071 = vmul.f32 %v713, 0.5
        %v1072 = vmul.f32 %v802, 0.5
        %v1073 = vmul.f32 %v891, 0.5
        %v1074 = vmul.f32 %v980, 0.5
        %v1075 = vmul.f32 %v715, 0.5
        %v1076 = vmul.f32 %v804, 0.5
        %v1077 = vmul.f32 %v893, 0.5
        %v1078 = vmul.f32 %v982, 0.5
        %v1079 = vmul.f32 %v718, 0.5
        %v1080 = vmul.f32 %v807, 0.5
        %v1081 = vmul.f32 %v896, 0.5
        %v1082 = vmul.f32 %v985, 0.5
        %v1083 = vmul.f32 %v720, 0.5
        %v1084 = vmul.f32 %v809, 0.5
        %v1085 = vmul.f32 %v898, 0.5
        %v1086 = vmul.f32 %v987, 0.5
        %v1087 = vmul.f32 %v723, 0.5
        %v1088 = vmul.f32 %v812, 0.5
        %v1089 = vmul.f32 %v901, 0.5
        %v1090 = vmul.f32 %v990, 0.5
        %v1091 = vmul.f32 %v725, 0.5
        %v1092 = vmul.f32 %v814, 0.5
        %v1093 = vmul.f32 %v903, 0.5
        %v1094 = vmul.f32 %v992, 0.5
        %v1095 = vmul.f32 %v728, 0.5
        %v1096 = vmul.f32 %v817, 0.5
        %v1097 = vmul.f32 %v906, 0.5
        %v1098 = vmul.f32 %v995, 0.5
        %v1099 = vmul.f32 %v730, 0.5
        %v1100 = vmul.f32 %v819, 0.5
        %v1101 = vmul.f32 %v908, 0.5
        %v1102 = vmul.f32 %v997, 0.5
        %v1103 = vmul.f32 %v733, 0.5
        %v1104 = vmul.f32 %v822, 0.5
        %v1105 = vmul.f32 %v911, 0.5
        %v1106 = vmul.f32 %v1000, 0.5
        %v1107 = vmul.f32 %v735, 0.5
        %v1108 = vmul.f32 %v824, 0.5
        %v1109 = vmul.f32 %v913, 0.5
        %v1110 = vmul.f32 %v1002, 0.5
        %v1111 = vmul.f32 %v738, 0.5
        %v1112 = vmul.f32 %v827, 0.5
        %v1113 = vmul.f32 %v916, 0.5
        %v1114 = vmul.f32 %v1005, 0.5
        %v1115 = vmul.f32 %v740, 0.5
        %v1116 = vmul.f32 %v829, 0.5
        %v1117 = vmul.f32 %v918, 0.5
        %v1118 = vmul.f32 %v1007, 0.5
        %v1119 = vmul.f32 %v743, 0.5
        %v1120 = vmul.f32 %v832, 0.5
        %v1121 = vmul.f32 %v921, 0.5
        %v1122 = vmul.f32 %v1010, 0.5
        %v1123 = vmul.f32 %v745, 0.5
        %v1124 = vmul.f32 %v834, 0.5
        %v1125 = vmul.f32 %v923, 0.5
        %v1126 = vmul.f32 %v1012, 0.5
        %v1127 = vmul.f32 %v748, 0.5
        %v1128 = vmul.f32 %v837, 0.5
        %v1129 = vmul.f32 %v926, 0.5
        %v1130 = vmul.f32 %v1015, 0.5
        %v1131 = vmul.f32 %v750, 0.5
        %v1132 = vmul.f32 %v839, 0.5
        %v1133 = vmul.f32 %v928, 0.5
        %v1134 = vmul.f32 %v1017, 0.5
        %v1135 = vmul.f32 %v753, 0.5
        %v1136 = vmul.f32 %v842, 0.5
        %v1137 = vmul.f32 %v931, 0.5
        %v1138 = vmul.f32 %v1020, 0.5
        %v1139 = vmul.f32 %v755, 0.5
        %v1140 = vmul.f32 %v844, 0.5
        %v1141 = vmul.f32 %v933, 0.5
        %v1142 = vmul.f32 %v1022, 0.5
        %v1143 = vmul.f32 %v758, 0.5
        %v1144 = vmul.f32 %v847, 0.5
        %v1145 = vmul.f32 %v936, 0.5
        %v1146 = vmul.f32 %v1025, 0.5
        %v1147 = vmul.f32 %v760, 0.5
        %v1148 = vmul.f32 %v849, 0.5
        %v1149 = vmul.f32 %v938, 0.5
        %v1150 = vmul.f32 %v1027, 0.5
        %v1151 = vmul.f32 %v763, 0.5
        %v1152 = vmul.f32 %v852, 0.5
        %v1153 = vmul.f32 %v941, 0.5
        %v1154 = vmul.f32 %v1030, 0.5
        %v1155 = vmul.f32 %v765, 0.5
        %v1156 = vmul.f32 %v854, 0.5
        %v1157 = vmul.f32 %v943, 0.5
        %v1158 = vmul.f32 %v1032, 0.5
        %v1159 = vmul.f32 %v768, 0.5
        %v1160 = vmul.f32 %v857, 0.5
        %v1161 = vmul.f32 %v946, 0.5
        %v1162 = vmul.f32 %v1035, 0.5
        %v1163 = vmul.f32 %v770, 0.5
        %v1164 = vmul.f32 %v859, 0.5
        %v1165 = vmul.f32 %v948, 0.5
        %v1166 = vmul.f32 %v1037, 0.5
        %v1167 = vmul.f32 %v693, 0.044715
        %v1168 = vmul.f32 %v782, 0.044715
        %v1169 = vmul.f32 %v871, 0.044715
        %v1170 = vmul.f32 %v960, 0.044715
        %v1171 = vmul.f32 %v695, 0.044715
        %v1172 = vmul.f32 %v784, 0.044715
        %v1173 = vmul.f32 %v873, 0.044715
        %v1174 = vmul.f32 %v962, 0.044715
        %v1175 = vmul.f32 %v698, 0.044715
        %v1176 = vmul.f32 %v787, 0.044715
        %v1177 = vmul.f32 %v876, 0.044715
        %v1178 = vmul.f32 %v965, 0.044715
        %v1179 = vmul.f32 %v700, 0.044715
        %v1180 = vmul.f32 %v789, 0.044715
        %v1181 = vmul.f32 %v878, 0.044715
        %v1182 = vmul.f32 %v967, 0.044715
        %v1183 = vmul.f32 %v703, 0.044715
        %v1184 = vmul.f32 %v792, 0.044715
        %v1185 = vmul.f32 %v881, 0.044715
        %v1186 = vmul.f32 %v970, 0.044715
        %v1187 = vmul.f32 %v705, 0.044715
        %v1188 = vmul.f32 %v794, 0.044715
        %v1189 = vmul.f32 %v883, 0.044715
        %v1190 = vmul.f32 %v972, 0.044715
        %v1191 = vmul.f32 %v708, 0.044715
        %v1192 = vmul.f32 %v797, 0.044715
        %v1193 = vmul.f32 %v886, 0.044715
        %v1194 = vmul.f32 %v975, 0.044715
        %v1195 = vmul.f32 %v710, 0.044715
        %v1196 = vmul.f32 %v799, 0.044715
        %v1197 = vmul.f32 %v888, 0.044715
        %v1198 = vmul.f32 %v977, 0.044715
        %v1199 = vmul.f32 %v713, 0.044715
        %v1200 = vmul.f32 %v802, 0.044715
        %v1201 = vmul.f32 %v891, 0.044715
        %v1202 = vmul.f32 %v980, 0.044715
        %v1203 = vmul.f32 %v715, 0.044715
        %v1204 = vmul.f32 %v804, 0.044715
        %v1205 = vmul.f32 %v893, 0.044715
        %v1206 = vmul.f32 %v982, 0.044715
        %v1207 = vmul.f32 %v718, 0.044715
        %v1208 = vmul.f32 %v807, 0.044715
        %v1209 = vmul.f32 %v896, 0.044715
        %v1210 = vmul.f32 %v985, 0.044715
        %v1211 = vmul.f32 %v720, 0.044715
        %v1212 = vmul.f32 %v809, 0.044715
        %v1213 = vmul.f32 %v898, 0.044715
        %v1214 = vmul.f32 %v987, 0.044715
        %v1215 = vmul.f32 %v723, 0.044715
        %v1216 = vmul.f32 %v812, 0.044715
        %v1217 = vmul.f32 %v901, 0.044715
        %v1218 = vmul.f32 %v990, 0.044715
        %v1219 = vmul.f32 %v725, 0.044715
        %v1220 = vmul.f32 %v814, 0.044715
        %v1221 = vmul.f32 %v903, 0.044715
        %v1222 = vmul.f32 %v992, 0.044715
        %v1223 = vmul.f32 %v728, 0.044715
        %v1224 = vmul.f32 %v817, 0.044715
        %v1225 = vmul.f32 %v906, 0.044715
        %v1226 = vmul.f32 %v995, 0.044715
        %v1227 = vmul.f32 %v730, 0.044715
        %v1228 = vmul.f32 %v819, 0.044715
        %v1229 = vmul.f32 %v908, 0.044715
        %v1230 = vmul.f32 %v997, 0.044715
        %v1231 = vmul.f32 %v733, 0.044715
        %v1232 = vmul.f32 %v822, 0.044715
        %v1233 = vmul.f32 %v911, 0.044715
        %v1234 = vmul.f32 %v1000, 0.044715
        %v1235 = vmul.f32 %v735, 0.044715
        %v1236 = vmul.f32 %v824, 0.044715
        %v1237 = vmul.f32 %v913, 0.044715
        %v1238 = vmul.f32 %v1002, 0.044715
        %v1239 = vmul.f32 %v738, 0.044715
        %v1240 = vmul.f32 %v827, 0.044715
        %v1241 = vmul.f32 %v916, 0.044715
        %v1242 = vmul.f32 %v1005, 0.044715
        %v1243 = vmul.f32 %v740, 0.044715
        %v1244 = vmul.f32 %v829, 0.044715
        %v1245 = vmul.f32 %v918, 0.044715
        %v1246 = vmul.f32 %v1007, 0.044715
        %v1247 = vmul.f32 %v743, 0.044715
        %v1248 = vmul.f32 %v832, 0.044715
        %v1249 = vmul.f32 %v921, 0.044715
        %v1250 = vmul.f32 %v1010, 0.044715
        %v1251 = vmul.f32 %v745, 0.044715
        %v1252 = vmul.f32 %v834, 0.044715
        %v1253 = vmul.f32 %v923, 0.044715
        %v1254 = vmul.f32 %v1012, 0.044715
        %v1255 = vmul.f32 %v748, 0.044715
        %v1256 = vmul.f32 %v837, 0.044715
        %v1257 = vmul.f32 %v926, 0.044715
        %v1258 = vmul.f32 %v1015, 0.044715
        %v1259 = vmul.f32 %v750, 0.044715
        %v1260 = vmul.f32 %v839, 0.044715
        %v1261 = vmul.f32 %v928, 0.044715
        %v1262 = vmul.f32 %v1017, 0.044715
        %v1263 = vmul.f32 %v753, 0.044715
        %v1264 = vmul.f32 %v842, 0.044715
        %v1265 = vmul.f32 %v931, 0.044715
        %v1266 = vmul.f32 %v1020, 0.044715
        %v1267 = vmul.f32 %v755, 0.044715
        %v1268 = vmul.f32 %v844, 0.044715
        %v1269 = vmul.f32 %v933, 0.044715
        %v1270 = vmul.f32 %v1022, 0.044715
        %v1271 = vmul.f32 %v758, 0.044715
        %v1272 = vmul.f32 %v847, 0.044715
        %v1273 = vmul.f32 %v936, 0.044715
        %v1274 = vmul.f32 %v1025, 0.044715
        %v1275 = vmul.f32 %v760, 0.044715
        %v1276 = vmul.f32 %v849, 0.044715
        %v1277 = vmul.f32 %v938, 0.044715
        %v1278 = vmul.f32 %v1027, 0.044715
        %v1279 = vmul.f32 %v763, 0.044715
        %v1280 = vmul.f32 %v852, 0.044715
        %v1281 = vmul.f32 %v941, 0.044715
        %v1282 = vmul.f32 %v1030, 0.044715
        %v1283 = vmul.f32 %v765, 0.044715
        %v1284 = vmul.f32 %v854, 0.044715
        %v1285 = vmul.f32 %v943, 0.044715
        %v1286 = vmul.f32 %v1032, 0.044715
        %v1287 = vmul.f32 %v768, 0.044715
        %v1288 = vmul.f32 %v857, 0.044715
        %v1289 = vmul.f32 %v946, 0.044715
        %v1290 = vmul.f32 %v1035, 0.044715
        %v1291 = vmul.f32 %v770, 0.044715
        %v1292 = vmul.f32 %v859, 0.044715
        %v1293 = vmul.f32 %v948, 0.044715
        %v1294 = vmul.f32 %v1037, 0.044715
        %v1295 = vmul.f32 %v1167, %v693
        %v1296 = vmul.f32 %v1168, %v782
        %v1297 = vmul.f32 %v1169, %v871
        %v1298 = vmul.f32 %v1170, %v960
        %v1299 = vmul.f32 %v1171, %v695
        %v1300 = vmul.f32 %v1172, %v784
        %v1301 = vmul.f32 %v1173, %v873
        %v1302 = vmul.f32 %v1174, %v962
        %v1303 = vmul.f32 %v1175, %v698
        %v1304 = vmul.f32 %v1176, %v787
        %v1305 = vmul.f32 %v1177, %v876
        %v1306 = vmul.f32 %v1178, %v965
        %v1307 = vmul.f32 %v1179, %v700
        %v1308 = vmul.f32 %v1180, %v789
        %v1309 = vmul.f32 %v1181, %v878
        %v1310 = vmul.f32 %v1182, %v967
        %v1311 = vmul.f32 %v1183, %v703
        %v1312 = vmul.f32 %v1184, %v792
        %v1313 = vmul.f32 %v1185, %v881
        %v1314 = vmul.f32 %v1186, %v970
        %v1315 = vmul.f32 %v1187, %v705
        %v1316 = vmul.f32 %v1188, %v794
        %v1317 = vmul.f32 %v1189, %v883
        %v1318 = vmul.f32 %v1190, %v972
        %v1319 = vmul.f32 %v1191, %v708
        %v1320 = vmul.f32 %v1192, %v797
        %v1321 = vmul.f32 %v1193, %v886
        %v1322 = vmul.f32 %v1194, %v975
        %v1323 = vmul.f32 %v1195, %v710
        %v1324 = vmul.f32 %v1196, %v799
        %v1325 = vmul.f32 %v1197, %v888
        %v1326 = vmul.f32 %v1198, %v977
        %v1327 = vmul.f32 %v1199, %v713
        %v1328 = vmul.f32 %v1200, %v802
        %v1329 = vmul.f32 %v1201, %v891
        %v1330 = vmul.f32 %v1202, %v980
        %v1331 = vmul.f32 %v1203, %v715
        %v1332 = vmul.f32 %v1204, %v804
        %v1333 = vmul.f32 %v1205, %v893
        %v1334 = vmul.f32 %v1206, %v982
        %v1335 = vmul.f32 %v1207, %v718
        %v1336 = vmul.f32 %v1208, %v807
        %v1337 = vmul.f32 %v1209, %v896
        %v1338 = vmul.f32 %v1210, %v985
        %v1339 = vmul.f32 %v1211, %v720
        %v1340 = vmul.f32 %v1212, %v809
        %v1341 = vmul.f32 %v1213, %v898
        %v1342 = vmul.f32 %v1214, %v987
        %v1343 = vmul.f32 %v1215, %v723
        %v1344 = vmul.f32 %v1216, %v812
        %v1345 = vmul.f32 %v1217, %v901
        %v1346 = vmul.f32 %v1218, %v990
        %v1347 = vmul.f32 %v1219, %v725
        %v1348 = vmul.f32 %v1220, %v814
        %v1349 = vmul.f32 %v1221, %v903
        %v1350 = vmul.f32 %v1222, %v992
        %v1351 = vmul.f32 %v1223, %v728
        %v1352 = vmul.f32 %v1224, %v817
        %v1353 = vmul.f32 %v1225, %v906
        %v1354 = vmul.f32 %v1226, %v995
        %v1355 = vmul.f32 %v1227, %v730
        %v1356 = vmul.f32 %v1228, %v819
        %v1357 = vmul.f32 %v1229, %v908
        %v1358 = vmul.f32 %v1230, %v997
        %v1359 = vmul.f32 %v1231, %v733
        %v1360 = vmul.f32 %v1232, %v822
        %v1361 = vmul.f32 %v1233, %v911
        %v1362 = vmul.f32 %v1234, %v1000
        %v1363 = vmul.f32 %v1235, %v735
        %v1364 = vmul.f32 %v1236, %v824
        %v1365 = vmul.f32 %v1237, %v913
        %v1366 = vmul.f32 %v1238, %v1002
        %v1367 = vmul.f32 %v1239, %v738
        %v1368 = vmul.f32 %v1240, %v827
        %v1369 = vmul.f32 %v1241, %v916
        %v1370 = vmul.f32 %v1242, %v1005
        %v1371 = vmul.f32 %v1243, %v740
        %v1372 = vmul.f32 %v1244, %v829
        %v1373 = vmul.f32 %v1245, %v918
        %v1374 = vmul.f32 %v1246, %v1007
        %v1375 = vmul.f32 %v1247, %v743
        %v1376 = vmul.f32 %v1248, %v832
        %v1377 = vmul.f32 %v1249, %v921
        %v1378 = vmul.f32 %v1250, %v1010
        %v1379 = vmul.f32 %v1251, %v745
        %v1380 = vmul.f32 %v1252, %v834
        %v1381 = vmul.f32 %v1253, %v923
        %v1382 = vmul.f32 %v1254, %v1012
        %v1383 = vmul.f32 %v1255, %v748
        %v1384 = vmul.f32 %v1256, %v837
        %v1385 = vmul.f32 %v1257, %v926
        %v1386 = vmul.f32 %v1258, %v1015
        %v1387 = vmul.f32 %v1259, %v750
        %v1388 = vmul.f32 %v1260, %v839
        %v1389 = vmul.f32 %v1261, %v928
        %v1390 = vmul.f32 %v1262, %v1017
        %v1391 = vmul.f32 %v1263, %v753
        %v1392 = vmul.f32 %v1264, %v842
        %v1393 = vmul.f32 %v1265, %v931
        %v1394 = vmul.f32 %v1266, %v1020
        %v1395 = vmul.f32 %v1267, %v755
        %v1396 = vmul.f32 %v1268, %v844
        %v1397 = vmul.f32 %v1269, %v933
        %v1398 = vmul.f32 %v1270, %v1022
        %v1399 = vmul.f32 %v1271, %v758
        %v1400 = vmul.f32 %v1272, %v847
        %v1401 = vmul.f32 %v1273, %v936
        %v1402 = vmul.f32 %v1274, %v1025
        %v1403 = vmul.f32 %v1275, %v760
        %v1404 = vmul.f32 %v1276, %v849
        %v1405 = vmul.f32 %v1277, %v938
        %v1406 = vmul.f32 %v1278, %v1027
        %v1407 = vmul.f32 %v1279, %v763
        %v1408 = vmul.f32 %v1280, %v852
        %v1409 = vmul.f32 %v1281, %v941
        %v1410 = vmul.f32 %v1282, %v1030
        %v1411 = vmul.f32 %v1283, %v765
        %v1412 = vmul.f32 %v1284, %v854
        %v1413 = vmul.f32 %v1285, %v943
        %v1414 = vmul.f32 %v1286, %v1032
        %v1415 = vmul.f32 %v1287, %v768
        %v1416 = vmul.f32 %v1288, %v857
        %v1417 = vmul.f32 %v1289, %v946
        %v1418 = vmul.f32 %v1290, %v1035
        %v1419 = vmul.f32 %v1291, %v770
        %v1420 = vmul.f32 %v1292, %v859
        %v1421 = vmul.f32 %v1293, %v948
        %v1422 = vmul.f32 %v1294, %v1037
        %v1423 = vmul.f32 %v1295, %v693
        %v1424 = vmul.f32 %v1296, %v782
        %v1425 = vmul.f32 %v1297, %v871
        %v1426 = vmul.f32 %v1298, %v960
        %v1427 = vmul.f32 %v1299, %v695
        %v1428 = vmul.f32 %v1300, %v784
        %v1429 = vmul.f32 %v1301, %v873
        %v1430 = vmul.f32 %v1302, %v962
        %v1431 = vmul.f32 %v1303, %v698
        %v1432 = vmul.f32 %v1304, %v787
        %v1433 = vmul.f32 %v1305, %v876
        %v1434 = vmul.f32 %v1306, %v965
        %v1435 = vmul.f32 %v1307, %v700
        %v1436 = vmul.f32 %v1308, %v789
        %v1437 = vmul.f32 %v1309, %v878
        %v1438 = vmul.f32 %v1310, %v967
        %v1439 = vmul.f32 %v1311, %v703
        %v1440 = vmul.f32 %v1312, %v792
        %v1441 = vmul.f32 %v1313, %v881
        %v1442 = vmul.f32 %v1314, %v970
        %v1443 = vmul.f32 %v1315, %v705
        %v1444 = vmul.f32 %v1316, %v794
        %v1445 = vmul.f32 %v1317, %v883
        %v1446 = vmul.f32 %v1318, %v972
        %v1447 = vmul.f32 %v1319, %v708
        %v1448 = vmul.f32 %v1320, %v797
        %v1449 = vmul.f32 %v1321, %v886
        %v1450 = vmul.f32 %v1322, %v975
        %v1451 = vmul.f32 %v1323, %v710
        %v1452 = vmul.f32 %v1324, %v799
        %v1453 = vmul.f32 %v1325, %v888
        %v1454 = vmul.f32 %v1326, %v977
        %v1455 = vmul.f32 %v1327, %v713
        %v1456 = vmul.f32 %v1328, %v802
        %v1457 = vmul.f32 %v1329, %v891
        %v1458 = vmul.f32 %v1330, %v980
        %v1459 = vmul.f32 %v1331, %v715
        %v1460 = vmul.f32 %v1332, %v804
        %v1461 = vmul.f32 %v1333, %v893
        %v1462 = vmul.f32 %v1334, %v982
        %v1463 = vmul.f32 %v1335, %v718
        %v1464 = vmul.f32 %v1336, %v807
        %v1465 = vmul.f32 %v1337, %v896
        %v1466 = vmul.f32 %v1338, %v985
        %v1467 = vmul.f32 %v1339, %v720
        %v1468 = vmul.f32 %v1340, %v809
        %v1469 = vmul.f32 %v1341, %v898
        %v1470 = vmul.f32 %v1342, %v987
        %v1471 = vmul.f32 %v1343, %v723
        %v1472 = vmul.f32 %v1344, %v812
        %v1473 = vmul.f32 %v1345, %v901
        %v1474 = vmul.f32 %v1346, %v990
        %v1475 = vmul.f32 %v1347, %v725
        %v1476 = vmul.f32 %v1348, %v814
        %v1477 = vmul.f32 %v1349, %v903
        %v1478 = vmul.f32 %v1350, %v992
        %v1479 = vmul.f32 %v1351, %v728
        %v1480 = vmul.f32 %v1352, %v817
        %v1481 = vmul.f32 %v1353, %v906
        %v1482 = vmul.f32 %v1354, %v995
        %v1483 = vmul.f32 %v1355, %v730
        %v1484 = vmul.f32 %v1356, %v819
        %v1485 = vmul.f32 %v1357, %v908
        %v1486 = vmul.f32 %v1358, %v997
        %v1487 = vmul.f32 %v1359, %v733
        %v1488 = vmul.f32 %v1360, %v822
        %v1489 = vmul.f32 %v1361, %v911
        %v1490 = vmul.f32 %v1362, %v1000
        %v1491 = vmul.f32 %v1363, %v735
        %v1492 = vmul.f32 %v1364, %v824
        %v1493 = vmul.f32 %v1365, %v913
        %v1494 = vmul.f32 %v1366, %v1002
        %v1495 = vmul.f32 %v1367, %v738
        %v1496 = vmul.f32 %v1368, %v827
        %v1497 = vmul.f32 %v1369, %v916
        %v1498 = vmul.f32 %v1370, %v1005
        %v1499 = vmul.f32 %v1371, %v740
        %v1500 = vmul.f32 %v1372, %v829
        %v1501 = vmul.f32 %v1373, %v918
        %v1502 = vmul.f32 %v1374, %v1007
        %v1503 = vmul.f32 %v1375, %v743
        %v1504 = vmul.f32 %v1376, %v832
        %v1505 = vmul.f32 %v1377, %v921
        %v1506 = vmul.f32 %v1378, %v1010
        %v1507 = vmul.f32 %v1379, %v745
        %v1508 = vmul.f32 %v1380, %v834
        %v1509 = vmul.f32 %v1381, %v923
        %v1510 = vmul.f32 %v1382, %v1012
        %v1511 = vmul.f32 %v1383, %v748
        %v1512 = vmul.f32 %v1384, %v837
        %v1513 = vmul.f32 %v1385, %v926
        %v1514 = vmul.f32 %v1386, %v1015
        %v1515 = vmul.f32 %v1387, %v750
        %v1516 = vmul.f32 %v1388, %v839
        %v1517 = vmul.f32 %v1389, %v928
        %v1518 = vmul.f32 %v1390, %v1017
        %v1519 = vmul.f32 %v1391, %v753
        %v1520 = vmul.f32 %v1392, %v842
        %v1521 = vmul.f32 %v1393, %v931
        %v1522 = vmul.f32 %v1394, %v1020
        %v1523 = vmul.f32 %v1395, %v755
        %v1524 = vmul.f32 %v1396, %v844
        %v1525 = vmul.f32 %v1397, %v933
        %v1526 = vmul.f32 %v1398, %v1022
        %v1527 = vmul.f32 %v1399, %v758
        %v1528 = vmul.f32 %v1400, %v847
        %v1529 = vmul.f32 %v1401, %v936
        %v1530 = vmul.f32 %v1402, %v1025
        %v1531 = vmul.f32 %v1403, %v760
        %v1532 = vmul.f32 %v1404, %v849
        %v1533 = vmul.f32 %v1405, %v938
        %v1534 = vmul.f32 %v1406, %v1027
        %v1535 = vmul.f32 %v1407, %v763
        %v1536 = vmul.f32 %v1408, %v852
        %v1537 = vmul.f32 %v1409, %v941
        %v1538 = vmul.f32 %v1410, %v1030
        %v1539 = vmul.f32 %v1411, %v765
        %v1540 = vmul.f32 %v1412, %v854
        %v1541 = vmul.f32 %v1413, %v943
        %v1542 = vmul.f32 %v1414, %v1032
        %v1543 = vmul.f32 %v1415, %v768
        %v1544 = vmul.f32 %v1416, %v857
        %v1545 = vmul.f32 %v1417, %v946
        %v1546 = vmul.f32 %v1418, %v1035
        %v1547 = vmul.f32 %v1419, %v770
        %v1548 = vmul.f32 %v1420, %v859
        %v1549 = vmul.f32 %v1421, %v948
        %v1550 = vmul.f32 %v1422, %v1037
        %v1551 = vadd.f32 %v693, %v1423
        %v1552 = vadd.f32 %v782, %v1424
        %v1553 = vadd.f32 %v871, %v1425
        %v1554 = vadd.f32 %v960, %v1426
        %v1555 = vadd.f32 %v695, %v1427
        %v1556 = vadd.f32 %v784, %v1428
        %v1557 = vadd.f32 %v873, %v1429
        %v1558 = vadd.f32 %v962, %v1430
        %v1559 = vadd.f32 %v698, %v1431
        %v1560 = vadd.f32 %v787, %v1432
        %v1561 = vadd.f32 %v876, %v1433
        %v1562 = vadd.f32 %v965, %v1434
        %v1563 = vadd.f32 %v700, %v1435
        %v1564 = vadd.f32 %v789, %v1436
        %v1565 = vadd.f32 %v878, %v1437
        %v1566 = vadd.f32 %v967, %v1438
        %v1567 = vadd.f32 %v703, %v1439
        %v1568 = vadd.f32 %v792, %v1440
        %v1569 = vadd.f32 %v881, %v1441
        %v1570 = vadd.f32 %v970, %v1442
        %v1571 = vadd.f32 %v705, %v1443
        %v1572 = vadd.f32 %v794, %v1444
        %v1573 = vadd.f32 %v883, %v1445
        %v1574 = vadd.f32 %v972, %v1446
        %v1575 = vadd.f32 %v708, %v1447
        %v1576 = vadd.f32 %v797, %v1448
        %v1577 = vadd.f32 %v886, %v1449
        %v1578 = vadd.f32 %v975, %v1450
        %v1579 = vadd.f32 %v710, %v1451
        %v1580 = vadd.f32 %v799, %v1452
        %v1581 = vadd.f32 %v888, %v1453
        %v1582 = vadd.f32 %v977, %v1454
        %v1583 = vadd.f32 %v713, %v1455
        %v1584 = vadd.f32 %v802, %v1456
        %v1585 = vadd.f32 %v891, %v1457
        %v1586 = vadd.f32 %v980, %v1458
        %v1587 = vadd.f32 %v715, %v1459
        %v1588 = vadd.f32 %v804, %v1460
        %v1589 = vadd.f32 %v893, %v1461
        %v1590 = vadd.f32 %v982, %v1462
        %v1591 = vadd.f32 %v718, %v1463
        %v1592 = vadd.f32 %v807, %v1464
        %v1593 = vadd.f32 %v896, %v1465
        %v1594 = vadd.f32 %v985, %v1466
        %v1595 = vadd.f32 %v720, %v1467
        %v1596 = vadd.f32 %v809, %v1468
        %v1597 = vadd.f32 %v898, %v1469
        %v1598 = vadd.f32 %v987, %v1470
        %v1599 = vadd.f32 %v723, %v1471
        %v1600 = vadd.f32 %v812, %v1472
        %v1601 = vadd.f32 %v901, %v1473
        %v1602 = vadd.f32 %v990, %v1474
        %v1603 = vadd.f32 %v725, %v1475
        %v1604 = vadd.f32 %v814, %v1476
        %v1605 = vadd.f32 %v903, %v1477
        %v1606 = vadd.f32 %v992, %v1478
        %v1607 = vadd.f32 %v728, %v1479
        %v1608 = vadd.f32 %v817, %v1480
        %v1609 = vadd.f32 %v906, %v1481
        %v1610 = vadd.f32 %v995, %v1482
        %v1611 = vadd.f32 %v730, %v1483
        %v1612 = vadd.f32 %v819, %v1484
        %v1613 = vadd.f32 %v908, %v1485
        %v1614 = vadd.f32 %v997, %v1486
        %v1615 = vadd.f32 %v733, %v1487
        %v1616 = vadd.f32 %v822, %v1488
        %v1617 = vadd.f32 %v911, %v1489
        %v1618 = vadd.f32 %v1000, %v1490
        %v1619 = vadd.f32 %v735, %v1491
        %v1620 = vadd.f32 %v824, %v1492
        %v1621 = vadd.f32 %v913, %v1493
        %v1622 = vadd.f32 %v1002, %v1494
        %v1623 = vadd.f32 %v738, %v1495
        %v1624 = vadd.f32 %v827, %v1496
        %v1625 = vadd.f32 %v916, %v1497
        %v1626 = vadd.f32 %v1005, %v1498
        %v1627 = vadd.f32 %v740, %v1499
        %v1628 = vadd.f32 %v829, %v1500
        %v1629 = vadd.f32 %v918, %v1501
        %v1630 = vadd.f32 %v1007, %v1502
        %v1631 = vadd.f32 %v743, %v1503
        %v1632 = vadd.f32 %v832, %v1504
        %v1633 = vadd.f32 %v921, %v1505
        %v1634 = vadd.f32 %v1010, %v1506
        %v1635 = vadd.f32 %v745, %v1507
        %v1636 = vadd.f32 %v834, %v1508
        %v1637 = vadd.f32 %v923, %v1509
        %v1638 = vadd.f32 %v1012, %v1510
        %v1639 = vadd.f32 %v748, %v1511
        %v1640 = vadd.f32 %v837, %v1512
        %v1641 = vadd.f32 %v926, %v1513
        %v1642 = vadd.f32 %v1015, %v1514
        %v1643 = vadd.f32 %v750, %v1515
        %v1644 = vadd.f32 %v839, %v1516
        %v1645 = vadd.f32 %v928, %v1517
        %v1646 = vadd.f32 %v1017, %v1518
        %v1647 = vadd.f32 %v753, %v1519
        %v1648 = vadd.f32 %v842, %v1520
        %v1649 = vadd.f32 %v931, %v1521
        %v1650 = vadd.f32 %v1020, %v1522
        %v1651 = vadd.f32 %v755, %v1523
        %v1652 = vadd.f32 %v844, %v1524
        %v1653 = vadd.f32 %v933, %v1525
        %v1654 = vadd.f32 %v1022, %v1526
        %v1655 = vadd.f32 %v758, %v1527
        %v1656 = vadd.f32 %v847, %v1528
        %v1657 = vadd.f32 %v936, %v1529
        %v1658 = vadd.f32 %v1025, %v1530
        %v1659 = vadd.f32 %v760, %v1531
        %v1660 = vadd.f32 %v849, %v1532
        %v1661 = vadd.f32 %v938, %v1533
        %v1662 = vadd.f32 %v1027, %v1534
        %v1663 = vadd.f32 %v763, %v1535
        %v1664 = vadd.f32 %v852, %v1536
        %v1665 = vadd.f32 %v941, %v1537
        %v1666 = vadd.f32 %v1030, %v1538
        %v1667 = vadd.f32 %v765, %v1539
        %v1668 = vadd.f32 %v854, %v1540
        %v1669 = vadd.f32 %v943, %v1541
        %v1670 = vadd.f32 %v1032, %v1542
        %v1671 = vadd.f32 %v768, %v1543
        %v1672 = vadd.f32 %v857, %v1544
        %v1673 = vadd.f32 %v946, %v1545
        %v1674 = vadd.f32 %v1035, %v1546
        %v1675 = vadd.f32 %v770, %v1547
        %v1676 = vadd.f32 %v859, %v1548
        %v1677 = vadd.f32 %v948, %v1549
        %v1678 = vadd.f32 %v1037, %v1550
        %v1679 = vmul.f32 %v1551, 0.7978846
        %v1680 = vmul.f32 %v1552, 0.7978846
        %v1681 = vmul.f32 %v1553, 0.7978846
        %v1682 = vmul.f32 %v1554, 0.7978846
        %v1683 = vmul.f32 %v1555, 0.7978846
        %v1684 = vmul.f32 %v1556, 0.7978846
        %v1685 = vmul.f32 %v1557, 0.7978846
        %v1686 = vmul.f32 %v1558, 0.7978846
        %v1687 = vmul.f32 %v1559, 0.7978846
        %v1688 = vmul.f32 %v1560, 0.7978846
        %v1689 = vmul.f32 %v1561, 0.7978846
        %v1690 = vmul.f32 %v1562, 0.7978846
        %v1691 = vmul.f32 %v1563, 0.7978846
        %v1692 = vmul.f32 %v1564, 0.7978846
        %v1693 = vmul.f32 %v1565, 0.7978846
        %v1694 = vmul.f32 %v1566, 0.7978846
        %v1695 = vmul.f32 %v1567, 0.7978846
        %v1696 = vmul.f32 %v1568, 0.7978846
        %v1697 = vmul.f32 %v1569, 0.7978846
        %v1698 = vmul.f32 %v1570, 0.7978846
        %v1699 = vmul.f32 %v1571, 0.7978846
        %v1700 = vmul.f32 %v1572, 0.7978846
        %v1701 = vmul.f32 %v1573, 0.7978846
        %v1702 = vmul.f32 %v1574, 0.7978846
        %v1703 = vmul.f32 %v1575, 0.7978846
        %v1704 = vmul.f32 %v1576, 0.7978846
        %v1705 = vmul.f32 %v1577, 0.7978846
        %v1706 = vmul.f32 %v1578, 0.7978846
        %v1707 = vmul.f32 %v1579, 0.7978846
        %v1708 = vmul.f32 %v1580, 0.7978846
        %v1709 = vmul.f32 %v1581, 0.7978846
        %v1710 = vmul.f32 %v1582, 0.7978846
        %v1711 = vmul.f32 %v1583, 0.7978846
        %v1712 = vmul.f32 %v1584, 0.7978846
        %v1713 = vmul.f32 %v1585, 0.7978846
        %v1714 = vmul.f32 %v1586, 0.7978846
        %v1715 = vmul.f32 %v1587, 0.7978846
        %v1716 = vmul.f32 %v1588, 0.7978846
        %v1717 = vmul.f32 %v1589, 0.7978846
        %v1718 = vmul.f32 %v1590, 0.7978846
        %v1719 = vmul.f32 %v1591, 0.7978846
        %v1720 = vmul.f32 %v1592, 0.7978846
        %v1721 = vmul.f32 %v1593, 0.7978846
        %v1722 = vmul.f32 %v1594, 0.7978846
        %v1723 = vmul.f32 %v1595, 0.7978846
        %v1724 = vmul.f32 %v1596, 0.7978846
        %v1725 = vmul.f32 %v1597, 0.7978846
        %v1726 = vmul.f32 %v1598, 0.7978846
        %v1727 = vmul.f32 %v1599, 0.7978846
        %v1728 = vmul.f32 %v1600, 0.7978846
        %v1729 = vmul.f32 %v1601, 0.7978846
        %v1730 = vmul.f32 %v1602, 0.7978846
        %v1731 = vmul.f32 %v1603, 0.7978846
        %v1732 = vmul.f32 %v1604, 0.7978846
        %v1733 = vmul.f32 %v1605, 0.7978846
        %v1734 = vmul.f32 %v1606, 0.7978846
        %v1735 = vmul.f32 %v1607, 0.7978846
        %v1736 = vmul.f32 %v1608, 0.7978846
        %v1737 = vmul.f32 %v1609, 0.7978846
        %v1738 = vmul.f32 %v1610, 0.7978846
        %v1739 = vmul.f32 %v1611, 0.7978846
        %v1740 = vmul.f32 %v1612, 0.7978846
        %v1741 = vmul.f32 %v1613, 0.7978846
        %v1742 = vmul.f32 %v1614, 0.7978846
        %v1743 = vmul.f32 %v1615, 0.7978846
        %v1744 = vmul.f32 %v1616, 0.7978846
        %v1745 = vmul.f32 %v1617, 0.7978846
        %v1746 = vmul.f32 %v1618, 0.7978846
        %v1747 = vmul.f32 %v1619, 0.7978846
        %v1748 = vmul.f32 %v1620, 0.7978846
        %v1749 = vmul.f32 %v1621, 0.7978846
        %v1750 = vmul.f32 %v1622, 0.7978846
        %v1751 = vmul.f32 %v1623, 0.7978846
        %v1752 = vmul.f32 %v1624, 0.7978846
        %v1753 = vmul.f32 %v1625, 0.7978846
        %v1754 = vmul.f32 %v1626, 0.7978846
        %v1755 = vmul.f32 %v1627, 0.7978846
        %v1756 = vmul.f32 %v1628, 0.7978846
        %v1757 = vmul.f32 %v1629, 0.7978846
        %v1758 = vmul.f32 %v1630, 0.7978846
        %v1759 = vmul.f32 %v1631, 0.7978846
        %v1760 = vmul.f32 %v1632, 0.7978846
        %v1761 = vmul.f32 %v1633, 0.7978846
        %v1762 = vmul.f32 %v1634, 0.7978846
        %v1763 = vmul.f32 %v1635, 0.7978846
        %v1764 = vmul.f32 %v1636, 0.7978846
        %v1765 = vmul.f32 %v1637, 0.7978846
        %v1766 = vmul.f32 %v1638, 0.7978846
        %v1767 = vmul.f32 %v1639, 0.7978846
        %v1768 = vmul.f32 %v1640, 0.7978846
        %v1769 = vmul.f32 %v1641, 0.7978846
        %v1770 = vmul.f32 %v1642, 0.7978846
        %v1771 = vmul.f32 %v1643, 0.7978846
        %v1772 = vmul.f32 %v1644, 0.7978846
        %v1773 = vmul.f32 %v1645, 0.7978846
        %v1774 = vmul.f32 %v1646, 0.7978846
        %v1775 = vmul.f32 %v1647, 0.7978846
        %v1776 = vmul.f32 %v1648, 0.7978846
        %v1777 = vmul.f32 %v1649, 0.7978846
        %v1778 = vmul.f32 %v1650, 0.7978846
        %v1779 = vmul.f32 %v1651, 0.7978846
        %v1780 = vmul.f32 %v1652, 0.7978846
        %v1781 = vmul.f32 %v1653, 0.7978846
        %v1782 = vmul.f32 %v1654, 0.7978846
        %v1783 = vmul.f32 %v1655, 0.7978846
        %v1784 = vmul.f32 %v1656, 0.7978846
        %v1785 = vmul.f32 %v1657, 0.7978846
        %v1786 = vmul.f32 %v1658, 0.7978846
        %v1787 = vmul.f32 %v1659, 0.7978846
        %v1788 = vmul.f32 %v1660, 0.7978846
        %v1789 = vmul.f32 %v1661, 0.7978846
        %v1790 = vmul.f32 %v1662, 0.7978846
        %v1791 = vmul.f32 %v1663, 0.7978846
        %v1792 = vmul.f32 %v1664, 0.7978846
        %v1793 = vmul.f32 %v1665, 0.7978846
        %v1794 = vmul.f32 %v1666, 0.7978846
        %v1795 = vmul.f32 %v1667, 0.7978846
        %v1796 = vmul.f32 %v1668, 0.7978846
        %v1797 = vmul.f32 %v1669, 0.7978846
        %v1798 = vmul.f32 %v1670, 0.7978846
        %v1799 = vmul.f32 %v1671, 0.7978846
        %v1800 = vmul.f32 %v1672, 0.7978846
        %v1801 = vmul.f32 %v1673, 0.7978846
        %v1802 = vmul.f32 %v1674, 0.7978846
        %v1803 = vmul.f32 %v1675, 0.7978846
        %v1804 = vmul.f32 %v1676, 0.7978846
        %v1805 = vmul.f32 %v1677, 0.7978846
        %v1806 = vmul.f32 %v1678, 0.7978846
        %v1807 = vtanh.pop %v1679
        %v1808 = vtanh.pop %v1680
        %v1809 = vtanh.pop %v1681
        %v1810 = vtanh.pop %v1682
        %v1811 = vtanh.pop %v1683
        %v1812 = vtanh.pop %v1684
        %v1813 = vtanh.pop %v1685
        %v1814 = vtanh.pop %v1686
        %v1815 = vtanh.pop %v1687
        %v1816 = vtanh.pop %v1688
        %v1817 = vtanh.pop %v1689
        %v1818 = vtanh.pop %v1690
        %v1819 = vtanh.pop %v1691
        %v1820 = vtanh.pop %v1692
        %v1821 = vtanh.pop %v1693
        %v1822 = vtanh.pop %v1694
        %v1823 = vtanh.pop %v1695
        %v1824 = vtanh.pop %v1696
        %v1825 = vtanh.pop %v1697
        %v1826 = vtanh.pop %v1698
        %v1827 = vtanh.pop %v1699
        %v1828 = vtanh.pop %v1700
        %v1829 = vtanh.pop %v1701
        %v1830 = vtanh.pop %v1702
        %v1831 = vtanh.pop %v1703
        %v1832 = vtanh.pop %v1704
        %v1833 = vtanh.pop %v1705
        %v1834 = vtanh.pop %v1706
        %v1835 = vtanh.pop %v1707
        %v1836 = vtanh.pop %v1708
        %v1837 = vtanh.pop %v1709
        %v1838 = vtanh.pop %v1710
        %v1839 = vtanh.pop %v1711
        %v1840 = vtanh.pop %v1712
        %v1841 = vtanh.pop %v1713
        %v1842 = vtanh.pop %v1714
        %v1843 = vtanh.pop %v1715
        %v1844 = vtanh.pop %v1716
        %v1845 = vtanh.pop %v1717
        %v1846 = vtanh.pop %v1718
        %v1847 = vtanh.pop %v1719
        %v1848 = vtanh.pop %v1720
        %v1849 = vtanh.pop %v1721
        %v1850 = vtanh.pop %v1722
        %v1851 = vtanh.pop %v1723
        %v1852 = vtanh.pop %v1724
        %v1853 = vtanh.pop %v1725
        %v1854 = vtanh.pop %v1726
        %v1855 = vtanh.pop %v1727
        %v1856 = vtanh.pop %v1728
        %v1857 = vtanh.pop %v1729
        %v1858 = vtanh.pop %v1730
        %v1859 = vtanh.pop %v1731
        %v1860 = vtanh.pop %v1732
        %v1861 = vtanh.pop %v1733
        %v1862 = vtanh.pop %v1734
        %v1863 = vtanh.pop %v1735
        %v1864 = vtanh.pop %v1736
        %v1865 = vtanh.pop %v1737
        %v1866 = vtanh.pop %v1738
        %v1867 = vtanh.pop %v1739
        %v1868 = vtanh.pop %v1740
        %v1869 = vtanh.pop %v1741
        %v1870 = vtanh.pop %v1742
        %v1871 = vtanh.pop %v1743
        %v1872 = vtanh.pop %v1744
        %v1873 = vtanh.pop %v1745
        %v1874 = vtanh.pop %v1746
        %v1875 = vtanh.pop %v1747
        %v1876 = vtanh.pop %v1748
        %v1877 = vtanh.pop %v1749
        %v1878 = vtanh.pop %v1750
        %v1879 = vtanh.pop %v1751
        %v1880 = vtanh.pop %v1752
        %v1881 = vtanh.pop %v1753
        %v1882 = vtanh.pop %v1754
        %v1883 = vtanh.pop %v1755
        %v1884 = vtanh.pop %v1756
        %v1885 = vtanh.pop %v1757
        %v1886 = vtanh.pop %v1758
        %v1887 = vtanh.pop %v1759
        %v1888 = vtanh.pop %v1760
        %v1889 = vtanh.pop %v1761
        %v1890 = vtanh.pop %v1762
        %v1891 = vtanh.pop %v1763
        %v1892 = vtanh.pop %v1764
        %v1893 = vtanh.pop %v1765
        %v1894 = vtanh.pop %v1766
        %v1895 = vtanh.pop %v1767
        %v1896 = vtanh.pop %v1768
        %v1897 = vtanh.pop %v1769
        %v1898 = vtanh.pop %v1770
        %v1899 = vtanh.pop %v1771
        %v1900 = vtanh.pop %v1772
        %v1901 = vtanh.pop %v1773
        %v1902 = vtanh.pop %v1774
        %v1903 = vtanh.pop %v1775
        %v1904 = vtanh.pop %v1776
        %v1905 = vtanh.pop %v1777
        %v1906 = vtanh.pop %v1778
        %v1907 = vtanh.pop %v1779
        %v1908 = vtanh.pop %v1780
        %v1909 = vtanh.pop %v1781
        %v1910 = vtanh.pop %v1782
        %v1911 = vtanh.pop %v1783
        %v1912 = vtanh.pop %v1784
        %v1913 = vtanh.pop %v1785
        %v1914 = vtanh.pop %v1786
        %v1915 = vtanh.pop %v1787
        %v1916 = vtanh.pop %v1788
        %v1917 = vtanh.pop %v1789
        %v1918 = vtanh.pop %v1790
        %v1919 = vtanh.pop %v1791
        %v1920 = vtanh.pop %v1792
        %v1921 = vtanh.pop %v1793
        %v1922 = vtanh.pop %v1794
        %v1923 = vtanh.pop %v1795
        %v1924 = vtanh.pop %v1796
        %v1925 = vtanh.pop %v1797
        %v1926 = vtanh.pop %v1798
        %v1927 = vtanh.pop %v1799
        %v1928 = vtanh.pop %v1800
        %v1929 = vtanh.pop %v1801
        %v1930 = vtanh.pop %v1802
        %v1931 = vtanh.pop %v1803
        %v1932 = vtanh.pop %v1804
        %v1933 = vtanh.pop %v1805
        %v1934 = vtanh.pop %v1806
        %v1935 = vadd.f32 %v1807, 1.0
        %v1936 = vadd.f32 %v1808, 1.0
        %v1937 = vadd.f32 %v1809, 1.0
        %v1938 = vadd.f32 %v1810, 1.0
        %v1939 = vadd.f32 %v1811, 1.0
        %v1940 = vadd.f32 %v1812, 1.0
        %v1941 = vadd.f32 %v1813, 1.0
        %v1942 = vadd.f32 %v1814, 1.0
        %v1943 = vadd.f32 %v1815, 1.0
        %v1944 = vadd.f32 %v1816, 1.0
        %v1945 = vadd.f32 %v1817, 1.0
        %v1946 = vadd.f32 %v1818, 1.0
        %v1947 = vadd.f32 %v1819, 1.0
        %v1948 = vadd.f32 %v1820, 1.0
        %v1949 = vadd.f32 %v1821, 1.0
        %v1950 = vadd.f32 %v1822, 1.0
        %v1951 = vadd.f32 %v1823, 1.0
        %v1952 = vadd.f32 %v1824, 1.0
        %v1953 = vadd.f32 %v1825, 1.0
        %v1954 = vadd.f32 %v1826, 1.0
        %v1955 = vadd.f32 %v1827, 1.0
        %v1956 = vadd.f32 %v1828, 1.0
        %v1957 = vadd.f32 %v1829, 1.0
        %v1958 = vadd.f32 %v1830, 1.0
        %v1959 = vadd.f32 %v1831, 1.0
        %v1960 = vadd.f32 %v1832, 1.0
        %v1961 = vadd.f32 %v1833, 1.0
        %v1962 = vadd.f32 %v1834, 1.0
        %v1963 = vadd.f32 %v1835, 1.0
        %v1964 = vadd.f32 %v1836, 1.0
        %v1965 = vadd.f32 %v1837, 1.0
        %v1966 = vadd.f32 %v1838, 1.0
        %v1967 = vadd.f32 %v1839, 1.0
        %v1968 = vadd.f32 %v1840, 1.0
        %v1969 = vadd.f32 %v1841, 1.0
        %v1970 = vadd.f32 %v1842, 1.0
        %v1971 = vadd.f32 %v1843, 1.0
        %v1972 = vadd.f32 %v1844, 1.0
        %v1973 = vadd.f32 %v1845, 1.0
        %v1974 = vadd.f32 %v1846, 1.0
        %v1975 = vadd.f32 %v1847, 1.0
        %v1976 = vadd.f32 %v1848, 1.0
        %v1977 = vadd.f32 %v1849, 1.0
        %v1978 = vadd.f32 %v1850, 1.0
        %v1979 = vadd.f32 %v1851, 1.0
        %v1980 = vadd.f32 %v1852, 1.0
        %v1981 = vadd.f32 %v1853, 1.0
        %v1982 = vadd.f32 %v1854, 1.0
        %v1983 = vadd.f32 %v1855, 1.0
        %v1984 = vadd.f32 %v1856, 1.0
        %v1985 = vadd.f32 %v1857, 1.0
        %v1986 = vadd.f32 %v1858, 1.0
        %v1987 = vadd.f32 %v1859, 1.0
        %v1988 = vadd.f32 %v1860, 1.0
        %v1989 = vadd.f32 %v1861, 1.0
        %v1990 = vadd.f32 %v1862, 1.0
        %v1991 = vadd.f32 %v1863, 1.0
        %v1992 = vadd.f32 %v1864, 1.0
        %v1993 = vadd.f32 %v1865, 1.0
        %v1994 = vadd.f32 %v1866, 1.0
        %v1995 = vadd.f32 %v1867, 1.0
        %v1996 = vadd.f32 %v1868, 1.0
        %v1997 = vadd.f32 %v1869, 1.0
        %v1998 = vadd.f32 %v1870, 1.0
        %v1999 = vadd.f32 %v1871, 1.0
        %v2000 = vadd.f32 %v1872, 1.0
        %v2001 = vadd.f32 %v1873, 1.0
        %v2002 = vadd.f32 %v1874, 1.0
        %v2003 = vadd.f32 %v1875, 1.0
        %v2004 = vadd.f32 %v1876, 1.0
        %v2005 = vadd.f32 %v1877, 1.0
        %v2006 = vadd.f32 %v1878, 1.0
        %v2007 = vadd.f32 %v1879, 1.0
        %v2008 = vadd.f32 %v1880, 1.0
        %v2009 = vadd.f32 %v1881, 1.0
        %v2010 = vadd.f32 %v1882, 1.0
        %v2011 = vadd.f32 %v1883, 1.0
        %v2012 = vadd.f32 %v1884, 1.0
        %v2013 = vadd.f32 %v1885, 1.0
        %v2014 = vadd.f32 %v1886, 1.0
        %v2015 = vadd.f32 %v1887, 1.0
        %v2016 = vadd.f32 %v1888, 1.0
        %v2017 = vadd.f32 %v1889, 1.0
        %v2018 = vadd.f32 %v1890, 1.0
        %v2019 = vadd.f32 %v1891, 1.0
        %v2020 = vadd.f32 %v1892, 1.0
        %v2021 = vadd.f32 %v1893, 1.0
        %v2022 = vadd.f32 %v1894, 1.0
        %v2023 = vadd.f32 %v1895, 1.0
        %v2024 = vadd.f32 %v1896, 1.0
        %v2025 = vadd.f32 %v1897, 1.0
        %v2026 = vadd.f32 %v1898, 1.0
        %v2027 = vadd.f32 %v1899, 1.0
        %v2028 = vadd.f32 %v1900, 1.0
        %v2029 = vadd.f32 %v1901, 1.0
        %v2030 = vadd.f32 %v1902, 1.0
        %v2031 = vadd.f32 %v1903, 1.0
        %v2032 = vadd.f32 %v1904, 1.0
        %v2033 = vadd.f32 %v1905, 1.0
        %v2034 = vadd.f32 %v1906, 1.0
        %v2035 = vadd.f32 %v1907, 1.0
        %v2036 = vadd.f32 %v1908, 1.0
        %v2037 = vadd.f32 %v1909, 1.0
        %v2038 = vadd.f32 %v1910, 1.0
        %v2039 = vadd.f32 %v1911, 1.0
        %v2040 = vadd.f32 %v1912, 1.0
        %v2041 = vadd.f32 %v1913, 1.0
        %v2042 = vadd.f32 %v1914, 1.0
        %v2043 = vadd.f32 %v1915, 1.0
        %v2044 = vadd.f32 %v1916, 1.0
        %v2045 = vadd.f32 %v1917, 1.0
        %v2046 = vadd.f32 %v1918, 1.0
        %v2047 = vadd.f32 %v1919, 1.0
        %v2048 = vadd.f32 %v1920, 1.0
        %v2049 = vadd.f32 %v1921, 1.0
        %v2050 = vadd.f32 %v1922, 1.0
        %v2051 = vadd.f32 %v1923, 1.0
        %v2052 = vadd.f32 %v1924, 1.0
        %v2053 = vadd.f32 %v1925, 1.0
        %v2054 = vadd.f32 %v1926, 1.0
        %v2055 = vadd.f32 %v1927, 1.0
        %v2056 = vadd.f32 %v1928, 1.0
        %v2057 = vadd.f32 %v1929, 1.0
        %v2058 = vadd.f32 %v1930, 1.0
        %v2059 = vadd.f32 %v1931, 1.0
        %v2060 = vadd.f32 %v1932, 1.0
        %v2061 = vadd.f32 %v1933, 1.0
        %v2062 = vadd.f32 %v1934, 1.0
        %v2063 = vmul.f32 %v1039, %v1935
        %v2064 = vmul.f32 %v1040, %v1936
        %v2065 = vmul.f32 %v1041, %v1937
        %v2066 = vmul.f32 %v1042, %v1938
        %v2067 = vmul.f32 %v1043, %v1939
        %v2068 = vmul.f32 %v1044, %v1940
        %v2069 = vmul.f32 %v1045, %v1941
        %v2070 = vmul.f32 %v1046, %v1942
        %v2071 = vmul.f32 %v1047, %v1943
        %v2072 = vmul.f32 %v1048, %v1944
        %v2073 = vmul.f32 %v1049, %v1945
        %v2074 = vmul.f32 %v1050, %v1946
        %v2075 = vmul.f32 %v1051, %v1947
        %v2076 = vmul.f32 %v1052, %v1948
        %v2077 = vmul.f32 %v1053, %v1949
        %v2078 = vmul.f32 %v1054, %v1950
        %v2079 = vmul.f32 %v1055, %v1951
        %v2080 = vmul.f32 %v1056, %v1952
        %v2081 = vmul.f32 %v1057, %v1953
        %v2082 = vmul.f32 %v1058, %v1954
        %v2083 = vmul.f32 %v1059, %v1955
        %v2084 = vmul.f32 %v1060, %v1956
        %v2085 = vmul.f32 %v1061, %v1957
        %v2086 = vmul.f32 %v1062, %v1958
        %v2087 = vmul.f32 %v1063, %v1959
        %v2088 = vmul.f32 %v1064, %v1960
        %v2089 = vmul.f32 %v1065, %v1961
        %v2090 = vmul.f32 %v1066, %v1962
        %v2091 = vmul.f32 %v1067, %v1963
        %v2092 = vmul.f32 %v1068, %v1964
        %v2093 = vmul.f32 %v1069, %v1965
        %v2094 = vmul.f32 %v1070, %v1966
        %v2095 = vmul.f32 %v1071, %v1967
        %v2096 = vmul.f32 %v1072, %v1968
        %v2097 = vmul.f32 %v1073, %v1969
        %v2098 = vmul.f32 %v1074, %v1970
        %v2099 = vmul.f32 %v1075, %v1971
        %v2100 = vmul.f32 %v1076, %v1972
        %v2101 = vmul.f32 %v1077, %v1973
        %v2102 = vmul.f32 %v1078, %v1974
        %v2103 = vmul.f32 %v1079, %v1975
        %v2104 = vmul.f32 %v1080, %v1976
        %v2105 = vmul.f32 %v1081, %v1977
        %v2106 = vmul.f32 %v1082, %v1978
        %v2107 = vmul.f32 %v1083, %v1979
        %v2108 = vmul.f32 %v1084, %v1980
        %v2109 = vmul.f32 %v1085, %v1981
        %v2110 = vmul.f32 %v1086, %v1982
        %v2111 = vmul.f32 %v1087, %v1983
        %v2112 = vmul.f32 %v1088, %v1984
        %v2113 = vmul.f32 %v1089, %v1985
        %v2114 = vmul.f32 %v1090, %v1986
        %v2115 = vmul.f32 %v1091, %v1987
        %v2116 = vmul.f32 %v1092, %v1988
        %v2117 = vmul.f32 %v1093, %v1989
        %v2118 = vmul.f32 %v1094, %v1990
        %v2119 = vmul.f32 %v1095, %v1991
        %v2120 = vmul.f32 %v1096, %v1992
        %v2121 = vmul.f32 %v1097, %v1993
        %v2122 = vmul.f32 %v1098, %v1994
        %v2123 = vmul.f32 %v1099, %v1995
        %v2124 = vmul.f32 %v1100, %v1996
        %v2125 = vmul.f32 %v1101, %v1997
        %v2126 = vmul.f32 %v1102, %v1998
        %v2127 = vmul.f32 %v1103, %v1999
        %v2128 = vmul.f32 %v1104, %v2000
        %v2129 = vmul.f32 %v1105, %v2001
        %v2130 = vmul.f32 %v1106, %v2002
        %v2131 = vmul.f32 %v1107, %v2003
        %v2132 = vmul.f32 %v1108, %v2004
        %v2133 = vmul.f32 %v1109, %v2005
        %v2134 = vmul.f32 %v1110, %v2006
        %v2135 = vmul.f32 %v1111, %v2007
        %v2136 = vmul.f32 %v1112, %v2008
        %v2137 = vmul.f32 %v1113, %v2009
        %v2138 = vmul.f32 %v1114, %v2010
        %v2139 = vmul.f32 %v1115, %v2011
        %v2140 = vmul.f32 %v1116, %v2012
        %v2141 = vmul.f32 %v1117, %v2013
        %v2142 = vmul.f32 %v1118, %v2014
        %v2143 = vmul.f32 %v1119, %v2015
        %v2144 = vmul.f32 %v1120, %v2016
        %v2145 = vmul.f32 %v1121, %v2017
        %v2146 = vmul.f32 %v1122, %v2018
        %v2147 = vmul.f32 %v1123, %v2019
        %v2148 = vmul.f32 %v1124, %v2020
        %v2149 = vmul.f32 %v1125, %v2021
        %v2150 = vmul.f32 %v1126, %v2022
        %v2151 = vmul.f32 %v1127, %v2023
        %v2152 = vmul.f32 %v1128, %v2024
        %v2153 = vmul.f32 %v1129, %v2025
        %v2154 = vmul.f32 %v1130, %v2026
        %v2155 = vmul.f32 %v1131, %v2027
        %v2156 = vmul.f32 %v1132, %v2028
        %v2157 = vmul.f32 %v1133, %v2029
        %v2158 = vmul.f32 %v1134, %v2030
        %v2159 = vmul.f32 %v1135, %v2031
        %v2160 = vmul.f32 %v1136, %v2032
        %v2161 = vmul.f32 %v1137, %v2033
        %v2162 = vmul.f32 %v1138, %v2034
        %v2163 = vmul.f32 %v1139, %v2035
        %v2164 = vmul.f32 %v1140, %v2036
        %v2165 = vmul.f32 %v1141, %v2037
        %v2166 = vmul.f32 %v1142, %v2038
        %v2167 = vmul.f32 %v1143, %v2039
        %v2168 = vmul.f32 %v1144, %v2040
        %v2169 = vmul.f32 %v1145, %v2041
        %v2170 = vmul.f32 %v1146, %v2042
        %v2171 = vmul.f32 %v1147, %v2043
        %v2172 = vmul.f32 %v1148, %v2044
        %v2173 = vmul.f32 %v1149, %v2045
        %v2174 = vmul.f32 %v1150, %v2046
        %v2175 = vmul.f32 %v1151, %v2047
        %v2176 = vmul.f32 %v1152, %v2048
        %v2177 = vmul.f32 %v1153, %v2049
        %v2178 = vmul.f32 %v1154, %v2050
        %v2179 = vmul.f32 %v1155, %v2051
        %v2180 = vmul.f32 %v1156, %v2052
        %v2181 = vmul.f32 %v1157, %v2053
        %v2182 = vmul.f32 %v1158, %v2054
        %v2183 = vmul.f32 %v1159, %v2055
        %v2184 = vmul.f32 %v1160, %v2056
        %v2185 = vmul.f32 %v1161, %v2057
        %v2186 = vmul.f32 %v1162, %v2058
        %v2187 = vmul.f32 %v1163, %v2059
        %v2188 = vmul.f32 %v1164, %v2060
        %v2189 = vmul.f32 %v1165, %v2061
        %v2190 = vmul.f32 %v1166, %v2062
        %v2191 = vpack.c.bf16 %v2067, %v2063
        %v2192 = vpack.c.bf16 %v2068, %v2064
        %v2193 = vpack.c.bf16 %v2069, %v2065
        %v2194 = vpack.c.bf16 %v2070, %v2066
        %v2195 = vpack.c.bf16 %v2075, %v2071
        %v2196 = vpack.c.bf16 %v2076, %v2072
        %v2197 = vpack.c.bf16 %v2077, %v2073
        %v2198 = vpack.c.bf16 %v2078, %v2074
        %v2199 = vpack.c.bf16 %v2083, %v2079
        %v2200 = vpack.c.bf16 %v2084, %v2080
        %v2201 = vpack.c.bf16 %v2085, %v2081
        %v2202 = vpack.c.bf16 %v2086, %v2082
        %v2203 = vpack.c.bf16 %v2091, %v2087
        %v2204 = vpack.c.bf16 %v2092, %v2088
        %v2205 = vpack.c.bf16 %v2093, %v2089
        %v2206 = vpack.c.bf16 %v2094, %v2090
        %v2207 = vpack.c.bf16 %v2099, %v2095
        %v2208 = vpack.c.bf16 %v2100, %v2096
        %v2209 = vpack.c.bf16 %v2101, %v2097
        %v2210 = vpack.c.bf16 %v2102, %v2098
        %v2211 = vpack.c.bf16 %v2107, %v2103
        %v2212 = vpack.c.bf16 %v2108, %v2104
        %v2213 = vpack.c.bf16 %v2109, %v2105
        %v2214 = vpack.c.bf16 %v2110, %v2106
        %v2215 = vpack.c.bf16 %v2115, %v2111
        %v2216 = vpack.c.bf16 %v2116, %v2112
        %v2217 = vpack.c.bf16 %v2117, %v2113
        %v2218 = vpack.c.bf16 %v2118, %v2114
        %v2219 = vpack.c.bf16 %v2123, %v2119
        %v2220 = vpack.c.bf16 %v2124, %v2120
        %v2221 = vpack.c.bf16 %v2125, %v2121
        %v2222 = vpack.c.bf16 %v2126, %v2122
        %v2223 = vpack.c.bf16 %v2131, %v2127
        %v2224 = vpack.c.bf16 %v2132, %v2128
        %v2225 = vpack.c.bf16 %v2133, %v2129
        %v2226 = vpack.c.bf16 %v2134, %v2130
        %v2227 = vpack.c.bf16 %v2139, %v2135
        %v2228 = vpack.c.bf16 %v2140, %v2136
        %v2229 = vpack.c.bf16 %v2141, %v2137
        %v2230 = vpack.c.bf16 %v2142, %v2138
        %v2231 = vpack.c.bf16 %v2147, %v2143
        %v2232 = vpack.c.bf16 %v2148, %v2144
        %v2233 = vpack.c.bf16 %v2149, %v2145
        %v2234 = vpack.c.bf16 %v2150, %v2146
        %v2235 = vpack.c.bf16 %v2155, %v2151
        %v2236 = vpack.c.bf16 %v2156, %v2152
        %v2237 = vpack.c.bf16 %v2157, %v2153
        %v2238 = vpack.c.bf16 %v2158, %v2154
        %v2239 = vpack.c.bf16 %v2163, %v2159
        %v2240 = vpack.c.bf16 %v2164, %v2160
        %v2241 = vpack.c.bf16 %v2165, %v2161
        %v2242 = vpack.c.bf16 %v2166, %v2162
        %v2243 = vpack.c.bf16 %v2171, %v2167
        %v2244 = vpack.c.bf16 %v2172, %v2168
        %v2245 = vpack.c.bf16 %v2173, %v2169
        %v2246 = vpack.c.bf16 %v2174, %v2170
        %v2247 = vpack.c.bf16 %v2179, %v2175
        %v2248 = vpack.c.bf16 %v2180, %v2176
        %v2249 = vpack.c.bf16 %v2181, %v2177
        %v2250 = vpack.c.bf16 %v2182, %v2178
        %v2251 = vpack.c.bf16 %v2187, %v2183
        %v2252 = vpack.c.bf16 %v2188, %v2184
        %v2253 = vpack.c.bf16 %v2189, %v2185
        %v2254 = vpack.c.bf16 %v2190, %v2186
        %v2255 = vld [vmem:[%s6] sm:$0xf]
        %v2256 = vld [vmem:[%s6 + $0x4] sm:$0xf]
        %v2257 = vld [vmem:[%s6 + $0x8] sm:$0xf]
        %v2258 = vld [vmem:[%s6 + $0xc] sm:$0xf]
        %v2259 = vld [vmem:[%s6 + $0x10] sm:$0xf]
        %v2260 = vld [vmem:[%s6 + $0x14] sm:$0xf]
        %v2261 = vld [vmem:[%s6 + $0x18] sm:$0xf]
        %v2262 = vld [vmem:[%s6 + $0x1c] sm:$0xf]
        %v2263 = vld [vmem:[%s6 + $0x20] sm:$0xf]
        %v2264 = vld [vmem:[%s6 + $0x24] sm:$0xf]
        %v2265 = vld [vmem:[%s6 + $0x28] sm:$0xf]
        %v2266 = vld [vmem:[%s6 + $0x2c] sm:$0xf]
        %v2267 = vld [vmem:[%s6 + $0x30] sm:$0xf]
        %v2268 = vld [vmem:[%s6 + $0x34] sm:$0xf]
        %v2269 = vld [vmem:[%s6 + $0x38] sm:$0xf]
        %v2270 = vld [vmem:[%s6 + $0x3c] sm:$0xf]
        %v2271 = vld [vmem:[%s6 + $0x40] sm:$0xf]
        %v2272 = vld [vmem:[%s6 + $0x44] sm:$0xf]
        %v2273 = vld [vmem:[%s6 + $0x48] sm:$0xf]
        %v2274 = vld [vmem:[%s6 + $0x4c] sm:$0xf]
        %v2275 = vld [vmem:[%s6 + $0x50] sm:$0xf]
        %v2276 = vld [vmem:[%s6 + $0x54] sm:$0xf]
        %v2277 = vld [vmem:[%s6 + $0x58] sm:$0xf]
        %v2278 = vld [vmem:[%s6 + $0x5c] sm:$0xf]
        %v2279 = vld [vmem:[%s6 + $0x60] sm:$0xf]
        %v2280 = vld [vmem:[%s6 + $0x64] sm:$0xf]
        %v2281 = vld [vmem:[%s6 + $0x68] sm:$0xf]
        %v2282 = vld [vmem:[%s6 + $0x6c] sm:$0xf]
        %v2283 = vld [vmem:[%s6 + $0x70] sm:$0xf]
        %v2284 = vld [vmem:[%s6 + $0x74] sm:$0xf]
        %v2285 = vld [vmem:[%s6 + $0x78] sm:$0xf]
        %v2286 = vld [vmem:[%s6 + $0x7c] sm:$0xf]
        %v2287 = vld [vmem:[%s6 + $0x80] sm:$0xf]
        %v2288 = vld [vmem:[%s6 + $0x84] sm:$0xf]
        %v2289 = vld [vmem:[%s6 + $0x88] sm:$0xf]
        %v2290 = vld [vmem:[%s6 + $0x8c] sm:$0xf]
        %v2291 = vld [vmem:[%s6 + $0x90] sm:$0xf]
        %v2292 = vld [vmem:[%s6 + $0x94] sm:$0xf]
        %v2293 = vld [vmem:[%s6 + $0x98] sm:$0xf]
        %v2294 = vld [vmem:[%s6 + $0x9c] sm:$0xf]
        %v2295 = vld [vmem:[%s6 + $0xa0] sm:$0xf]
        %v2296 = vld [vmem:[%s6 + $0xa4] sm:$0xf]
        %v2297 = vld [vmem:[%s6 + $0xa8] sm:$0xf]
        %v2298 = vld [vmem:[%s6 + $0xac] sm:$0xf]
        %v2299 = vld [vmem:[%s6 + $0xb0] sm:$0xf]
        %v2300 = vld [vmem:[%s6 + $0xb4] sm:$0xf]
        %v2301 = vld [vmem:[%s6 + $0xb8] sm:$0xf]
        %v2302 = vld [vmem:[%s6 + $0xbc] sm:$0xf]
        %v2303 = vld [vmem:[%s6 + $0xc0] sm:$0xf]
        %v2304 = vld [vmem:[%s6 + $0xc4] sm:$0xf]
        %v2305 = vld [vmem:[%s6 + $0xc8] sm:$0xf]
        %v2306 = vld [vmem:[%s6 + $0xcc] sm:$0xf]
        %v2307 = vld [vmem:[%s6 + $0xd0] sm:$0xf]
        %v2308 = vld [vmem:[%s6 + $0xd4] sm:$0xf]
        %v2309 = vld [vmem:[%s6 + $0xd8] sm:$0xf]
        %v2310 = vld [vmem:[%s6 + $0xdc] sm:$0xf]
        %v2311 = vld [vmem:[%s6 + $0xe0] sm:$0xf]
        %v2312 = vld [vmem:[%s6 + $0xe4] sm:$0xf]
        %v2313 = vld [vmem:[%s6 + $0xe8] sm:$0xf]
        %v2314 = vld [vmem:[%s6 + $0xec] sm:$0xf]
        %v2315 = vld [vmem:[%s6 + $0xf0] sm:$0xf]
        %v2316 = vld [vmem:[%s6 + $0xf4] sm:$0xf]
        %v2317 = vld [vmem:[%s6 + $0xf8] sm:$0xf]
        %v2318 = vld [vmem:[%s6 + $0xfc] sm:$0xf]
        %v2319 = vld [vmem:[%s7] sm:$0x1]
        %v2321 = vperm.slane %v2319, 0
        %v2387 = vunpack.c.l.b16 %v2255
        %v2388 = vunpack.c.l.b16 %v2256
        %v2389 = vunpack.c.l.b16 %v2257
        %v2390 = vunpack.c.l.b16 %v2258
        %v2391 = vunpack.c.l.b16 %v2259
        %v2392 = vunpack.c.l.b16 %v2260
        %v2393 = vunpack.c.l.b16 %v2261
        %v2394 = vunpack.c.l.b16 %v2262
        %v2395 = vunpack.c.l.b16 %v2263
        %v2396 = vunpack.c.l.b16 %v2264
        %v2397 = vunpack.c.l.b16 %v2265
        %v2398 = vunpack.c.l.b16 %v2266
        %v2399 = vunpack.c.l.b16 %v2267
        %v2400 = vunpack.c.l.b16 %v2268
        %v2401 = vunpack.c.l.b16 %v2269
        %v2402 = vunpack.c.l.b16 %v2270
        %v2403 = vunpack.c.l.b16 %v2271
        %v2404 = vunpack.c.l.b16 %v2272
        %v2405 = vunpack.c.l.b16 %v2273
        %v2406 = vunpack.c.l.b16 %v2274
        %v2407 = vunpack.c.l.b16 %v2275
        %v2408 = vunpack.c.l.b16 %v2276
        %v2409 = vunpack.c.l.b16 %v2277
        %v2410 = vunpack.c.l.b16 %v2278
        %v2411 = vunpack.c.l.b16 %v2279
        %v2412 = vunpack.c.l.b16 %v2280
        %v2413 = vunpack.c.l.b16 %v2281
        %v2414 = vunpack.c.l.b16 %v2282
        %v2415 = vunpack.c.l.b16 %v2283
        %v2416 = vunpack.c.l.b16 %v2284
        %v2417 = vunpack.c.l.b16 %v2285
        %v2418 = vunpack.c.l.b16 %v2286
        %v2419 = vunpack.c.l.b16 %v2287
        %v2420 = vunpack.c.l.b16 %v2288
        %v2421 = vunpack.c.l.b16 %v2289
        %v2422 = vunpack.c.l.b16 %v2290
        %v2423 = vunpack.c.l.b16 %v2291
        %v2424 = vunpack.c.l.b16 %v2292
        %v2425 = vunpack.c.l.b16 %v2293
        %v2426 = vunpack.c.l.b16 %v2294
        %v2427 = vunpack.c.l.b16 %v2295
        %v2428 = vunpack.c.l.b16 %v2296
        %v2429 = vunpack.c.l.b16 %v2297
        %v2430 = vunpack.c.l.b16 %v2298
        %v2431 = vunpack.c.l.b16 %v2299
        %v2432 = vunpack.c.l.b16 %v2300
        %v2433 = vunpack.c.l.b16 %v2301
        %v2434 = vunpack.c.l.b16 %v2302
        %v2435 = vunpack.c.l.b16 %v2303
        %v2436 = vunpack.c.l.b16 %v2304
        %v2437 = vunpack.c.l.b16 %v2305
        %v2438 = vunpack.c.l.b16 %v2306
        %v2439 = vunpack.c.l.b16 %v2307
        %v2440 = vunpack.c.l.b16 %v2308
        %v2441 = vunpack.c.l.b16 %v2309
        %v2442 = vunpack.c.l.b16 %v2310
        %v2443 = vunpack.c.l.b16 %v2311
        %v2444 = vunpack.c.l.b16 %v2312
        %v2445 = vunpack.c.l.b16 %v2313
        %v2446 = vunpack.c.l.b16 %v2314
        %v2447 = vunpack.c.l.b16 %v2315
        %v2448 = vunpack.c.l.b16 %v2316
        %v2449 = vunpack.c.l.b16 %v2317
        %v2450 = vunpack.c.l.b16 %v2318
        %v2451 = vpack.c.b16 %v2388, %v2387
        %v2452 = vpack.c.b16 %v2390, %v2389
        %v2453 = vpack.c.b16 %v2392, %v2391
        %v2454 = vpack.c.b16 %v2394, %v2393
        %v2455 = vpack.c.b16 %v2396, %v2395
        %v2456 = vpack.c.b16 %v2398, %v2397
        %v2457 = vpack.c.b16 %v2400, %v2399
        %v2458 = vpack.c.b16 %v2402, %v2401
        %v2459 = vpack.c.b16 %v2404, %v2403
        %v2460 = vpack.c.b16 %v2406, %v2405
        %v2461 = vpack.c.b16 %v2408, %v2407
        %v2462 = vpack.c.b16 %v2410, %v2409
        %v2463 = vpack.c.b16 %v2412, %v2411
        %v2464 = vpack.c.b16 %v2414, %v2413
        %v2465 = vpack.c.b16 %v2416, %v2415
        %v2466 = vpack.c.b16 %v2418, %v2417
        %v2467 = vpack.c.b16 %v2420, %v2419
        %v2468 = vpack.c.b16 %v2422, %v2421
        %v2469 = vpack.c.b16 %v2424, %v2423
        %v2470 = vpack.c.b16 %v2426, %v2425
        %v2471 = vpack.c.b16 %v2428, %v2427
        %v2472 = vpack.c.b16 %v2430, %v2429
        %v2473 = vpack.c.b16 %v2432, %v2431
        %v2474 = vpack.c.b16 %v2434, %v2433
        %v2475 = vpack.c.b16 %v2436, %v2435
        %v2476 = vpack.c.b16 %v2438, %v2437
        %v2477 = vpack.c.b16 %v2440, %v2439
        %v2478 = vpack.c.b16 %v2442, %v2441
        %v2479 = vpack.c.b16 %v2444, %v2443
        %v2480 = vpack.c.b16 %v2446, %v2445
        %v2481 = vpack.c.b16 %v2448, %v2447
        %v2482 = vpack.c.b16 %v2450, %v2449
        %2515 = vmatpush.bf16.msra.mxu0 %v2458
        %2516 = vmatpush.bf16.msra.mxu0 %v2457
        %2517 = vmatpush.bf16.msra.mxu0 %v2456
        %2518 = vmatpush.bf16.msra.mxu0 %v2455
        %2519 = vmatpush.bf16.msra.mxu0 %v2454
        %2520 = vmatpush.bf16.msra.mxu0 %v2453
        %2521 = vmatpush.bf16.msra.mxu0 %v2452
        %2522 = vmatpush.bf16.msra.mxu0 %v2451
        %2523 = vmatmul.bf16.gmra.mxu0 %v2191
        %v2524 = vpop.f32.mrf.mxu0
        %v2525 = vadd.f32 %v2321, %v2524
        %v2526 = vpop.f32.mrf.mxu0
        %v2527 = vadd.f32 %v2321, %v2526
        %2528 = vmatmul.bf16.gmra.mxu0 %v2195
        %v2529 = vpop.f32.mrf.mxu0
        %v2530 = vadd.f32 %v2321, %v2529
        %v2531 = vpop.f32.mrf.mxu0
        %v2532 = vadd.f32 %v2321, %v2531
        %2533 = vmatmul.bf16.gmra.mxu0 %v2199
        %v2534 = vpop.f32.mrf.mxu0
        %v2535 = vadd.f32 %v2321, %v2534
        %v2536 = vpop.f32.mrf.mxu0
        %v2537 = vadd.f32 %v2321, %v2536
        %2538 = vmatmul.bf16.gmra.mxu0 %v2203
        %v2539 = vpop.f32.mrf.mxu0
        %v2540 = vadd.f32 %v2321, %v2539
        %v2541 = vpop.f32.mrf.mxu0
        %v2542 = vadd.f32 %v2321, %v2541
        %2543 = vmatmul.bf16.gmra.mxu0 %v2207
        %v2544 = vpop.f32.mrf.mxu0
        %v2545 = vadd.f32 %v2321, %v2544
        %v2546 = vpop.f32.mrf.mxu0
        %v2547 = vadd.f32 %v2321, %v2546
        %2548 = vmatmul.bf16.gmra.mxu0 %v2211
        %v2549 = vpop.f32.mrf.mxu0
        %v2550 = vadd.f32 %v2321, %v2549
        %v2551 = vpop.f32.mrf.mxu0
        %v2552 = vadd.f32 %v2321, %v2551
        %2553 = vmatmul.bf16.gmra.mxu0 %v2215
        %v2554 = vpop.f32.mrf.mxu0
        %v2555 = vadd.f32 %v2321, %v2554
        %v2556 = vpop.f32.mrf.mxu0
        %v2557 = vadd.f32 %v2321, %v2556
        %2558 = vmatmul.bf16.gmra.mxu0 %v2219
        %v2559 = vpop.f32.mrf.mxu0
        %v2560 = vadd.f32 %v2321, %v2559
        %v2561 = vpop.f32.mrf.mxu0
        %v2562 = vadd.f32 %v2321, %v2561
        %2563 = vmatmul.bf16.gmra.mxu0 %v2223
        %v2564 = vpop.f32.mrf.mxu0
        %v2565 = vadd.f32 %v2321, %v2564
        %v2566 = vpop.f32.mrf.mxu0
        %v2567 = vadd.f32 %v2321, %v2566
        %2568 = vmatmul.bf16.gmra.mxu0 %v2227
        %v2569 = vpop.f32.mrf.mxu0
        %v2570 = vadd.f32 %v2321, %v2569
        %v2571 = vpop.f32.mrf.mxu0
        %v2572 = vadd.f32 %v2321, %v2571
        %2573 = vmatmul.bf16.gmra.mxu0 %v2231
        %v2574 = vpop.f32.mrf.mxu0
        %v2575 = vadd.f32 %v2321, %v2574
        %v2576 = vpop.f32.mrf.mxu0
        %v2577 = vadd.f32 %v2321, %v2576
        %2578 = vmatmul.bf16.gmra.mxu0 %v2235
        %v2579 = vpop.f32.mrf.mxu0
        %v2580 = vadd.f32 %v2321, %v2579
        %v2581 = vpop.f32.mrf.mxu0
        %v2582 = vadd.f32 %v2321, %v2581
        %2583 = vmatmul.bf16.gmra.mxu0 %v2239
        %v2584 = vpop.f32.mrf.mxu0
        %v2585 = vadd.f32 %v2321, %v2584
        %v2586 = vpop.f32.mrf.mxu0
        %v2587 = vadd.f32 %v2321, %v2586
        %2588 = vmatmul.bf16.gmra.mxu0 %v2243
        %v2589 = vpop.f32.mrf.mxu0
        %v2590 = vadd.f32 %v2321, %v2589
        %v2591 = vpop.f32.mrf.mxu0
        %v2592 = vadd.f32 %v2321, %v2591
        %2593 = vmatmul.bf16.gmra.mxu0 %v2247
        %v2594 = vpop.f32.mrf.mxu0
        %v2595 = vadd.f32 %v2321, %v2594
        %v2596 = vpop.f32.mrf.mxu0
        %v2597 = vadd.f32 %v2321, %v2596
        %2598 = vmatmul.bf16.gmra.mxu0 %v2251
        %v2599 = vpop.f32.mrf.mxu0
        %v2600 = vadd.f32 %v2321, %v2599
        %v2601 = vpop.f32.mrf.mxu0
        %v2602 = vadd.f32 %v2321, %v2601
        %2603 = vdwg.mxu0
        %2604 = vmatpush.bf16.msra.mxu0 %v2466
        %2605 = vmatpush.bf16.msra.mxu0 %v2465
        %2606 = vmatpush.bf16.msra.mxu0 %v2464
        %2607 = vmatpush.bf16.msra.mxu0 %v2463
        %2608 = vmatpush.bf16.msra.mxu0 %v2462
        %2609 = vmatpush.bf16.msra.mxu0 %v2461
        %2610 = vmatpush.bf16.msra.mxu0 %v2460
        %2611 = vmatpush.bf16.msra.mxu0 %v2459
        %2612 = vmatmul.bf16.gmra.mxu0 %v2192
        %v2613 = vpop.f32.mrf.mxu0
        %v2614 = vadd.f32 %v2525, %v2613
        %v2615 = vpop.f32.mrf.mxu0
        %v2616 = vadd.f32 %v2527, %v2615
        %2617 = vmatmul.bf16.gmra.mxu0 %v2196
        %v2618 = vpop.f32.mrf.mxu0
        %v2619 = vadd.f32 %v2530, %v2618
        %v2620 = vpop.f32.mrf.mxu0
        %v2621 = vadd.f32 %v2532, %v2620
        %2622 = vmatmul.bf16.gmra.mxu0 %v2200
        %v2623 = vpop.f32.mrf.mxu0
        %v2624 = vadd.f32 %v2535, %v2623
        %v2625 = vpop.f32.mrf.mxu0
        %v2626 = vadd.f32 %v2537, %v2625
        %2627 = vmatmul.bf16.gmra.mxu0 %v2204
        %v2628 = vpop.f32.mrf.mxu0
        %v2629 = vadd.f32 %v2540, %v2628
        %v2630 = vpop.f32.mrf.mxu0
        %v2631 = vadd.f32 %v2542, %v2630
        %2632 = vmatmul.bf16.gmra.mxu0 %v2208
        %v2633 = vpop.f32.mrf.mxu0
        %v2634 = vadd.f32 %v2545, %v2633
        %v2635 = vpop.f32.mrf.mxu0
        %v2636 = vadd.f32 %v2547, %v2635
        %2637 = vmatmul.bf16.gmra.mxu0 %v2212
        %v2638 = vpop.f32.mrf.mxu0
        %v2639 = vadd.f32 %v2550, %v2638
        %v2640 = vpop.f32.mrf.mxu0
        %v2641 = vadd.f32 %v2552, %v2640
        %2642 = vmatmul.bf16.gmra.mxu0 %v2216
        %v2643 = vpop.f32.mrf.mxu0
        %v2644 = vadd.f32 %v2555, %v2643
        %v2645 = vpop.f32.mrf.mxu0
        %v2646 = vadd.f32 %v2557, %v2645
        %2647 = vmatmul.bf16.gmra.mxu0 %v2220
        %v2648 = vpop.f32.mrf.mxu0
        %v2649 = vadd.f32 %v2560, %v2648
        %v2650 = vpop.f32.mrf.mxu0
        %v2651 = vadd.f32 %v2562, %v2650
        %2652 = vmatmul.bf16.gmra.mxu0 %v2224
        %v2653 = vpop.f32.mrf.mxu0
        %v2654 = vadd.f32 %v2565, %v2653
        %v2655 = vpop.f32.mrf.mxu0
        %v2656 = vadd.f32 %v2567, %v2655
        %2657 = vmatmul.bf16.gmra.mxu0 %v2228
        %v2658 = vpop.f32.mrf.mxu0
        %v2659 = vadd.f32 %v2570, %v2658
        %v2660 = vpop.f32.mrf.mxu0
        %v2661 = vadd.f32 %v2572, %v2660
        %2662 = vmatmul.bf16.gmra.mxu0 %v2232
        %v2663 = vpop.f32.mrf.mxu0
        %v2664 = vadd.f32 %v2575, %v2663
        %v2665 = vpop.f32.mrf.mxu0
        %v2666 = vadd.f32 %v2577, %v2665
        %2667 = vmatmul.bf16.gmra.mxu0 %v2236
        %v2668 = vpop.f32.mrf.mxu0
        %v2669 = vadd.f32 %v2580, %v2668
        %v2670 = vpop.f32.mrf.mxu0
        %v2671 = vadd.f32 %v2582, %v2670
        %2672 = vmatmul.bf16.gmra.mxu0 %v2240
        %v2673 = vpop.f32.mrf.mxu0
        %v2674 = vadd.f32 %v2585, %v2673
        %v2675 = vpop.f32.mrf.mxu0
        %v2676 = vadd.f32 %v2587, %v2675
        %2677 = vmatmul.bf16.gmra.mxu0 %v2244
        %v2678 = vpop.f32.mrf.mxu0
        %v2679 = vadd.f32 %v2590, %v2678
        %v2680 = vpop.f32.mrf.mxu0
        %v2681 = vadd.f32 %v2592, %v2680
        %2682 = vmatmul.bf16.gmra.mxu0 %v2248
        %v2683 = vpop.f32.mrf.mxu0
        %v2684 = vadd.f32 %v2595, %v2683
        %v2685 = vpop.f32.mrf.mxu0
        %v2686 = vadd.f32 %v2597, %v2685
        %2687 = vmatmul.bf16.gmra.mxu0 %v2252
        %v2688 = vpop.f32.mrf.mxu0
        %v2689 = vadd.f32 %v2600, %v2688
        %v2690 = vpop.f32.mrf.mxu0
        %v2691 = vadd.f32 %v2602, %v2690
        %2692 = vdwg.mxu0
        %2693 = vmatpush.bf16.msra.mxu0 %v2474
        %2694 = vmatpush.bf16.msra.mxu0 %v2473
        %2695 = vmatpush.bf16.msra.mxu0 %v2472
        %2696 = vmatpush.bf16.msra.mxu0 %v2471
        %2697 = vmatpush.bf16.msra.mxu0 %v2470
        %2698 = vmatpush.bf16.msra.mxu0 %v2469
        %2699 = vmatpush.bf16.msra.mxu0 %v2468
        %2700 = vmatpush.bf16.msra.mxu0 %v2467
        %2701 = vmatmul.bf16.gmra.mxu0 %v2193
        %v2702 = vpop.f32.mrf.mxu0
        %v2703 = vadd.f32 %v2614, %v2702
        %v2704 = vpop.f32.mrf.mxu0
        %v2705 = vadd.f32 %v2616, %v2704
        %2706 = vmatmul.bf16.gmra.mxu0 %v2197
        %v2707 = vpop.f32.mrf.mxu0
        %v2708 = vadd.f32 %v2619, %v2707
        %v2709 = vpop.f32.mrf.mxu0
        %v2710 = vadd.f32 %v2621, %v2709
        %2711 = vmatmul.bf16.gmra.mxu0 %v2201
        %v2712 = vpop.f32.mrf.mxu0
        %v2713 = vadd.f32 %v2624, %v2712
        %v2714 = vpop.f32.mrf.mxu0
        %v2715 = vadd.f32 %v2626, %v2714
        %2716 = vmatmul.bf16.gmra.mxu0 %v2205
        %v2717 = vpop.f32.mrf.mxu0
        %v2718 = vadd.f32 %v2629, %v2717
        %v2719 = vpop.f32.mrf.mxu0
        %v2720 = vadd.f32 %v2631, %v2719
        %2721 = vmatmul.bf16.gmra.mxu0 %v2209
        %v2722 = vpop.f32.mrf.mxu0
        %v2723 = vadd.f32 %v2634, %v2722
        %v2724 = vpop.f32.mrf.mxu0
        %v2725 = vadd.f32 %v2636, %v2724
        %2726 = vmatmul.bf16.gmra.mxu0 %v2213
        %v2727 = vpop.f32.mrf.mxu0
        %v2728 = vadd.f32 %v2639, %v2727
        %v2729 = vpop.f32.mrf.mxu0
        %v2730 = vadd.f32 %v2641, %v2729
        %2731 = vmatmul.bf16.gmra.mxu0 %v2217
        %v2732 = vpop.f32.mrf.mxu0
        %v2733 = vadd.f32 %v2644, %v2732
        %v2734 = vpop.f32.mrf.mxu0
        %v2735 = vadd.f32 %v2646, %v2734
        %2736 = vmatmul.bf16.gmra.mxu0 %v2221
        %v2737 = vpop.f32.mrf.mxu0
        %v2738 = vadd.f32 %v2649, %v2737
        %v2739 = vpop.f32.mrf.mxu0
        %v2740 = vadd.f32 %v2651, %v2739
        %2741 = vmatmul.bf16.gmra.mxu0 %v2225
        %v2742 = vpop.f32.mrf.mxu0
        %v2743 = vadd.f32 %v2654, %v2742
        %v2744 = vpop.f32.mrf.mxu0
        %v2745 = vadd.f32 %v2656, %v2744
        %2746 = vmatmul.bf16.gmra.mxu0 %v2229
        %v2747 = vpop.f32.mrf.mxu0
        %v2748 = vadd.f32 %v2659, %v2747
        %v2749 = vpop.f32.mrf.mxu0
        %v2750 = vadd.f32 %v2661, %v2749
        %2751 = vmatmul.bf16.gmra.mxu0 %v2233
        %v2752 = vpop.f32.mrf.mxu0
        %v2753 = vadd.f32 %v2664, %v2752
        %v2754 = vpop.f32.mrf.mxu0
        %v2755 = vadd.f32 %v2666, %v2754
        %2756 = vmatmul.bf16.gmra.mxu0 %v2237
        %v2757 = vpop.f32.mrf.mxu0
        %v2758 = vadd.f32 %v2669, %v2757
        %v2759 = vpop.f32.mrf.mxu0
        %v2760 = vadd.f32 %v2671, %v2759
        %2761 = vmatmul.bf16.gmra.mxu0 %v2241
        %v2762 = vpop.f32.mrf.mxu0
        %v2763 = vadd.f32 %v2674, %v2762
        %v2764 = vpop.f32.mrf.mxu0
        %v2765 = vadd.f32 %v2676, %v2764
        %2766 = vmatmul.bf16.gmra.mxu0 %v2245
        %v2767 = vpop.f32.mrf.mxu0
        %v2768 = vadd.f32 %v2679, %v2767
        %v2769 = vpop.f32.mrf.mxu0
        %v2770 = vadd.f32 %v2681, %v2769
        %2771 = vmatmul.bf16.gmra.mxu0 %v2249
        %v2772 = vpop.f32.mrf.mxu0
        %v2773 = vadd.f32 %v2684, %v2772
        %v2774 = vpop.f32.mrf.mxu0
        %v2775 = vadd.f32 %v2686, %v2774
        %2776 = vmatmul.bf16.gmra.mxu0 %v2253
        %v2777 = vpop.f32.mrf.mxu0
        %v2778 = vadd.f32 %v2689, %v2777
        %v2779 = vpop.f32.mrf.mxu0
        %v2780 = vadd.f32 %v2691, %v2779
        %2781 = vdwg.mxu0
        %2782 = vmatpush.bf16.msra.mxu0 %v2482
        %2783 = vmatpush.bf16.msra.mxu0 %v2481
        %2784 = vmatpush.bf16.msra.mxu0 %v2480
        %2785 = vmatpush.bf16.msra.mxu0 %v2479
        %2786 = vmatpush.bf16.msra.mxu0 %v2478
        %2787 = vmatpush.bf16.msra.mxu0 %v2477
        %2788 = vmatpush.bf16.msra.mxu0 %v2476
        %2789 = vmatpush.bf16.msra.mxu0 %v2475
        %2790 = vmatmul.bf16.gmra.mxu0 %v2194
        %v2791 = vpop.f32.mrf.mxu0
        %v2792 = vadd.f32 %v2703, %v2791
        %v2793 = vpop.f32.mrf.mxu0
        %v2794 = vadd.f32 %v2705, %v2793
        %2795 = vmatmul.bf16.gmra.mxu0 %v2198
        %v2796 = vpop.f32.mrf.mxu0
        %v2797 = vadd.f32 %v2708, %v2796
        %v2798 = vpop.f32.mrf.mxu0
        %v2799 = vadd.f32 %v2710, %v2798
        %2800 = vmatmul.bf16.gmra.mxu0 %v2202
        %v2801 = vpop.f32.mrf.mxu0
        %v2802 = vadd.f32 %v2713, %v2801
        %v2803 = vpop.f32.mrf.mxu0
        %v2804 = vadd.f32 %v2715, %v2803
        %2805 = vmatmul.bf16.gmra.mxu0 %v2206
        %v2806 = vpop.f32.mrf.mxu0
        %v2807 = vadd.f32 %v2718, %v2806
        %v2808 = vpop.f32.mrf.mxu0
        %v2809 = vadd.f32 %v2720, %v2808
        %2810 = vmatmul.bf16.gmra.mxu0 %v2210
        %v2811 = vpop.f32.mrf.mxu0
        %v2812 = vadd.f32 %v2723, %v2811
        %v2813 = vpop.f32.mrf.mxu0
        %v2814 = vadd.f32 %v2725, %v2813
        %2815 = vmatmul.bf16.gmra.mxu0 %v2214
        %v2816 = vpop.f32.mrf.mxu0
        %v2817 = vadd.f32 %v2728, %v2816
        %v2818 = vpop.f32.mrf.mxu0
        %v2819 = vadd.f32 %v2730, %v2818
        %2820 = vmatmul.bf16.gmra.mxu0 %v2218
        %v2821 = vpop.f32.mrf.mxu0
        %v2822 = vadd.f32 %v2733, %v2821
        %v2823 = vpop.f32.mrf.mxu0
        %v2824 = vadd.f32 %v2735, %v2823
        %2825 = vmatmul.bf16.gmra.mxu0 %v2222
        %v2826 = vpop.f32.mrf.mxu0
        %v2827 = vadd.f32 %v2738, %v2826
        %v2828 = vpop.f32.mrf.mxu0
        %v2829 = vadd.f32 %v2740, %v2828
        %2830 = vmatmul.bf16.gmra.mxu0 %v2226
        %v2831 = vpop.f32.mrf.mxu0
        %v2832 = vadd.f32 %v2743, %v2831
        %v2833 = vpop.f32.mrf.mxu0
        %v2834 = vadd.f32 %v2745, %v2833
        %2835 = vmatmul.bf16.gmra.mxu0 %v2230
        %v2836 = vpop.f32.mrf.mxu0
        %v2837 = vadd.f32 %v2748, %v2836
        %v2838 = vpop.f32.mrf.mxu0
        %v2839 = vadd.f32 %v2750, %v2838
        %2840 = vmatmul.bf16.gmra.mxu0 %v2234
        %v2841 = vpop.f32.mrf.mxu0
        %v2842 = vadd.f32 %v2753, %v2841
        %v2843 = vpop.f32.mrf.mxu0
        %v2844 = vadd.f32 %v2755, %v2843
        %2845 = vmatmul.bf16.gmra.mxu0 %v2238
        %v2846 = vpop.f32.mrf.mxu0
        %v2847 = vadd.f32 %v2758, %v2846
        %v2848 = vpop.f32.mrf.mxu0
        %v2849 = vadd.f32 %v2760, %v2848
        %2850 = vmatmul.bf16.gmra.mxu0 %v2242
        %v2851 = vpop.f32.mrf.mxu0
        %v2852 = vadd.f32 %v2763, %v2851
        %v2853 = vpop.f32.mrf.mxu0
        %v2854 = vadd.f32 %v2765, %v2853
        %2855 = vmatmul.bf16.gmra.mxu0 %v2246
        %v2856 = vpop.f32.mrf.mxu0
        %v2857 = vadd.f32 %v2768, %v2856
        %v2858 = vpop.f32.mrf.mxu0
        %v2859 = vadd.f32 %v2770, %v2858
        %2860 = vmatmul.bf16.gmra.mxu0 %v2250
        %v2861 = vpop.f32.mrf.mxu0
        %v2862 = vadd.f32 %v2773, %v2861
        %v2863 = vpop.f32.mrf.mxu0
        %v2864 = vadd.f32 %v2775, %v2863
        %2865 = vmatmul.bf16.gmra.mxu0 %v2254
        %v2866 = vpop.f32.mrf.mxu0
        %v2867 = vadd.f32 %v2778, %v2866
        %v2868 = vpop.f32.mrf.mxu0
        %v2869 = vadd.f32 %v2780, %v2868
        %2870 = vdwg.mxu0
        %v2871 = vld [vmem:[%s326] sm:$0xff]
        %v2872 = vld [vmem:[%s326 + $0x8] sm:$0xff]
        %v2873 = vld [vmem:[%s326 + $0x10] sm:$0xff]
        %v2874 = vld [vmem:[%s326 + $0x18] sm:$0xff]
        %v2875 = vld [vmem:[%s326 + $0x20] sm:$0xff]
        %v2876 = vld [vmem:[%s326 + $0x28] sm:$0xff]
        %v2877 = vld [vmem:[%s326 + $0x30] sm:$0xff]
        %v2878 = vld [vmem:[%s326 + $0x38] sm:$0xff]
        %v2879 = vld [vmem:[%s326 + $0x40] sm:$0xff]
        %v2880 = vld [vmem:[%s326 + $0x48] sm:$0xff]
        %v2881 = vld [vmem:[%s326 + $0x50] sm:$0xff]
        %v2882 = vld [vmem:[%s326 + $0x58] sm:$0xff]
        %v2883 = vld [vmem:[%s326 + $0x60] sm:$0xff]
        %v2884 = vld [vmem:[%s326 + $0x68] sm:$0xff]
        %v2885 = vld [vmem:[%s326 + $0x70] sm:$0xff]
        %v2886 = vld [vmem:[%s326 + $0x78] sm:$0xff]
        %v2887 = vld [vmem:[%s326 + $0x80] sm:$0xff]
        %v2888 = vld [vmem:[%s326 + $0x88] sm:$0xff]
        %v2889 = vld [vmem:[%s326 + $0x90] sm:$0xff]
        %v2890 = vld [vmem:[%s326 + $0x98] sm:$0xff]
        %v2891 = vld [vmem:[%s326 + $0xa0] sm:$0xff]
        %v2892 = vld [vmem:[%s326 + $0xa8] sm:$0xff]
        %v2893 = vld [vmem:[%s326 + $0xb0] sm:$0xff]
        %v2894 = vld [vmem:[%s326 + $0xb8] sm:$0xff]
        %v2895 = vld [vmem:[%s326 + $0xc0] sm:$0xff]
        %v2896 = vld [vmem:[%s326 + $0xc8] sm:$0xff]
        %v2897 = vld [vmem:[%s326 + $0xd0] sm:$0xff]
        %v2898 = vld [vmem:[%s326 + $0xd8] sm:$0xff]
        %v2899 = vld [vmem:[%s326 + $0xe0] sm:$0xff]
        %v2900 = vld [vmem:[%s326 + $0xe8] sm:$0xff]
        %v2901 = vld [vmem:[%s326 + $0xf0] sm:$0xff]
        %v2902 = vld [vmem:[%s326 + $0xf8] sm:$0xff]
        %v2903 = vadd.f32 %v2792, %v2871
        %v2904 = vadd.f32 %v2794, %v2872
        %v2905 = vadd.f32 %v2797, %v2873
        %v2906 = vadd.f32 %v2799, %v2874
        %v2907 = vadd.f32 %v2802, %v2875
        %v2908 = vadd.f32 %v2804, %v2876
        %v2909 = vadd.f32 %v2807, %v2877
        %v2910 = vadd.f32 %v2809, %v2878
        %v2911 = vadd.f32 %v2812, %v2879
        %v2912 = vadd.f32 %v2814, %v2880
        %v2913 = vadd.f32 %v2817, %v2881
        %v2914 = vadd.f32 %v2819, %v2882
        %v2915 = vadd.f32 %v2822, %v2883
        %v2916 = vadd.f32 %v2824, %v2884
        %v2917 = vadd.f32 %v2827, %v2885
        %v2918 = vadd.f32 %v2829, %v2886
        %v2919 = vadd.f32 %v2832, %v2887
        %v2920 = vadd.f32 %v2834, %v2888
        %v2921 = vadd.f32 %v2837, %v2889
        %v2922 = vadd.f32 %v2839, %v2890
        %v2923 = vadd.f32 %v2842, %v2891
        %v2924 = vadd.f32 %v2844, %v2892
        %v2925 = vadd.f32 %v2847, %v2893
        %v2926 = vadd.f32 %v2849, %v2894
        %v2927 = vadd.f32 %v2852, %v2895
        %v2928 = vadd.f32 %v2854, %v2896
        %v2929 = vadd.f32 %v2857, %v2897
        %v2930 = vadd.f32 %v2859, %v2898
        %v2931 = vadd.f32 %v2862, %v2899
        %v2932 = vadd.f32 %v2864, %v2900
        %v2933 = vadd.f32 %v2867, %v2901
        %v2934 = vadd.f32 %v2869, %v2902
        %2935 = vst [vmem:[%s315] sm:$0xff] %v2903
        %2936 = vst [vmem:[%s315 + $0x8] sm:$0xff] %v2904
        %2937 = vst [vmem:[%s315 + $0x10] sm:$0xff] %v2905
        %2938 = vst [vmem:[%s315 + $0x18] sm:$0xff] %v2906
        %2939 = vst [vmem:[%s315 + $0x20] sm:$0xff] %v2907
        %2940 = vst [vmem:[%s315 + $0x28] sm:$0xff] %v2908
        %2941 = vst [vmem:[%s315 + $0x30] sm:$0xff] %v2909
        %2942 = vst [vmem:[%s315 + $0x38] sm:$0xff] %v2910
        %2943 = vst [vmem:[%s315 + $0x40] sm:$0xff] %v2911
        %2944 = vst [vmem:[%s315 + $0x48] sm:$0xff] %v2912
        %2945 = vst [vmem:[%s315 + $0x50] sm:$0xff] %v2913
        %2946 = vst [vmem:[%s315 + $0x58] sm:$0xff] %v2914
        %2947 = vst [vmem:[%s315 + $0x60] sm:$0xff] %v2915
        %2948 = vst [vmem:[%s315 + $0x68] sm:$0xff] %v2916
        %2949 = vst [vmem:[%s315 + $0x70] sm:$0xff] %v2917
        %2950 = vst [vmem:[%s315 + $0x78] sm:$0xff] %v2918
        %2951 = vst [vmem:[%s315 + $0x80] sm:$0xff] %v2919
        %2952 = vst [vmem:[%s315 + $0x88] sm:$0xff] %v2920
        %2953 = vst [vmem:[%s315 + $0x90] sm:$0xff] %v2921
        %2954 = vst [vmem:[%s315 + $0x98] sm:$0xff] %v2922
        %2955 = vst [vmem:[%s315 + $0xa0] sm:$0xff] %v2923
        %2956 = vst [vmem:[%s315 + $0xa8] sm:$0xff] %v2924
        %2957 = vst [vmem:[%s315 + $0xb0] sm:$0xff] %v2925
        %2958 = vst [vmem:[%s315 + $0xb8] sm:$0xff] %v2926
        %2959 = vst [vmem:[%s315 + $0xc0] sm:$0xff] %v2927
        %2960 = vst [vmem:[%s315 + $0xc8] sm:$0xff] %v2928
        %2961 = vst [vmem:[%s315 + $0xd0] sm:$0xff] %v2929
        %2962 = vst [vmem:[%s315 + $0xd8] sm:$0xff] %v2930
        %2963 = vst [vmem:[%s315 + $0xe0] sm:$0xff] %v2931
        %2964 = vst [vmem:[%s315 + $0xe8] sm:$0xff] %v2932
        %2965 = vst [vmem:[%s315 + $0xf0] sm:$0xff] %v2933
        %2966 = vst [vmem:[%s315 + $0xf8] sm:$0xff] %v2934
        %s2967 = sand.u32 %s208, 1
        %s2968 = scalar_lea.sflag [#allocation3], %s2967
        %s2969 = sand.u32 %s208, 1
        %s2970 = smul.addr %s2969, 256
        %s2971 = scalar_lea.vmem [#allocation2], %s2970
        // Predicated region
        $region53: #{conv_block_forward.3} parent=51 // pred_check
          %p2972 = pneg %p218
        $region54: #{conv_block_forward.3} parent=51 // pred_check_branch
          %2974 = sbr.rel (%p2972) target = $region56
        $region55: #{conv_block_forward.3} parent=51 // pred_region
          %s2975 = smul.u32 32, %s22
          %2977 = vsyncadd %s2968, 0
          %s2978 = smul.addr %s2975, 8
          %s2979 = scalar_lea.hbm %s8, %s2978
          %s2980 = sshll.u32 %s2971, 4
          %s2981 = int_to_ptr.vmem [resolvable:$true] %s2980
          %s2982 = sshll.u32 %s2979, 4
          %s2983 = int_to_ptr.hbm [resolvable:$true] %s2982
          %2988 = dma.vmem_to_hbm [thread:$0]  %s2981, 4096, %s2983, %s2968, 128, 128, 8
        $region56: #{conv_block_forward.3} parent=51 // pred_fallthru
          _
      $region52: #{conv_block_forward.3} parent=5 // pred_fallthru
        _
      %p2989 = scmp.le.s32.totalorder 2, %s17
      // Predicated region
      $region57: #{conv_block_forward.3} parent=5 // pred_check
        %p2990 = pneg %p2989
      $region58: #{conv_block_forward.3} parent=5 // pred_check_branch
        %2992 = sbr.rel (%p2990) target = $region60
      $region59: #{conv_block_forward.3} parent=5 // pred_region
        %s2993 = ssub.s32 %s17, 2
        // Predicated region
        $region61: #{conv_block_forward.3} parent=59 // pred_check
          %p2994 = pneg %p224
        $region62: #{conv_block_forward.3} parent=59 // pred_check_branch
          %2996 = sbr.rel (%p2994) target = $region64
        $region63: #{conv_block_forward.3} parent=59 // pred_region
          %s2997 = sand.u32 %s209, 1
          %s2998 = scalar_lea.sflag [#allocation3], %s2997
          %s2999 = sand.u32 %s209, 1
          %s3000 = smul.addr %s2999, 256
          %s3001 = scalar_lea.vmem [#allocation2], %s3000
          %3003 = dma.done %s2998, 4096
        $region64: #{conv_block_forward.3} parent=59 // pred_fallthru
          _
      $region60: #{conv_block_forward.3} parent=5 // pred_fallthru
        _
    $region6: #{conv_block_forward.3} parent=1 // loop_footer
      %s21 = sadd.s32 1, %s17
    $region7: #{conv_block_forward.3} parent=1 // loop_footer_branch
      %16 = sbr.rel target = $region3
    $region8: #{conv_block_forward.3} parent=1 // loop_exit
      _
    %3004 = vsyncpa [#allocation3], 1
    %s3005 = scalar_lea.sflag [#allocation3], 1
    %3006 = vsyncpa %s3005, 1

// kernel: conv_block_forward.2
$region0: #{conv_block_forward.2}
  #allocation0 [shape = 'u32[]', space=smem, size = 0x4, offset = 0x4, fixed_abs, tag = 'smem constant byte address 0x4 - core index']
  #allocation1 [shape = 'u32[72,128]{1,0:T(1,128)}', space=vmem, size = 0x9000, scoped, tag = 'internal scratch']
  #allocation2 [shape = 'f32[1,14,32,128]{3,2,1,0:T(8,128)}', space=vmem, size = 0x38000, scoped, tag = 'scratch operand']
  #allocation3 [shape = 's32[3]{0}', space=sflag, size = 0xc, scoped, tag = 'scratch operand']
  #allocation4 [shape = 's32[]', space=sflag, size = 0x4, offset = 0, fixed_abs, tag = 'sflag constant byte address 0x0 - dummy sync flag']
  #allocation5 [shape = 's32[]', space=sflag, size = 0x4, offset = 0, fixed_abs, tag = 'sflag constant byte address 0x0 - dummy sync flag']
  #allocation6 [shape = 's32[]', space=sflag, size = 0x4, offset = 0, fixed_abs, tag = 'sflag constant byte address 0x0 - dummy sync flag']
  %s0 = inlined_call_operand.vmem [shape: f32[2,16,16,128], index: 0, kind: input, shape index: {}]
  %s1 = inlined_call_operand.vmem [shape: f32[7,7,128], index: 1, kind: input, shape index: {}]
  %s2 = inlined_call_operand.vmem [shape: f32[1,128], index: 2, kind: input, shape index: {}]
  %s3 = inlined_call_operand.vmem [shape: bf16[2,16,16,128], index: 3, kind: output, shape index: {0}]
  %s4 = inlined_call_operand.vmem [shape: f32[2,2,1,128], index: 4, kind: output, shape index: {1}]
  %s5 = inlined_call_operand.vmem [shape: f32[2,2,1,128], index: 5, kind: output, shape index: {2}]
  %6 = xla_tuple %s3, %s4, %s5
  %s7 = sld [smem:[#allocation0]]
  $region138: #{conv_block_forward.2} parent=0
    _
  %s9 = ssub.s32 1, %s7
  %s10 = scalar_select 0, %s9, %s7
  loop: start=0, step=1, limit=6
  $region2: #{conv_block_forward.2} parent=0 // loop_pre_header
    _
  $region3: #{conv_block_forward.2} parent=0 // loop_header
    %s12 = sphi 0, %s16
    %p13 = scmp.ge.s32.totalorder %s12, 6
    %s19 = sphi 0, %s38
    %s20 = sphi 0, %s34
    %s21 = sphi 0, %s30
    %s22 = sphi 0, %s19
    %s23 = sphi 0, %s20
    %s24 = sphi 0, %s21
    %s25 = sphi 0, %s22
    %s26 = sphi 0, %s23
    %s27 = sphi 0, %s24
    %s41 = sphi 0, %s43
    %s44 = sphi 0, %s41
    %s45 = sphi 0, %s44
    %s61 = sphi 0, %s45
    %s67 = sphi 0, %s69
    %s70 = sphi 0, %s67
    %s71 = sphi 0, %s70
    %s87 = sphi 0, %s71
    %s97 = sphi 0, %s99
    %s100 = sphi 0, %s97
    %s101 = sphi 0, %s100
    %s117 = sphi 0, %s101
    %s127 = sphi 0, %s129
    %s130 = sphi 0, %s127
    %s131 = sphi 0, %s130
    %s147 = sphi 0, %s131
    %s157 = sphi 0, %s159
    %s160 = sphi 0, %s157
    %s161 = sphi 0, %s160
    %s177 = sphi 0, %s161
  $region4: #{conv_block_forward.2} parent=0 // loop_header_branch
    %15 = sbr.rel (%p13) target = $region8
  $region5: #{conv_block_forward.2} parent=0 // loop_body
    %s17 = ssub.s32 %s12, 1
    %s18 = ssub.s32 %s12, 2
    %s28 = sadd.s32 1, %s21
    %p29 = scmp.ge.s32.totalorder %s28, 2
    %s30 = scalar_select %p29, 0, %s28
    %s31 = sadd.s32 1, %s20
    %s32 = scalar_select %p29, %s31, %s20
    %p33 = scmp.ge.s32.totalorder %s32, 2
    %s34 = scalar_select %p33, 0, %s32
    %s35 = sadd.s32 1, %s19
    %s36 = scalar_select %p33, %s35, %s19
    %p37 = scmp.ge.s32.totalorder %s36, 1
    %s38 = scalar_select %p37, 0, %s36
    %s39 = ssub.s32 %s19, %s38
    %p40 = scmp.eq.s32.totalorder %s39, 0
    %s42 = sadd.s32 %s41, 1
    %s43 = scalar_select %p40, %s41, %s42
    %p46 = pneg %p40
    %p47 = scmp.eq.s32.totalorder %s12, 3
    %p48 = por %p46, %p47
    %p49 = scmp.ne.s32.totalorder %s41, %s44
    %p50 = scmp.eq.s32.totalorder %s12, 0
    %p51 = por %p49, %p50
    %p52 = scmp.ne.s32.totalorder %s41, %s44
    %p53 = scmp.eq.s32.totalorder %s17, 3
    %p54 = por %p52, %p53
    %p55 = scmp.ne.s32.totalorder %s44, %s45
    %p56 = scmp.eq.s32.totalorder %s17, 0
    %p57 = por %p55, %p56
    %p58 = scmp.ne.s32.totalorder %s44, %s45
    %p59 = scmp.eq.s32.totalorder %s18, 3
    %p60 = por %p58, %p59
    %p62 = scmp.ne.s32.totalorder %s45, %s61
    %p63 = scmp.eq.s32.totalorder %s18, 0
    %p64 = por %p62, %p63
    %s65 = ssub.s32 %s19, %s38
    %p66 = scmp.eq.s32.totalorder %s65, 0
    %s68 = sadd.s32 %s67, 1
    %s69 = scalar_select %p66, %s67, %s68
    %p72 = pneg %p66
    %p73 = scmp.eq.s32.totalorder %s12, 3
    %p74 = por %p72, %p73
    %p75 = scmp.ne.s32.totalorder %s67, %s70
    %p76 = scmp.eq.s32.totalorder %s12, 0
    %p77 = por %p75, %p76
    %p78 = scmp.ne.s32.totalorder %s67, %s70
    %p79 = scmp.eq.s32.totalorder %s17, 3
    %p80 = por %p78, %p79
    %p81 = scmp.ne.s32.totalorder %s70, %s71
    %p82 = scmp.eq.s32.totalorder %s17, 0
    %p83 = por %p81, %p82
    %p84 = scmp.ne.s32.totalorder %s70, %s71
    %p85 = scmp.eq.s32.totalorder %s18, 3
    %p86 = por %p84, %p85
    %p88 = scmp.ne.s32.totalorder %s71, %s87
    %p89 = scmp.eq.s32.totalorder %s18, 0
    %p90 = por %p88, %p89
    %s91 = ssub.s32 %s20, %s34
    %s92 = ssub.s32 %s21, %s30
    %s93 = sor.u32 %s91, %s92
    %s94 = ssub.s32 %s19, %s38
    %s95 = sor.u32 %s93, %s94
    %p96 = scmp.eq.s32.totalorder %s95, 0
    %s98 = sadd.s32 %s97, 1
    %s99 = scalar_select %p96, %s97, %s98
    %p102 = pneg %p96
    %p103 = scmp.eq.s32.totalorder %s12, 3
    %p104 = por %p102, %p103
    %p105 = scmp.ne.s32.totalorder %s97, %s100
    %p106 = scmp.eq.s32.totalorder %s12, 0
    %p107 = por %p105, %p106
    %p108 = scmp.ne.s32.totalorder %s97, %s100
    %p109 = scmp.eq.s32.totalorder %s17, 3
    %p110 = por %p108, %p109
    %p111 = scmp.ne.s32.totalorder %s100, %s101
    %p112 = scmp.eq.s32.totalorder %s17, 0
    %p113 = por %p111, %p112
    %p114 = scmp.ne.s32.totalorder %s100, %s101
    %p115 = scmp.eq.s32.totalorder %s18, 3
    %p116 = por %p114, %p115
    %p118 = scmp.ne.s32.totalorder %s101, %s117
    %p119 = scmp.eq.s32.totalorder %s18, 0
    %p120 = por %p118, %p119
    %s121 = ssub.s32 %s20, %s34
    %s122 = ssub.s32 %s21, %s30
    %s123 = sor.u32 %s121, %s122
    %s124 = ssub.s32 %s19, %s38
    %s125 = sor.u32 %s123, %s124
    %p126 = scmp.eq.s32.totalorder %s125, 0
    %s128 = sadd.s32 %s127, 1
    %s129 = scalar_select %p126, %s127, %s128
    %p132 = pneg %p126
    %p133 = scmp.eq.s32.totalorder %s12, 3
    %p134 = por %p132, %p133
    %p135 = scmp.ne.s32.totalorder %s127, %s130
    %p136 = scmp.eq.s32.totalorder %s12, 0
    %p137 = por %p135, %p136
    %p138 = scmp.ne.s32.totalorder %s127, %s130
    %p139 = scmp.eq.s32.totalorder %s17, 3
    %p140 = por %p138, %p139
    %p141 = scmp.ne.s32.totalorder %s130, %s131
    %p142 = scmp.eq.s32.totalorder %s17, 0
    %p143 = por %p141, %p142
    %p144 = scmp.ne.s32.totalorder %s130, %s131
    %p145 = scmp.eq.s32.totalorder %s18, 3
    %p146 = por %p144, %p145
    %p148 = scmp.ne.s32.totalorder %s131, %s147
    %p149 = scmp.eq.s32.totalorder %s18, 0
    %p150 = por %p148, %p149
    %s151 = ssub.s32 %s20, %s34
    %s152 = ssub.s32 %s21, %s30
    %s153 = sor.u32 %s151, %s152
    %s154 = ssub.s32 %s19, %s38
    %s155 = sor.u32 %s153, %s154
    %p156 = scmp.eq.s32.totalorder %s155, 0
    %s158 = sadd.s32 %s157, 1
    %s159 = scalar_select %p156, %s157, %s158
    %p162 = pneg %p156
    %p163 = scmp.eq.s32.totalorder %s12, 3
    %p164 = por %p162, %p163
    %p165 = scmp.ne.s32.totalorder %s157, %s160
    %p166 = scmp.eq.s32.totalorder %s12, 0
    %p167 = por %p165, %p166
    %p168 = scmp.ne.s32.totalorder %s157, %s160
    %p169 = scmp.eq.s32.totalorder %s17, 3
    %p170 = por %p168, %p169
    %p171 = scmp.ne.s32.totalorder %s160, %s161
    %p172 = scmp.eq.s32.totalorder %s17, 0
    %p173 = por %p171, %p172
    %p174 = scmp.ne.s32.totalorder %s160, %s161
    %p175 = scmp.eq.s32.totalorder %s18, 3
    %p176 = por %p174, %p175
    %p178 = scmp.ne.s32.totalorder %s161, %s177
    %p179 = scmp.eq.s32.totalorder %s18, 0
    %p180 = por %p178, %p179
    %p181 = scmp.le.s32.totalorder 1, %s12
    %p182 = scmp.lt.s32.totalorder %s12, 5
    %p183 = pnand %p181, %p182
    %p184 = pneg %p183
    // Predicated region
    $region9: #{conv_block_forward.2} parent=5 // pred_check
      _
    $region10: #{conv_block_forward.2} parent=5 // pred_check_branch
      %186 = sbr.rel (%p183) target = $region12
    $region11: #{conv_block_forward.2} parent=5 // pred_region
      %s187 = ssub.s32 %s12, 1
      // Predicated region
      $region13: #{conv_block_forward.2} parent=11 // pred_check
        %p188 = pneg %p57
      $region14: #{conv_block_forward.2} parent=11 // pred_check_branch
        %190 = sbr.rel (%p188) target = $region16
      $region15: #{conv_block_forward.2} parent=11 // pred_region
        %p191 = scmp.lt.s32.totalorder %s22, 0
        %s192 = scalar_select %p191, %s22, 0
        %s193 = smul.addr %s192, 8
        %s194 = scalar_lea.vmem %s1, %s193
      $region16: #{conv_block_forward.2} parent=11 // pred_fallthru
        _
      // Predicated region
      $region17: #{conv_block_forward.2} parent=11 // pred_check
        %p195 = pneg %p83
      $region18: #{conv_block_forward.2} parent=11 // pred_check_branch
        %197 = sbr.rel (%p195) target = $region20
      $region19: #{conv_block_forward.2} parent=11 // pred_region
        %p198 = scmp.lt.s32.totalorder %s22, 0
        %s199 = scalar_select %p198, %s22, 0
        %s200 = scalar_lea.vmem %s2, %s199
      $region20: #{conv_block_forward.2} parent=11 // pred_fallthru
        _
    $region12: #{conv_block_forward.2} parent=5 // pred_fallthru
      _
    %p201 = scmp.lt.s32.totalorder %s12, 4
    // Predicated region
    $region21: #{conv_block_forward.2} parent=5 // pred_check
      %p202 = pneg %p201
    $region22: #{conv_block_forward.2} parent=5 // pred_check_branch
      %204 = sbr.rel (%p202) target = $region24
    $region23: #{conv_block_forward.2} parent=5 // pred_region
      _
    $region24: #{conv_block_forward.2} parent=5 // pred_fallthru
      _
    %p205 = scmp.le.s32.totalorder 1, %s12
    %p206 = scmp.lt.s32.totalorder %s12, 5
    %p207 = pnand %p205, %p206
    %p208 = pneg %p207
    // Predicated region
    $region25: #{conv_block_forward.2} parent=5 // pred_check
      _
    $region26: #{conv_block_forward.2} parent=5 // pred_check_branch
      %210 = sbr.rel (%p207) target = $region28
    $region27: #{conv_block_forward.2} parent=5 // pred_region
      %s211 = ssub.s32 %s12, 1
      %p212 = scmp.lt.s32.totalorder %s22, 0
      %s213 = scalar_select %p212, %s22, 0
      %s214 = smul.addr %s213, 8
      %s215 = scalar_lea.vmem %s1, %s214
      %p216 = pneg %p57
      %p217 = pneg %p54
      %p218 = scmp.lt.s32.totalorder %s22, 0
      %s219 = scalar_select %p218, %s22, 0
      %s220 = scalar_lea.vmem %s2, %s219
      %p221 = pneg %p83
      %p222 = pneg %p80
      %p223 = pneg %p113
      %p224 = pneg %p110
      %s225 = smul.u32 8, %s24
      %p226 = scmp.lt.s32.totalorder %s23, 1
      %s227 = scalar_select %p226, %s23, 1
      %p228 = scmp.lt.s32.totalorder %s225, 15
      %s229 = scalar_select %p228, %s225, 15
      %p230 = scmp.lt.s32.totalorder %s22, 0
      %s231 = scalar_select %p230, %s22, 0
      %s232 = smul.addr %s229, 2
      %s233 = sadd.s32 %s231, %s232
      %s234 = smul.addr %s227, 32
      %s235 = sadd.s32 %s233, %s234
      %s236 = smul.addr %s235, 4
      %s237 = scalar_lea.vmem %s3, %s236
      %p238 = pneg %p143
      %p239 = pneg %p140
      %p240 = scmp.lt.s32.totalorder %s23, 1
      %s241 = scalar_select %p240, %s23, 1
      %p242 = scmp.lt.s32.totalorder %s24, 1
      %s243 = scalar_select %p242, %s24, 1
      %p244 = scmp.lt.s32.totalorder %s22, 0
      %s245 = scalar_select %p244, %s22, 0
      %s246 = sadd.s32 %s245, %s243
      %s247 = smul.addr %s241, 2
      %s248 = sadd.s32 %s246, %s247
      %s249 = scalar_lea.vmem %s4, %s248
      %p250 = pneg %p173
      %p251 = pneg %p170
      %p252 = scmp.lt.s32.totalorder %s23, 1
      %s253 = scalar_select %p252, %s23, 1
      %p254 = scmp.lt.s32.totalorder %s24, 1
      %s255 = scalar_select %p254, %s24, 1
      %p256 = scmp.lt.s32.totalorder %s22, 0
      %s257 = scalar_select %p256, %s22, 0
      %s258 = sadd.s32 %s257, %s255
      %s259 = smul.addr %s253, 2
      %s260 = sadd.s32 %s258, %s259
      %s261 = scalar_lea.vmem %s5, %s260
      %p262 = scmp.lt.s32.totalorder %s22, 0
      %s263 = scalar_select %p262, %s22, 0
      %s264 = smul.addr %s263, 8
      %s265 = scalar_lea.vmem %s1, %s264
      %p266 = scmp.lt.s32.totalorder %s22, 0
      %s267 = scalar_select %p266, %s22, 0
      %s268 = scalar_lea.vmem %s2, %s267
      %s269 = smul.u32 8, %s24
      %p270 = scmp.lt.s32.totalorder %s23, 1
      %s271 = scalar_select %p270, %s23, 1
      %p272 = scmp.lt.s32.totalorder %s269, 15
      %s273 = scalar_select %p272, %s269, 15
      %p274 = scmp.lt.s32.totalorder %s22, 0
      %s275 = scalar_select %p274, %s22, 0
      %s276 = smul.addr %s273, 2
      %s277 = sadd.s32 %s275, %s276
      %s278 = smul.addr %s271, 32
      %s279 = sadd.s32 %s277, %s278
      %s280 = smul.addr %s279, 4
      %s281 = scalar_lea.vmem %s3, %s280
      %s282 = smul.u32 8, %s24
      %p283 = scmp.lt.s32.totalorder %s23, 1
      %s284 = scalar_select %p283, %s23, 1
      %p285 = scmp.lt.s32.totalorder %s24, 1
      %s286 = scalar_select %p285, %s24, 1
      %p287 = scmp.lt.s32.totalorder %s22, 0
      %s288 = scalar_select %p287, %s22, 0
      %s289 = sadd.s32 %s288, %s286
      %s290 = smul.addr %s284, 2
      %s291 = sadd.s32 %s289, %s290
      %s292 = scalar_lea.vmem %s4, %s291
      %p293 = scmp.lt.s32.totalorder %s23, 1
      %s294 = scalar_select %p293, %s23, 1
      %p295 = scmp.lt.s32.totalorder %s24, 1
      %s296 = scalar_select %p295, %s24, 1
      %p297 = scmp.lt.s32.totalorder %s22, 0
      %s298 = scalar_select %p297, %s22, 0
      %s299 = sadd.s32 %s298, %s296
      %s300 = smul.addr %s294, 2
      %s301 = sadd.s32 %s299, %s300
      %s302 = scalar_lea.vmem %s5, %s301
      %s303 = smul.u32 %s24, 8
      %s304 = smul.u32 %s22, 128
      %s305 = sshra.s32 %s304, 7
      %s306 = sand.u32 %s304, 127
      %s307 = smul.u32 %s303, 16
      %s308 = sadd.s32 %s305, %s307
      %s309 = smul.u32 %s23, 256
      %s310 = sadd.s32 %s308, %s309
      %s311 = scalar_lea.vmem %s0, %s310
      %s312 = scalar_lea.vmem [#allocation2], 104
      // Predicated region
      $region29: #{conv_block_forward.2} parent=27 // pred_check
        _
      $region30: #{conv_block_forward.2} parent=27 // pred_check_branch
        %314 = sbr.rel (0) target = $region32
      $region31: #{conv_block_forward.2} parent=27 // pred_region
        loop: start=0, step=1, limit=1
        $region33: #{conv_block_forward.2} parent=31 // loop_pre_header
          _
        $region34: #{conv_block_forward.2} parent=31 // loop_header
          %s316 = sphi 0, %s320
          %p317 = scmp.ge.s32.totalorder %s316, 1
          %s321 = sphi %s311, %s311
          %s322 = sphi %s312, %s312
        $region35: #{conv_block_forward.2} parent=31 // loop_header_branch
          %319 = sbr.rel (%p317) target = $region39
        $region36: #{conv_block_forward.2} parent=31 // loop_body
          %v323 = vld [vmem:[%s321] sm:$0xff]
          %324 = vst [vmem:[%s322] sm:$0xff] %v323
          %v325 = vld [vmem:[%s321 + $0x8] sm:$0xff]
          %326 = vst [vmem:[%s322 + $0x8] sm:$0xff] %v325
          %v327 = vld [vmem:[%s321 + $0x10] sm:$0xff]
          %328 = vst [vmem:[%s322 + $0x20] sm:$0xff] %v327
          %v329 = vld [vmem:[%s321 + $0x18] sm:$0xff]
          %330 = vst [vmem:[%s322 + $0x28] sm:$0xff] %v329
          %v331 = vld [vmem:[%s321 + $0x20] sm:$0xff]
          %332 = vst [vmem:[%s322 + $0x40] sm:$0xff] %v331
          %v333 = vld [vmem:[%s321 + $0x28] sm:$0xff]
          %334 = vst [vmem:[%s322 + $0x48] sm:$0xff] %v333
          %v335 = vld [vmem:[%s321 + $0x30] sm:$0xff]
          %336 = vst [vmem:[%s322 + $0x60] sm:$0xff] %v335
          %v337 = vld [vmem:[%s321 + $0x38] sm:$0xff]
          %338 = vst [vmem:[%s322 + $0x68] sm:$0xff] %v337
          %v339 = vld [vmem:[%s321 + $0x40] sm:$0xff]
          %340 = vst [vmem:[%s322 + $0x80] sm:$0xff] %v339
          %v341 = vld [vmem:[%s321 + $0x48] sm:$0xff]
          %342 = vst [vmem:[%s322 + $0x88] sm:$0xff] %v341
          %v343 = vld [vmem:[%s321 + $0x50] sm:$0xff]
          %344 = vst [vmem:[%s322 + $0xa0] sm:$0xff] %v343
          %v345 = vld [vmem:[%s321 + $0x58] sm:$0xff]
          %346 = vst [vmem:[%s322 + $0xa8] sm:$0xff] %v345
          %v347 = vld [vmem:[%s321 + $0x60] sm:$0xff]
          %348 = vst [vmem:[%s322 + $0xc0] sm:$0xff] %v347
          %v349 = vld [vmem:[%s321 + $0x68] sm:$0xff]
          %350 = vst [vmem:[%s322 + $0xc8] sm:$0xff] %v349
          %v351 = vld [vmem:[%s321 + $0x70] sm:$0xff]
          %352 = vst [vmem:[%s322 + $0xe0] sm:$0xff] %v351
          %v353 = vld [vmem:[%s321 + $0x78] sm:$0xff]
          %354 = vst [vmem:[%s322 + $0xe8] sm:$0xff] %v353
        $region37: #{conv_block_forward.2} parent=31 // loop_footer
          %s320 = sadd.s32 1, %s316
        $region38: #{conv_block_forward.2} parent=31 // loop_footer_branch
          %315 = sbr.rel target = $region34
        $region39: #{conv_block_forward.2} parent=31 // loop_exit
          _
      $region32: #{conv_block_forward.2} parent=27 // pred_fallthru
        _
      // Predicated region
      $region40: #{conv_block_forward.2} parent=27 // pred_check
        _
      $region41: #{conv_block_forward.2} parent=27 // pred_check_branch
        %356 = sbr.rel target = $region43
      $region42: #{conv_block_forward.2} parent=27 // pred_region
        _
      $region43: #{conv_block_forward.2} parent=27 // pred_fallthru
        _
      // Predicated region
      $region44: #{conv_block_forward.2} parent=27 // pred_check
        _
      $region45: #{conv_block_forward.2} parent=27 // pred_check_branch
        %359 = sbr.rel (0) target = $region47
      $region46: #{conv_block_forward.2} parent=27 // pred_region
        %360 = vsyncadd [#allocation3], 2048
      $region47: #{conv_block_forward.2} parent=27 // pred_fallthru
        _
      %p361 = scmp.gt.s32.totalorder %s24, 0
      // Predicated region
      $region48: #{conv_block_forward.2} parent=27 // pred_check
        %p362 = pneg %p361
      $region49: #{conv_block_forward.2} parent=27 // pred_check_branch
        %364 = sbr.rel (%p362) target = $region51
      $region50: #{conv_block_forward.2} parent=27 // pred_region
        %s365 = ssub.s32 %s303, 3
        %s366 = smul.u32 %s365, 16
        %s367 = sadd.s32 %s305, %s366
        %s368 = sadd.s32 %s367, %s309
        %s369 = scalar_lea.vmem %s0, %s368
        %s370 = scalar_lea.vmem [#allocation2], 8
        %s371 = scalar_lea.sflag [#allocation3], 1
        // Predicated region
        $region52: #{conv_block_forward.2} parent=50 // pred_check
          _
        $region53: #{conv_block_forward.2} parent=50 // pred_check_branch
          %373 = sbr.rel (0) target = $region55
        $region54: #{conv_block_forward.2} parent=50 // pred_region
          loop: start=0, step=1, limit=1
          $region56: #{conv_block_forward.2} parent=54 // loop_pre_header
            _
          $region57: #{conv_block_forward.2} parent=54 // loop_header
            %s375 = sphi 0, %s379
            %p376 = scmp.ge.s32.totalorder %s375, 1
            %s380 = sphi %s369, %s369
            %s381 = sphi %s370, %s370
          $region58: #{conv_block_forward.2} parent=54 // loop_header_branch
            %378 = sbr.rel (%p376) target = $region62
          $region59: #{conv_block_forward.2} parent=54 // loop_body
            %v382 = vld [vmem:[%s380] sm:$0xff]
            %383 = vst [vmem:[%s381] sm:$0xff] %v382
            %v384 = vld [vmem:[%s380 + $0x8] sm:$0xff]
            %385 = vst [vmem:[%s381 + $0x8] sm:$0xff] %v384
            %v386 = vld [vmem:[%s380 + $0x10] sm:$0xff]
            %387 = vst [vmem:[%s381 + $0x20] sm:$0xff] %v386
            %v388 = vld [vmem:[%s380 + $0x18] sm:$0xff]
            %389 = vst [vmem:[%s381 + $0x28] sm:$0xff] %v388
            %v390 = vld [vmem:[%s380 + $0x20] sm:$0xff]
            %391 = vst [vmem:[%s381 + $0x40] sm:$0xff] %v390
            %v392 = vld [vmem:[%s380 + $0x28] sm:$0xff]
            %393 = vst [vmem:[%s381 + $0x48] sm:$0xff] %v392
          $region60: #{conv_block_forward.2} parent=54 // loop_footer
            %s379 = sadd.s32 1, %s375
          $region61: #{conv_block_forward.2} parent=54 // loop_footer_branch
            %374 = sbr.rel target = $region57
          $region62: #{conv_block_forward.2} parent=54 // loop_exit
            _
        $region55: #{conv_block_forward.2} parent=50 // pred_fallthru
          _
        // Predicated region
        $region63: #{conv_block_forward.2} parent=50 // pred_check
          _
        $region64: #{conv_block_forward.2} parent=50 // pred_check_branch
          %395 = sbr.rel target = $region66
        $region65: #{conv_block_forward.2} parent=50 // pred_region
          _
        $region66: #{conv_block_forward.2} parent=50 // pred_fallthru
          _
        // Predicated region
        $region67: #{conv_block_forward.2} parent=50 // pred_check
          _
        $region68: #{conv_block_forward.2} parent=50 // pred_check_branch
          %398 = sbr.rel (0) target = $region70
        $region69: #{conv_block_forward.2} parent=50 // pred_region
          %399 = vsyncadd %s371, 768
        $region70: #{conv_block_forward.2} parent=50 // pred_fallthru
          _
      $region51: #{conv_block_forward.2} parent=27 // pred_fallthru
        _
      %p400 = scmp.lt.s32.totalorder %s24, 1
      // Predicated region
      $region71: #{conv_block_forward.2} parent=27 // pred_check
        %p401 = pneg %p400
      $region72: #{conv_block_forward.2} parent=27 // pred_check_branch
        %403 = sbr.rel (%p401) target = $region74
      $region73: #{conv_block_forward.2} parent=27 // pred_region
        %s404 = sadd.s32 %s303, 8
        %s405 = smul.u32 %s404, 16
        %s406 = sadd.s32 %s305, %s405
        %s407 = sadd.s32 %s406, %s309
        %s408 = scalar_lea.vmem %s0, %s407
        %s409 = scalar_lea.vmem [#allocation2], 360
        %s410 = scalar_lea.sflag [#allocation3], 2
        // Predicated region
        $region75: #{conv_block_forward.2} parent=73 // pred_check
          _
        $region76: #{conv_block_forward.2} parent=73 // pred_check_branch
          %412 = sbr.rel (0) target = $region78
        $region77: #{conv_block_forward.2} parent=73 // pred_region
          loop: start=0, step=1, limit=1
          $region79: #{conv_block_forward.2} parent=77 // loop_pre_header
            _
          $region80: #{conv_block_forward.2} parent=77 // loop_header
            %s414 = sphi 0, %s418
            %p415 = scmp.ge.s32.totalorder %s414, 1
            %s419 = sphi %s408, %s408
            %s420 = sphi %s409, %s409
          $region81: #{conv_block_forward.2} parent=77 // loop_header_branch
            %417 = sbr.rel (%p415) target = $region85
          $region82: #{conv_block_forward.2} parent=77 // loop_body
            %v421 = vld [vmem:[%s419] sm:$0xff]
            %422 = vst [vmem:[%s420] sm:$0xff] %v421
            %v423 = vld [vmem:[%s419 + $0x8] sm:$0xff]
            %424 = vst [vmem:[%s420 + $0x8] sm:$0xff] %v423
            %v425 = vld [vmem:[%s419 + $0x10] sm:$0xff]
            %426 = vst [vmem:[%s420 + $0x20] sm:$0xff] %v425
            %v427 = vld [vmem:[%s419 + $0x18] sm:$0xff]
            %428 = vst [vmem:[%s420 + $0x28] sm:$0xff] %v427
            %v429 = vld [vmem:[%s419 + $0x20] sm:$0xff]
            %430 = vst [vmem:[%s420 + $0x40] sm:$0xff] %v429
            %v431 = vld [vmem:[%s419 + $0x28] sm:$0xff]
            %432 = vst [vmem:[%s420 + $0x48] sm:$0xff] %v431
          $region83: #{conv_block_forward.2} parent=77 // loop_footer
            %s418 = sadd.s32 1, %s414
          $region84: #{conv_block_forward.2} parent=77 // loop_footer_branch
            %413 = sbr.rel target = $region80
          $region85: #{conv_block_forward.2} parent=77 // loop_exit
            _
        $region78: #{conv_block_forward.2} parent=73 // pred_fallthru
          _
        // Predicated region
        $region86: #{conv_block_forward.2} parent=73 // pred_check
          _
        $region87: #{conv_block_forward.2} parent=73 // pred_check_branch
          %434 = sbr.rel target = $region89
        $region88: #{conv_block_forward.2} parent=73 // pred_region
          _
        $region89: #{conv_block_forward.2} parent=73 // pred_fallthru
          _
        // Predicated region
        $region90: #{conv_block_forward.2} parent=73 // pred_check
          _
        $region91: #{conv_block_forward.2} parent=73 // pred_check_branch
          %437 = sbr.rel (0) target = $region93
        $region92: #{conv_block_forward.2} parent=73 // pred_region
          %438 = vsyncadd %s410, 768
        $region93: #{conv_block_forward.2} parent=73 // pred_fallthru
          _
      $region74: #{conv_block_forward.2} parent=27 // pred_fallthru
        _
      %p439 = scmp.eq.s32.totalorder %s24, 0
      // Predicated region
      $region94: #{conv_block_forward.2} parent=27 // pred_check
        %p440 = pneg %p439
      $region95: #{conv_block_forward.2} parent=27 // pred_check_branch
        %442 = sbr.rel (%p440) target = $region97
      $region96: #{conv_block_forward.2} parent=27 // pred_region
        %443 = vst [vmem:[#allocation2 + $0x8] sm:$0xff] 0.0
        %444 = vst [vmem:[#allocation2 + $0x10] sm:$0xff] 0.0
        %445 = vst [vmem:[#allocation2 + $0x28] sm:$0xff] 0.0
        %446 = vst [vmem:[#allocation2 + $0x30] sm:$0xff] 0.0
        %447 = vst [vmem:[#allocation2 + $0x48] sm:$0xff] 0.0
        %448 = vst [vmem:[#allocation2 + $0x50] sm:$0xff] 0.0
      $region97: #{conv_block_forward.2} parent=27 // pred_fallthru
        _
      %p449 = scmp.eq.s32.totalorder %s24, 1
      // Predicated region
      $region98: #{conv_block_forward.2} parent=27 // pred_check
        %p450 = pneg %p449
      $region99: #{conv_block_forward.2} parent=27 // pred_check_branch
        %452 = sbr.rel (%p450) target = $region101
      $region100: #{conv_block_forward.2} parent=27 // pred_region
        %s453 = scalar_lea.vmem [#allocation2], 352
        %454 = vst [vmem:[%s453 + $0x8] sm:$0xff] 0.0
        %455 = vst [vmem:[%s453 + $0x10] sm:$0xff] 0.0
        %456 = vst [vmem:[%s453 + $0x28] sm:$0xff] 0.0
        %457 = vst [vmem:[%s453 + $0x30] sm:$0xff] 0.0
        %458 = vst [vmem:[%s453 + $0x48] sm:$0xff] 0.0
        %459 = vst [vmem:[%s453 + $0x50] sm:$0xff] 0.0
      $region101: #{conv_block_forward.2} parent=27 // pred_fallthru
        _
      %460 = vst [vmem:[#allocation2 + $0x5] sm:$0x7] 0.0
      %461 = vst [vmem:[#allocation2 + $0x25] sm:$0x7] 0.0
      %462 = vst [vmem:[#allocation2 + $0x45] sm:$0x7] 0.0
      %463 = vst [vmem:[#allocation2 + $0x65] sm:$0x7] 0.0
      %464 = vst [vmem:[#allocation2 + $0x85] sm:$0x7] 0.0
      %465 = vst [vmem:[#allocation2 + $0xa5] sm:$0x7] 0.0
      %466 = vst [vmem:[#allocation2 + $0xc5] sm:$0x7] 0.0
      %467 = vst [vmem:[#allocation2 + $0xe5] sm:$0x7] 0.0
      %468 = vst [vmem:[#allocation2 + $0x105] sm:$0x7] 0.0
      %469 = vst [vmem:[#allocation2 + $0x125] sm:$0x7] 0.0
      %470 = vst [vmem:[#allocation2 + $0x145] sm:$0x7] 0.0
      %471 = vst [vmem:[#allocation2 + $0x165] sm:$0x7] 0.0
      %472 = vst [vmem:[#allocation2 + $0x185] sm:$0x7] 0.0
      %473 = vst [vmem:[#allocation2 + $0x1a5] sm:$0x7] 0.0
      %474 = vst [vmem:[#allocation2 + $0x18] sm:$0x7] 0.0
      %475 = vst [vmem:[#allocation2 + $0x38] sm:$0x7] 0.0
      %476 = vst [vmem:[#allocation2 + $0x58] sm:$0x7] 0.0
      %477 = vst [vmem:[#allocation2 + $0x78] sm:$0x7] 0.0
      %478 = vst [vmem:[#allocation2 + $0x98] sm:$0x7] 0.0
      %479 = vst [vmem:[#allocation2 + $0xb8] sm:$0x7] 0.0
      %480 = vst [vmem:[#allocation2 + $0xd8] sm:$0x7] 0.0
      %481 = vst [vmem:[#allocation2 + $0xf8] sm:$0x7] 0.0
      %482 = vst [vmem:[#allocation2 + $0x118] sm:$0x7] 0.0
      %483 = vst [vmem:[#allocation2 + $0x138] sm:$0x7] 0.0
      %484 = vst [vmem:[#allocation2 + $0x158] sm:$0x7] 0.0
      %485 = vst [vmem:[#allocation2 + $0x178] sm:$0x7] 0.0
      %486 = vst [vmem:[#allocation2 + $0x198] sm:$0x7] 0.0
      %487 = vst [vmem:[#allocation2 + $0x1b8] sm:$0x7] 0.0
      // Predicated region
      $region102: #{conv_block_forward.2} parent=27 // pred_check
        %p488 = pneg %p361
      $region103: #{conv_block_forward.2} parent=27 // pred_check_branch
        %490 = sbr.rel (%p488) target = $region105
      $region104: #{conv_block_forward.2} parent=27 // pred_region
        %s491 = scalar_lea.sflag [#allocation3], 1
        %s492 = smul.u32 1, 3
        %s493 = smul.u32 %s492, 16
        %s494 = smul.u32 %s493, 1
        %s495 = sshll.u32 %s494, 4
        %496 = dma.done %s491, %s495
      $region105: #{conv_block_forward.2} parent=27 // pred_fallthru
        _
      // Predicated region
      $region106: #{conv_block_forward.2} parent=27 // pred_check
        %p497 = pneg %p400
      $region107: #{conv_block_forward.2} parent=27 // pred_check_branch
        %499 = sbr.rel (%p497) target = $region109
      $region108: #{conv_block_forward.2} parent=27 // pred_region
        %s500 = scalar_lea.sflag [#allocation3], 2
        %s501 = smul.u32 1, 3
        %s502 = smul.u32 %s501, 16
        %s503 = smul.u32 %s502, 1
        %s504 = sshll.u32 %s503, 4
        %505 = dma.done %s500, %s504
      $region109: #{conv_block_forward.2} parent=27 // pred_fallthru
        _
      %s506 = smul.u32 1, 8
      %s507 = smul.u32 %s506, 16
      %s508 = smul.u32 %s507, 1
      %s509 = sshll.u32 %s508, 4
      %510 = dma.done [#allocation3], %s509
      %v511 = vld [vmem:[%s268] sm:$0x1]
      %v513 = vperm.slane %v511, 0
      %v515 = vadd.f32 %v513, 0.0
      %v516 = vld [vmem:[#allocation2 + $0x5] sm:$0xff]
      %v517 = vld [vmem:[#allocation2 + $0xd] sm:$0xff]
      %v518 = vld [vmem:[#allocation2 + $0x25] sm:$0xff]
      %v519 = vld [vmem:[#allocation2 + $0x2d] sm:$0xff]
      %v520 = vld [vmem:[#allocation2 + $0x45] sm:$0xff]
      %v521 = vld [vmem:[#allocation2 + $0x4d] sm:$0xff]
      %v522 = vld [vmem:[#allocation2 + $0x65] sm:$0xff]
      %v523 = vld [vmem:[#allocation2 + $0x6d] sm:$0xff]
      %v524 = vld [vmem:[#allocation2 + $0x85] sm:$0xff]
      %v525 = vld [vmem:[#allocation2 + $0x8d] sm:$0xff]
      %v526 = vld [vmem:[#allocation2 + $0xa5] sm:$0xff]
      %v527 = vld [vmem:[#allocation2 + $0xad] sm:$0xff]
      %v528 = vld [vmem:[#allocation2 + $0xc5] sm:$0xff]
      %v529 = vld [vmem:[#allocation2 + $0xcd] sm:$0xff]
      %v530 = vld [vmem:[#allocation2 + $0xe5] sm:$0xff]
      %v531 = vld [vmem:[#allocation2 + $0xed] sm:$0xff]
      %v532 = vld [vmem:[#allocation2 + $0x105] sm:$0xff]
      %v533 = vld [vmem:[#allocation2 + $0x10d] sm:$0xff]
      %v534 = vld [vmem:[#allocation2 + $0x125] sm:$0xff]
      %v535 = vld [vmem:[#allocation2 + $0x12d] sm:$0xff]
      %v536 = vld [vmem:[#allocation2 + $0x145] sm:$0xff]
      %v537 = vld [vmem:[#allocation2 + $0x14d] sm:$0xff]
      %v538 = vld [vmem:[#allocation2 + $0x165] sm:$0xff]
      %v539 = vld [vmem:[#allocation2 + $0x16d] sm:$0xff]
      %v540 = vld [vmem:[#allocation2 + $0x185] sm:$0xff]
      %v541 = vld [vmem:[#allocation2 + $0x18d] sm:$0xff]
      %v542 = vld [vmem:[#allocation2 + $0x1a5] sm:$0xff]
      %v543 = vld [vmem:[#allocation2 + $0x1ad] sm:$0xff]
      %v544 = vld [vmem:[%s265] sm:$0x1]
      %v545 = vperm.slane %v544, 0
      %v546 = vmul.f32 %v516, %v545
      %v547 = vmul.f32 %v517, %v545
      %v548 = vmul.f32 %v518, %v545
      %v549 = vmul.f32 %v519, %v545
      %v550 = vmul.f32 %v520, %v545
      %v551 = vmul.f32 %v521, %v545
      %v552 = vmul.f32 %v522, %v545
      %v553 = vmul.f32 %v523, %v545
      %v554 = vmul.f32 %v524, %v545
      %v555 = vmul.f32 %v525, %v545
      %v556 = vmul.f32 %v526, %v545
      %v557 = vmul.f32 %v527, %v545
      %v558 = vmul.f32 %v528, %v545
      %v559 = vmul.f32 %v529, %v545
      %v560 = vmul.f32 %v530, %v545
      %v561 = vmul.f32 %v531, %v545
      %v562 = vadd.f32 %v515, %v546
      %v563 = vadd.f32 %v515, %v547
      %v564 = vadd.f32 %v515, %v548
      %v565 = vadd.f32 %v515, %v549
      %v566 = vadd.f32 %v515, %v550
      %v567 = vadd.f32 %v515, %v551
      %v568 = vadd.f32 %v515, %v552
      %v569 = vadd.f32 %v515, %v553
      %v570 = vadd.f32 %v515, %v554
      %v571 = vadd.f32 %v515, %v555
      %v572 = vadd.f32 %v515, %v556
      %v573 = vadd.f32 %v515, %v557
      %v574 = vadd.f32 %v515, %v558
      %v575 = vadd.f32 %v515, %v559
      %v576 = vadd.f32 %v515, %v560
      %v577 = vadd.f32 %v515, %v561
      %s578 = scalar_lea.vmem %s265, 8
      %v579 = vld [vmem:[%s578] sm:$0x1]
      %v580 = vperm.slane %v579, 0
      %v581 = vmul.f32 %v518, %v580
      %v582 = vmul.f32 %v519, %v580
      %v583 = vmul.f32 %v520, %v580
      %v584 = vmul.f32 %v521, %v580
      %v585 = vmul.f32 %v522, %v580
      %v586 = vmul.f32 %v523, %v580
      %v587 = vmul.f32 %v524, %v580
      %v588 = vmul.f32 %v525, %v580
      %v589 = vmul.f32 %v526, %v580
      %v590 = vmul.f32 %v527, %v580
      %v591 = vmul.f32 %v528, %v580
      %v592 = vmul.f32 %v529, %v580
      %v593 = vmul.f32 %v530, %v580
      %v594 = vmul.f32 %v531, %v580
      %v595 = vmul.f32 %v532, %v580
      %v596 = vmul.f32 %v533, %v580
      %v597 = vadd.f32 %v562, %v581
      %v598 = vadd.f32 %v563, %v582
      %v599 = vadd.f32 %v564, %v583
      %v600 = vadd.f32 %v565, %v584
      %v601 = vadd.f32 %v566, %v585
      %v602 = vadd.f32 %v567, %v586
      %v603 = vadd.f32 %v568, %v587
      %v604 = vadd.f32 %v569, %v588
      %v605 = vadd.f32 %v570, %v589
      %v606 = vadd.f32 %v571, %v590
      %v607 = vadd.f32 %v572, %v591
      %v608 = vadd.f32 %v573, %v592
      %v609 = vadd.f32 %v574, %v593
      %v610 = vadd.f32 %v575, %v594
      %v611 = vadd.f32 %v576, %v595
      %v612 = vadd.f32 %v577, %v596
      %s613 = scalar_lea.vmem %s265, 16
      %v614 = vld [vmem:[%s613] sm:$0x1]
      %v615 = vperm.slane %v614, 0
      %v616 = vmul.f32 %v520, %v615
      %v617 = vmul.f32 %v521, %v615
      %v618 = vmul.f32 %v522, %v615
      %v619 = vmul.f32 %v523, %v615
      %v620 = vmul.f32 %v524, %v615
      %v621 = vmul.f32 %v525, %v615
      %v622 = vmul.f32 %v526, %v615
      %v623 = vmul.f32 %v527, %v615
      %v624 = vmul.f32 %v528, %v615
      %v625 = vmul.f32 %v529, %v615
      %v626 = vmul.f32 %v530, %v615
      %v627 = vmul.f32 %v531, %v615
      %v628 = vmul.f32 %v532, %v615
      %v629 = vmul.f32 %v533, %v615
      %v630 = vmul.f32 %v534, %v615
      %v631 = vmul.f32 %v535, %v615
      %v632 = vadd.f32 %v597, %v616
      %v633 = vadd.f32 %v598, %v617
      %v634 = vadd.f32 %v599, %v618
      %v635 = vadd.f32 %v600, %v619
      %v636 = vadd.f32 %v601, %v620
      %v637 = vadd.f32 %v602, %v621
      %v638 = vadd.f32 %v603, %v622
      %v639 = vadd.f32 %v604, %v623
      %v640 = vadd.f32 %v605, %v624
      %v641 = vadd.f32 %v606, %v625
      %v642 = vadd.f32 %v607, %v626
      %v643 = vadd.f32 %v608, %v627
      %v644 = vadd.f32 %v609, %v628
      %v645 = vadd.f32 %v610, %v629
      %v646 = vadd.f32 %v611, %v630
      %v647 = vadd.f32 %v612, %v631
      %s648 = scalar_lea.vmem %s265, 24
      %v649 = vld [vmem:[%s648] sm:$0x1]
      %v650 = vperm.slane %v649, 0
      %v651 = vmul.f32 %v522, %v650
      %v652 = vmul.f32 %v523, %v650
      %v653 = vmul.f32 %v524, %v650
      %v654 = vmul.f32 %v525, %v650
      %v655 = vmul.f32 %v526, %v650
      %v656 = vmul.f32 %v527, %v650
      %v657 = vmul.f32 %v528, %v650
      %v658 = vmul.f32 %v529, %v650
      %v659 = vmul.f32 %v530, %v650
      %v660 = vmul.f32 %v531, %v650
      %v661 = vmul.f32 %v532, %v650
      %v662 = vmul.f32 %v533, %v650
      %v663 = vmul.f32 %v534, %v650
      %v664 = vmul.f32 %v535, %v650
      %v665 = vmul.f32 %v536, %v650
      %v666 = vmul.f32 %v537, %v650
      %v667 = vadd.f32 %v632, %v651
      %v668 = vadd.f32 %v633, %v652
      %v669 = vadd.f32 %v634, %v653
      %v670 = vadd.f32 %v635, %v654
      %v671 = vadd.f32 %v636, %v655
      %v672 = vadd.f32 %v637, %v656
      %v673 = vadd.f32 %v638, %v657
      %v674 = vadd.f32 %v639, %v658
      %v675 = vadd.f32 %v640, %v659
      %v676 = vadd.f32 %v641, %v660
      %v677 = vadd.f32 %v642, %v661
      %v678 = vadd.f32 %v643, %v662
      %v679 = vadd.f32 %v644, %v663
      %v680 = vadd.f32 %v645, %v664
      %v681 = vadd.f32 %v646, %v665
      %v682 = vadd.f32 %v647, %v666
      %s683 = scalar_lea.vmem %s265, 32
      %v684 = vld [vmem:[%s683] sm:$0x1]
      %v685 = vperm.slane %v684, 0
      %v686 = vmul.f32 %v524, %v685
      %v687 = vmul.f32 %v525, %v685
      %v688 = vmul.f32 %v526, %v685
      %v689 = vmul.f32 %v527, %v685
      %v690 = vmul.f32 %v528, %v685
      %v691 = vmul.f32 %v529, %v685
      %v692 = vmul.f32 %v530, %v685
      %v693 = vmul.f32 %v531, %v685
      %v694 = vmul.f32 %v532, %v685
      %v695 = vmul.f32 %v533, %v685
      %v696 = vmul.f32 %v534, %v685
      %v697 = vmul.f32 %v535, %v685
      %v698 = vmul.f32 %v536, %v685
      %v699 = vmul.f32 %v537, %v685
      %v700 = vmul.f32 %v538, %v685
      %v701 = vmul.f32 %v539, %v685
      %v702 = vadd.f32 %v667, %v686
      %v703 = vadd.f32 %v668, %v687
      %v704 = vadd.f32 %v669, %v688
      %v705 = vadd.f32 %v670, %v689
      %v706 = vadd.f32 %v671, %v690
      %v707 = vadd.f32 %v672, %v691
      %v708 = vadd.f32 %v673, %v692
      %v709 = vadd.f32 %v674, %v693
      %v710 = vadd.f32 %v675, %v694
      %v711 = vadd.f32 %v676, %v695
      %v712 = vadd.f32 %v677, %v696
      %v713 = vadd.f32 %v678, %v697
      %v714 = vadd.f32 %v679, %v698
      %v715 = vadd.f32 %v680, %v699
      %v716 = vadd.f32 %v681, %v700
      %v717 = vadd.f32 %v682, %v701
      %s718 = scalar_lea.vmem %s265, 40
      %v719 = vld [vmem:[%s718] sm:$0x1]
      %v720 = vperm.slane %v719, 0
      %v721 = vmul.f32 %v526, %v720
      %v722 = vmul.f32 %v527, %v720
      %v723 = vmul.f32 %v528, %v720
      %v724 = vmul.f32 %v529, %v720
      %v725 = vmul.f32 %v530, %v720
      %v726 = vmul.f32 %v531, %v720
      %v727 = vmul.f32 %v532, %v720
      %v728 = vmul.f32 %v533, %v720
      %v729 = vmul.f32 %v534, %v720
      %v730 = vmul.f32 %v535, %v720
      %v731 = vmul.f32 %v536, %v720
      %v732 = vmul.f32 %v537, %v720
      %v733 = vmul.f32 %v538, %v720
      %v734 = vmul.f32 %v539, %v720
      %v735 = vmul.f32 %v540, %v720
      %v736 = vmul.f32 %v541, %v720
      %v737 = vadd.f32 %v702, %v721
      %v738 = vadd.f32 %v703, %v722
      %v739 = vadd.f32 %v704, %v723
      %v740 = vadd.f32 %v705, %v724
      %v741 = vadd.f32 %v706, %v725
      %v742 = vadd.f32 %v707, %v726
      %v743 = vadd.f32 %v708, %v727
      %v744 = vadd.f32 %v709, %v728
      %v745 = vadd.f32 %v710, %v729
      %v746 = vadd.f32 %v711, %v730
      %v747 = vadd.f32 %v712, %v731
      %v748 = vadd.f32 %v713, %v732
      %v749 = vadd.f32 %v714, %v733
      %v750 = vadd.f32 %v715, %v734
      %v751 = vadd.f32 %v716, %v735
      %v752 = vadd.f32 %v717, %v736
      %s753 = scalar_lea.vmem %s265, 48
      %v754 = vld [vmem:[%s753] sm:$0x1]
      %v755 = vperm.slane %v754, 0
      %v756 = vmul.f32 %v528, %v755
      %v757 = vmul.f32 %v529, %v755
      %v758 = vmul.f32 %v530, %v755
      %v759 = vmul.f32 %v531, %v755
      %v760 = vmul.f32 %v532, %v755
      %v761 = vmul.f32 %v533, %v755
      %v762 = vmul.f32 %v534, %v755
      %v763 = vmul.f32 %v535, %v755
      %v764 = vmul.f32 %v536, %v755
      %v765 = vmul.f32 %v537, %v755
      %v766 = vmul.f32 %v538, %v755
      %v767 = vmul.f32 %v539, %v755
      %v768 = vmul.f32 %v540, %v755
      %v769 = vmul.f32 %v541, %v755
      %v770 = vmul.f32 %v542, %v755
      %v771 = vmul.f32 %v543, %v755
      %v772 = vadd.f32 %v737, %v756
      %v773 = vadd.f32 %v738, %v757
      %v774 = vadd.f32 %v739, %v758
      %v775 = vadd.f32 %v740, %v759
      %v776 = vadd.f32 %v741, %v760
      %v777 = vadd.f32 %v742, %v761
      %v778 = vadd.f32 %v743, %v762
      %v779 = vadd.f32 %v744, %v763
      %v780 = vadd.f32 %v745, %v764
      %v781 = vadd.f32 %v746, %v765
      %v782 = vadd.f32 %v747, %v766
      %v783 = vadd.f32 %v748, %v767
      %v784 = vadd.f32 %v749, %v768
      %v785 = vadd.f32 %v750, %v769
      %v786 = vadd.f32 %v751, %v770
      %v787 = vadd.f32 %v752, %v771
      %v788 = vld [vmem:[#allocation2 + $0x6] sm:$0xff]
      %v789 = vld [vmem:[#allocation2 + $0xe] sm:$0xff]
      %v790 = vld [vmem:[#allocation2 + $0x26] sm:$0xff]
      %v791 = vld [vmem:[#allocation2 + $0x2e] sm:$0xff]
      %v792 = vld [vmem:[#allocation2 + $0x46] sm:$0xff]
      %v793 = vld [vmem:[#allocation2 + $0x4e] sm:$0xff]
      %v794 = vld [vmem:[#allocation2 + $0x66] sm:$0xff]
      %v795 = vld [vmem:[#allocation2 + $0x6e] sm:$0xff]
      %v796 = vld [vmem:[#allocation2 + $0x86] sm:$0xff]
      %v797 = vld [vmem:[#allocation2 + $0x8e] sm:$0xff]
      %v798 = vld [vmem:[#allocation2 + $0xa6] sm:$0xff]
      %v799 = vld [vmem:[#allocation2 + $0xae] sm:$0xff]
      %v800 = vld [vmem:[#allocation2 + $0xc6] sm:$0xff]
      %v801 = vld [vmem:[#allocation2 + $0xce] sm:$0xff]
      %v802 = vld [vmem:[#allocation2 + $0xe6] sm:$0xff]
      %v803 = vld [vmem:[#allocation2 + $0xee] sm:$0xff]
      %v804 = vld [vmem:[#allocation2 + $0x106] sm:$0xff]
      %v805 = vld [vmem:[#allocation2 + $0x10e] sm:$0xff]
      %v806 = vld [vmem:[#allocation2 + $0x126] sm:$0xff]
      %v807 = vld [vmem:[#allocation2 + $0x12e] sm:$0xff]
      %v808 = vld [vmem:[#allocation2 + $0x146] sm:$0xff]
      %v809 = vld [vmem:[#allocation2 + $0x14e] sm:$0xff]
      %v810 = vld [vmem:[#allocation2 + $0x166] sm:$0xff]
      %v811 = vld [vmem:[#allocation2 + $0x16e] sm:$0xff]
      %v812 = vld [vmem:[#allocation2 + $0x186] sm:$0xff]
      %v813 = vld [vmem:[#allocation2 + $0x18e] sm:$0xff]
      %v814 = vld [vmem:[#allocation2 + $0x1a6] sm:$0xff]
      %v815 = vld [vmem:[#allocation2 + $0x1ae] sm:$0xff]
      %v816 = vld [vmem:[%s265 + $0x1] sm:$0x1]
      %v817 = vperm.slane %v816, 0
      %v818 = vmul.f32 %v788, %v817
      %v819 = vmul.f32 %v789, %v817
      %v820 = vmul.f32 %v790, %v817
      %v821 = vmul.f32 %v791, %v817
      %v822 = vmul.f32 %v792, %v817
      %v823 = vmul.f32 %v793, %v817
      %v824 = vmul.f32 %v794, %v817
      %v825 = vmul.f32 %v795, %v817
      %v826 = vmul.f32 %v796, %v817
      %v827 = vmul.f32 %v797, %v817
      %v828 = vmul.f32 %v798, %v817
      %v829 = vmul.f32 %v799, %v817
      %v830 = vmul.f32 %v800, %v817
      %v831 = vmul.f32 %v801, %v817
      %v832 = vmul.f32 %v802, %v817
      %v833 = vmul.f32 %v803, %v817
      %v834 = vadd.f32 %v772, %v818
      %v835 = vadd.f32 %v773, %v819
      %v836 = vadd.f32 %v774, %v820
      %v837 = vadd.f32 %v775, %v821
      %v838 = vadd.f32 %v776, %v822
      %v839 = vadd.f32 %v777, %v823
      %v840 = vadd.f32 %v778, %v824
      %v841 = vadd.f32 %v779, %v825
      %v842 = vadd.f32 %v780, %v826
      %v843 = vadd.f32 %v781, %v827
      %v844 = vadd.f32 %v782, %v828
      %v845 = vadd.f32 %v783, %v829
      %v846 = vadd.f32 %v784, %v830
      %v847 = vadd.f32 %v785, %v831
      %v848 = vadd.f32 %v786, %v832
      %v849 = vadd.f32 %v787, %v833
      %v850 = vld [vmem:[%s578 + $0x1] sm:$0x1]
      %v851 = vperm.slane %v850, 0
      %v852 = vmul.f32 %v790, %v851
      %v853 = vmul.f32 %v791, %v851
      %v854 = vmul.f32 %v792, %v851
      %v855 = vmul.f32 %v793, %v851
      %v856 = vmul.f32 %v794, %v851
      %v857 = vmul.f32 %v795, %v851
      %v858 = vmul.f32 %v796, %v851
      %v859 = vmul.f32 %v797, %v851
      %v860 = vmul.f32 %v798, %v851
      %v861 = vmul.f32 %v799, %v851
      %v862 = vmul.f32 %v800, %v851
      %v863 = vmul.f32 %v801, %v851
      %v864 = vmul.f32 %v802, %v851
      %v865 = vmul.f32 %v803, %v851
      %v866 = vmul.f32 %v804, %v851
      %v867 = vmul.f32 %v805, %v851
      %v868 = vadd.f32 %v834, %v852
      %v869 = vadd.f32 %v835, %v853
      %v870 = vadd.f32 %v836, %v854
      %v871 = vadd.f32 %v837, %v855
      %v872 = vadd.f32 %v838, %v856
      %v873 = vadd.f32 %v839, %v857
      %v874 = vadd.f32 %v840, %v858
      %v875 = vadd.f32 %v841, %v859
      %v876 = vadd.f32 %v842, %v860
      %v877 = vadd.f32 %v843, %v861
      %v878 = vadd.f32 %v844, %v862
      %v879 = vadd.f32 %v845, %v863
      %v880 = vadd.f32 %v846, %v864
      %v881 = vadd.f32 %v847, %v865
      %v882 = vadd.f32 %v848, %v866
      %v883 = vadd.f32 %v849, %v867
      %v884 = vld [vmem:[%s613 + $0x1] sm:$0x1]
      %v885 = vperm.slane %v884, 0
      %v886 = vmul.f32 %v792, %v885
      %v887 = vmul.f32 %v793, %v885
      %v888 = vmul.f32 %v794, %v885
      %v889 = vmul.f32 %v795, %v885
      %v890 = vmul.f32 %v796, %v885
      %v891 = vmul.f32 %v797, %v885
      %v892 = vmul.f32 %v798, %v885
      %v893 = vmul.f32 %v799, %v885
      %v894 = vmul.f32 %v800, %v885
      %v895 = vmul.f32 %v801, %v885
      %v896 = vmul.f32 %v802, %v885
      %v897 = vmul.f32 %v803, %v885
      %v898 = vmul.f32 %v804, %v885
      %v899 = vmul.f32 %v805, %v885
      %v900 = vmul.f32 %v806, %v885
      %v901 = vmul.f32 %v807, %v885
      %v902 = vadd.f32 %v868, %v886
      %v903 = vadd.f32 %v869, %v887
      %v904 = vadd.f32 %v870, %v888
      %v905 = vadd.f32 %v871, %v889
      %v906 = vadd.f32 %v872, %v890
      %v907 = vadd.f32 %v873, %v891
      %v908 = vadd.f32 %v874, %v892
      %v909 = vadd.f32 %v875, %v893
      %v910 = vadd.f32 %v876, %v894
      %v911 = vadd.f32 %v877, %v895
      %v912 = vadd.f32 %v878, %v896
      %v913 = vadd.f32 %v879, %v897
      %v914 = vadd.f32 %v880, %v898
      %v915 = vadd.f32 %v881, %v899
      %v916 = vadd.f32 %v882, %v900
      %v917 = vadd.f32 %v883, %v901
      %v918 = vld [vmem:[%s648 + $0x1] sm:$0x1]
      %v919 = vperm.slane %v918, 0
      %v920 = vmul.f32 %v794, %v919
      %v921 = vmul.f32 %v795, %v919
      %v922 = vmul.f32 %v796, %v919
      %v923 = vmul.f32 %v797, %v919
      %v924 = vmul.f32 %v798, %v919
      %v925 = vmul.f32 %v799, %v919
      %v926 = vmul.f32 %v800, %v919
      %v927 = vmul.f32 %v801, %v919
      %v928 = vmul.f32 %v802, %v919
      %v929 = vmul.f32 %v803, %v919
      %v930 = vmul.f32 %v804, %v919
      %v931 = vmul.f32 %v805, %v919
      %v932 = vmul.f32 %v806, %v919
      %v933 = vmul.f32 %v807, %v919
      %v934 = vmul.f32 %v808, %v919
      %v935 = vmul.f32 %v809, %v919
      %v936 = vadd.f32 %v902, %v920
      %v937 = vadd.f32 %v903, %v921
      %v938 = vadd.f32 %v904, %v922
      %v939 = vadd.f32 %v905, %v923
      %v940 = vadd.f32 %v906, %v924
      %v941 = vadd.f32 %v907, %v925
      %v942 = vadd.f32 %v908, %v926
      %v943 = vadd.f32 %v909, %v927
      %v944 = vadd.f32 %v910, %v928
      %v945 = vadd.f32 %v911, %v929
      %v946 = vadd.f32 %v912, %v930
      %v947 = vadd.f32 %v913, %v931
      %v948 = vadd.f32 %v914, %v932
      %v949 = vadd.f32 %v915, %v933
      %v950 = vadd.f32 %v916, %v934
      %v951 = vadd.f32 %v917, %v935
      %v952 = vld [vmem:[%s683 + $0x1] sm:$0x1]
      %v953 = vperm.slane %v952, 0
      %v954 = vmul.f32 %v796, %v953
      %v955 = vmul.f32 %v797, %v953
      %v956 = vmul.f32 %v798, %v953
      %v957 = vmul.f32 %v799, %v953
      %v958 = vmul.f32 %v800, %v953
      %v959 = vmul.f32 %v801, %v953
      %v960 = vmul.f32 %v802, %v953
      %v961 = vmul.f32 %v803, %v953
      %v962 = vmul.f32 %v804, %v953
      %v963 = vmul.f32 %v805, %v953
      %v964 = vmul.f32 %v806, %v953
      %v965 = vmul.f32 %v807, %v953
      %v966 = vmul.f32 %v808, %v953
      %v967 = vmul.f32 %v809, %v953
      %v968 = vmul.f32 %v810, %v953
      %v969 = vmul.f32 %v811, %v953
      %v970 = vadd.f32 %v936, %v954
      %v971 = vadd.f32 %v937, %v955
      %v972 = vadd.f32 %v938, %v956
      %v973 = vadd.f32 %v939, %v957
      %v974 = vadd.f32 %v940, %v958
      %v975 = vadd.f32 %v941, %v959
      %v976 = vadd.f32 %v942, %v960
      %v977 = vadd.f32 %v943, %v961
      %v978 = vadd.f32 %v944, %v962
      %v979 = vadd.f32 %v945, %v963
      %v980 = vadd.f32 %v946, %v964
      %v981 = vadd.f32 %v947, %v965
      %v982 = vadd.f32 %v948, %v966
      %v983 = vadd.f32 %v949, %v967
      %v984 = vadd.f32 %v950, %v968
      %v985 = vadd.f32 %v951, %v969
      %v986 = vld [vmem:[%s718 + $0x1] sm:$0x1]
      %v987 = vperm.slane %v986, 0
      %v988 = vmul.f32 %v798, %v987
      %v989 = vmul.f32 %v799, %v987
      %v990 = vmul.f32 %v800, %v987
      %v991 = vmul.f32 %v801, %v987
      %v992 = vmul.f32 %v802, %v987
      %v993 = vmul.f32 %v803, %v987
      %v994 = vmul.f32 %v804, %v987
      %v995 = vmul.f32 %v805, %v987
      %v996 = vmul.f32 %v806, %v987
      %v997 = vmul.f32 %v807, %v987
      %v998 = vmul.f32 %v808, %v987
      %v999 = vmul.f32 %v809, %v987
      %v1000 = vmul.f32 %v810, %v987
      %v1001 = vmul.f32 %v811, %v987
      %v1002 = vmul.f32 %v812, %v987
      %v1003 = vmul.f32 %v813, %v987
      %v1004 = vadd.f32 %v970, %v988
      %v1005 = vadd.f32 %v971, %v989
      %v1006 = vadd.f32 %v972, %v990
      %v1007 = vadd.f32 %v973, %v991
      %v1008 = vadd.f32 %v974, %v992
      %v1009 = vadd.f32 %v975, %v993
      %v1010 = vadd.f32 %v976, %v994
      %v1011 = vadd.f32 %v977, %v995
      %v1012 = vadd.f32 %v978, %v996
      %v1013 = vadd.f32 %v979, %v997
      %v1014 = vadd.f32 %v980, %v998
      %v1015 = vadd.f32 %v981, %v999
      %v1016 = vadd.f32 %v982, %v1000
      %v1017 = vadd.f32 %v983, %v1001
      %v1018 = vadd.f32 %v984, %v1002
      %v1019 = vadd.f32 %v985, %v1003
      %v1020 = vld [vmem:[%s753 + $0x1] sm:$0x1]
      %v1021 = vperm.slane %v1020, 0
      %v1022 = vmul.f32 %v800, %v1021
      %v1023 = vmul.f32 %v801, %v1021
      %v1024 = vmul.f32 %v802, %v1021
      %v1025 = vmul.f32 %v803, %v1021
      %v1026 = vmul.f32 %v804, %v1021
      %v1027 = vmul.f32 %v805, %v1021
      %v1028 = vmul.f32 %v806, %v1021
      %v1029 = vmul.f32 %v807, %v1021
      %v1030 = vmul.f32 %v808, %v1021
      %v1031 = vmul.f32 %v809, %v1021
      %v1032 = vmul.f32 %v810, %v1021
      %v1033 = vmul.f32 %v811, %v1021
      %v1034 = vmul.f32 %v812, %v1021
      %v1035 = vmul.f32 %v813, %v1021
      %v1036 = vmul.f32 %v814, %v1021
      %v1037 = vmul.f32 %v815, %v1021
      %v1038 = vadd.f32 %v1004, %v1022
      %v1039 = vadd.f32 %v1005, %v1023
      %v1040 = vadd.f32 %v1006, %v1024
      %v1041 = vadd.f32 %v1007, %v1025
      %v1042 = vadd.f32 %v1008, %v1026
      %v1043 = vadd.f32 %v1009, %v1027
      %v1044 = vadd.f32 %v1010, %v1028
      %v1045 = vadd.f32 %v1011, %v1029
      %v1046 = vadd.f32 %v1012, %v1030
      %v1047 = vadd.f32 %v1013, %v1031
      %v1048 = vadd.f32 %v1014, %v1032
      %v1049 = vadd.f32 %v1015, %v1033
      %v1050 = vadd.f32 %v1016, %v1034
      %v1051 = vadd.f32 %v1017, %v1035
      %v1052 = vadd.f32 %v1018, %v1036
      %v1053 = vadd.f32 %v1019, %v1037
      %v1054 = vld [vmem:[#allocation2 + $0x7] sm:$0xff]
      %v1055 = vld [vmem:[#allocation2 + $0xf] sm:$0xff]
      %v1056 = vld [vmem:[#allocation2 + $0x27] sm:$0xff]
      %v1057 = vld [vmem:[#allocation2 + $0x2f] sm:$0xff]
      %v1058 = vld [vmem:[#allocation2 + $0x47] sm:$0xff]
      %v1059 = vld [vmem:[#allocation2 + $0x4f] sm:$0xff]
      %v1060 = vld [vmem:[#allocation2 + $0x67] sm:$0xff]
      %v1061 = vld [vmem:[#allocation2 + $0x6f] sm:$0xff]
      %v1062 = vld [vmem:[#allocation2 + $0x87] sm:$0xff]
      %v1063 = vld [vmem:[#allocation2 + $0x8f] sm:$0xff]
      %v1064 = vld [vmem:[#allocation2 + $0xa7] sm:$0xff]
      %v1065 = vld [vmem:[#allocation2 + $0xaf] sm:$0xff]
      %v1066 = vld [vmem:[#allocation2 + $0xc7] sm:$0xff]
      %v1067 = vld [vmem:[#allocation2 + $0xcf] sm:$0xff]
      %v1068 = vld [vmem:[#allocation2 + $0xe7] sm:$0xff]
      %v1069 = vld [vmem:[#allocation2 + $0xef] sm:$0xff]
      %v1070 = vld [vmem:[#allocation2 + $0x107] sm:$0xff]
      %v1071 = vld [vmem:[#allocation2 + $0x10f] sm:$0xff]
      %v1072 = vld [vmem:[#allocation2 + $0x127] sm:$0xff]
      %v1073 = vld [vmem:[#allocation2 + $0x12f] sm:$0xff]
      %v1074 = vld [vmem:[#allocation2 + $0x147] sm:$0xff]
      %v1075 = vld [vmem:[#allocation2 + $0x14f] sm:$0xff]
      %v1076 = vld [vmem:[#allocation2 + $0x167] sm:$0xff]
      %v1077 = vld [vmem:[#allocation2 + $0x16f] sm:$0xff]
      %v1078 = vld [vmem:[#allocation2 + $0x187] sm:$0xff]
      %v1079 = vld [vmem:[#allocation2 + $0x18f] sm:$0xff]
      %v1080 = vld [vmem:[#allocation2 + $0x1a7] sm:$0xff]
      %v1081 = vld [vmem:[#allocation2 + $0x1af] sm:$0xff]
      %v1082 = vld [vmem:[%s265 + $0x2] sm:$0x1]
      %v1083 = vperm.slane %v1082, 0
      %v1084 = vmul.f32 %v1054, %v1083
      %v1085 = vmul.f32 %v1055, %v1083
      %v1086 = vmul.f32 %v1056, %v1083
      %v1087 = vmul.f32 %v1057, %v1083
      %v1088 = vmul.f32 %v1058, %v1083
      %v1089 = vmul.f32 %v1059, %v1083
      %v1090 = vmul.f32 %v1060, %v1083
      %v1091 = vmul.f32 %v1061, %v1083
      %v1092 = vmul.f32 %v1062, %v1083
      %v1093 = vmul.f32 %v1063, %v1083
      %v1094 = vmul.f32 %v1064, %v1083
      %v1095 = vmul.f32 %v1065, %v1083
      %v1096 = vmul.f32 %v1066, %v1083
      %v1097 = vmul.f32 %v1067, %v1083
      %v1098 = vmul.f32 %v1068, %v1083
      %v1099 = vmul.f32 %v1069, %v1083
      %v1100 = vadd.f32 %v1038, %v1084
      %v1101 = vadd.f32 %v1039, %v1085
      %v1102 = vadd.f32 %v1040, %v1086
      %v1103 = vadd.f32 %v1041, %v1087
      %v1104 = vadd.f32 %v1042, %v1088
      %v1105 = vadd.f32 %v1043, %v1089
      %v1106 = vadd.f32 %v1044, %v1090
      %v1107 = vadd.f32 %v1045, %v1091
      %v1108 = vadd.f32 %v1046, %v1092
      %v1109 = vadd.f32 %v1047, %v1093
      %v1110 = vadd.f32 %v1048, %v1094
      %v1111 = vadd.f32 %v1049, %v1095
      %v1112 = vadd.f32 %v1050, %v1096
      %v1113 = vadd.f32 %v1051, %v1097
      %v1114 = vadd.f32 %v1052, %v1098
      %v1115 = vadd.f32 %v1053, %v1099
      %v1116 = vld [vmem:[%s578 + $0x2] sm:$0x1]
      %v1117 = vperm.slane %v1116, 0
      %v1118 = vmul.f32 %v1056, %v1117
      %v1119 = vmul.f32 %v1057, %v1117
      %v1120 = vmul.f32 %v1058, %v1117
      %v1121 = vmul.f32 %v1059, %v1117
      %v1122 = vmul.f32 %v1060, %v1117
      %v1123 = vmul.f32 %v1061, %v1117
      %v1124 = vmul.f32 %v1062, %v1117
      %v1125 = vmul.f32 %v1063, %v1117
      %v1126 = vmul.f32 %v1064, %v1117
      %v1127 = vmul.f32 %v1065, %v1117
      %v1128 = vmul.f32 %v1066, %v1117
      %v1129 = vmul.f32 %v1067, %v1117
      %v1130 = vmul.f32 %v1068, %v1117
      %v1131 = vmul.f32 %v1069, %v1117
      %v1132 = vmul.f32 %v1070, %v1117
      %v1133 = vmul.f32 %v1071, %v1117
      %v1134 = vadd.f32 %v1100, %v1118
      %v1135 = vadd.f32 %v1101, %v1119
      %v1136 = vadd.f32 %v1102, %v1120
      %v1137 = vadd.f32 %v1103, %v1121
      %v1138 = vadd.f32 %v1104, %v1122
      %v1139 = vadd.f32 %v1105, %v1123
      %v1140 = vadd.f32 %v1106, %v1124
      %v1141 = vadd.f32 %v1107, %v1125
      %v1142 = vadd.f32 %v1108, %v1126
      %v1143 = vadd.f32 %v1109, %v1127
      %v1144 = vadd.f32 %v1110, %v1128
      %v1145 = vadd.f32 %v1111, %v1129
      %v1146 = vadd.f32 %v1112, %v1130
      %v1147 = vadd.f32 %v1113, %v1131
      %v1148 = vadd.f32 %v1114, %v1132
      %v1149 = vadd.f32 %v1115, %v1133
      %v1150 = vld [vmem:[%s613 + $0x2] sm:$0x1]
      %v1151 = vperm.slane %v1150, 0
      %v1152 = vmul.f32 %v1058, %v1151
      %v1153 = vmul.f32 %v1059, %v1151
      %v1154 = vmul.f32 %v1060, %v1151
      %v1155 = vmul.f32 %v1061, %v1151
      %v1156 = vmul.f32 %v1062, %v1151
      %v1157 = vmul.f32 %v1063, %v1151
      %v1158 = vmul.f32 %v1064, %v1151
      %v1159 = vmul.f32 %v1065, %v1151
      %v1160 = vmul.f32 %v1066, %v1151
      %v1161 = vmul.f32 %v1067, %v1151
      %v1162 = vmul.f32 %v1068, %v1151
      %v1163 = vmul.f32 %v1069, %v1151
      %v1164 = vmul.f32 %v1070, %v1151
      %v1165 = vmul.f32 %v1071, %v1151
      %v1166 = vmul.f32 %v1072, %v1151
      %v1167 = vmul.f32 %v1073, %v1151
      %v1168 = vadd.f32 %v1134, %v1152
      %v1169 = vadd.f32 %v1135, %v1153
      %v1170 = vadd.f32 %v1136, %v1154
      %v1171 = vadd.f32 %v1137, %v1155
      %v1172 = vadd.f32 %v1138, %v1156
      %v1173 = vadd.f32 %v1139, %v1157
      %v1174 = vadd.f32 %v1140, %v1158
      %v1175 = vadd.f32 %v1141, %v1159
      %v1176 = vadd.f32 %v1142, %v1160
      %v1177 = vadd.f32 %v1143, %v1161
      %v1178 = vadd.f32 %v1144, %v1162
      %v1179 = vadd.f32 %v1145, %v1163
      %v1180 = vadd.f32 %v1146, %v1164
      %v1181 = vadd.f32 %v1147, %v1165
      %v1182 = vadd.f32 %v1148, %v1166
      %v1183 = vadd.f32 %v1149, %v1167
      %v1184 = vld [vmem:[%s648 + $0x2] sm:$0x1]
      %v1185 = vperm.slane %v1184, 0
      %v1186 = vmul.f32 %v1060, %v1185
      %v1187 = vmul.f32 %v1061, %v1185
      %v1188 = vmul.f32 %v1062, %v1185
      %v1189 = vmul.f32 %v1063, %v1185
      %v1190 = vmul.f32 %v1064, %v1185
      %v1191 = vmul.f32 %v1065, %v1185
      %v1192 = vmul.f32 %v1066, %v1185
      %v1193 = vmul.f32 %v1067, %v1185
      %v1194 = vmul.f32 %v1068, %v1185
      %v1195 = vmul.f32 %v1069, %v1185
      %v1196 = vmul.f32 %v1070, %v1185
      %v1197 = vmul.f32 %v1071, %v1185
      %v1198 = vmul.f32 %v1072, %v1185
      %v1199 = vmul.f32 %v1073, %v1185
      %v1200 = vmul.f32 %v1074, %v1185
      %v1201 = vmul.f32 %v1075, %v1185
      %v1202 = vadd.f32 %v1168, %v1186
      %v1203 = vadd.f32 %v1169, %v1187
      %v1204 = vadd.f32 %v1170, %v1188
      %v1205 = vadd.f32 %v1171, %v1189
      %v1206 = vadd.f32 %v1172, %v1190
      %v1207 = vadd.f32 %v1173, %v1191
      %v1208 = vadd.f32 %v1174, %v1192
      %v1209 = vadd.f32 %v1175, %v1193
      %v1210 = vadd.f32 %v1176, %v1194
      %v1211 = vadd.f32 %v1177, %v1195
      %v1212 = vadd.f32 %v1178, %v1196
      %v1213 = vadd.f32 %v1179, %v1197
      %v1214 = vadd.f32 %v1180, %v1198
      %v1215 = vadd.f32 %v1181, %v1199
      %v1216 = vadd.f32 %v1182, %v1200
      %v1217 = vadd.f32 %v1183, %v1201
      %v1218 = vld [vmem:[%s683 + $0x2] sm:$0x1]
      %v1219 = vperm.slane %v1218, 0
      %v1220 = vmul.f32 %v1062, %v1219
      %v1221 = vmul.f32 %v1063, %v1219
      %v1222 = vmul.f32 %v1064, %v1219
      %v1223 = vmul.f32 %v1065, %v1219
      %v1224 = vmul.f32 %v1066, %v1219
      %v1225 = vmul.f32 %v1067, %v1219
      %v1226 = vmul.f32 %v1068, %v1219
      %v1227 = vmul.f32 %v1069, %v1219
      %v1228 = vmul.f32 %v1070, %v1219
      %v1229 = vmul.f32 %v1071, %v1219
      %v1230 = vmul.f32 %v1072, %v1219
      %v1231 = vmul.f32 %v1073, %v1219
      %v1232 = vmul.f32 %v1074, %v1219
      %v1233 = vmul.f32 %v1075, %v1219
      %v1234 = vmul.f32 %v1076, %v1219
      %v1235 = vmul.f32 %v1077, %v1219
      %v1236 = vadd.f32 %v1202, %v1220
      %v1237 = vadd.f32 %v1203, %v1221
      %v1238 = vadd.f32 %v1204, %v1222
      %v1239 = vadd.f32 %v1205, %v1223
      %v1240 = vadd.f32 %v1206, %v1224
      %v1241 = vadd.f32 %v1207, %v1225
      %v1242 = vadd.f32 %v1208, %v1226
      %v1243 = vadd.f32 %v1209, %v1227
      %v1244 = vadd.f32 %v1210, %v1228
      %v1245 = vadd.f32 %v1211, %v1229
      %v1246 = vadd.f32 %v1212, %v1230
      %v1247 = vadd.f32 %v1213, %v1231
      %v1248 = vadd.f32 %v1214, %v1232
      %v1249 = vadd.f32 %v1215, %v1233
      %v1250 = vadd.f32 %v1216, %v1234
      %v1251 = vadd.f32 %v1217, %v1235
      %v1252 = vld [vmem:[%s718 + $0x2] sm:$0x1]
      %v1253 = vperm.slane %v1252, 0
      %v1254 = vmul.f32 %v1064, %v1253
      %v1255 = vmul.f32 %v1065, %v1253
      %v1256 = vmul.f32 %v1066, %v1253
      %v1257 = vmul.f32 %v1067, %v1253
      %v1258 = vmul.f32 %v1068, %v1253
      %v1259 = vmul.f32 %v1069, %v1253
      %v1260 = vmul.f32 %v1070, %v1253
      %v1261 = vmul.f32 %v1071, %v1253
      %v1262 = vmul.f32 %v1072, %v1253
      %v1263 = vmul.f32 %v1073, %v1253
      %v1264 = vmul.f32 %v1074, %v1253
      %v1265 = vmul.f32 %v1075, %v1253
      %v1266 = vmul.f32 %v1076, %v1253
      %v1267 = vmul.f32 %v1077, %v1253
      %v1268 = vmul.f32 %v1078, %v1253
      %v1269 = vmul.f32 %v1079, %v1253
      %v1270 = vadd.f32 %v1236, %v1254
      %v1271 = vadd.f32 %v1237, %v1255
      %v1272 = vadd.f32 %v1238, %v1256
      %v1273 = vadd.f32 %v1239, %v1257
      %v1274 = vadd.f32 %v1240, %v1258
      %v1275 = vadd.f32 %v1241, %v1259
      %v1276 = vadd.f32 %v1242, %v1260
      %v1277 = vadd.f32 %v1243, %v1261
      %v1278 = vadd.f32 %v1244, %v1262
      %v1279 = vadd.f32 %v1245, %v1263
      %v1280 = vadd.f32 %v1246, %v1264
      %v1281 = vadd.f32 %v1247, %v1265
      %v1282 = vadd.f32 %v1248, %v1266
      %v1283 = vadd.f32 %v1249, %v1267
      %v1284 = vadd.f32 %v1250, %v1268
      %v1285 = vadd.f32 %v1251, %v1269
      %v1286 = vld [vmem:[%s753 + $0x2] sm:$0x1]
      %v1287 = vperm.slane %v1286, 0
      %v1288 = vmul.f32 %v1066, %v1287
      %v1289 = vmul.f32 %v1067, %v1287
      %v1290 = vmul.f32 %v1068, %v1287
      %v1291 = vmul.f32 %v1069, %v1287
      %v1292 = vmul.f32 %v1070, %v1287
      %v1293 = vmul.f32 %v1071, %v1287
      %v1294 = vmul.f32 %v1072, %v1287
      %v1295 = vmul.f32 %v1073, %v1287
      %v1296 = vmul.f32 %v1074, %v1287
      %v1297 = vmul.f32 %v1075, %v1287
      %v1298 = vmul.f32 %v1076, %v1287
      %v1299 = vmul.f32 %v1077, %v1287
      %v1300 = vmul.f32 %v1078, %v1287
      %v1301 = vmul.f32 %v1079, %v1287
      %v1302 = vmul.f32 %v1080, %v1287
      %v1303 = vmul.f32 %v1081, %v1287
      %v1304 = vadd.f32 %v1270, %v1288
      %v1305 = vadd.f32 %v1271, %v1289
      %v1306 = vadd.f32 %v1272, %v1290
      %v1307 = vadd.f32 %v1273, %v1291
      %v1308 = vadd.f32 %v1274, %v1292
      %v1309 = vadd.f32 %v1275, %v1293
      %v1310 = vadd.f32 %v1276, %v1294
      %v1311 = vadd.f32 %v1277, %v1295
      %v1312 = vadd.f32 %v1278, %v1296
      %v1313 = vadd.f32 %v1279, %v1297
      %v1314 = vadd.f32 %v1280, %v1298
      %v1315 = vadd.f32 %v1281, %v1299
      %v1316 = vadd.f32 %v1282, %v1300
      %v1317 = vadd.f32 %v1283, %v1301
      %v1318 = vadd.f32 %v1284, %v1302
      %v1319 = vadd.f32 %v1285, %v1303
      %v1320 = vld [vmem:[#allocation2 + $0x8] sm:$0xff]
      %v1321 = vld [vmem:[#allocation2 + $0x10] sm:$0xff]
      %v1322 = vld [vmem:[#allocation2 + $0x28] sm:$0xff]
      %v1323 = vld [vmem:[#allocation2 + $0x30] sm:$0xff]
      %v1324 = vld [vmem:[#allocation2 + $0x48] sm:$0xff]
      %v1325 = vld [vmem:[#allocation2 + $0x50] sm:$0xff]
      %v1326 = vld [vmem:[#allocation2 + $0x68] sm:$0xff]
      %v1327 = vld [vmem:[#allocation2 + $0x70] sm:$0xff]
      %v1328 = vld [vmem:[#allocation2 + $0x88] sm:$0xff]
      %v1329 = vld [vmem:[#allocation2 + $0x90] sm:$0xff]
      %v1330 = vld [vmem:[#allocation2 + $0xa8] sm:$0xff]
      %v1331 = vld [vmem:[#allocation2 + $0xb0] sm:$0xff]
      %v1332 = vld [vmem:[#allocation2 + $0xc8] sm:$0xff]
      %v1333 = vld [vmem:[#allocation2 + $0xd0] sm:$0xff]
      %v1334 = vld [vmem:[#allocation2 + $0xe8] sm:$0xff]
      %v1335 = vld [vmem:[#allocation2 + $0xf0] sm:$0xff]
      %v1336 = vld [vmem:[#allocation2 + $0x108] sm:$0xff]
      %v1337 = vld [vmem:[#allocation2 + $0x110] sm:$0xff]
      %v1338 = vld [vmem:[#allocation2 + $0x128] sm:$0xff]
      %v1339 = vld [vmem:[#allocation2 + $0x130] sm:$0xff]
      %v1340 = vld [vmem:[#allocation2 + $0x148] sm:$0xff]
      %v1341 = vld [vmem:[#allocation2 + $0x150] sm:$0xff]
      %v1342 = vld [vmem:[#allocation2 + $0x168] sm:$0xff]
      %v1343 = vld [vmem:[#allocation2 + $0x170] sm:$0xff]
      %v1344 = vld [vmem:[#allocation2 + $0x188] sm:$0xff]
      %v1345 = vld [vmem:[#allocation2 + $0x190] sm:$0xff]
      %v1346 = vld [vmem:[#allocation2 + $0x1a8] sm:$0xff]
      %v1347 = vld [vmem:[#allocation2 + $0x1b0] sm:$0xff]
      %v1348 = vld [vmem:[%s265 + $0x3] sm:$0x1]
      %v1349 = vperm.slane %v1348, 0
      %v1350 = vmul.f32 %v1320, %v1349
      %v1351 = vmul.f32 %v1321, %v1349
      %v1352 = vmul.f32 %v1322, %v1349
      %v1353 = vmul.f32 %v1323, %v1349
      %v1354 = vmul.f32 %v1324, %v1349
      %v1355 = vmul.f32 %v1325, %v1349
      %v1356 = vmul.f32 %v1326, %v1349
      %v1357 = vmul.f32 %v1327, %v1349
      %v1358 = vmul.f32 %v1328, %v1349
      %v1359 = vmul.f32 %v1329, %v1349
      %v1360 = vmul.f32 %v1330, %v1349
      %v1361 = vmul.f32 %v1331, %v1349
      %v1362 = vmul.f32 %v1332, %v1349
      %v1363 = vmul.f32 %v1333, %v1349
      %v1364 = vmul.f32 %v1334, %v1349
      %v1365 = vmul.f32 %v1335, %v1349
      %v1366 = vadd.f32 %v1304, %v1350
      %v1367 = vadd.f32 %v1305, %v1351
      %v1368 = vadd.f32 %v1306, %v1352
      %v1369 = vadd.f32 %v1307, %v1353
      %v1370 = vadd.f32 %v1308, %v1354
      %v1371 = vadd.f32 %v1309, %v1355
      %v1372 = vadd.f32 %v1310, %v1356
      %v1373 = vadd.f32 %v1311, %v1357
      %v1374 = vadd.f32 %v1312, %v1358
      %v1375 = vadd.f32 %v1313, %v1359
      %v1376 = vadd.f32 %v1314, %v1360
      %v1377 = vadd.f32 %v1315, %v1361
      %v1378 = vadd.f32 %v1316, %v1362
      %v1379 = vadd.f32 %v1317, %v1363
      %v1380 = vadd.f32 %v1318, %v1364
      %v1381 = vadd.f32 %v1319, %v1365
      %v1382 = vld [vmem:[%s578 + $0x3] sm:$0x1]
      %v1383 = vperm.slane %v1382, 0
      %v1384 = vmul.f32 %v1322, %v1383
      %v1385 = vmul.f32 %v1323, %v1383
      %v1386 = vmul.f32 %v1324, %v1383
      %v1387 = vmul.f32 %v1325, %v1383
      %v1388 = vmul.f32 %v1326, %v1383
      %v1389 = vmul.f32 %v1327, %v1383
      %v1390 = vmul.f32 %v1328, %v1383
      %v1391 = vmul.f32 %v1329, %v1383
      %v1392 = vmul.f32 %v1330, %v1383
      %v1393 = vmul.f32 %v1331, %v1383
      %v1394 = vmul.f32 %v1332, %v1383
      %v1395 = vmul.f32 %v1333, %v1383
      %v1396 = vmul.f32 %v1334, %v1383
      %v1397 = vmul.f32 %v1335, %v1383
      %v1398 = vmul.f32 %v1336, %v1383
      %v1399 = vmul.f32 %v1337, %v1383
      %v1400 = vadd.f32 %v1366, %v1384
      %v1401 = vadd.f32 %v1367, %v1385
      %v1402 = vadd.f32 %v1368, %v1386
      %v1403 = vadd.f32 %v1369, %v1387
      %v1404 = vadd.f32 %v1370, %v1388
      %v1405 = vadd.f32 %v1371, %v1389
      %v1406 = vadd.f32 %v1372, %v1390
      %v1407 = vadd.f32 %v1373, %v1391
      %v1408 = vadd.f32 %v1374, %v1392
      %v1409 = vadd.f32 %v1375, %v1393
      %v1410 = vadd.f32 %v1376, %v1394
      %v1411 = vadd.f32 %v1377, %v1395
      %v1412 = vadd.f32 %v1378, %v1396
      %v1413 = vadd.f32 %v1379, %v1397
      %v1414 = vadd.f32 %v1380, %v1398
      %v1415 = vadd.f32 %v1381, %v1399
      %v1416 = vld [vmem:[%s613 + $0x3] sm:$0x1]
      %v1417 = vperm.slane %v1416, 0
      %v1418 = vmul.f32 %v1324, %v1417
      %v1419 = vmul.f32 %v1325, %v1417
      %v1420 = vmul.f32 %v1326, %v1417
      %v1421 = vmul.f32 %v1327, %v1417
      %v1422 = vmul.f32 %v1328, %v1417
      %v1423 = vmul.f32 %v1329, %v1417
      %v1424 = vmul.f32 %v1330, %v1417
      %v1425 = vmul.f32 %v1331, %v1417
      %v1426 = vmul.f32 %v1332, %v1417
      %v1427 = vmul.f32 %v1333, %v1417
      %v1428 = vmul.f32 %v1334, %v1417
      %v1429 = vmul.f32 %v1335, %v1417
      %v1430 = vmul.f32 %v1336, %v1417
      %v1431 = vmul.f32 %v1337, %v1417
      %v1432 = vmul.f32 %v1338, %v1417
      %v1433 = vmul.f32 %v1339, %v1417
      %v1434 = vadd.f32 %v1400, %v1418
      %v1435 = vadd.f32 %v1401, %v1419
      %v1436 = vadd.f32 %v1402, %v1420
      %v1437 = vadd.f32 %v1403, %v1421
      %v1438 = vadd.f32 %v1404, %v1422
      %v1439 = vadd.f32 %v1405, %v1423
      %v1440 = vadd.f32 %v1406, %v1424
      %v1441 = vadd.f32 %v1407, %v1425
      %v1442 = vadd.f32 %v1408, %v1426
      %v1443 = vadd.f32 %v1409, %v1427
      %v1444 = vadd.f32 %v1410, %v1428
      %v1445 = vadd.f32 %v1411, %v1429
      %v1446 = vadd.f32 %v1412, %v1430
      %v1447 = vadd.f32 %v1413, %v1431
      %v1448 = vadd.f32 %v1414, %v1432
      %v1449 = vadd.f32 %v1415, %v1433
      %v1450 = vld [vmem:[%s648 + $0x3] sm:$0x1]
      %v1451 = vperm.slane %v1450, 0
      %v1452 = vmul.f32 %v1326, %v1451
      %v1453 = vmul.f32 %v1327, %v1451
      %v1454 = vmul.f32 %v1328, %v1451
      %v1455 = vmul.f32 %v1329, %v1451
      %v1456 = vmul.f32 %v1330, %v1451
      %v1457 = vmul.f32 %v1331, %v1451
      %v1458 = vmul.f32 %v1332, %v1451
      %v1459 = vmul.f32 %v1333, %v1451
      %v1460 = vmul.f32 %v1334, %v1451
      %v1461 = vmul.f32 %v1335, %v1451
      %v1462 = vmul.f32 %v1336, %v1451
      %v1463 = vmul.f32 %v1337, %v1451
      %v1464 = vmul.f32 %v1338, %v1451
      %v1465 = vmul.f32 %v1339, %v1451
      %v1466 = vmul.f32 %v1340, %v1451
      %v1467 = vmul.f32 %v1341, %v1451
      %v1468 = vadd.f32 %v1434, %v1452
      %v1469 = vadd.f32 %v1435, %v1453
      %v1470 = vadd.f32 %v1436, %v1454
      %v1471 = vadd.f32 %v1437, %v1455
      %v1472 = vadd.f32 %v1438, %v1456
      %v1473 = vadd.f32 %v1439, %v1457
      %v1474 = vadd.f32 %v1440, %v1458
      %v1475 = vadd.f32 %v1441, %v1459
      %v1476 = vadd.f32 %v1442, %v1460
      %v1477 = vadd.f32 %v1443, %v1461
      %v1478 = vadd.f32 %v1444, %v1462
      %v1479 = vadd.f32 %v1445, %v1463
      %v1480 = vadd.f32 %v1446, %v1464
      %v1481 = vadd.f32 %v1447, %v1465
      %v1482 = vadd.f32 %v1448, %v1466
      %v1483 = vadd.f32 %v1449, %v1467
      %v1484 = vld [vmem:[%s683 + $0x3] sm:$0x1]
      %v1485 = vperm.slane %v1484, 0
      %v1486 = vmul.f32 %v1328, %v1485
      %v1487 = vmul.f32 %v1329, %v1485
      %v1488 = vmul.f32 %v1330, %v1485
      %v1489 = vmul.f32 %v1331, %v1485
      %v1490 = vmul.f32 %v1332, %v1485
      %v1491 = vmul.f32 %v1333, %v1485
      %v1492 = vmul.f32 %v1334, %v1485
      %v1493 = vmul.f32 %v1335, %v1485
      %v1494 = vmul.f32 %v1336, %v1485
      %v1495 = vmul.f32 %v1337, %v1485
      %v1496 = vmul.f32 %v1338, %v1485
      %v1497 = vmul.f32 %v1339, %v1485
      %v1498 = vmul.f32 %v1340, %v1485
      %v1499 = vmul.f32 %v1341, %v1485
      %v1500 = vmul.f32 %v1342, %v1485
      %v1501 = vmul.f32 %v1343, %v1485
      %v1502 = vadd.f32 %v1468, %v1486
      %v1503 = vadd.f32 %v1469, %v1487
      %v1504 = vadd.f32 %v1470, %v1488
      %v1505 = vadd.f32 %v1471, %v1489
      %v1506 = vadd.f32 %v1472, %v1490
      %v1507 = vadd.f32 %v1473, %v1491
      %v1508 = vadd.f32 %v1474, %v1492
      %v1509 = vadd.f32 %v1475, %v1493
      %v1510 = vadd.f32 %v1476, %v1494
      %v1511 = vadd.f32 %v1477, %v1495
      %v1512 = vadd.f32 %v1478, %v1496
      %v1513 = vadd.f32 %v1479, %v1497
      %v1514 = vadd.f32 %v1480, %v1498
      %v1515 = vadd.f32 %v1481, %v1499
      %v1516 = vadd.f32 %v1482, %v1500
      %v1517 = vadd.f32 %v1483, %v1501
      %v1518 = vld [vmem:[%s718 + $0x3] sm:$0x1]
      %v1519 = vperm.slane %v1518, 0
      %v1520 = vmul.f32 %v1330, %v1519
      %v1521 = vmul.f32 %v1331, %v1519
      %v1522 = vmul.f32 %v1332, %v1519
      %v1523 = vmul.f32 %v1333, %v1519
      %v1524 = vmul.f32 %v1334, %v1519
      %v1525 = vmul.f32 %v1335, %v1519
      %v1526 = vmul.f32 %v1336, %v1519
      %v1527 = vmul.f32 %v1337, %v1519
      %v1528 = vmul.f32 %v1338, %v1519
      %v1529 = vmul.f32 %v1339, %v1519
      %v1530 = vmul.f32 %v1340, %v1519
      %v1531 = vmul.f32 %v1341, %v1519
      %v1532 = vmul.f32 %v1342, %v1519
      %v1533 = vmul.f32 %v1343, %v1519
      %v1534 = vmul.f32 %v1344, %v1519
      %v1535 = vmul.f32 %v1345, %v1519
      %v1536 = vadd.f32 %v1502, %v1520
      %v1537 = vadd.f32 %v1503, %v1521
      %v1538 = vadd.f32 %v1504, %v1522
      %v1539 = vadd.f32 %v1505, %v1523
      %v1540 = vadd.f32 %v1506, %v1524
      %v1541 = vadd.f32 %v1507, %v1525
      %v1542 = vadd.f32 %v1508, %v1526
      %v1543 = vadd.f32 %v1509, %v1527
      %v1544 = vadd.f32 %v1510, %v1528
      %v1545 = vadd.f32 %v1511, %v1529
      %v1546 = vadd.f32 %v1512, %v1530
      %v1547 = vadd.f32 %v1513, %v1531
      %v1548 = vadd.f32 %v1514, %v1532
      %v1549 = vadd.f32 %v1515, %v1533
      %v1550 = vadd.f32 %v1516, %v1534
      %v1551 = vadd.f32 %v1517, %v1535
      %v1552 = vld [vmem:[%s753 + $0x3] sm:$0x1]
      %v1553 = vperm.slane %v1552, 0
      %v1554 = vmul.f32 %v1332, %v1553
      %v1555 = vmul.f32 %v1333, %v1553
      %v1556 = vmul.f32 %v1334, %v1553
      %v1557 = vmul.f32 %v1335, %v1553
      %v1558 = vmul.f32 %v1336, %v1553
      %v1559 = vmul.f32 %v1337, %v1553
      %v1560 = vmul.f32 %v1338, %v1553
      %v1561 = vmul.f32 %v1339, %v1553
      %v1562 = vmul.f32 %v1340, %v1553
      %v1563 = vmul.f32 %v1341, %v1553
      %v1564 = vmul.f32 %v1342, %v1553
      %v1565 = vmul.f32 %v1343, %v1553
      %v1566 = vmul.f32 %v1344, %v1553
      %v1567 = vmul.f32 %v1345, %v1553
      %v1568 = vmul.f32 %v1346, %v1553
      %v1569 = vmul.f32 %v1347, %v1553
      %v1570 = vadd.f32 %v1536, %v1554
      %v1571 = vadd.f32 %v1537, %v1555
      %v1572 = vadd.f32 %v1538, %v1556
      %v1573 = vadd.f32 %v1539, %v1557
      %v1574 = vadd.f32 %v1540, %v1558
      %v1575 = vadd.f32 %v1541, %v1559
      %v1576 = vadd.f32 %v1542, %v1560
      %v1577 = vadd.f32 %v1543, %v1561
      %v1578 = vadd.f32 %v1544, %v1562
      %v1579 = vadd.f32 %v1545, %v1563
      %v1580 = vadd.f32 %v1546, %v1564
      %v1581 = vadd.f32 %v1547, %v1565
      %v1582 = vadd.f32 %v1548, %v1566
      %v1583 = vadd.f32 %v1549, %v1567
      %v1584 = vadd.f32 %v1550, %v1568
      %v1585 = vadd.f32 %v1551, %v1569
      %v1586 = vld [vmem:[#allocation2 + $0x9] sm:$0xff]
      %v1587 = vld [vmem:[#allocation2 + $0x11] sm:$0xff]
      %v1588 = vld [vmem:[#allocation2 + $0x29] sm:$0xff]
      %v1589 = vld [vmem:[#allocation2 + $0x31] sm:$0xff]
      %v1590 = vld [vmem:[#allocation2 + $0x49] sm:$0xff]
      %v1591 = vld [vmem:[#allocation2 + $0x51] sm:$0xff]
      %v1592 = vld [vmem:[#allocation2 + $0x69] sm:$0xff]
      %v1593 = vld [vmem:[#allocation2 + $0x71] sm:$0xff]
      %v1594 = vld [vmem:[#allocation2 + $0x89] sm:$0xff]
      %v1595 = vld [vmem:[#allocation2 + $0x91] sm:$0xff]
      %v1596 = vld [vmem:[#allocation2 + $0xa9] sm:$0xff]
      %v1597 = vld [vmem:[#allocation2 + $0xb1] sm:$0xff]
      %v1598 = vld [vmem:[#allocation2 + $0xc9] sm:$0xff]
      %v1599 = vld [vmem:[#allocation2 + $0xd1] sm:$0xff]
      %v1600 = vld [vmem:[#allocation2 + $0xe9] sm:$0xff]
      %v1601 = vld [vmem:[#allocation2 + $0xf1] sm:$0xff]
      %v1602 = vld [vmem:[#allocation2 + $0x109] sm:$0xff]
      %v1603 = vld [vmem:[#allocation2 + $0x111] sm:$0xff]
      %v1604 = vld [vmem:[#allocation2 + $0x129] sm:$0xff]
      %v1605 = vld [vmem:[#allocation2 + $0x131] sm:$0xff]
      %v1606 = vld [vmem:[#allocation2 + $0x149] sm:$0xff]
      %v1607 = vld [vmem:[#allocation2 + $0x151] sm:$0xff]
      %v1608 = vld [vmem:[#allocation2 + $0x169] sm:$0xff]
      %v1609 = vld [vmem:[#allocation2 + $0x171] sm:$0xff]
      %v1610 = vld [vmem:[#allocation2 + $0x189] sm:$0xff]
      %v1611 = vld [vmem:[#allocation2 + $0x191] sm:$0xff]
      %v1612 = vld [vmem:[#allocation2 + $0x1a9] sm:$0xff]
      %v1613 = vld [vmem:[#allocation2 + $0x1b1] sm:$0xff]
      %v1614 = vld [vmem:[%s265 + $0x4] sm:$0x1]
      %v1615 = vperm.slane %v1614, 0
      %v1616 = vmul.f32 %v1586, %v1615
      %v1617 = vmul.f32 %v1587, %v1615
      %v1618 = vmul.f32 %v1588, %v1615
      %v1619 = vmul.f32 %v1589, %v1615
      %v1620 = vmul.f32 %v1590, %v1615
      %v1621 = vmul.f32 %v1591, %v1615
      %v1622 = vmul.f32 %v1592, %v1615
      %v1623 = vmul.f32 %v1593, %v1615
      %v1624 = vmul.f32 %v1594, %v1615
      %v1625 = vmul.f32 %v1595, %v1615
      %v1626 = vmul.f32 %v1596, %v1615
      %v1627 = vmul.f32 %v1597, %v1615
      %v1628 = vmul.f32 %v1598, %v1615
      %v1629 = vmul.f32 %v1599, %v1615
      %v1630 = vmul.f32 %v1600, %v1615
      %v1631 = vmul.f32 %v1601, %v1615
      %v1632 = vadd.f32 %v1570, %v1616
      %v1633 = vadd.f32 %v1571, %v1617
      %v1634 = vadd.f32 %v1572, %v1618
      %v1635 = vadd.f32 %v1573, %v1619
      %v1636 = vadd.f32 %v1574, %v1620
      %v1637 = vadd.f32 %v1575, %v1621
      %v1638 = vadd.f32 %v1576, %v1622
      %v1639 = vadd.f32 %v1577, %v1623
      %v1640 = vadd.f32 %v1578, %v1624
      %v1641 = vadd.f32 %v1579, %v1625
      %v1642 = vadd.f32 %v1580, %v1626
      %v1643 = vadd.f32 %v1581, %v1627
      %v1644 = vadd.f32 %v1582, %v1628
      %v1645 = vadd.f32 %v1583, %v1629
      %v1646 = vadd.f32 %v1584, %v1630
      %v1647 = vadd.f32 %v1585, %v1631
      %v1648 = vld [vmem:[%s578 + $0x4] sm:$0x1]
      %v1649 = vperm.slane %v1648, 0
      %v1650 = vmul.f32 %v1588, %v1649
      %v1651 = vmul.f32 %v1589, %v1649
      %v1652 = vmul.f32 %v1590, %v1649
      %v1653 = vmul.f32 %v1591, %v1649
      %v1654 = vmul.f32 %v1592, %v1649
      %v1655 = vmul.f32 %v1593, %v1649
      %v1656 = vmul.f32 %v1594, %v1649
      %v1657 = vmul.f32 %v1595, %v1649
      %v1658 = vmul.f32 %v1596, %v1649
      %v1659 = vmul.f32 %v1597, %v1649
      %v1660 = vmul.f32 %v1598, %v1649
      %v1661 = vmul.f32 %v1599, %v1649
      %v1662 = vmul.f32 %v1600, %v1649
      %v1663 = vmul.f32 %v1601, %v1649
      %v1664 = vmul.f32 %v1602, %v1649
      %v1665 = vmul.f32 %v1603, %v1649
      %v1666 = vadd.f32 %v1632, %v1650
      %v1667 = vadd.f32 %v1633, %v1651
      %v1668 = vadd.f32 %v1634, %v1652
      %v1669 = vadd.f32 %v1635, %v1653
      %v1670 = vadd.f32 %v1636, %v1654
      %v1671 = vadd.f32 %v1637, %v1655
      %v1672 = vadd.f32 %v1638, %v1656
      %v1673 = vadd.f32 %v1639, %v1657
      %v1674 = vadd.f32 %v1640, %v1658
      %v1675 = vadd.f32 %v1641, %v1659
      %v1676 = vadd.f32 %v1642, %v1660
      %v1677 = vadd.f32 %v1643, %v1661
      %v1678 = vadd.f32 %v1644, %v1662
      %v1679 = vadd.f32 %v1645, %v1663
      %v1680 = vadd.f32 %v1646, %v1664
      %v1681 = vadd.f32 %v1647, %v1665
      %v1682 = vld [vmem:[%s613 + $0x4] sm:$0x1]
      %v1683 = vperm.slane %v1682, 0
      %v1684 = vmul.f32 %v1590, %v1683
      %v1685 = vmul.f32 %v1591, %v1683
      %v1686 = vmul.f32 %v1592, %v1683
      %v1687 = vmul.f32 %v1593, %v1683
      %v1688 = vmul.f32 %v1594, %v1683
      %v1689 = vmul.f32 %v1595, %v1683
      %v1690 = vmul.f32 %v1596, %v1683
      %v1691 = vmul.f32 %v1597, %v1683
      %v1692 = vmul.f32 %v1598, %v1683
      %v1693 = vmul.f32 %v1599, %v1683
      %v1694 = vmul.f32 %v1600, %v1683
      %v1695 = vmul.f32 %v1601, %v1683
      %v1696 = vmul.f32 %v1602, %v1683
      %v1697 = vmul.f32 %v1603, %v1683
      %v1698 = vmul.f32 %v1604, %v1683
      %v1699 = vmul.f32 %v1605, %v1683
      %v1700 = vadd.f32 %v1666, %v1684
      %v1701 = vadd.f32 %v1667, %v1685
      %v1702 = vadd.f32 %v1668, %v1686
      %v1703 = vadd.f32 %v1669, %v1687
      %v1704 = vadd.f32 %v1670, %v1688
      %v1705 = vadd.f32 %v1671, %v1689
      %v1706 = vadd.f32 %v1672, %v1690
      %v1707 = vadd.f32 %v1673, %v1691
      %v1708 = vadd.f32 %v1674, %v1692
      %v1709 = vadd.f32 %v1675, %v1693
      %v1710 = vadd.f32 %v1676, %v1694
      %v1711 = vadd.f32 %v1677, %v1695
      %v1712 = vadd.f32 %v1678, %v1696
      %v1713 = vadd.f32 %v1679, %v1697
      %v1714 = vadd.f32 %v1680, %v1698
      %v1715 = vadd.f32 %v1681, %v1699
      %v1716 = vld [vmem:[%s648 + $0x4] sm:$0x1]
      %v1717 = vperm.slane %v1716, 0
      %v1718 = vmul.f32 %v1592, %v1717
      %v1719 = vmul.f32 %v1593, %v1717
      %v1720 = vmul.f32 %v1594, %v1717
      %v1721 = vmul.f32 %v1595, %v1717
      %v1722 = vmul.f32 %v1596, %v1717
      %v1723 = vmul.f32 %v1597, %v1717
      %v1724 = vmul.f32 %v1598, %v1717
      %v1725 = vmul.f32 %v1599, %v1717
      %v1726 = vmul.f32 %v1600, %v1717
      %v1727 = vmul.f32 %v1601, %v1717
      %v1728 = vmul.f32 %v1602, %v1717
      %v1729 = vmul.f32 %v1603, %v1717
      %v1730 = vmul.f32 %v1604, %v1717
      %v1731 = vmul.f32 %v1605, %v1717
      %v1732 = vmul.f32 %v1606, %v1717
      %v1733 = vmul.f32 %v1607, %v1717
      %v1734 = vadd.f32 %v1700, %v1718
      %v1735 = vadd.f32 %v1701, %v1719
      %v1736 = vadd.f32 %v1702, %v1720
      %v1737 = vadd.f32 %v1703, %v1721
      %v1738 = vadd.f32 %v1704, %v1722
      %v1739 = vadd.f32 %v1705, %v1723
      %v1740 = vadd.f32 %v1706, %v1724
      %v1741 = vadd.f32 %v1707, %v1725
      %v1742 = vadd.f32 %v1708, %v1726
      %v1743 = vadd.f32 %v1709, %v1727
      %v1744 = vadd.f32 %v1710, %v1728
      %v1745 = vadd.f32 %v1711, %v1729
      %v1746 = vadd.f32 %v1712, %v1730
      %v1747 = vadd.f32 %v1713, %v1731
      %v1748 = vadd.f32 %v1714, %v1732
      %v1749 = vadd.f32 %v1715, %v1733
      %v1750 = vld [vmem:[%s683 + $0x4] sm:$0x1]
      %v1751 = vperm.slane %v1750, 0
      %v1752 = vmul.f32 %v1594, %v1751
      %v1753 = vmul.f32 %v1595, %v1751
      %v1754 = vmul.f32 %v1596, %v1751
      %v1755 = vmul.f32 %v1597, %v1751
      %v1756 = vmul.f32 %v1598, %v1751
      %v1757 = vmul.f32 %v1599, %v1751
      %v1758 = vmul.f32 %v1600, %v1751
      %v1759 = vmul.f32 %v1601, %v1751
      %v1760 = vmul.f32 %v1602, %v1751
      %v1761 = vmul.f32 %v1603, %v1751
      %v1762 = vmul.f32 %v1604, %v1751
      %v1763 = vmul.f32 %v1605, %v1751
      %v1764 = vmul.f32 %v1606, %v1751
      %v1765 = vmul.f32 %v1607, %v1751
      %v1766 = vmul.f32 %v1608, %v1751
      %v1767 = vmul.f32 %v1609, %v1751
      %v1768 = vadd.f32 %v1734, %v1752
      %v1769 = vadd.f32 %v1735, %v1753
      %v1770 = vadd.f32 %v1736, %v1754
      %v1771 = vadd.f32 %v1737, %v1755
      %v1772 = vadd.f32 %v1738, %v1756
      %v1773 = vadd.f32 %v1739, %v1757
      %v1774 = vadd.f32 %v1740, %v1758
      %v1775 = vadd.f32 %v1741, %v1759
      %v1776 = vadd.f32 %v1742, %v1760
      %v1777 = vadd.f32 %v1743, %v1761
      %v1778 = vadd.f32 %v1744, %v1762
      %v1779 = vadd.f32 %v1745, %v1763
      %v1780 = vadd.f32 %v1746, %v1764
      %v1781 = vadd.f32 %v1747, %v1765
      %v1782 = vadd.f32 %v1748, %v1766
      %v1783 = vadd.f32 %v1749, %v1767
      %v1784 = vld [vmem:[%s718 + $0x4] sm:$0x1]
      %v1785 = vperm.slane %v1784, 0
      %v1786 = vmul.f32 %v1596, %v1785
      %v1787 = vmul.f32 %v1597, %v1785
      %v1788 = vmul.f32 %v1598, %v1785
      %v1789 = vmul.f32 %v1599, %v1785
      %v1790 = vmul.f32 %v1600, %v1785
      %v1791 = vmul.f32 %v1601, %v1785
      %v1792 = vmul.f32 %v1602, %v1785
      %v1793 = vmul.f32 %v1603, %v1785
      %v1794 = vmul.f32 %v1604, %v1785
      %v1795 = vmul.f32 %v1605, %v1785
      %v1796 = vmul.f32 %v1606, %v1785
      %v1797 = vmul.f32 %v1607, %v1785
      %v1798 = vmul.f32 %v1608, %v1785
      %v1799 = vmul.f32 %v1609, %v1785
      %v1800 = vmul.f32 %v1610, %v1785
      %v1801 = vmul.f32 %v1611, %v1785
      %v1802 = vadd.f32 %v1768, %v1786
      %v1803 = vadd.f32 %v1769, %v1787
      %v1804 = vadd.f32 %v1770, %v1788
      %v1805 = vadd.f32 %v1771, %v1789
      %v1806 = vadd.f32 %v1772, %v1790
      %v1807 = vadd.f32 %v1773, %v1791
      %v1808 = vadd.f32 %v1774, %v1792
      %v1809 = vadd.f32 %v1775, %v1793
      %v1810 = vadd.f32 %v1776, %v1794
      %v1811 = vadd.f32 %v1777, %v1795
      %v1812 = vadd.f32 %v1778, %v1796
      %v1813 = vadd.f32 %v1779, %v1797
      %v1814 = vadd.f32 %v1780, %v1798
      %v1815 = vadd.f32 %v1781, %v1799
      %v1816 = vadd.f32 %v1782, %v1800
      %v1817 = vadd.f32 %v1783, %v1801
      %v1818 = vld [vmem:[%s753 + $0x4] sm:$0x1]
      %v1819 = vperm.slane %v1818, 0
      %v1820 = vmul.f32 %v1598, %v1819
      %v1821 = vmul.f32 %v1599, %v1819
      %v1822 = vmul.f32 %v1600, %v1819
      %v1823 = vmul.f32 %v1601, %v1819
      %v1824 = vmul.f32 %v1602, %v1819
      %v1825 = vmul.f32 %v1603, %v1819
      %v1826 = vmul.f32 %v1604, %v1819
      %v1827 = vmul.f32 %v1605, %v1819
      %v1828 = vmul.f32 %v1606, %v1819
      %v1829 = vmul.f32 %v1607, %v1819
      %v1830 = vmul.f32 %v1608, %v1819
      %v1831 = vmul.f32 %v1609, %v1819
      %v1832 = vmul.f32 %v1610, %v1819
      %v1833 = vmul.f32 %v1611, %v1819
      %v1834 = vmul.f32 %v1612, %v1819
      %v1835 = vmul.f32 %v1613, %v1819
      %v1836 = vadd.f32 %v1802, %v1820
      %v1837 = vadd.f32 %v1803, %v1821
      %v1838 = vadd.f32 %v1804, %v1822
      %v1839 = vadd.f32 %v1805, %v1823
      %v1840 = vadd.f32 %v1806, %v1824
      %v1841 = vadd.f32 %v1807, %v1825
      %v1842 = vadd.f32 %v1808, %v1826
      %v1843 = vadd.f32 %v1809, %v1827
      %v1844 = vadd.f32 %v1810, %v1828
      %v1845 = vadd.f32 %v1811, %v1829
      %v1846 = vadd.f32 %v1812, %v1830
      %v1847 = vadd.f32 %v1813, %v1831
      %v1848 = vadd.f32 %v1814, %v1832
      %v1849 = vadd.f32 %v1815, %v1833
      %v1850 = vadd.f32 %v1816, %v1834
      %v1851 = vadd.f32 %v1817, %v1835
      %v1852 = vld [vmem:[#allocation2 + $0xa] sm:$0xff]
      %v1853 = vld [vmem:[#allocation2 + $0x12] sm:$0xff]
      %v1854 = vld [vmem:[#allocation2 + $0x2a] sm:$0xff]
      %v1855 = vld [vmem:[#allocation2 + $0x32] sm:$0xff]
      %v1856 = vld [vmem:[#allocation2 + $0x4a] sm:$0xff]
      %v1857 = vld [vmem:[#allocation2 + $0x52] sm:$0xff]
      %v1858 = vld [vmem:[#allocation2 + $0x6a] sm:$0xff]
      %v1859 = vld [vmem:[#allocation2 + $0x72] sm:$0xff]
      %v1860 = vld [vmem:[#allocation2 + $0x8a] sm:$0xff]
      %v1861 = vld [vmem:[#allocation2 + $0x92] sm:$0xff]
      %v1862 = vld [vmem:[#allocation2 + $0xaa] sm:$0xff]
      %v1863 = vld [vmem:[#allocation2 + $0xb2] sm:$0xff]
      %v1864 = vld [vmem:[#allocation2 + $0xca] sm:$0xff]
      %v1865 = vld [vmem:[#allocation2 + $0xd2] sm:$0xff]
      %v1866 = vld [vmem:[#allocation2 + $0xea] sm:$0xff]
      %v1867 = vld [vmem:[#allocation2 + $0xf2] sm:$0xff]
      %v1868 = vld [vmem:[#allocation2 + $0x10a] sm:$0xff]
      %v1869 = vld [vmem:[#allocation2 + $0x112] sm:$0xff]
      %v1870 = vld [vmem:[#allocation2 + $0x12a] sm:$0xff]
      %v1871 = vld [vmem:[#allocation2 + $0x132] sm:$0xff]
      %v1872 = vld [vmem:[#allocation2 + $0x14a] sm:$0xff]
      %v1873 = vld [vmem:[#allocation2 + $0x152] sm:$0xff]
      %v1874 = vld [vmem:[#allocation2 + $0x16a] sm:$0xff]
      %v1875 = vld [vmem:[#allocation2 + $0x172] sm:$0xff]
      %v1876 = vld [vmem:[#allocation2 + $0x18a] sm:$0xff]
      %v1877 = vld [vmem:[#allocation2 + $0x192] sm:$0xff]
      %v1878 = vld [vmem:[#allocation2 + $0x1aa] sm:$0xff]
      %v1879 = vld [vmem:[#allocation2 + $0x1b2] sm:$0xff]
      %v1880 = vld [vmem:[%s265 + $0x5] sm:$0x1]
      %v1881 = vperm.slane %v1880, 0
      %v1882 = vmul.f32 %v1852, %v1881
      %v1883 = vmul.f32 %v1853, %v1881
      %v1884 = vmul.f32 %v1854, %v1881
      %v1885 = vmul.f32 %v1855, %v1881
      %v1886 = vmul.f32 %v1856, %v1881
      %v1887 = vmul.f32 %v1857, %v1881
      %v1888 = vmul.f32 %v1858, %v1881
      %v1889 = vmul.f32 %v1859, %v1881
      %v1890 = vmul.f32 %v1860, %v1881
      %v1891 = vmul.f32 %v1861, %v1881
      %v1892 = vmul.f32 %v1862, %v1881
      %v1893 = vmul.f32 %v1863, %v1881
      %v1894 = vmul.f32 %v1864, %v1881
      %v1895 = vmul.f32 %v1865, %v1881
      %v1896 = vmul.f32 %v1866, %v1881
      %v1897 = vmul.f32 %v1867, %v1881
      %v1898 = vadd.f32 %v1836, %v1882
      %v1899 = vadd.f32 %v1837, %v1883
      %v1900 = vadd.f32 %v1838, %v1884
      %v1901 = vadd.f32 %v1839, %v1885
      %v1902 = vadd.f32 %v1840, %v1886
      %v1903 = vadd.f32 %v1841, %v1887
      %v1904 = vadd.f32 %v1842, %v1888
      %v1905 = vadd.f32 %v1843, %v1889
      %v1906 = vadd.f32 %v1844, %v1890
      %v1907 = vadd.f32 %v1845, %v1891
      %v1908 = vadd.f32 %v1846, %v1892
      %v1909 = vadd.f32 %v1847, %v1893
      %v1910 = vadd.f32 %v1848, %v1894
      %v1911 = vadd.f32 %v1849, %v1895
      %v1912 = vadd.f32 %v1850, %v1896
      %v1913 = vadd.f32 %v1851, %v1897
      %v1914 = vld [vmem:[%s578 + $0x5] sm:$0x1]
      %v1915 = vperm.slane %v1914, 0
      %v1916 = vmul.f32 %v1854, %v1915
      %v1917 = vmul.f32 %v1855, %v1915
      %v1918 = vmul.f32 %v1856, %v1915
      %v1919 = vmul.f32 %v1857, %v1915
      %v1920 = vmul.f32 %v1858, %v1915
      %v1921 = vmul.f32 %v1859, %v1915
      %v1922 = vmul.f32 %v1860, %v1915
      %v1923 = vmul.f32 %v1861, %v1915
      %v1924 = vmul.f32 %v1862, %v1915
      %v1925 = vmul.f32 %v1863, %v1915
      %v1926 = vmul.f32 %v1864, %v1915
      %v1927 = vmul.f32 %v1865, %v1915
      %v1928 = vmul.f32 %v1866, %v1915
      %v1929 = vmul.f32 %v1867, %v1915
      %v1930 = vmul.f32 %v1868, %v1915
      %v1931 = vmul.f32 %v1869, %v1915
      %v1932 = vadd.f32 %v1898, %v1916
      %v1933 = vadd.f32 %v1899, %v1917
      %v1934 = vadd.f32 %v1900, %v1918
      %v1935 = vadd.f32 %v1901, %v1919
      %v1936 = vadd.f32 %v1902, %v1920
      %v1937 = vadd.f32 %v1903, %v1921
      %v1938 = vadd.f32 %v1904, %v1922
      %v1939 = vadd.f32 %v1905, %v1923
      %v1940 = vadd.f32 %v1906, %v1924
      %v1941 = vadd.f32 %v1907, %v1925
      %v1942 = vadd.f32 %v1908, %v1926
      %v1943 = vadd.f32 %v1909, %v1927
      %v1944 = vadd.f32 %v1910, %v1928
      %v1945 = vadd.f32 %v1911, %v1929
      %v1946 = vadd.f32 %v1912, %v1930
      %v1947 = vadd.f32 %v1913, %v1931
      %v1948 = vld [vmem:[%s613 + $0x5] sm:$0x1]
      %v1949 = vperm.slane %v1948, 0
      %v1950 = vmul.f32 %v1856, %v1949
      %v1951 = vmul.f32 %v1857, %v1949
      %v1952 = vmul.f32 %v1858, %v1949
      %v1953 = vmul.f32 %v1859, %v1949
      %v1954 = vmul.f32 %v1860, %v1949
      %v1955 = vmul.f32 %v1861, %v1949
      %v1956 = vmul.f32 %v1862, %v1949
      %v1957 = vmul.f32 %v1863, %v1949
      %v1958 = vmul.f32 %v1864, %v1949
      %v1959 = vmul.f32 %v1865, %v1949
      %v1960 = vmul.f32 %v1866, %v1949
      %v1961 = vmul.f32 %v1867, %v1949
      %v1962 = vmul.f32 %v1868, %v1949
      %v1963 = vmul.f32 %v1869, %v1949
      %v1964 = vmul.f32 %v1870, %v1949
      %v1965 = vmul.f32 %v1871, %v1949
      %v1966 = vadd.f32 %v1932, %v1950
      %v1967 = vadd.f32 %v1933, %v1951
      %v1968 = vadd.f32 %v1934, %v1952
      %v1969 = vadd.f32 %v1935, %v1953
      %v1970 = vadd.f32 %v1936, %v1954
      %v1971 = vadd.f32 %v1937, %v1955
      %v1972 = vadd.f32 %v1938, %v1956
      %v1973 = vadd.f32 %v1939, %v1957
      %v1974 = vadd.f32 %v1940, %v1958
      %v1975 = vadd.f32 %v1941, %v1959
      %v1976 = vadd.f32 %v1942, %v1960
      %v1977 = vadd.f32 %v1943, %v1961
      %v1978 = vadd.f32 %v1944, %v1962
      %v1979 = vadd.f32 %v1945, %v1963
      %v1980 = vadd.f32 %v1946, %v1964
      %v1981 = vadd.f32 %v1947, %v1965
      %v1982 = vld [vmem:[%s648 + $0x5] sm:$0x1]
      %v1983 = vperm.slane %v1982, 0
      %v1984 = vmul.f32 %v1858, %v1983
      %v1985 = vmul.f32 %v1859, %v1983
      %v1986 = vmul.f32 %v1860, %v1983
      %v1987 = vmul.f32 %v1861, %v1983
      %v1988 = vmul.f32 %v1862, %v1983
      %v1989 = vmul.f32 %v1863, %v1983
      %v1990 = vmul.f32 %v1864, %v1983
      %v1991 = vmul.f32 %v1865, %v1983
      %v1992 = vmul.f32 %v1866, %v1983
      %v1993 = vmul.f32 %v1867, %v1983
      %v1994 = vmul.f32 %v1868, %v1983
      %v1995 = vmul.f32 %v1869, %v1983
      %v1996 = vmul.f32 %v1870, %v1983
      %v1997 = vmul.f32 %v1871, %v1983
      %v1998 = vmul.f32 %v1872, %v1983
      %v1999 = vmul.f32 %v1873, %v1983
      %v2000 = vadd.f32 %v1966, %v1984
      %v2001 = vadd.f32 %v1967, %v1985
      %v2002 = vadd.f32 %v1968, %v1986
      %v2003 = vadd.f32 %v1969, %v1987
      %v2004 = vadd.f32 %v1970, %v1988
      %v2005 = vadd.f32 %v1971, %v1989
      %v2006 = vadd.f32 %v1972, %v1990
      %v2007 = vadd.f32 %v1973, %v1991
      %v2008 = vadd.f32 %v1974, %v1992
      %v2009 = vadd.f32 %v1975, %v1993
      %v2010 = vadd.f32 %v1976, %v1994
      %v2011 = vadd.f32 %v1977, %v1995
      %v2012 = vadd.f32 %v1978, %v1996
      %v2013 = vadd.f32 %v1979, %v1997
      %v2014 = vadd.f32 %v1980, %v1998
      %v2015 = vadd.f32 %v1981, %v1999
      %v2016 = vld [vmem:[%s683 + $0x5] sm:$0x1]
      %v2017 = vperm.slane %v2016, 0
      %v2018 = vmul.f32 %v1860, %v2017
      %v2019 = vmul.f32 %v1861, %v2017
      %v2020 = vmul.f32 %v1862, %v2017
      %v2021 = vmul.f32 %v1863, %v2017
      %v2022 = vmul.f32 %v1864, %v2017
      %v2023 = vmul.f32 %v1865, %v2017
      %v2024 = vmul.f32 %v1866, %v2017
      %v2025 = vmul.f32 %v1867, %v2017
      %v2026 = vmul.f32 %v1868, %v2017
      %v2027 = vmul.f32 %v1869, %v2017
      %v2028 = vmul.f32 %v1870, %v2017
      %v2029 = vmul.f32 %v1871, %v2017
      %v2030 = vmul.f32 %v1872, %v2017
      %v2031 = vmul.f32 %v1873, %v2017
      %v2032 = vmul.f32 %v1874, %v2017
      %v2033 = vmul.f32 %v1875, %v2017
      %v2034 = vadd.f32 %v2000, %v2018
      %v2035 = vadd.f32 %v2001, %v2019
      %v2036 = vadd.f32 %v2002, %v2020
      %v2037 = vadd.f32 %v2003, %v2021
      %v2038 = vadd.f32 %v2004, %v2022
      %v2039 = vadd.f32 %v2005, %v2023
      %v2040 = vadd.f32 %v2006, %v2024
      %v2041 = vadd.f32 %v2007, %v2025
      %v2042 = vadd.f32 %v2008, %v2026
      %v2043 = vadd.f32 %v2009, %v2027
      %v2044 = vadd.f32 %v2010, %v2028
      %v2045 = vadd.f32 %v2011, %v2029
      %v2046 = vadd.f32 %v2012, %v2030
      %v2047 = vadd.f32 %v2013, %v2031
      %v2048 = vadd.f32 %v2014, %v2032
      %v2049 = vadd.f32 %v2015, %v2033
      %v2050 = vld [vmem:[%s718 + $0x5] sm:$0x1]
      %v2051 = vperm.slane %v2050, 0
      %v2052 = vmul.f32 %v1862, %v2051
      %v2053 = vmul.f32 %v1863, %v2051
      %v2054 = vmul.f32 %v1864, %v2051
      %v2055 = vmul.f32 %v1865, %v2051
      %v2056 = vmul.f32 %v1866, %v2051
      %v2057 = vmul.f32 %v1867, %v2051
      %v2058 = vmul.f32 %v1868, %v2051
      %v2059 = vmul.f32 %v1869, %v2051
      %v2060 = vmul.f32 %v1870, %v2051
      %v2061 = vmul.f32 %v1871, %v2051
      %v2062 = vmul.f32 %v1872, %v2051
      %v2063 = vmul.f32 %v1873, %v2051
      %v2064 = vmul.f32 %v1874, %v2051
      %v2065 = vmul.f32 %v1875, %v2051
      %v2066 = vmul.f32 %v1876, %v2051
      %v2067 = vmul.f32 %v1877, %v2051
      %v2068 = vadd.f32 %v2034, %v2052
      %v2069 = vadd.f32 %v2035, %v2053
      %v2070 = vadd.f32 %v2036, %v2054
      %v2071 = vadd.f32 %v2037, %v2055
      %v2072 = vadd.f32 %v2038, %v2056
      %v2073 = vadd.f32 %v2039, %v2057
      %v2074 = vadd.f32 %v2040, %v2058
      %v2075 = vadd.f32 %v2041, %v2059
      %v2076 = vadd.f32 %v2042, %v2060
      %v2077 = vadd.f32 %v2043, %v2061
      %v2078 = vadd.f32 %v2044, %v2062
      %v2079 = vadd.f32 %v2045, %v2063
      %v2080 = vadd.f32 %v2046, %v2064
      %v2081 = vadd.f32 %v2047, %v2065
      %v2082 = vadd.f32 %v2048, %v2066
      %v2083 = vadd.f32 %v2049, %v2067
      %v2084 = vld [vmem:[%s753 + $0x5] sm:$0x1]
      %v2085 = vperm.slane %v2084, 0
      %v2086 = vmul.f32 %v1864, %v2085
      %v2087 = vmul.f32 %v1865, %v2085
      %v2088 = vmul.f32 %v1866, %v2085
      %v2089 = vmul.f32 %v1867, %v2085
      %v2090 = vmul.f32 %v1868, %v2085
      %v2091 = vmul.f32 %v1869, %v2085
      %v2092 = vmul.f32 %v1870, %v2085
      %v2093 = vmul.f32 %v1871, %v2085
      %v2094 = vmul.f32 %v1872, %v2085
      %v2095 = vmul.f32 %v1873, %v2085
      %v2096 = vmul.f32 %v1874, %v2085
      %v2097 = vmul.f32 %v1875, %v2085
      %v2098 = vmul.f32 %v1876, %v2085
      %v2099 = vmul.f32 %v1877, %v2085
      %v2100 = vmul.f32 %v1878, %v2085
      %v2101 = vmul.f32 %v1879, %v2085
      %v2102 = vadd.f32 %v2068, %v2086
      %v2103 = vadd.f32 %v2069, %v2087
      %v2104 = vadd.f32 %v2070, %v2088
      %v2105 = vadd.f32 %v2071, %v2089
      %v2106 = vadd.f32 %v2072, %v2090
      %v2107 = vadd.f32 %v2073, %v2091
      %v2108 = vadd.f32 %v2074, %v2092
      %v2109 = vadd.f32 %v2075, %v2093
      %v2110 = vadd.f32 %v2076, %v2094
      %v2111 = vadd.f32 %v2077, %v2095
      %v2112 = vadd.f32 %v2078, %v2096
      %v2113 = vadd.f32 %v2079, %v2097
      %v2114 = vadd.f32 %v2080, %v2098
      %v2115 = vadd.f32 %v2081, %v2099
      %v2116 = vadd.f32 %v2082, %v2100
      %v2117 = vadd.f32 %v2083, %v2101
      %v2118 = vld [vmem:[#allocation2 + $0xb] sm:$0xff]
      %v2119 = vld [vmem:[#allocation2 + $0x13] sm:$0xff]
      %v2120 = vld [vmem:[#allocation2 + $0x2b] sm:$0xff]
      %v2121 = vld [vmem:[#allocation2 + $0x33] sm:$0xff]
      %v2122 = vld [vmem:[#allocation2 + $0x4b] sm:$0xff]
      %v2123 = vld [vmem:[#allocation2 + $0x53] sm:$0xff]
      %v2124 = vld [vmem:[#allocation2 + $0x6b] sm:$0xff]
      %v2125 = vld [vmem:[#allocation2 + $0x73] sm:$0xff]
      %v2126 = vld [vmem:[#allocation2 + $0x8b] sm:$0xff]
      %v2127 = vld [vmem:[#allocation2 + $0x93] sm:$0xff]
      %v2128 = vld [vmem:[#allocation2 + $0xab] sm:$0xff]
      %v2129 = vld [vmem:[#allocation2 + $0xb3] sm:$0xff]
      %v2130 = vld [vmem:[#allocation2 + $0xcb] sm:$0xff]
      %v2131 = vld [vmem:[#allocation2 + $0xd3] sm:$0xff]
      %v2132 = vld [vmem:[#allocation2 + $0xeb] sm:$0xff]
      %v2133 = vld [vmem:[#allocation2 + $0xf3] sm:$0xff]
      %v2134 = vld [vmem:[#allocation2 + $0x10b] sm:$0xff]
      %v2135 = vld [vmem:[#allocation2 + $0x113] sm:$0xff]
      %v2136 = vld [vmem:[#allocation2 + $0x12b] sm:$0xff]
      %v2137 = vld [vmem:[#allocation2 + $0x133] sm:$0xff]
      %v2138 = vld [vmem:[#allocation2 + $0x14b] sm:$0xff]
      %v2139 = vld [vmem:[#allocation2 + $0x153] sm:$0xff]
      %v2140 = vld [vmem:[#allocation2 + $0x16b] sm:$0xff]
      %v2141 = vld [vmem:[#allocation2 + $0x173] sm:$0xff]
      %v2142 = vld [vmem:[#allocation2 + $0x18b] sm:$0xff]
      %v2143 = vld [vmem:[#allocation2 + $0x193] sm:$0xff]
      %v2144 = vld [vmem:[#allocation2 + $0x1ab] sm:$0xff]
      %v2145 = vld [vmem:[#allocation2 + $0x1b3] sm:$0xff]
      %v2146 = vld [vmem:[%s265 + $0x6] sm:$0x1]
      %v2147 = vperm.slane %v2146, 0
      %v2148 = vmul.f32 %v2118, %v2147
      %v2149 = vmul.f32 %v2119, %v2147
      %v2150 = vmul.f32 %v2120, %v2147
      %v2151 = vmul.f32 %v2121, %v2147
      %v2152 = vmul.f32 %v2122, %v2147
      %v2153 = vmul.f32 %v2123, %v2147
      %v2154 = vmul.f32 %v2124, %v2147
      %v2155 = vmul.f32 %v2125, %v2147
      %v2156 = vmul.f32 %v2126, %v2147
      %v2157 = vmul.f32 %v2127, %v2147
      %v2158 = vmul.f32 %v2128, %v2147
      %v2159 = vmul.f32 %v2129, %v2147
      %v2160 = vmul.f32 %v2130, %v2147
      %v2161 = vmul.f32 %v2131, %v2147
      %v2162 = vmul.f32 %v2132, %v2147
      %v2163 = vmul.f32 %v2133, %v2147
      %v2164 = vadd.f32 %v2102, %v2148
      %v2165 = vadd.f32 %v2103, %v2149
      %v2166 = vadd.f32 %v2104, %v2150
      %v2167 = vadd.f32 %v2105, %v2151
      %v2168 = vadd.f32 %v2106, %v2152
      %v2169 = vadd.f32 %v2107, %v2153
      %v2170 = vadd.f32 %v2108, %v2154
      %v2171 = vadd.f32 %v2109, %v2155
      %v2172 = vadd.f32 %v2110, %v2156
      %v2173 = vadd.f32 %v2111, %v2157
      %v2174 = vadd.f32 %v2112, %v2158
      %v2175 = vadd.f32 %v2113, %v2159
      %v2176 = vadd.f32 %v2114, %v2160
      %v2177 = vadd.f32 %v2115, %v2161
      %v2178 = vadd.f32 %v2116, %v2162
      %v2179 = vadd.f32 %v2117, %v2163
      %v2180 = vld [vmem:[%s578 + $0x6] sm:$0x1]
      %v2181 = vperm.slane %v2180, 0
      %v2182 = vmul.f32 %v2120, %v2181
      %v2183 = vmul.f32 %v2121, %v2181
      %v2184 = vmul.f32 %v2122, %v2181
      %v2185 = vmul.f32 %v2123, %v2181
      %v2186 = vmul.f32 %v2124, %v2181
      %v2187 = vmul.f32 %v2125, %v2181
      %v2188 = vmul.f32 %v2126, %v2181
      %v2189 = vmul.f32 %v2127, %v2181
      %v2190 = vmul.f32 %v2128, %v2181
      %v2191 = vmul.f32 %v2129, %v2181
      %v2192 = vmul.f32 %v2130, %v2181
      %v2193 = vmul.f32 %v2131, %v2181
      %v2194 = vmul.f32 %v2132, %v2181
      %v2195 = vmul.f32 %v2133, %v2181
      %v2196 = vmul.f32 %v2134, %v2181
      %v2197 = vmul.f32 %v2135, %v2181
      %v2198 = vadd.f32 %v2164, %v2182
      %v2199 = vadd.f32 %v2165, %v2183
      %v2200 = vadd.f32 %v2166, %v2184
      %v2201 = vadd.f32 %v2167, %v2185
      %v2202 = vadd.f32 %v2168, %v2186
      %v2203 = vadd.f32 %v2169, %v2187
      %v2204 = vadd.f32 %v2170, %v2188
      %v2205 = vadd.f32 %v2171, %v2189
      %v2206 = vadd.f32 %v2172, %v2190
      %v2207 = vadd.f32 %v2173, %v2191
      %v2208 = vadd.f32 %v2174, %v2192
      %v2209 = vadd.f32 %v2175, %v2193
      %v2210 = vadd.f32 %v2176, %v2194
      %v2211 = vadd.f32 %v2177, %v2195
      %v2212 = vadd.f32 %v2178, %v2196
      %v2213 = vadd.f32 %v2179, %v2197
      %v2214 = vld [vmem:[%s613 + $0x6] sm:$0x1]
      %v2215 = vperm.slane %v2214, 0
      %v2216 = vmul.f32 %v2122, %v2215
      %v2217 = vmul.f32 %v2123, %v2215
      %v2218 = vmul.f32 %v2124, %v2215
      %v2219 = vmul.f32 %v2125, %v2215
      %v2220 = vmul.f32 %v2126, %v2215
      %v2221 = vmul.f32 %v2127, %v2215
      %v2222 = vmul.f32 %v2128, %v2215
      %v2223 = vmul.f32 %v2129, %v2215
      %v2224 = vmul.f32 %v2130, %v2215
      %v2225 = vmul.f32 %v2131, %v2215
      %v2226 = vmul.f32 %v2132, %v2215
      %v2227 = vmul.f32 %v2133, %v2215
      %v2228 = vmul.f32 %v2134, %v2215
      %v2229 = vmul.f32 %v2135, %v2215
      %v2230 = vmul.f32 %v2136, %v2215
      %v2231 = vmul.f32 %v2137, %v2215
      %v2232 = vadd.f32 %v2198, %v2216
      %v2233 = vadd.f32 %v2199, %v2217
      %v2234 = vadd.f32 %v2200, %v2218
      %v2235 = vadd.f32 %v2201, %v2219
      %v2236 = vadd.f32 %v2202, %v2220
      %v2237 = vadd.f32 %v2203, %v2221
      %v2238 = vadd.f32 %v2204, %v2222
      %v2239 = vadd.f32 %v2205, %v2223
      %v2240 = vadd.f32 %v2206, %v2224
      %v2241 = vadd.f32 %v2207, %v2225
      %v2242 = vadd.f32 %v2208, %v2226
      %v2243 = vadd.f32 %v2209, %v2227
      %v2244 = vadd.f32 %v2210, %v2228
      %v2245 = vadd.f32 %v2211, %v2229
      %v2246 = vadd.f32 %v2212, %v2230
      %v2247 = vadd.f32 %v2213, %v2231
      %v2248 = vld [vmem:[%s648 + $0x6] sm:$0x1]
      %v2249 = vperm.slane %v2248, 0
      %v2250 = vmul.f32 %v2124, %v2249
      %v2251 = vmul.f32 %v2125, %v2249
      %v2252 = vmul.f32 %v2126, %v2249
      %v2253 = vmul.f32 %v2127, %v2249
      %v2254 = vmul.f32 %v2128, %v2249
      %v2255 = vmul.f32 %v2129, %v2249
      %v2256 = vmul.f32 %v2130, %v2249
      %v2257 = vmul.f32 %v2131, %v2249
      %v2258 = vmul.f32 %v2132, %v2249
      %v2259 = vmul.f32 %v2133, %v2249
      %v2260 = vmul.f32 %v2134, %v2249
      %v2261 = vmul.f32 %v2135, %v2249
      %v2262 = vmul.f32 %v2136, %v2249
      %v2263 = vmul.f32 %v2137, %v2249
      %v2264 = vmul.f32 %v2138, %v2249
      %v2265 = vmul.f32 %v2139, %v2249
      %v2266 = vadd.f32 %v2232, %v2250
      %v2267 = vadd.f32 %v2233, %v2251
      %v2268 = vadd.f32 %v2234, %v2252
      %v2269 = vadd.f32 %v2235, %v2253
      %v2270 = vadd.f32 %v2236, %v2254
      %v2271 = vadd.f32 %v2237, %v2255
      %v2272 = vadd.f32 %v2238, %v2256
      %v2273 = vadd.f32 %v2239, %v2257
      %v2274 = vadd.f32 %v2240, %v2258
      %v2275 = vadd.f32 %v2241, %v2259
      %v2276 = vadd.f32 %v2242, %v2260
      %v2277 = vadd.f32 %v2243, %v2261
      %v2278 = vadd.f32 %v2244, %v2262
      %v2279 = vadd.f32 %v2245, %v2263
      %v2280 = vadd.f32 %v2246, %v2264
      %v2281 = vadd.f32 %v2247, %v2265
      %v2282 = vld [vmem:[%s683 + $0x6] sm:$0x1]
      %v2283 = vperm.slane %v2282, 0
      %v2284 = vmul.f32 %v2126, %v2283
      %v2285 = vmul.f32 %v2127, %v2283
      %v2286 = vmul.f32 %v2128, %v2283
      %v2287 = vmul.f32 %v2129, %v2283
      %v2288 = vmul.f32 %v2130, %v2283
      %v2289 = vmul.f32 %v2131, %v2283
      %v2290 = vmul.f32 %v2132, %v2283
      %v2291 = vmul.f32 %v2133, %v2283
      %v2292 = vmul.f32 %v2134, %v2283
      %v2293 = vmul.f32 %v2135, %v2283
      %v2294 = vmul.f32 %v2136, %v2283
      %v2295 = vmul.f32 %v2137, %v2283
      %v2296 = vmul.f32 %v2138, %v2283
      %v2297 = vmul.f32 %v2139, %v2283
      %v2298 = vmul.f32 %v2140, %v2283
      %v2299 = vmul.f32 %v2141, %v2283
      %v2300 = vadd.f32 %v2266, %v2284
      %v2301 = vadd.f32 %v2267, %v2285
      %v2302 = vadd.f32 %v2268, %v2286
      %v2303 = vadd.f32 %v2269, %v2287
      %v2304 = vadd.f32 %v2270, %v2288
      %v2305 = vadd.f32 %v2271, %v2289
      %v2306 = vadd.f32 %v2272, %v2290
      %v2307 = vadd.f32 %v2273, %v2291
      %v2308 = vadd.f32 %v2274, %v2292
      %v2309 = vadd.f32 %v2275, %v2293
      %v2310 = vadd.f32 %v2276, %v2294
      %v2311 = vadd.f32 %v2277, %v2295
      %v2312 = vadd.f32 %v2278, %v2296
      %v2313 = vadd.f32 %v2279, %v2297
      %v2314 = vadd.f32 %v2280, %v2298
      %v2315 = vadd.f32 %v2281, %v2299
      %v2316 = vld [vmem:[%s718 + $0x6] sm:$0x1]
      %v2317 = vperm.slane %v2316, 0
      %v2318 = vmul.f32 %v2128, %v2317
      %v2319 = vmul.f32 %v2129, %v2317
      %v2320 = vmul.f32 %v2130, %v2317
      %v2321 = vmul.f32 %v2131, %v2317
      %v2322 = vmul.f32 %v2132, %v2317
      %v2323 = vmul.f32 %v2133, %v2317
      %v2324 = vmul.f32 %v2134, %v2317
      %v2325 = vmul.f32 %v2135, %v2317
      %v2326 = vmul.f32 %v2136, %v2317
      %v2327 = vmul.f32 %v2137, %v2317
      %v2328 = vmul.f32 %v2138, %v2317
      %v2329 = vmul.f32 %v2139, %v2317
      %v2330 = vmul.f32 %v2140, %v2317
      %v2331 = vmul.f32 %v2141, %v2317
      %v2332 = vmul.f32 %v2142, %v2317
      %v2333 = vmul.f32 %v2143, %v2317
      %v2334 = vadd.f32 %v2300, %v2318
      %v2335 = vadd.f32 %v2301, %v2319
      %v2336 = vadd.f32 %v2302, %v2320
      %v2337 = vadd.f32 %v2303, %v2321
      %v2338 = vadd.f32 %v2304, %v2322
      %v2339 = vadd.f32 %v2305, %v2323
      %v2340 = vadd.f32 %v2306, %v2324
      %v2341 = vadd.f32 %v2307, %v2325
      %v2342 = vadd.f32 %v2308, %v2326
      %v2343 = vadd.f32 %v2309, %v2327
      %v2344 = vadd.f32 %v2310, %v2328
      %v2345 = vadd.f32 %v2311, %v2329
      %v2346 = vadd.f32 %v2312, %v2330
      %v2347 = vadd.f32 %v2313, %v2331
      %v2348 = vadd.f32 %v2314, %v2332
      %v2349 = vadd.f32 %v2315, %v2333
      %v2350 = vld [vmem:[%s753 + $0x6] sm:$0x1]
      %v2351 = vperm.slane %v2350, 0
      %v2352 = vmul.f32 %v2130, %v2351
      %v2353 = vmul.f32 %v2131, %v2351
      %v2354 = vmul.f32 %v2132, %v2351
      %v2355 = vmul.f32 %v2133, %v2351
      %v2356 = vmul.f32 %v2134, %v2351
      %v2357 = vmul.f32 %v2135, %v2351
      %v2358 = vmul.f32 %v2136, %v2351
      %v2359 = vmul.f32 %v2137, %v2351
      %v2360 = vmul.f32 %v2138, %v2351
      %v2361 = vmul.f32 %v2139, %v2351
      %v2362 = vmul.f32 %v2140, %v2351
      %v2363 = vmul.f32 %v2141, %v2351
      %v2364 = vmul.f32 %v2142, %v2351
      %v2365 = vmul.f32 %v2143, %v2351
      %v2366 = vmul.f32 %v2144, %v2351
      %v2367 = vmul.f32 %v2145, %v2351
      %v2368 = vadd.f32 %v2334, %v2352
      %v2369 = vadd.f32 %v2335, %v2353
      %v2370 = vadd.f32 %v2336, %v2354
      %v2371 = vadd.f32 %v2337, %v2355
      %v2372 = vadd.f32 %v2338, %v2356
      %v2373 = vadd.f32 %v2339, %v2357
      %v2374 = vadd.f32 %v2340, %v2358
      %v2375 = vadd.f32 %v2341, %v2359
      %v2376 = vadd.f32 %v2342, %v2360
      %v2377 = vadd.f32 %v2343, %v2361
      %v2378 = vadd.f32 %v2344, %v2362
      %v2379 = vadd.f32 %v2345, %v2363
      %v2380 = vadd.f32 %v2346, %v2364
      %v2381 = vadd.f32 %v2347, %v2365
      %v2382 = vadd.f32 %v2348, %v2366
      %v2383 = vadd.f32 %v2349, %v2367
      %v2384 = vpack.c.bf16 %v2368, %v2368
      %v2385 = vpack.c.bf16 %v2369, %v2369
      %v2386 = vpack.c.bf16 %v2370, %v2370
      %v2387 = vpack.c.bf16 %v2371, %v2371
      %v2388 = vpack.c.bf16 %v2372, %v2372
      %v2389 = vpack.c.bf16 %v2373, %v2373
      %v2390 = vpack.c.bf16 %v2374, %v2374
      %v2391 = vpack.c.bf16 %v2375, %v2375
      %v2392 = vpack.c.bf16 %v2376, %v2376
      %v2393 = vpack.c.bf16 %v2377, %v2377
      %v2394 = vpack.c.bf16 %v2378, %v2378
      %v2395 = vpack.c.bf16 %v2379, %v2379
      %v2396 = vpack.c.bf16 %v2380, %v2380
      %v2397 = vpack.c.bf16 %v2381, %v2381
      %v2398 = vpack.c.bf16 %v2382, %v2382
      %v2399 = vpack.c.bf16 %v2383, %v2383
      %2400 = vst [vmem:[%s281] sm:$0xf] %v2384
      %2401 = vst [vmem:[%s281 + $0x4] sm:$0xf] %v2385
      %2402 = vst [vmem:[%s281 + $0x8] sm:$0xf] %v2386
      %2403 = vst [vmem:[%s281 + $0xc] sm:$0xf] %v2387
      %2404 = vst [vmem:[%s281 + $0x10] sm:$0xf] %v2388
      %2405 = vst [vmem:[%s281 + $0x14] sm:$0xf] %v2389
      %2406 = vst [vmem:[%s281 + $0x18] sm:$0xf] %v2390
      %2407 = vst [vmem:[%s281 + $0x1c] sm:$0xf] %v2391
      %2408 = vst [vmem:[%s281 + $0x20] sm:$0xf] %v2392
      %2409 = vst [vmem:[%s281 + $0x24] sm:$0xf] %v2393
      %2410 = vst [vmem:[%s281 + $0x28] sm:$0xf] %v2394
      %2411 = vst [vmem:[%s281 + $0x2c] sm:$0xf] %v2395
      %2412 = vst [vmem:[%s281 + $0x30] sm:$0xf] %v2396
      %2413 = vst [vmem:[%s281 + $0x34] sm:$0xf] %v2397
      %2414 = vst [vmem:[%s281 + $0x38] sm:$0xf] %v2398
      %2415 = vst [vmem:[%s281 + $0x3c] sm:$0xf] %v2399
      %v2416 = vadd.f32 %v2368, %v2369
      %v2417 = vadd.f32 %v2416, %v2370
      %v2418 = vadd.f32 %v2417, %v2371
      %v2419 = vadd.f32 %v2418, %v2372
      %v2420 = vadd.f32 %v2419, %v2373
      %v2421 = vadd.f32 %v2420, %v2374
      %v2422 = vadd.f32 %v2421, %v2375
      %v2423 = vadd.f32 %v2422, %v2376
      %v2424 = vadd.f32 %v2423, %v2377
      %v2425 = vadd.f32 %v2424, %v2378
      %v2426 = vadd.f32 %v2425, %v2379
      %v2427 = vadd.f32 %v2426, %v2380
      %v2428 = vadd.f32 %v2427, %v2381
      %v2429 = vadd.f32 %v2428, %v2382
      %v2430 = vadd.f32 %v2429, %v2383
      %v2431 = vrot.slane %v2430, 4
      %v2432 = vadd.f32 %v2430, %v2431
      %v2433 = vrot.slane %v2432, 2
      %v2434 = vadd.f32 %v2432, %v2433
      %v2435 = vrot.slane %v2434, 1
      %v2436 = vadd.f32 %v2434, %v2435
      %v2437 = vadd.f32 %v2436, 0.0
      %v2438 = vsub.f32 %v2368, %v513
      %v2439 = vsub.f32 %v2369, %v513
      %v2440 = vsub.f32 %v2370, %v513
      %v2441 = vsub.f32 %v2371, %v513
      %v2442 = vsub.f32 %v2372, %v513
      %v2443 = vsub.f32 %v2373, %v513
      %v2444 = vsub.f32 %v2374, %v513
      %v2445 = vsub.f32 %v2375, %v513
      %v2446 = vsub.f32 %v2376, %v513
      %v2447 = vsub.f32 %v2377, %v513
      %v2448 = vsub.f32 %v2378, %v513
      %v2449 = vsub.f32 %v2379, %v513
      %v2450 = vsub.f32 %v2380, %v513
      %v2451 = vsub.f32 %v2381, %v513
      %v2452 = vsub.f32 %v2382, %v513
      %v2453 = vsub.f32 %v2383, %v513
      %v2454 = vmul.f32 %v2438, %v2438
      %v2455 = vmul.f32 %v2439, %v2439
      %v2456 = vmul.f32 %v2440, %v2440
      %v2457 = vmul.f32 %v2441, %v2441
      %v2458 = vmul.f32 %v2442, %v2442
      %v2459 = vmul.f32 %v2443, %v2443
      %v2460 = vmul.f32 %v2444, %v2444
      %v2461 = vmul.f32 %v2445, %v2445
      %v2462 = vmul.f32 %v2446, %v2446
      %v2463 = vmul.f32 %v2447, %v2447
      %v2464 = vmul.f32 %v2448, %v2448
      %v2465 = vmul.f32 %v2449, %v2449
      %v2466 = vmul.f32 %v2450, %v2450
      %v2467 = vmul.f32 %v2451, %v2451
      %v2468 = vmul.f32 %v2452, %v2452
      %v2469 = vmul.f32 %v2453, %v2453
      %v2470 = vadd.f32 %v2454, %v2455
      %v2471 = vadd.f32 %v2470, %v2456
      %v2472 = vadd.f32 %v2471, %v2457
      %v2473 = vadd.f32 %v2472, %v2458
      %v2474 = vadd.f32 %v2473, %v2459
      %v2475 = vadd.f32 %v2474, %v2460
      %v2476 = vadd.f32 %v2475, %v2461
      %v2477 = vadd.f32 %v2476, %v2462
      %v2478 = vadd.f32 %v2477, %v2463
      %v2479 = vadd.f32 %v2478, %v2464
      %v2480 = vadd.f32 %v2479, %v2465
      %v2481 = vadd.f32 %v2480, %v2466
      %v2482 = vadd.f32 %v2481, %v2467
      %v2483 = vadd.f32 %v2482, %v2468
      %v2484 = vadd.f32 %v2483, %v2469
      %v2485 = vrot.slane %v2484, 4
      %v2486 = vadd.f32 %v2484, %v2485
      %v2487 = vrot.slane %v2486, 2
      %v2488 = vadd.f32 %v2486, %v2487
      %v2489 = vrot.slane %v2488, 1
      %v2490 = vadd.f32 %v2488, %v2489
      %v2491 = vadd.f32 %v2490, 0.0
      %2492 = vst [vmem:[%s292] sm:$0x1] %v2437
      %2493 = vst [vmem:[%s302] sm:$0x1] %v2491
      %s2494 = smul.u32 8, %s24
      %p2495 = scmp.lt.s32.totalorder %s23, 1
      %s2496 = scalar_select %p2495, %s23, 1
      %p2497 = scmp.lt.s32.totalorder %s2494, 15
      %s2498 = scalar_select %p2497, %s2494, 15
      %p2499 = scmp.lt.s32.totalorder %s22, 0
      %s2500 = scalar_select %p2499, %s22, 0
      %s2501 = smul.addr %s2498, 2
      %s2502 = sadd.s32 %s2500, %s2501
      %s2503 = smul.addr %s2496, 32
      %s2504 = sadd.s32 %s2502, %s2503
      %s2505 = smul.addr %s2504, 4
      %s2506 = scalar_lea.vmem %s3, %s2505
      %p2507 = scmp.lt.s32.totalorder %s23, 1
      %s2508 = scalar_select %p2507, %s23, 1
      %p2509 = scmp.lt.s32.totalorder %s24, 1
      %s2510 = scalar_select %p2509, %s24, 1
      %p2511 = scmp.lt.s32.totalorder %s22, 0
      %s2512 = scalar_select %p2511, %s22, 0
      %s2513 = sadd.s32 %s2512, %s2510
      %s2514 = smul.addr %s2508, 2
      %s2515 = sadd.s32 %s2513, %s2514
      %s2516 = scalar_lea.vmem %s4, %s2515
      %p2517 = scmp.lt.s32.totalorder %s23, 1
      %s2518 = scalar_select %p2517, %s23, 1
      %p2519 = scmp.lt.s32.totalorder %s24, 1
      %s2520 = scalar_select %p2519, %s24, 1
      %p2521 = scmp.lt.s32.totalorder %s22, 0
      %s2522 = scalar_select %p2521, %s22, 0
      %s2523 = sadd.s32 %s2522, %s2520
      %s2524 = smul.addr %s2518, 2
      %s2525 = sadd.s32 %s2523, %s2524
      %s2526 = scalar_lea.vmem %s5, %s2525
      // Predicated region
      $region110: #{conv_block_forward.2} parent=27 // pred_check
        %p2527 = pneg %p110
      $region111: #{conv_block_forward.2} parent=27 // pred_check_branch
        %2529 = sbr.rel (%p2527) target = $region113
      $region112: #{conv_block_forward.2} parent=27 // pred_region
        %s2530 = smul.u32 8, %s24
      $region113: #{conv_block_forward.2} parent=27 // pred_fallthru
        _
      // Predicated region
      $region114: #{conv_block_forward.2} parent=27 // pred_check
        %p2531 = pneg %p140
      $region115: #{conv_block_forward.2} parent=27 // pred_check_branch
        %2533 = sbr.rel (%p2531) target = $region117
      $region116: #{conv_block_forward.2} parent=27 // pred_region
        _
      $region117: #{conv_block_forward.2} parent=27 // pred_fallthru
        _
      // Predicated region
      $region118: #{conv_block_forward.2} parent=27 // pred_check
        %p2534 = pneg %p170
      $region119: #{conv_block_forward.2} parent=27 // pred_check_branch
        %2536 = sbr.rel (%p2534) target = $region121
      $region120: #{conv_block_forward.2} parent=27 // pred_region
        _
      $region121: #{conv_block_forward.2} parent=27 // pred_fallthru
        _
    $region28: #{conv_block_forward.2} parent=5 // pred_fallthru
      _
    %p2537 = scmp.le.s32.totalorder 2, %s12
    // Predicated region
    $region122: #{conv_block_forward.2} parent=5 // pred_check
      %p2538 = pneg %p2537
    $region123: #{conv_block_forward.2} parent=5 // pred_check_branch
      %2540 = sbr.rel (%p2538) target = $region125
    $region124: #{conv_block_forward.2} parent=5 // pred_region
      %s2541 = ssub.s32 %s12, 2
      // Predicated region
      $region126: #{conv_block_forward.2} parent=124 // pred_check
        %p2542 = pneg %p116
      $region127: #{conv_block_forward.2} parent=124 // pred_check_branch
        %2544 = sbr.rel (%p2542) target = $region129
      $region128: #{conv_block_forward.2} parent=124 // pred_region
        %s2545 = smul.u32 8, %s27
        %p2546 = scmp.lt.s32.totalorder %s26, 1
        %s2547 = scalar_select %p2546, %s26, 1
        %p2548 = scmp.lt.s32.totalorder %s2545, 15
        %s2549 = scalar_select %p2548, %s2545, 15
        %p2550 = scmp.lt.s32.totalorder %s25, 0
        %s2551 = scalar_select %p2550, %s25, 0
        %s2552 = smul.addr %s2549, 2
        %s2553 = sadd.s32 %s2551, %s2552
        %s2554 = smul.addr %s2547, 32
        %s2555 = sadd.s32 %s2553, %s2554
        %s2556 = smul.addr %s2555, 4
        %s2557 = scalar_lea.vmem %s3, %s2556
      $region129: #{conv_block_forward.2} parent=124 // pred_fallthru
        _
      // Predicated region
      $region130: #{conv_block_forward.2} parent=124 // pred_check
        %p2558 = pneg %p146
      $region131: #{conv_block_forward.2} parent=124 // pred_check_branch
        %2560 = sbr.rel (%p2558) target = $region133
      $region132: #{conv_block_forward.2} parent=124 // pred_region
        %p2561 = scmp.lt.s32.totalorder %s26, 1
        %s2562 = scalar_select %p2561, %s26, 1
        %p2563 = scmp.lt.s32.totalorder %s27, 1
        %s2564 = scalar_select %p2563, %s27, 1
        %p2565 = scmp.lt.s32.totalorder %s25, 0
        %s2566 = scalar_select %p2565, %s25, 0
        %s2567 = sadd.s32 %s2566, %s2564
        %s2568 = smul.addr %s2562, 2
        %s2569 = sadd.s32 %s2567, %s2568
        %s2570 = scalar_lea.vmem %s4, %s2569
      $region133: #{conv_block_forward.2} parent=124 // pred_fallthru
        _
      // Predicated region
      $region134: #{conv_block_forward.2} parent=124 // pred_check
        %p2571 = pneg %p176
      $region135: #{conv_block_forward.2} parent=124 // pred_check_branch
        %2573 = sbr.rel (%p2571) target = $region137
      $region136: #{conv_block_forward.2} parent=124 // pred_region
        %p2574 = scmp.lt.s32.totalorder %s26, 1
        %s2575 = scalar_select %p2574, %s26, 1
        %p2576 = scmp.lt.s32.totalorder %s27, 1
        %s2577 = scalar_select %p2576, %s27, 1
        %p2578 = scmp.lt.s32.totalorder %s25, 0
        %s2579 = scalar_select %p2578, %s25, 0
        %s2580 = sadd.s32 %s2579, %s2577
        %s2581 = smul.addr %s2575, 2
        %s2582 = sadd.s32 %s2580, %s2581
        %s2583 = scalar_lea.vmem %s5, %s2582
      $region137: #{conv_block_forward.2} parent=124 // pred_fallthru
        _
    $region125: #{conv_block_forward.2} parent=5 // pred_fallthru
      _
  $region6: #{conv_block_forward.2} parent=0 // loop_footer
    %s16 = sadd.s32 1, %s12
  $region7: #{conv_block_forward.2} parent=0 // loop_footer_branch
    %11 = sbr.rel target = $region3
  $region8: #{conv_block_forward.2} parent=0 // loop_exit
    _
  %2584 = vsyncmov [#allocation3]
  %s2585 = vpop.sfrf %2584
  %p2586 = scmp.eq.s32.totalorder %s2585, 0
  %p2587 = pneg %p2586
  %2589 = shalt.err (%p2587)
  %s2590 = scalar_lea.sflag [#allocation3], 1
  %2591 = vsyncmov %s2590
  %s2592 = vpop.sfrf %2591
  %p2593 = scmp.eq.s32.totalorder %s2592, 0
  %p2594 = pneg %p2593
  %2596 = shalt.err (%p2594)
  %s2597 = scalar_lea.sflag [#allocation3], 2
  %2598 = vsyncmov %s2597
  %s2599 = vpop.sfrf %2598
  %p2600 = scmp.eq.s32.totalorder %s2599, 0
  %p2601 = pneg %p2600
  %2603 = shalt.err (%p2601)

</llo_original>
